<compile_context>
chip_gen: v7x
topology: tpu7x:2x2x1
jax: 0.10.0
libtpu: 0.0.40
codegen_flags: <defaults>
</compile_context>

<pallas_src>
import functools

import jax
import jax.numpy as jnp
from jax import lax
from jax.experimental import pallas as pl
from jax.experimental.pallas import tpu as pltpu

LRELU_SLOPE = 0.1


# ----------------------------------------------------------------------------
# Fused Pallas kernel: whole MRF for one batch element per grid step.
# ----------------------------------------------------------------------------
def _mrf_fused_kernel(*args, kernel_sizes, dilation_sizes, resblock_type,
                      C, T, pad_max):
    nb = len(kernel_sizes)
    x_ref = args[0]
    w_refs = [args[1 + 2 * b] for b in range(nb)]        # (n_convs_b, C, K_b*C) bf16
    b_refs = [args[2 + 2 * b] for b in range(nb)]        # (n_convs_b, C, 1)     f32
    o_ref = args[1 + 2 * nb]
    pbuf = args[2 + 2 * nb]                              # (C, T + 2*pad_max)    bf16
    sbuf = args[3 + 2 * nb]                              # (K_max*C, T)          bf16

    # Zero only the halo/pad columns; the interior [pad_max, pad_max+T) is
    # overwritten before every conv, so the pads are the only columns that must
    # stay zero.  (Done every grid step so it is safe if the "parallel" batch
    # axis is sharded across TensorCores, each with its own scratch.)
    if pad_max > 0:
        pbuf[:, 0:pad_max] = jnp.zeros((C, pad_max), pbuf.dtype)
        pbuf[:, T + pad_max:T + 2 * pad_max] = jnp.zeros((C, pad_max), pbuf.dtype)

    x = x_ref[0].astype(jnp.float32)                     # (C, T)

    def conv_im2col(xt, w_u, b_u, K, d):
        """'same'-padded dilated conv1d of xt (C,T) as one deep MXU matmul."""
        pad = (K - 1) * d // 2
        off = pad_max - pad
        pbuf[:, pad_max:pad_max + T] = xt.astype(pbuf.dtype)
        for k in range(K):                               # build (K*C, T) im2col slab
            sbuf[k * C:(k + 1) * C, :] = pbuf[:, off + k * d: off + k * d + T]
        y = jnp.dot(w_u, sbuf[:K * C, :], preferred_element_type=jnp.float32)
        return y + b_u                                   # (C, T) f32

    out_sum = jnp.zeros((C, T), jnp.float32)
    for b in range(nb):
        K = kernel_sizes[b]
        dils = dilation_sizes[b]
        xb = x
        for u, d in enumerate(dils):
            if resblock_type == "1":
                t = conv_im2col(jnp.where(xb > 0, xb, LRELU_SLOPE * xb),
                                w_refs[b][2 * u], b_refs[b][2 * u], K, d)
                t = conv_im2col(jnp.where(t > 0, t, LRELU_SLOPE * t),
                                w_refs[b][2 * u + 1], b_refs[b][2 * u + 1], K, 1)
                xb = t + xb
            else:
                t = conv_im2col(jnp.where(xb > 0, xb, LRELU_SLOPE * xb),
                                w_refs[b][u], b_refs[b][u], K, d)
                xb = t + xb
        out_sum = out_sum + xb

    o_ref[0] = (out_sum * (1.0 / nb)).astype(o_ref.dtype)


# ----------------------------------------------------------------------------
# Wrapper: one pallas_call for the whole MRF forward.
# ----------------------------------------------------------------------------
def mrf_forward(x, prepped_params, kernel_sizes, dilation_sizes, resblock_type):
    """x: (N, C, T) f32.  prepped_params: output of prepare_mrf_params()."""
    N, C, T = x.shape
    nb = len(kernel_sizes)
    pad_max = max((K - 1) * max(dils) // 2
                  for K, dils in zip(kernel_sizes, dilation_sizes))
    K_max = max(kernel_sizes)

    kern = functools.partial(
        _mrf_fused_kernel,
        kernel_sizes=tuple(kernel_sizes),
        dilation_sizes=tuple(tuple(d) for d in dilation_sizes),
        resblock_type=resblock_type, C=C, T=T, pad_max=pad_max)

    in_specs = [pl.BlockSpec((1, C, T), lambda n: (n, 0, 0))]
    inputs = [x]
    for (wcat, bcat) in prepped_params:
        in_specs.append(pl.BlockSpec(wcat.shape, lambda n: (0, 0, 0)))
        in_specs.append(pl.BlockSpec(bcat.shape, lambda n: (0, 0, 0)))
        inputs.append(wcat)
        inputs.append(bcat)

    return pl.pallas_call(
        kern,
        out_shape=jax.ShapeDtypeStruct((N, C, T), x.dtype),
        grid_spec=pltpu.PrefetchScalarGridSpec(
            num_scalar_prefetch=0,
            grid=(N,),
            in_specs=in_specs,
            out_specs=pl.BlockSpec((1, C, T), lambda n: (n, 0, 0)),
            scratch_shapes=[
                pltpu.VMEM((C, T + 2 * pad_max), jnp.bfloat16),   # padded activation
                pltpu.VMEM((K_max * C, T), jnp.bfloat16),         # im2col slab
            ],
        ),
        compiler_params=pltpu.CompilerParams(
            dimension_semantics=("parallel",),      # batch is independent; v7x uses 2 TCs
        ),
    )(*inputs)


# ----------------------------------------------------------------------------
# One-time parameter preparation (hoisted out of the forward pass):
# PyTorch-layout (C_out, C_in, K) weights -> stacked im2col (n_convs, C_out, K*C_in)
# in bf16; biases -> (n_convs, C_out, 1) f32.
# ----------------------------------------------------------------------------
def prepare_mrf_params(params, resblock_type, matmul_dtype=jnp.bfloat16):
    prepped = []
    for blk in params:
        ws, bs = [], []
        for unit in blk:
            if resblock_type == "1":
                w1, b1, w2, b2 = unit
                pairs = ((w1, b1), (w2, b2))
            else:
                w, b = unit
                pairs = ((w, b),)
            for w, b in pairs:
                C_out, C_in, K = w.shape
                w_im2col = jnp.transpose(w, (0, 2, 1)).reshape(C_out, K * C_in)
                ws.append(w_im2col)
                bs.append(b.reshape(C_out, 1))
        prepped.append((jnp.stack(ws).astype(matmul_dtype),
                        jnp.stack(bs).astype(jnp.float32)))
    return prepped


# ----------------------------------------------------------------------------
# Deterministic parameter construction (weight_norm applied in plain JAX:
# w = g * v / ||v||, norm over (C_in, K) per output channel).
# ----------------------------------------------------------------------------
def _wn_weight(key, C, K, scale=0.1):
    kv, kg = jax.random.split(key)
    v = jax.random.normal(kv, (C, C, K), jnp.float32) * scale
    g = 1.0 + 0.1 * jax.random.normal(kg, (C, 1, 1), jnp.float32)
    norm = jnp.sqrt(jnp.sum(v * v, axis=(1, 2), keepdims=True)) + 1e-12
    return g * v / norm


def make_mrf_params(key, in_channels, kernel_sizes, dilation_sizes, resblock_type):
    params = []
    for K, dils in zip(kernel_sizes, dilation_sizes):
        blk = []
        for _d in dils:
            if resblock_type == "1":
                key, k1, k2, k3, k4 = jax.random.split(key, 5)
                w1 = _wn_weight(k1, in_channels, K)
                b1 = 0.01 * jax.random.normal(k2, (in_channels,), jnp.float32)
                w2 = _wn_weight(k3, in_channels, K)
                b2 = 0.01 * jax.random.normal(k4, (in_channels,), jnp.float32)
                blk.append((w1, b1, w2, b2))
            else:
                key, k1, k2 = jax.random.split(key, 3)
                w = _wn_weight(k1, in_channels, K)
                b = 0.01 * jax.random.normal(k2, (in_channels,), jnp.float32)
                blk.append((w, b))
        params.append(blk)
    return params


# ----------------------------------------------------------------------------
# Pure-JAX reference (correctness check only; high-precision baseline).
# ----------------------------------------------------------------------------
def _conv1d_ref(x, w, b, d):
    K = w.shape[-1]
    pad = (K - 1) * d // 2
    y = lax.conv_general_dilated(
        x, w, window_strides=(1,), padding=[(pad, pad)],
        rhs_dilation=(d,), dimension_numbers=("NCH", "OIH", "NCH"),
        precision=lax.Precision.HIGHEST)
    return y + b[None, :, None]


def mrf_ref(x, params, kernel_sizes, dilation_sizes, resblock_type):
    out_sum = jnp.zeros_like(x)
    for blk_params, K, dils in zip(params, kernel_sizes, dilation_sizes):
        xb = x
        for unit_params, d in zip(blk_params, dils):
            if resblock_type == "1":
                w1, b1, w2, b2 = unit_params
                xt = jax.nn.leaky_relu(xb, LRELU_SLOPE)
                xt = _conv1d_ref(xt, w1, b1, d)
                xt = jax.nn.leaky_relu(xt, LRELU_SLOPE)
                xt = _conv1d_ref(xt, w2, b2, 1)
                xb = xt + xb
            else:
                w, b = unit_params
                xt = jax.nn.leaky_relu(xb, LRELU_SLOPE)
                xt = _conv1d_ref(xt, w, b, d)
                xb = xt + xb
        out_sum = out_sum + xb
    return out_sum / float(len(kernel_sizes))


# ----------------------------------------------------------------------------
if __name__ == "__main__":
    key = jax.random.PRNGKey(0)
    kx, kp1, kp2 = jax.random.split(key, 3)

    N, C, T = 2, 32, 128                      # batch, channels, time
    x = jax.random.normal(kx, (N, C, T), jnp.float32)

    # ResBlock type "1" config (HiFi-GAN v1 style)
    ks1 = (3, 7, 11)
    ds1 = ((1, 3, 5), (1, 3, 5), (1, 3, 5))
    raw1 = make_mrf_params(kp1, C, ks1, ds1, "1")
    prep1 = prepare_mrf_params(raw1, "1")
    out1 = jax.block_until_ready(mrf_forward(x, prep1, ks1, ds1, "1"))
    ref1 = mrf_ref(x, raw1, ks1, ds1, "1")
    assert out1.shape == x.shape and out1.dtype == x.dtype
    err1 = float(jnp.max(jnp.abs(out1 - ref1)) / (jnp.max(jnp.abs(ref1)) + 1e-6))
    assert err1 < 5e-2, f"type-1 mismatch, rel-to-max err {err1}"

    # ResBlock type "2" config
    ks2 = (3, 7)
    ds2 = ((1, 3), (1, 3))
    raw2 = make_mrf_params(kp2, C, ks2, ds2, "2")
    prep2 = prepare_mrf_params(raw2, "2")
    out2 = jax.block_until_ready(mrf_forward(x, prep2, ks2, ds2, "2"))
    ref2 = mrf_ref(x, raw2, ks2, ds2, "2")
    assert out2.shape == x.shape and out2.dtype == x.dtype
    err2 = float(jnp.max(jnp.abs(out2 - ref2)) / (jnp.max(jnp.abs(ref2)) + 1e-6))
    assert err2 < 5e-2, f"type-2 mismatch, rel-to-max err {err2}"

    print("KERNEL_OK")
</pallas_src>

<mosaic_0001>
module attributes {stable_mosaic.version = 11 : i64} {
  func.func @_mrf_fused_kernel(%arg0: i32, %arg1: memref<1x32x128xf32, #tpu.memory_space<vmem>>, %arg2: memref<6x32x96xbf16, #tpu.memory_space<vmem>>, %arg3: memref<6x32x1xf32, #tpu.memory_space<vmem>>, %arg4: memref<6x32x224xbf16, #tpu.memory_space<vmem>>, %arg5: memref<6x32x1xf32, #tpu.memory_space<vmem>>, %arg6: memref<6x32x352xbf16, #tpu.memory_space<vmem>>, %arg7: memref<6x32x1xf32, #tpu.memory_space<vmem>>, %arg8: memref<1x32x128xf32, #tpu.memory_space<vmem>>, %arg9: memref<32x178xbf16, #tpu.memory_space<vmem>>, %arg10: memref<352x128xbf16, #tpu.memory_space<vmem>>) attributes {dimension_semantics = [#tpu.dimension_semantics<parallel>], iteration_bounds = array<i64: 2>, scalar_prefetch = 0 : i64, scratch_operands = 2 : i64, tpu.core_type = #tpu.core_type<tc>, window_params = [{transform_indices = @transform_0, window_bounds = array<i64: 1, 32, 128>}, {pipeline_mode = #tpu.pipeline_mode<synchronous>, transform_indices = @transform_1, window_bounds = array<i64: 6, 32, 96>}, {pipeline_mode = #tpu.pipeline_mode<synchronous>, transform_indices = @transform_2, window_bounds = array<i64: 6, 32, 1>}, {pipeline_mode = #tpu.pipeline_mode<synchronous>, transform_indices = @transform_3, window_bounds = array<i64: 6, 32, 224>}, {pipeline_mode = #tpu.pipeline_mode<synchronous>, transform_indices = @transform_4, window_bounds = array<i64: 6, 32, 1>}, {pipeline_mode = #tpu.pipeline_mode<synchronous>, transform_indices = @transform_5, window_bounds = array<i64: 6, 32, 352>}, {pipeline_mode = #tpu.pipeline_mode<synchronous>, transform_indices = @transform_6, window_bounds = array<i64: 6, 32, 1>}, {transform_indices = @transform_7, window_bounds = array<i64: 1, 32, 128>}]} {
    %cst = arith.constant 0.000000e+00 : bf16
    %0 = vector.broadcast %cst : bf16 to vector<32x25xbf16>
    %c0 = arith.constant 0 : index
    %c0_0 = arith.constant 0 : index
    %1 = vector.load %arg9[%c0, %c0_0] : memref<32x178xbf16, #tpu.memory_space<vmem>>, vector<32x25xbf16>
    tpu.vector_store %arg9[%c0, %c0_0], %0 {strides = array<i32>} : memref<32x178xbf16, #tpu.memory_space<vmem>>, vector<32x25xbf16>,
    %cst_1 = arith.constant 0.000000e+00 : bf16
    %2 = vector.broadcast %cst_1 : bf16 to vector<32x25xbf16>
    %c0_2 = arith.constant 0 : index
    %c153 = arith.constant 153 : index
    %3 = vector.load %arg9[%c0_2, %c153] : memref<32x178xbf16, #tpu.memory_space<vmem>>, vector<32x25xbf16>
    tpu.vector_store %arg9[%c0_2, %c153], %2 {strides = array<i32>} : memref<32x178xbf16, #tpu.memory_space<vmem>>, vector<32x25xbf16>,
    %c0_3 = arith.constant 0 : index
    %c0_4 = arith.constant 0 : index
    %c0_5 = arith.constant 0 : index
    %4 = vector.load %arg1[%c0_3, %c0_4, %c0_5] : memref<1x32x128xf32, #tpu.memory_space<vmem>>, vector<1x32x128xf32>
    %5 = vector.shape_cast %4 : vector<1x32x128xf32> to vector<32x128xf32>
    %cst_6 = arith.constant 0.000000e+00 : f32
    %6 = vector.broadcast %cst_6 : f32 to vector<32x128xf32>
    %cst_7 = arith.constant 0.000000e+00 : f32
    %7 = vector.broadcast %cst_7 : f32 to vector<32x128xf32>
    %8 = arith.cmpf ogt, %5, %7 : vector<32x128xf32>
    %cst_8 = arith.constant 1.000000e-01 : f32
    %9 = vector.broadcast %cst_8 : f32 to vector<32x128xf32>
    %10 = arith.mulf %9, %5 : vector<32x128xf32>
    %11 = arith.select %8, %5, %10 : vector<32x128xi1>, vector<32x128xf32>
    %c0_9 = arith.constant 0 : index
    %c0_10 = arith.constant 0 : index
    %c0_11 = arith.constant 0 : index
    %12 = vector.load %arg2[%c0_9, %c0_10, %c0_11] : memref<6x32x96xbf16, #tpu.memory_space<vmem>>, vector<1x32x96xbf16>
    %13 = vector.shape_cast %12 : vector<1x32x96xbf16> to vector<32x96xbf16>
    %c0_12 = arith.constant 0 : index
    %c0_13 = arith.constant 0 : index
    %c0_14 = arith.constant 0 : index
    %14 = vector.load %arg3[%c0_12, %c0_13, %c0_14] : memref<6x32x1xf32, #tpu.memory_space<vmem>>, vector<1x32x1xf32>
    %15 = vector.shape_cast %14 : vector<1x32x1xf32> to vector<32x1xf32>
    %16 = arith.truncf %11 : vector<32x128xf32> to vector<32x128xbf16>
    %c0_15 = arith.constant 0 : index
    %c25 = arith.constant 25 : index
    %17 = vector.load %arg9[%c0_15, %c25] : memref<32x178xbf16, #tpu.memory_space<vmem>>, vector<32x128xbf16>
    tpu.vector_store %arg9[%c0_15, %c25], %16 {strides = array<i32>} : memref<32x178xbf16, #tpu.memory_space<vmem>>, vector<32x128xbf16>,
    %c0_16 = arith.constant 0 : index
    %c24 = arith.constant 24 : index
    %18 = vector.load %arg9[%c0_16, %c24] : memref<32x178xbf16, #tpu.memory_space<vmem>>, vector<32x128xbf16>
    %c0_17 = arith.constant 0 : index
    %c0_18 = arith.constant 0 : index
    %19 = vector.load %arg10[%c0_17, %c0_18] : memref<352x128xbf16, #tpu.memory_space<vmem>>, vector<32x128xbf16>
    tpu.vector_store %arg10[%c0_17, %c0_18], %18 {strides = array<i32>} : memref<352x128xbf16, #tpu.memory_space<vmem>>, vector<32x128xbf16>,
    %c0_19 = arith.constant 0 : index
    %c25_20 = arith.constant 25 : index
    %20 = vector.load %arg9[%c0_19, %c25_20] : memref<32x178xbf16, #tpu.memory_space<vmem>>, vector<32x128xbf16>
    %c32 = arith.constant 32 : index
    %c0_21 = arith.constant 0 : index
    %21 = vector.load %arg10[%c32, %c0_21] : memref<352x128xbf16, #tpu.memory_space<vmem>>, vector<32x128xbf16>
    tpu.vector_store %arg10[%c32, %c0_21], %20 {strides = array<i32>} : memref<352x128xbf16, #tpu.memory_space<vmem>>, vector<32x128xbf16>,
    %c0_22 = arith.constant 0 : index
    %c26 = arith.constant 26 : index
    %22 = vector.load %arg9[%c0_22, %c26] : memref<32x178xbf16, #tpu.memory_space<vmem>>, vector<32x128xbf16>
    %c64 = arith.constant 64 : index
    %c0_23 = arith.constant 0 : index
    %23 = vector.load %arg10[%c64, %c0_23] : memref<352x128xbf16, #tpu.memory_space<vmem>>, vector<32x128xbf16>
    tpu.vector_store %arg10[%c64, %c0_23], %22 {strides = array<i32>} : memref<352x128xbf16, #tpu.memory_space<vmem>>, vector<32x128xbf16>,
    %c0_24 = arith.constant 0 : index
    %c0_25 = arith.constant 0 : index
    %24 = vector.load %arg10[%c0_24, %c0_25] : memref<352x128xbf16, #tpu.memory_space<vmem>>, vector<96x128xbf16>
    %cst_26 = arith.constant dense<0.000000e+00> : vector<32x128xf32>
    %25 = tpu.matmul %13, %24, %cst_26 {dimension_numbers = #tpu.dot_dimension_numbers<[1], [0], [0], [1], [0, 0, 1, 1], [], []>} : vector<32x96xbf16>, vector<96x128xbf16>, vector<32x128xf32> -> vector<32x128xf32>
    %26 = vector.broadcast %15 : vector<32x1xf32> to vector<32x128xf32>
    %27 = arith.addf %25, %26 : vector<32x128xf32>
    %cst_27 = arith.constant 0.000000e+00 : f32
    %28 = vector.broadcast %cst_27 : f32 to vector<32x128xf32>
    %29 = arith.cmpf ogt, %27, %28 : vector<32x128xf32>
    %cst_28 = arith.constant 1.000000e-01 : f32
    %30 = vector.broadcast %cst_28 : f32 to vector<32x128xf32>
    %31 = arith.mulf %30, %27 : vector<32x128xf32>
    %32 = arith.select %29, %27, %31 : vector<32x128xi1>, vector<32x128xf32>
    %c1 = arith.constant 1 : index
    %c0_29 = arith.constant 0 : index
    %c0_30 = arith.constant 0 : index
    %33 = vector.load %arg2[%c1, %c0_29, %c0_30] : memref<6x32x96xbf16, #tpu.memory_space<vmem>>, vector<1x32x96xbf16>
    %34 = vector.shape_cast %33 : vector<1x32x96xbf16> to vector<32x96xbf16>
    %c1_31 = arith.constant 1 : index
    %c0_32 = arith.constant 0 : index
    %c0_33 = arith.constant 0 : index
    %35 = vector.load %arg3[%c1_31, %c0_32, %c0_33] : memref<6x32x1xf32, #tpu.memory_space<vmem>>, vector<1x32x1xf32>
    %36 = vector.shape_cast %35 : vector<1x32x1xf32> to vector<32x1xf32>
    %37 = arith.truncf %32 : vector<32x128xf32> to vector<32x128xbf16>
    %c0_34 = arith.constant 0 : index
    %c25_35 = arith.constant 25 : index
    %38 = vector.load %arg9[%c0_34, %c25_35] : memref<32x178xbf16, #tpu.memory_space<vmem>>, vector<32x128xbf16>
    tpu.vector_store %arg9[%c0_34, %c25_35], %37 {strides = array<i32>} : memref<32x178xbf16, #tpu.memory_space<vmem>>, vector<32x128xbf16>,
    %c0_36 = arith.constant 0 : index
    %c24_37 = arith.constant 24 : index
    %39 = vector.load %arg9[%c0_36, %c24_37] : memref<32x178xbf16, #tpu.memory_space<vmem>>, vector<32x128xbf16>
    %c0_38 = arith.constant 0 : index
    %c0_39 = arith.constant 0 : index
    %40 = vector.load %arg10[%c0_38, %c0_39] : memref<352x128xbf16, #tpu.memory_space<vmem>>, vector<32x128xbf16>
    tpu.vector_store %arg10[%c0_38, %c0_39], %39 {strides = array<i32>} : memref<352x128xbf16, #tpu.memory_space<vmem>>, vector<32x128xbf16>,
    %c0_40 = arith.constant 0 : index
    %c25_41 = arith.constant 25 : index
    %41 = vector.load %arg9[%c0_40, %c25_41] : memref<32x178xbf16, #tpu.memory_space<vmem>>, vector<32x128xbf16>
    %c32_42 = arith.constant 32 : index
    %c0_43 = arith.constant 0 : index
    %42 = vector.load %arg10[%c32_42, %c0_43] : memref<352x128xbf16, #tpu.memory_space<vmem>>, vector<32x128xbf16>
    tpu.vector_store %arg10[%c32_42, %c0_43], %41 {strides = array<i32>} : memref<352x128xbf16, #tpu.memory_space<vmem>>, vector<32x128xbf16>,
    %c0_44 = arith.constant 0 : index
    %c26_45 = arith.constant 26 : index
    %43 = vector.load %arg9[%c0_44, %c26_45] : memref<32x178xbf16, #tpu.memory_space<vmem>>, vector<32x128xbf16>
    %c64_46 = arith.constant 64 : index
    %c0_47 = arith.constant 0 : index
    %44 = vector.load %arg10[%c64_46, %c0_47] : memref<352x128xbf16, #tpu.memory_space<vmem>>, vector<32x128xbf16>
    tpu.vector_store %arg10[%c64_46, %c0_47], %43 {strides = array<i32>} : memref<352x128xbf16, #tpu.memory_space<vmem>>, vector<32x128xbf16>,
    %c0_48 = arith.constant 0 : index
    %c0_49 = arith.constant 0 : index
    %45 = vector.load %arg10[%c0_48, %c0_49] : memref<352x128xbf16, #tpu.memory_space<vmem>>, vector<96x128xbf16>
    %cst_50 = arith.constant dense<0.000000e+00> : vector<32x128xf32>
    %46 = tpu.matmul %34, %45, %cst_50 {dimension_numbers = #tpu.dot_dimension_numbers<[1], [0], [0], [1], [0, 0, 1, 1], [], []>} : vector<32x96xbf16>, vector<96x128xbf16>, vector<32x128xf32> -> vector<32x128xf32>
    %47 = vector.broadcast %36 : vector<32x1xf32> to vector<32x128xf32>
    %48 = arith.addf %46, %47 : vector<32x128xf32>
    %49 = arith.addf %48, %5 : vector<32x128xf32>
    %cst_51 = arith.constant 0.000000e+00 : f32
    %50 = vector.broadcast %cst_51 : f32 to vector<32x128xf32>
    %51 = arith.cmpf ogt, %49, %50 : vector<32x128xf32>
    %cst_52 = arith.constant 1.000000e-01 : f32
    %52 = vector.broadcast %cst_52 : f32 to vector<32x128xf32>
    %53 = arith.mulf %52, %49 : vector<32x128xf32>
    %54 = arith.select %51, %49, %53 : vector<32x128xi1>, vector<32x128xf32>
    %c2 = arith.constant 2 : index
    %c0_53 = arith.constant 0 : index
    %c0_54 = arith.constant 0 : index
    %55 = vector.load %arg2[%c2, %c0_53, %c0_54] : memref<6x32x96xbf16, #tpu.memory_space<vmem>>, vector<1x32x96xbf16>
    %56 = vector.shape_cast %55 : vector<1x32x96xbf16> to vector<32x96xbf16>
    %c2_55 = arith.constant 2 : index
    %c0_56 = arith.constant 0 : index
    %c0_57 = arith.constant 0 : index
    %57 = vector.load %arg3[%c2_55, %c0_56, %c0_57] : memref<6x32x1xf32, #tpu.memory_space<vmem>>, vector<1x32x1xf32>
    %58 = vector.shape_cast %57 : vector<1x32x1xf32> to vector<32x1xf32>
    %59 = arith.truncf %54 : vector<32x128xf32> to vector<32x128xbf16>
    %c0_58 = arith.constant 0 : index
    %c25_59 = arith.constant 25 : index
    %60 = vector.load %arg9[%c0_58, %c25_59] : memref<32x178xbf16, #tpu.memory_space<vmem>>, vector<32x128xbf16>
    tpu.vector_store %arg9[%c0_58, %c25_59], %59 {strides = array<i32>} : memref<32x178xbf16, #tpu.memory_space<vmem>>, vector<32x128xbf16>,
    %c0_60 = arith.constant 0 : index
    %c22 = arith.constant 22 : index
    %61 = vector.load %arg9[%c0_60, %c22] : memref<32x178xbf16, #tpu.memory_space<vmem>>, vector<32x128xbf16>
    %c0_61 = arith.constant 0 : index
    %c0_62 = arith.constant 0 : index
    %62 = vector.load %arg10[%c0_61, %c0_62] : memref<352x128xbf16, #tpu.memory_space<vmem>>, vector<32x128xbf16>
    tpu.vector_store %arg10[%c0_61, %c0_62], %61 {strides = array<i32>} : memref<352x128xbf16, #tpu.memory_space<vmem>>, vector<32x128xbf16>,
    %c0_63 = arith.constant 0 : index
    %c25_64 = arith.constant 25 : index
    %63 = vector.load %arg9[%c0_63, %c25_64] : memref<32x178xbf16, #tpu.memory_space<vmem>>, vector<32x128xbf16>
    %c32_65 = arith.constant 32 : index
    %c0_66 = arith.constant 0 : index
    %64 = vector.load %arg10[%c32_65, %c0_66] : memref<352x128xbf16, #tpu.memory_space<vmem>>, vector<32x128xbf16>
    tpu.vector_store %arg10[%c32_65, %c0_66], %63 {strides = array<i32>} : memref<352x128xbf16, #tpu.memory_space<vmem>>, vector<32x128xbf16>,
    %c0_67 = arith.constant 0 : index
    %c28 = arith.constant 28 : index
    %65 = vector.load %arg9[%c0_67, %c28] : memref<32x178xbf16, #tpu.memory_space<vmem>>, vector<32x128xbf16>
    %c64_68 = arith.constant 64 : index
    %c0_69 = arith.constant 0 : index
    %66 = vector.load %arg10[%c64_68, %c0_69] : memref<352x128xbf16, #tpu.memory_space<vmem>>, vector<32x128xbf16>
    tpu.vector_store %arg10[%c64_68, %c0_69], %65 {strides = array<i32>} : memref<352x128xbf16, #tpu.memory_space<vmem>>, vector<32x128xbf16>,
    %c0_70 = arith.constant 0 : index
    %c0_71 = arith.constant 0 : index
    %67 = vector.load %arg10[%c0_70, %c0_71] : memref<352x128xbf16, #tpu.memory_space<vmem>>, vector<96x128xbf16>
    %cst_72 = arith.constant dense<0.000000e+00> : vector<32x128xf32>
    %68 = tpu.matmul %56, %67, %cst_72 {dimension_numbers = #tpu.dot_dimension_numbers<[1], [0], [0], [1], [0, 0, 1, 1], [], []>} : vector<32x96xbf16>, vector<96x128xbf16>, vector<32x128xf32> -> vector<32x128xf32>
    %69 = vector.broadcast %58 : vector<32x1xf32> to vector<32x128xf32>
    %70 = arith.addf %68, %69 : vector<32x128xf32>
    %cst_73 = arith.constant 0.000000e+00 : f32
    %71 = vector.broadcast %cst_73 : f32 to vector<32x128xf32>
    %72 = arith.cmpf ogt, %70, %71 : vector<32x128xf32>
    %cst_74 = arith.constant 1.000000e-01 : f32
    %73 = vector.broadcast %cst_74 : f32 to vector<32x128xf32>
    %74 = arith.mulf %73, %70 : vector<32x128xf32>
    %75 = arith.select %72, %70, %74 : vector<32x128xi1>, vector<32x128xf32>
    %c3 = arith.constant 3 : index
    %c0_75 = arith.constant 0 : index
    %c0_76 = arith.constant 0 : index
    %76 = vector.load %arg2[%c3, %c0_75, %c0_76] : memref<6x32x96xbf16, #tpu.memory_space<vmem>>, vector<1x32x96xbf16>
    %77 = vector.shape_cast %76 : vector<1x32x96xbf16> to vector<32x96xbf16>
    %c3_77 = arith.constant 3 : index
    %c0_78 = arith.constant 0 : index
    %c0_79 = arith.constant 0 : index
    %78 = vector.load %arg3[%c3_77, %c0_78, %c0_79] : memref<6x32x1xf32, #tpu.memory_space<vmem>>, vector<1x32x1xf32>
    %79 = vector.shape_cast %78 : vector<1x32x1xf32> to vector<32x1xf32>
    %80 = arith.truncf %75 : vector<32x128xf32> to vector<32x128xbf16>
    %c0_80 = arith.constant 0 : index
    %c25_81 = arith.constant 25 : index
    %81 = vector.load %arg9[%c0_80, %c25_81] : memref<32x178xbf16, #tpu.memory_space<vmem>>, vector<32x128xbf16>
    tpu.vector_store %arg9[%c0_80, %c25_81], %80 {strides = array<i32>} : memref<32x178xbf16, #tpu.memory_space<vmem>>, vector<32x128xbf16>,
    %c0_82 = arith.constant 0 : index
    %c24_83 = arith.constant 24 : index
    %82 = vector.load %arg9[%c0_82, %c24_83] : memref<32x178xbf16, #tpu.memory_space<vmem>>, vector<32x128xbf16>
    %c0_84 = arith.constant 0 : index
    %c0_85 = arith.constant 0 : index
    %83 = vector.load %arg10[%c0_84, %c0_85] : memref<352x128xbf16, #tpu.memory_space<vmem>>, vector<32x128xbf16>
    tpu.vector_store %arg10[%c0_84, %c0_85], %82 {strides = array<i32>} : memref<352x128xbf16, #tpu.memory_space<vmem>>, vector<32x128xbf16>,
    %c0_86 = arith.constant 0 : index
    %c25_87 = arith.constant 25 : index
    %84 = vector.load %arg9[%c0_86, %c25_87] : memref<32x178xbf16, #tpu.memory_space<vmem>>, vector<32x128xbf16>
    %c32_88 = arith.constant 32 : index
    %c0_89 = arith.constant 0 : index
    %85 = vector.load %arg10[%c32_88, %c0_89] : memref<352x128xbf16, #tpu.memory_space<vmem>>, vector<32x128xbf16>
    tpu.vector_store %arg10[%c32_88, %c0_89], %84 {strides = array<i32>} : memref<352x128xbf16, #tpu.memory_space<vmem>>, vector<32x128xbf16>,
    %c0_90 = arith.constant 0 : index
    %c26_91 = arith.constant 26 : index
    %86 = vector.load %arg9[%c0_90, %c26_91] : memref<32x178xbf16, #tpu.memory_space<vmem>>, vector<32x128xbf16>
    %c64_92 = arith.constant 64 : index
    %c0_93 = arith.constant 0 : index
    %87 = vector.load %arg10[%c64_92, %c0_93] : memref<352x128xbf16, #tpu.memory_space<vmem>>, vector<32x128xbf16>
    tpu.vector_store %arg10[%c64_92, %c0_93], %86 {strides = array<i32>} : memref<352x128xbf16, #tpu.memory_space<vmem>>, vector<32x128xbf16>,
    %c0_94 = arith.constant 0 : index
    %c0_95 = arith.constant 0 : index
    %88 = vector.load %arg10[%c0_94, %c0_95] : memref<352x128xbf16, #tpu.memory_space<vmem>>, vector<96x128xbf16>
    %cst_96 = arith.constant dense<0.000000e+00> : vector<32x128xf32>
    %89 = tpu.matmul %77, %88, %cst_96 {dimension_numbers = #tpu.dot_dimension_numbers<[1], [0], [0], [1], [0, 0, 1, 1], [], []>} : vector<32x96xbf16>, vector<96x128xbf16>, vector<32x128xf32> -> vector<32x128xf32>
    %90 = vector.broadcast %79 : vector<32x1xf32> to vector<32x128xf32>
    %91 = arith.addf %89, %90 : vector<32x128xf32>
    %92 = arith.addf %91, %49 : vector<32x128xf32>
    %cst_97 = arith.constant 0.000000e+00 : f32
    %93 = vector.broadcast %cst_97 : f32 to vector<32x128xf32>
    %94 = arith.cmpf ogt, %92, %93 : vector<32x128xf32>
    %cst_98 = arith.constant 1.000000e-01 : f32
    %95 = vector.broadcast %cst_98 : f32 to vector<32x128xf32>
    %96 = arith.mulf %95, %92 : vector<32x128xf32>
    %97 = arith.select %94, %92, %96 : vector<32x128xi1>, vector<32x128xf32>
    %c4 = arith.constant 4 : index
    %c0_99 = arith.constant 0 : index
    %c0_100 = arith.constant 0 : index
    %98 = vector.load %arg2[%c4, %c0_99, %c0_100] : memref<6x32x96xbf16, #tpu.memory_space<vmem>>, vector<1x32x96xbf16>
    %99 = vector.shape_cast %98 : vector<1x32x96xbf16> to vector<32x96xbf16>
    %c4_101 = arith.constant 4 : index
    %c0_102 = arith.constant 0 : index
    %c0_103 = arith.constant 0 : index
    %100 = vector.load %arg3[%c4_101, %c0_102, %c0_103] : memref<6x32x1xf32, #tpu.memory_space<vmem>>, vector<1x32x1xf32>
    %101 = vector.shape_cast %100 : vector<1x32x1xf32> to vector<32x1xf32>
    %102 = arith.truncf %97 : vector<32x128xf32> to vector<32x128xbf16>
    %c0_104 = arith.constant 0 : index
    %c25_105 = arith.constant 25 : index
    %103 = vector.load %arg9[%c0_104, %c25_105] : memref<32x178xbf16, #tpu.memory_space<vmem>>, vector<32x128xbf16>
    tpu.vector_store %arg9[%c0_104, %c25_105], %102 {strides = array<i32>} : memref<32x178xbf16, #tpu.memory_space<vmem>>, vector<32x128xbf16>,
    %c0_106 = arith.constant 0 : index
    %c20 = arith.constant 20 : index
    %104 = vector.load %arg9[%c0_106, %c20] : memref<32x178xbf16, #tpu.memory_space<vmem>>, vector<32x128xbf16>
    %c0_107 = arith.constant 0 : index
    %c0_108 = arith.constant 0 : index
    %105 = vector.load %arg10[%c0_107, %c0_108] : memref<352x128xbf16, #tpu.memory_space<vmem>>, vector<32x128xbf16>
    tpu.vector_store %arg10[%c0_107, %c0_108], %104 {strides = array<i32>} : memref<352x128xbf16, #tpu.memory_space<vmem>>, vector<32x128xbf16>,
    %c0_109 = arith.constant 0 : index
    %c25_110 = arith.constant 25 : index
    %106 = vector.load %arg9[%c0_109, %c25_110] : memref<32x178xbf16, #tpu.memory_space<vmem>>, vector<32x128xbf16>
    %c32_111 = arith.constant 32 : index
    %c0_112 = arith.constant 0 : index
    %107 = vector.load %arg10[%c32_111, %c0_112] : memref<352x128xbf16, #tpu.memory_space<vmem>>, vector<32x128xbf16>
    tpu.vector_store %arg10[%c32_111, %c0_112], %106 {strides = array<i32>} : memref<352x128xbf16, #tpu.memory_space<vmem>>, vector<32x128xbf16>,
    %c0_113 = arith.constant 0 : index
    %c30 = arith.constant 30 : index
    %108 = vector.load %arg9[%c0_113, %c30] : memref<32x178xbf16, #tpu.memory_space<vmem>>, vector<32x128xbf16>
    %c64_114 = arith.constant 64 : index
    %c0_115 = arith.constant 0 : index
    %109 = vector.load %arg10[%c64_114, %c0_115] : memref<352x128xbf16, #tpu.memory_space<vmem>>, vector<32x128xbf16>
    tpu.vector_store %arg10[%c64_114, %c0_115], %108 {strides = array<i32>} : memref<352x128xbf16, #tpu.memory_space<vmem>>, vector<32x128xbf16>,
    %c0_116 = arith.constant 0 : index
    %c0_117 = arith.constant 0 : index
    %110 = vector.load %arg10[%c0_116, %c0_117] : memref<352x128xbf16, #tpu.memory_space<vmem>>, vector<96x128xbf16>
    %cst_118 = arith.constant dense<0.000000e+00> : vector<32x128xf32>
    %111 = tpu.matmul %99, %110, %cst_118 {dimension_numbers = #tpu.dot_dimension_numbers<[1], [0], [0], [1], [0, 0, 1, 1], [], []>} : vector<32x96xbf16>, vector<96x128xbf16>, vector<32x128xf32> -> vector<32x128xf32>
    %112 = vector.broadcast %101 : vector<32x1xf32> to vector<32x128xf32>
    %113 = arith.addf %111, %112 : vector<32x128xf32>
    %cst_119 = arith.constant 0.000000e+00 : f32
    %114 = vector.broadcast %cst_119 : f32 to vector<32x128xf32>
    %115 = arith.cmpf ogt, %113, %114 : vector<32x128xf32>
    %cst_120 = arith.constant 1.000000e-01 : f32
    %116 = vector.broadcast %cst_120 : f32 to vector<32x128xf32>
    %117 = arith.mulf %116, %113 : vector<32x128xf32>
    %118 = arith.select %115, %113, %117 : vector<32x128xi1>, vector<32x128xf32>
    %c5 = arith.constant 5 : index
    %c0_121 = arith.constant 0 : index
    %c0_122 = arith.constant 0 : index
    %119 = vector.load %arg2[%c5, %c0_121, %c0_122] : memref<6x32x96xbf16, #tpu.memory_space<vmem>>, vector<1x32x96xbf16>
    %120 = vector.shape_cast %119 : vector<1x32x96xbf16> to vector<32x96xbf16>
    %c5_123 = arith.constant 5 : index
    %c0_124 = arith.constant 0 : index
    %c0_125 = arith.constant 0 : index
    %121 = vector.load %arg3[%c5_123, %c0_124, %c0_125] : memref<6x32x1xf32, #tpu.memory_space<vmem>>, vector<1x32x1xf32>
    %122 = vector.shape_cast %121 : vector<1x32x1xf32> to vector<32x1xf32>
    %123 = arith.truncf %118 : vector<32x128xf32> to vector<32x128xbf16>
    %c0_126 = arith.constant 0 : index
    %c25_127 = arith.constant 25 : index
    %124 = vector.load %arg9[%c0_126, %c25_127] : memref<32x178xbf16, #tpu.memory_space<vmem>>, vector<32x128xbf16>
    tpu.vector_store %arg9[%c0_126, %c25_127], %123 {strides = array<i32>} : memref<32x178xbf16, #tpu.memory_space<vmem>>, vector<32x128xbf16>,
    %c0_128 = arith.constant 0 : index
    %c24_129 = arith.constant 24 : index
    %125 = vector.load %arg9[%c0_128, %c24_129] : memref<32x178xbf16, #tpu.memory_space<vmem>>, vector<32x128xbf16>
    %c0_130 = arith.constant 0 : index
    %c0_131 = arith.constant 0 : index
    %126 = vector.load %arg10[%c0_130, %c0_131] : memref<352x128xbf16, #tpu.memory_space<vmem>>, vector<32x128xbf16>
    tpu.vector_store %arg10[%c0_130, %c0_131], %125 {strides = array<i32>} : memref<352x128xbf16, #tpu.memory_space<vmem>>, vector<32x128xbf16>,
    %c0_132 = arith.constant 0 : index
    %c25_133 = arith.constant 25 : index
    %127 = vector.load %arg9[%c0_132, %c25_133] : memref<32x178xbf16, #tpu.memory_space<vmem>>, vector<32x128xbf16>
    %c32_134 = arith.constant 32 : index
    %c0_135 = arith.constant 0 : index
    %128 = vector.load %arg10[%c32_134, %c0_135] : memref<352x128xbf16, #tpu.memory_space<vmem>>, vector<32x128xbf16>
    tpu.vector_store %arg10[%c32_134, %c0_135], %127 {strides = array<i32>} : memref<352x128xbf16, #tpu.memory_space<vmem>>, vector<32x128xbf16>,
    %c0_136 = arith.constant 0 : index
    %c26_137 = arith.constant 26 : index
    %129 = vector.load %arg9[%c0_136, %c26_137] : memref<32x178xbf16, #tpu.memory_space<vmem>>, vector<32x128xbf16>
    %c64_138 = arith.constant 64 : index
    %c0_139 = arith.constant 0 : index
    %130 = vector.load %arg10[%c64_138, %c0_139] : memref<352x128xbf16, #tpu.memory_space<vmem>>, vector<32x128xbf16>
    tpu.vector_store %arg10[%c64_138, %c0_139], %129 {strides = array<i32>} : memref<352x128xbf16, #tpu.memory_space<vmem>>, vector<32x128xbf16>,
    %c0_140 = arith.constant 0 : index
    %c0_141 = arith.constant 0 : index
    %131 = vector.load %arg10[%c0_140, %c0_141] : memref<352x128xbf16, #tpu.memory_space<vmem>>, vector<96x128xbf16>
    %cst_142 = arith.constant dense<0.000000e+00> : vector<32x128xf32>
    %132 = tpu.matmul %120, %131, %cst_142 {dimension_numbers = #tpu.dot_dimension_numbers<[1], [0], [0], [1], [0, 0, 1, 1], [], []>} : vector<32x96xbf16>, vector<96x128xbf16>, vector<32x128xf32> -> vector<32x128xf32>
    %133 = vector.broadcast %122 : vector<32x1xf32> to vector<32x128xf32>
    %134 = arith.addf %132, %133 : vector<32x128xf32>
    %135 = arith.addf %134, %92 : vector<32x128xf32>
    %136 = arith.addf %6, %135 : vector<32x128xf32>
    %cst_143 = arith.constant 0.000000e+00 : f32
    %137 = vector.broadcast %cst_143 : f32 to vector<32x128xf32>
    %138 = arith.cmpf ogt, %5, %137 : vector<32x128xf32>
    %cst_144 = arith.constant 1.000000e-01 : f32
    %139 = vector.broadcast %cst_144 : f32 to vector<32x128xf32>
    %140 = arith.mulf %139, %5 : vector<32x128xf32>
    %141 = arith.select %138, %5, %140 : vector<32x128xi1>, vector<32x128xf32>
    %c0_145 = arith.constant 0 : index
    %c0_146 = arith.constant 0 : index
    %c0_147 = arith.constant 0 : index
    %142 = vector.load %arg4[%c0_145, %c0_146, %c0_147] : memref<6x32x224xbf16, #tpu.memory_space<vmem>>, vector<1x32x224xbf16>
    %143 = vector.shape_cast %142 : vector<1x32x224xbf16> to vector<32x224xbf16>
    %c0_148 = arith.constant 0 : index
    %c0_149 = arith.constant 0 : index
    %c0_150 = arith.constant 0 : index
    %144 = vector.load %arg5[%c0_148, %c0_149, %c0_150] : memref<6x32x1xf32, #tpu.memory_space<vmem>>, vector<1x32x1xf32>
    %145 = vector.shape_cast %144 : vector<1x32x1xf32> to vector<32x1xf32>
    %146 = arith.truncf %141 : vector<32x128xf32> to vector<32x128xbf16>
    %c0_151 = arith.constant 0 : index
    %c25_152 = arith.constant 25 : index
    %147 = vector.load %arg9[%c0_151, %c25_152] : memref<32x178xbf16, #tpu.memory_space<vmem>>, vector<32x128xbf16>
    tpu.vector_store %arg9[%c0_151, %c25_152], %146 {strides = array<i32>} : memref<32x178xbf16, #tpu.memory_space<vmem>>, vector<32x128xbf16>,
    %c0_153 = arith.constant 0 : index
    %c22_154 = arith.constant 22 : index
    %148 = vector.load %arg9[%c0_153, %c22_154] : memref<32x178xbf16, #tpu.memory_space<vmem>>, vector<32x128xbf16>
    %c0_155 = arith.constant 0 : index
    %c0_156 = arith.constant 0 : index
    %149 = vector.load %arg10[%c0_155, %c0_156] : memref<352x128xbf16, #tpu.memory_space<vmem>>, vector<32x128xbf16>
    tpu.vector_store %arg10[%c0_155, %c0_156], %148 {strides = array<i32>} : memref<352x128xbf16, #tpu.memory_space<vmem>>, vector<32x128xbf16>,
    %c0_157 = arith.constant 0 : index
    %c23 = arith.constant 23 : index
    %150 = vector.load %arg9[%c0_157, %c23] : memref<32x178xbf16, #tpu.memory_space<vmem>>, vector<32x128xbf16>
    %c32_158 = arith.constant 32 : index
    %c0_159 = arith.constant 0 : index
    %151 = vector.load %arg10[%c32_158, %c0_159] : memref<352x128xbf16, #tpu.memory_space<vmem>>, vector<32x128xbf16>
    tpu.vector_store %arg10[%c32_158, %c0_159], %150 {strides = array<i32>} : memref<352x128xbf16, #tpu.memory_space<vmem>>, vector<32x128xbf16>,
    %c0_160 = arith.constant 0 : index
    %c24_161 = arith.constant 24 : index
    %152 = vector.load %arg9[%c0_160, %c24_161] : memref<32x178xbf16, #tpu.memory_space<vmem>>, vector<32x128xbf16>
    %c64_162 = arith.constant 64 : index
    %c0_163 = arith.constant 0 : index
    %153 = vector.load %arg10[%c64_162, %c0_163] : memref<352x128xbf16, #tpu.memory_space<vmem>>, vector<32x128xbf16>
    tpu.vector_store %arg10[%c64_162, %c0_163], %152 {strides = array<i32>} : memref<352x128xbf16, #tpu.memory_space<vmem>>, vector<32x128xbf16>,
    %c0_164 = arith.constant 0 : index
    %c25_165 = arith.constant 25 : index
    %154 = vector.load %arg9[%c0_164, %c25_165] : memref<32x178xbf16, #tpu.memory_space<vmem>>, vector<32x128xbf16>
    %c96 = arith.constant 96 : index
    %c0_166 = arith.constant 0 : index
    %155 = vector.load %arg10[%c96, %c0_166] : memref<352x128xbf16, #tpu.memory_space<vmem>>, vector<32x128xbf16>
    tpu.vector_store %arg10[%c96, %c0_166], %154 {strides = array<i32>} : memref<352x128xbf16, #tpu.memory_space<vmem>>, vector<32x128xbf16>,
    %c0_167 = arith.constant 0 : index
    %c26_168 = arith.constant 26 : index
    %156 = vector.load %arg9[%c0_167, %c26_168] : memref<32x178xbf16, #tpu.memory_space<vmem>>, vector<32x128xbf16>
    %c128 = arith.constant 128 : index
    %c0_169 = arith.constant 0 : index
    %157 = vector.load %arg10[%c128, %c0_169] : memref<352x128xbf16, #tpu.memory_space<vmem>>, vector<32x128xbf16>
    tpu.vector_store %arg10[%c128, %c0_169], %156 {strides = array<i32>} : memref<352x128xbf16, #tpu.memory_space<vmem>>, vector<32x128xbf16>,
    %c0_170 = arith.constant 0 : index
    %c27 = arith.constant 27 : index
    %158 = vector.load %arg9[%c0_170, %c27] : memref<32x178xbf16, #tpu.memory_space<vmem>>, vector<32x128xbf16>
    %c160 = arith.constant 160 : index
    %c0_171 = arith.constant 0 : index
    %159 = vector.load %arg10[%c160, %c0_171] : memref<352x128xbf16, #tpu.memory_space<vmem>>, vector<32x128xbf16>
    tpu.vector_store %arg10[%c160, %c0_171], %158 {strides = array<i32>} : memref<352x128xbf16, #tpu.memory_space<vmem>>, vector<32x128xbf16>,
    %c0_172 = arith.constant 0 : index
    %c28_173 = arith.constant 28 : index
    %160 = vector.load %arg9[%c0_172, %c28_173] : memref<32x178xbf16, #tpu.memory_space<vmem>>, vector<32x128xbf16>
    %c192 = arith.constant 192 : index
    %c0_174 = arith.constant 0 : index
    %161 = vector.load %arg10[%c192, %c0_174] : memref<352x128xbf16, #tpu.memory_space<vmem>>, vector<32x128xbf16>
    tpu.vector_store %arg10[%c192, %c0_174], %160 {strides = array<i32>} : memref<352x128xbf16, #tpu.memory_space<vmem>>, vector<32x128xbf16>,
    %c0_175 = arith.constant 0 : index
    %c0_176 = arith.constant 0 : index
    %162 = vector.load %arg10[%c0_175, %c0_176] : memref<352x128xbf16, #tpu.memory_space<vmem>>, vector<224x128xbf16>
    %cst_177 = arith.constant dense<0.000000e+00> : vector<32x128xf32>
    %163 = tpu.matmul %143, %162, %cst_177 {dimension_numbers = #tpu.dot_dimension_numbers<[1], [0], [0], [1], [0, 0, 1, 1], [], []>} : vector<32x224xbf16>, vector<224x128xbf16>, vector<32x128xf32> -> vector<32x128xf32>
    %164 = vector.broadcast %145 : vector<32x1xf32> to vector<32x128xf32>
    %165 = arith.addf %163, %164 : vector<32x128xf32>
    %cst_178 = arith.constant 0.000000e+00 : f32
    %166 = vector.broadcast %cst_178 : f32 to vector<32x128xf32>
    %167 = arith.cmpf ogt, %165, %166 : vector<32x128xf32>
    %cst_179 = arith.constant 1.000000e-01 : f32
    %168 = vector.broadcast %cst_179 : f32 to vector<32x128xf32>
    %169 = arith.mulf %168, %165 : vector<32x128xf32>
    %170 = arith.select %167, %165, %169 : vector<32x128xi1>, vector<32x128xf32>
    %c1_180 = arith.constant 1 : index
    %c0_181 = arith.constant 0 : index
    %c0_182 = arith.constant 0 : index
    %171 = vector.load %arg4[%c1_180, %c0_181, %c0_182] : memref<6x32x224xbf16, #tpu.memory_space<vmem>>, vector<1x32x224xbf16>
    %172 = vector.shape_cast %171 : vector<1x32x224xbf16> to vector<32x224xbf16>
    %c1_183 = arith.constant 1 : index
    %c0_184 = arith.constant 0 : index
    %c0_185 = arith.constant 0 : index
    %173 = vector.load %arg5[%c1_183, %c0_184, %c0_185] : memref<6x32x1xf32, #tpu.memory_space<vmem>>, vector<1x32x1xf32>
    %174 = vector.shape_cast %173 : vector<1x32x1xf32> to vector<32x1xf32>
    %175 = arith.truncf %170 : vector<32x128xf32> to vector<32x128xbf16>
    %c0_186 = arith.constant 0 : index
    %c25_187 = arith.constant 25 : index
    %176 = vector.load %arg9[%c0_186, %c25_187] : memref<32x178xbf16, #tpu.memory_space<vmem>>, vector<32x128xbf16>
    tpu.vector_store %arg9[%c0_186, %c25_187], %175 {strides = array<i32>} : memref<32x178xbf16, #tpu.memory_space<vmem>>, vector<32x128xbf16>,
    %c0_188 = arith.constant 0 : index
    %c22_189 = arith.constant 22 : index
    %177 = vector.load %arg9[%c0_188, %c22_189] : memref<32x178xbf16, #tpu.memory_space<vmem>>, vector<32x128xbf16>
    %c0_190 = arith.constant 0 : index
    %c0_191 = arith.constant 0 : index
    %178 = vector.load %arg10[%c0_190, %c0_191] : memref<352x128xbf16, #tpu.memory_space<vmem>>, vector<32x128xbf16>
    tpu.vector_store %arg10[%c0_190, %c0_191], %177 {strides = array<i32>} : memref<352x128xbf16, #tpu.memory_space<vmem>>, vector<32x128xbf16>,
    %c0_192 = arith.constant 0 : index
    %c23_193 = arith.constant 23 : index
    %179 = vector.load %arg9[%c0_192, %c23_193] : memref<32x178xbf16, #tpu.memory_space<vmem>>, vector<32x128xbf16>
    %c32_194 = arith.constant 32 : index
    %c0_195 = arith.constant 0 : index
    %180 = vector.load %arg10[%c32_194, %c0_195] : memref<352x128xbf16, #tpu.memory_space<vmem>>, vector<32x128xbf16>
    tpu.vector_store %arg10[%c32_194, %c0_195], %179 {strides = array<i32>} : memref<352x128xbf16, #tpu.memory_space<vmem>>, vector<32x128xbf16>,
    %c0_196 = arith.constant 0 : index
    %c24_197 = arith.constant 24 : index
    %181 = vector.load %arg9[%c0_196, %c24_197] : memref<32x178xbf16, #tpu.memory_space<vmem>>, vector<32x128xbf16>
    %c64_198 = arith.constant 64 : index
    %c0_199 = arith.constant 0 : index
    %182 = vector.load %arg10[%c64_198, %c0_199] : memref<352x128xbf16, #tpu.memory_space<vmem>>, vector<32x128xbf16>
    tpu.vector_store %arg10[%c64_198, %c0_199], %181 {strides = array<i32>} : memref<352x128xbf16, #tpu.memory_space<vmem>>, vector<32x128xbf16>,
    %c0_200 = arith.constant 0 : index
    %c25_201 = arith.constant 25 : index
    %183 = vector.load %arg9[%c0_200, %c25_201] : memref<32x178xbf16, #tpu.memory_space<vmem>>, vector<32x128xbf16>
    %c96_202 = arith.constant 96 : index
    %c0_203 = arith.constant 0 : index
    %184 = vector.load %arg10[%c96_202, %c0_203] : memref<352x128xbf16, #tpu.memory_space<vmem>>, vector<32x128xbf16>
    tpu.vector_store %arg10[%c96_202, %c0_203], %183 {strides = array<i32>} : memref<352x128xbf16, #tpu.memory_space<vmem>>, vector<32x128xbf16>,
    %c0_204 = arith.constant 0 : index
    %c26_205 = arith.constant 26 : index
    %185 = vector.load %arg9[%c0_204, %c26_205] : memref<32x178xbf16, #tpu.memory_space<vmem>>, vector<32x128xbf16>
    %c128_206 = arith.constant 128 : index
    %c0_207 = arith.constant 0 : index
    %186 = vector.load %arg10[%c128_206, %c0_207] : memref<352x128xbf16, #tpu.memory_space<vmem>>, vector<32x128xbf16>
    tpu.vector_store %arg10[%c128_206, %c0_207], %185 {strides = array<i32>} : memref<352x128xbf16, #tpu.memory_space<vmem>>, vector<32x128xbf16>,
    %c0_208 = arith.constant 0 : index
    %c27_209 = arith.constant 27 : index
    %187 = vector.load %arg9[%c0_208, %c27_209] : memref<32x178xbf16, #tpu.memory_space<vmem>>, vector<32x128xbf16>
    %c160_210 = arith.constant 160 : index
    %c0_211 = arith.constant 0 : index
    %188 = vector.load %arg10[%c160_210, %c0_211] : memref<352x128xbf16, #tpu.memory_space<vmem>>, vector<32x128xbf16>
    tpu.vector_store %arg10[%c160_210, %c0_211], %187 {strides = array<i32>} : memref<352x128xbf16, #tpu.memory_space<vmem>>, vector<32x128xbf16>,
    %c0_212 = arith.constant 0 : index
    %c28_213 = arith.constant 28 : index
    %189 = vector.load %arg9[%c0_212, %c28_213] : memref<32x178xbf16, #tpu.memory_space<vmem>>, vector<32x128xbf16>
    %c192_214 = arith.constant 192 : index
    %c0_215 = arith.constant 0 : index
    %190 = vector.load %arg10[%c192_214, %c0_215] : memref<352x128xbf16, #tpu.memory_space<vmem>>, vector<32x128xbf16>
    tpu.vector_store %arg10[%c192_214, %c0_215], %189 {strides = array<i32>} : memref<352x128xbf16, #tpu.memory_space<vmem>>, vector<32x128xbf16>,
    %c0_216 = arith.constant 0 : index
    %c0_217 = arith.constant 0 : index
    %191 = vector.load %arg10[%c0_216, %c0_217] : memref<352x128xbf16, #tpu.memory_space<vmem>>, vector<224x128xbf16>
    %cst_218 = arith.constant dense<0.000000e+00> : vector<32x128xf32>
    %192 = tpu.matmul %172, %191, %cst_218 {dimension_numbers = #tpu.dot_dimension_numbers<[1], [0], [0], [1], [0, 0, 1, 1], [], []>} : vector<32x224xbf16>, vector<224x128xbf16>, vector<32x128xf32> -> vector<32x128xf32>
    %193 = vector.broadcast %174 : vector<32x1xf32> to vector<32x128xf32>
    %194 = arith.addf %192, %193 : vector<32x128xf32>
    %195 = arith.addf %194, %5 : vector<32x128xf32>
    %cst_219 = arith.constant 0.000000e+00 : f32
    %196 = vector.broadcast %cst_219 : f32 to vector<32x128xf32>
    %197 = arith.cmpf ogt, %195, %196 : vector<32x128xf32>
    %cst_220 = arith.constant 1.000000e-01 : f32
    %198 = vector.broadcast %cst_220 : f32 to vector<32x128xf32>
    %199 = arith.mulf %198, %195 : vector<32x128xf32>
    %200 = arith.select %197, %195, %199 : vector<32x128xi1>, vector<32x128xf32>
    %c2_221 = arith.constant 2 : index
    %c0_222 = arith.constant 0 : index
    %c0_223 = arith.constant 0 : index
    %201 = vector.load %arg4[%c2_221, %c0_222, %c0_223] : memref<6x32x224xbf16, #tpu.memory_space<vmem>>, vector<1x32x224xbf16>
    %202 = vector.shape_cast %201 : vector<1x32x224xbf16> to vector<32x224xbf16>
    %c2_224 = arith.constant 2 : index
    %c0_225 = arith.constant 0 : index
    %c0_226 = arith.constant 0 : index
    %203 = vector.load %arg5[%c2_224, %c0_225, %c0_226] : memref<6x32x1xf32, #tpu.memory_space<vmem>>, vector<1x32x1xf32>
    %204 = vector.shape_cast %203 : vector<1x32x1xf32> to vector<32x1xf32>
    %205 = arith.truncf %200 : vector<32x128xf32> to vector<32x128xbf16>
    %c0_227 = arith.constant 0 : index
    %c25_228 = arith.constant 25 : index
    %206 = vector.load %arg9[%c0_227, %c25_228] : memref<32x178xbf16, #tpu.memory_space<vmem>>, vector<32x128xbf16>
    tpu.vector_store %arg9[%c0_227, %c25_228], %205 {strides = array<i32>} : memref<32x178xbf16, #tpu.memory_space<vmem>>, vector<32x128xbf16>,
    %c0_229 = arith.constant 0 : index
    %c16 = arith.constant 16 : index
    %207 = vector.load %arg9[%c0_229, %c16] : memref<32x178xbf16, #tpu.memory_space<vmem>>, vector<32x128xbf16>
    %c0_230 = arith.constant 0 : index
    %c0_231 = arith.constant 0 : index
    %208 = vector.load %arg10[%c0_230, %c0_231] : memref<352x128xbf16, #tpu.memory_space<vmem>>, vector<32x128xbf16>
    tpu.vector_store %arg10[%c0_230, %c0_231], %207 {strides = array<i32>} : memref<352x128xbf16, #tpu.memory_space<vmem>>, vector<32x128xbf16>,
    %c0_232 = arith.constant 0 : index
    %c19 = arith.constant 19 : index
    %209 = vector.load %arg9[%c0_232, %c19] : memref<32x178xbf16, #tpu.memory_space<vmem>>, vector<32x128xbf16>
    %c32_233 = arith.constant 32 : index
    %c0_234 = arith.constant 0 : index
    %210 = vector.load %arg10[%c32_233, %c0_234] : memref<352x128xbf16, #tpu.memory_space<vmem>>, vector<32x128xbf16>
    tpu.vector_store %arg10[%c32_233, %c0_234], %209 {strides = array<i32>} : memref<352x128xbf16, #tpu.memory_space<vmem>>, vector<32x128xbf16>,
    %c0_235 = arith.constant 0 : index
    %c22_236 = arith.constant 22 : index
    %211 = vector.load %arg9[%c0_235, %c22_236] : memref<32x178xbf16, #tpu.memory_space<vmem>>, vector<32x128xbf16>
    %c64_237 = arith.constant 64 : index
    %c0_238 = arith.constant 0 : index
    %212 = vector.load %arg10[%c64_237, %c0_238] : memref<352x128xbf16, #tpu.memory_space<vmem>>, vector<32x128xbf16>
    tpu.vector_store %arg10[%c64_237, %c0_238], %211 {strides = array<i32>} : memref<352x128xbf16, #tpu.memory_space<vmem>>, vector<32x128xbf16>,
    %c0_239 = arith.constant 0 : index
    %c25_240 = arith.constant 25 : index
    %213 = vector.load %arg9[%c0_239, %c25_240] : memref<32x178xbf16, #tpu.memory_space<vmem>>, vector<32x128xbf16>
    %c96_241 = arith.constant 96 : index
    %c0_242 = arith.constant 0 : index
    %214 = vector.load %arg10[%c96_241, %c0_242] : memref<352x128xbf16, #tpu.memory_space<vmem>>, vector<32x128xbf16>
    tpu.vector_store %arg10[%c96_241, %c0_242], %213 {strides = array<i32>} : memref<352x128xbf16, #tpu.memory_space<vmem>>, vector<32x128xbf16>,
    %c0_243 = arith.constant 0 : index
    %c28_244 = arith.constant 28 : index
    %215 = vector.load %arg9[%c0_243, %c28_244] : memref<32x178xbf16, #tpu.memory_space<vmem>>, vector<32x128xbf16>
    %c128_245 = arith.constant 128 : index
    %c0_246 = arith.constant 0 : index
    %216 = vector.load %arg10[%c128_245, %c0_246] : memref<352x128xbf16, #tpu.memory_space<vmem>>, vector<32x128xbf16>
    tpu.vector_store %arg10[%c128_245, %c0_246], %215 {strides = array<i32>} : memref<352x128xbf16, #tpu.memory_space<vmem>>, vector<32x128xbf16>,
    %c0_247 = arith.constant 0 : index
    %c31 = arith.constant 31 : index
    %217 = vector.load %arg9[%c0_247, %c31] : memref<32x178xbf16, #tpu.memory_space<vmem>>, vector<32x128xbf16>
    %c160_248 = arith.constant 160 : index
    %c0_249 = arith.constant 0 : index
    %218 = vector.load %arg10[%c160_248, %c0_249] : memref<352x128xbf16, #tpu.memory_space<vmem>>, vector<32x128xbf16>
    tpu.vector_store %arg10[%c160_248, %c0_249], %217 {strides = array<i32>} : memref<352x128xbf16, #tpu.memory_space<vmem>>, vector<32x128xbf16>,
    %c0_250 = arith.constant 0 : index
    %c34 = arith.constant 34 : index
    %219 = vector.load %arg9[%c0_250, %c34] : memref<32x178xbf16, #tpu.memory_space<vmem>>, vector<32x128xbf16>
    %c192_251 = arith.constant 192 : index
    %c0_252 = arith.constant 0 : index
    %220 = vector.load %arg10[%c192_251, %c0_252] : memref<352x128xbf16, #tpu.memory_space<vmem>>, vector<32x128xbf16>
    tpu.vector_store %arg10[%c192_251, %c0_252], %219 {strides = array<i32>} : memref<352x128xbf16, #tpu.memory_space<vmem>>, vector<32x128xbf16>,
    %c0_253 = arith.constant 0 : index
    %c0_254 = arith.constant 0 : index
    %221 = vector.load %arg10[%c0_253, %c0_254] : memref<352x128xbf16, #tpu.memory_space<vmem>>, vector<224x128xbf16>
    %cst_255 = arith.constant dense<0.000000e+00> : vector<32x128xf32>
    %222 = tpu.matmul %202, %221, %cst_255 {dimension_numbers = #tpu.dot_dimension_numbers<[1], [0], [0], [1], [0, 0, 1, 1], [], []>} : vector<32x224xbf16>, vector<224x128xbf16>, vector<32x128xf32> -> vector<32x128xf32>
    %223 = vector.broadcast %204 : vector<32x1xf32> to vector<32x128xf32>
    %224 = arith.addf %222, %223 : vector<32x128xf32>
    %cst_256 = arith.constant 0.000000e+00 : f32
    %225 = vector.broadcast %cst_256 : f32 to vector<32x128xf32>
    %226 = arith.cmpf ogt, %224, %225 : vector<32x128xf32>
    %cst_257 = arith.constant 1.000000e-01 : f32
    %227 = vector.broadcast %cst_257 : f32 to vector<32x128xf32>
    %228 = arith.mulf %227, %224 : vector<32x128xf32>
    %229 = arith.select %226, %224, %228 : vector<32x128xi1>, vector<32x128xf32>
    %c3_258 = arith.constant 3 : index
    %c0_259 = arith.constant 0 : index
    %c0_260 = arith.constant 0 : index
    %230 = vector.load %arg4[%c3_258, %c0_259, %c0_260] : memref<6x32x224xbf16, #tpu.memory_space<vmem>>, vector<1x32x224xbf16>
    %231 = vector.shape_cast %230 : vector<1x32x224xbf16> to vector<32x224xbf16>
    %c3_261 = arith.constant 3 : index
    %c0_262 = arith.constant 0 : index
    %c0_263 = arith.constant 0 : index
    %232 = vector.load %arg5[%c3_261, %c0_262, %c0_263] : memref<6x32x1xf32, #tpu.memory_space<vmem>>, vector<1x32x1xf32>
    %233 = vector.shape_cast %232 : vector<1x32x1xf32> to vector<32x1xf32>
    %234 = arith.truncf %229 : vector<32x128xf32> to vector<32x128xbf16>
    %c0_264 = arith.constant 0 : index
    %c25_265 = arith.constant 25 : index
    %235 = vector.load %arg9[%c0_264, %c25_265] : memref<32x178xbf16, #tpu.memory_space<vmem>>, vector<32x128xbf16>
    tpu.vector_store %arg9[%c0_264, %c25_265], %234 {strides = array<i32>} : memref<32x178xbf16, #tpu.memory_space<vmem>>, vector<32x128xbf16>,
    %c0_266 = arith.constant 0 : index
    %c22_267 = arith.constant 22 : index
    %236 = vector.load %arg9[%c0_266, %c22_267] : memref<32x178xbf16, #tpu.memory_space<vmem>>, vector<32x128xbf16>
    %c0_268 = arith.constant 0 : index
    %c0_269 = arith.constant 0 : index
    %237 = vector.load %arg10[%c0_268, %c0_269] : memref<352x128xbf16, #tpu.memory_space<vmem>>, vector<32x128xbf16>
    tpu.vector_store %arg10[%c0_268, %c0_269], %236 {strides = array<i32>} : memref<352x128xbf16, #tpu.memory_space<vmem>>, vector<32x128xbf16>,
    %c0_270 = arith.constant 0 : index
    %c23_271 = arith.constant 23 : index
    %238 = vector.load %arg9[%c0_270, %c23_271] : memref<32x178xbf16, #tpu.memory_space<vmem>>, vector<32x128xbf16>
    %c32_272 = arith.constant 32 : index
    %c0_273 = arith.constant 0 : index
    %239 = vector.load %arg10[%c32_272, %c0_273] : memref<352x128xbf16, #tpu.memory_space<vmem>>, vector<32x128xbf16>
    tpu.vector_store %arg10[%c32_272, %c0_273], %238 {strides = array<i32>} : memref<352x128xbf16, #tpu.memory_space<vmem>>, vector<32x128xbf16>,
    %c0_274 = arith.constant 0 : index
    %c24_275 = arith.constant 24 : index
    %240 = vector.load %arg9[%c0_274, %c24_275] : memref<32x178xbf16, #tpu.memory_space<vmem>>, vector<32x128xbf16>
    %c64_276 = arith.constant 64 : index
    %c0_277 = arith.constant 0 : index
    %241 = vector.load %arg10[%c64_276, %c0_277] : memref<352x128xbf16, #tpu.memory_space<vmem>>, vector<32x128xbf16>
    tpu.vector_store %arg10[%c64_276, %c0_277], %240 {strides = array<i32>} : memref<352x128xbf16, #tpu.memory_space<vmem>>, vector<32x128xbf16>,
    %c0_278 = arith.constant 0 : index
    %c25_279 = arith.constant 25 : index
    %242 = vector.load %arg9[%c0_278, %c25_279] : memref<32x178xbf16, #tpu.memory_space<vmem>>, vector<32x128xbf16>
    %c96_280 = arith.constant 96 : index
    %c0_281 = arith.constant 0 : index
    %243 = vector.load %arg10[%c96_280, %c0_281] : memref<352x128xbf16, #tpu.memory_space<vmem>>, vector<32x128xbf16>
    tpu.vector_store %arg10[%c96_280, %c0_281], %242 {strides = array<i32>} : memref<352x128xbf16, #tpu.memory_space<vmem>>, vector<32x128xbf16>,
    %c0_282 = arith.constant 0 : index
    %c26_283 = arith.constant 26 : index
    %244 = vector.load %arg9[%c0_282, %c26_283] : memref<32x178xbf16, #tpu.memory_space<vmem>>, vector<32x128xbf16>
    %c128_284 = arith.constant 128 : index
    %c0_285 = arith.constant 0 : index
    %245 = vector.load %arg10[%c128_284, %c0_285] : memref<352x128xbf16, #tpu.memory_space<vmem>>, vector<32x128xbf16>
    tpu.vector_store %arg10[%c128_284, %c0_285], %244 {strides = array<i32>} : memref<352x128xbf16, #tpu.memory_space<vmem>>, vector<32x128xbf16>,
    %c0_286 = arith.constant 0 : index
    %c27_287 = arith.constant 27 : index
    %246 = vector.load %arg9[%c0_286, %c27_287] : memref<32x178xbf16, #tpu.memory_space<vmem>>, vector<32x128xbf16>
    %c160_288 = arith.constant 160 : index
    %c0_289 = arith.constant 0 : index
    %247 = vector.load %arg10[%c160_288, %c0_289] : memref<352x128xbf16, #tpu.memory_space<vmem>>, vector<32x128xbf16>
    tpu.vector_store %arg10[%c160_288, %c0_289], %246 {strides = array<i32>} : memref<352x128xbf16, #tpu.memory_space<vmem>>, vector<32x128xbf16>,
    %c0_290 = arith.constant 0 : index
    %c28_291 = arith.constant 28 : index
    %248 = vector.load %arg9[%c0_290, %c28_291] : memref<32x178xbf16, #tpu.memory_space<vmem>>, vector<32x128xbf16>
    %c192_292 = arith.constant 192 : index
    %c0_293 = arith.constant 0 : index
    %249 = vector.load %arg10[%c192_292, %c0_293] : memref<352x128xbf16, #tpu.memory_space<vmem>>, vector<32x128xbf16>
    tpu.vector_store %arg10[%c192_292, %c0_293], %248 {strides = array<i32>} : memref<352x128xbf16, #tpu.memory_space<vmem>>, vector<32x128xbf16>,
    %c0_294 = arith.constant 0 : index
    %c0_295 = arith.constant 0 : index
    %250 = vector.load %arg10[%c0_294, %c0_295] : memref<352x128xbf16, #tpu.memory_space<vmem>>, vector<224x128xbf16>
    %cst_296 = arith.constant dense<0.000000e+00> : vector<32x128xf32>
    %251 = tpu.matmul %231, %250, %cst_296 {dimension_numbers = #tpu.dot_dimension_numbers<[1], [0], [0], [1], [0, 0, 1, 1], [], []>} : vector<32x224xbf16>, vector<224x128xbf16>, vector<32x128xf32> -> vector<32x128xf32>
    %252 = vector.broadcast %233 : vector<32x1xf32> to vector<32x128xf32>
    %253 = arith.addf %251, %252 : vector<32x128xf32>
    %254 = arith.addf %253, %195 : vector<32x128xf32>
    %cst_297 = arith.constant 0.000000e+00 : f32
    %255 = vector.broadcast %cst_297 : f32 to vector<32x128xf32>
    %256 = arith.cmpf ogt, %254, %255 : vector<32x128xf32>
    %cst_298 = arith.constant 1.000000e-01 : f32
    %257 = vector.broadcast %cst_298 : f32 to vector<32x128xf32>
    %258 = arith.mulf %257, %254 : vector<32x128xf32>
    %259 = arith.select %256, %254, %258 : vector<32x128xi1>, vector<32x128xf32>
    %c4_299 = arith.constant 4 : index
    %c0_300 = arith.constant 0 : index
    %c0_301 = arith.constant 0 : index
    %260 = vector.load %arg4[%c4_299, %c0_300, %c0_301] : memref<6x32x224xbf16, #tpu.memory_space<vmem>>, vector<1x32x224xbf16>
    %261 = vector.shape_cast %260 : vector<1x32x224xbf16> to vector<32x224xbf16>
    %c4_302 = arith.constant 4 : index
    %c0_303 = arith.constant 0 : index
    %c0_304 = arith.constant 0 : index
    %262 = vector.load %arg5[%c4_302, %c0_303, %c0_304] : memref<6x32x1xf32, #tpu.memory_space<vmem>>, vector<1x32x1xf32>
    %263 = vector.shape_cast %262 : vector<1x32x1xf32> to vector<32x1xf32>
    %264 = arith.truncf %259 : vector<32x128xf32> to vector<32x128xbf16>
    %c0_305 = arith.constant 0 : index
    %c25_306 = arith.constant 25 : index
    %265 = vector.load %arg9[%c0_305, %c25_306] : memref<32x178xbf16, #tpu.memory_space<vmem>>, vector<32x128xbf16>
    tpu.vector_store %arg9[%c0_305, %c25_306], %264 {strides = array<i32>} : memref<32x178xbf16, #tpu.memory_space<vmem>>, vector<32x128xbf16>,
    %c0_307 = arith.constant 0 : index
    %c10 = arith.constant 10 : index
    %266 = vector.load %arg9[%c0_307, %c10] : memref<32x178xbf16, #tpu.memory_space<vmem>>, vector<32x128xbf16>
    %c0_308 = arith.constant 0 : index
    %c0_309 = arith.constant 0 : index
    %267 = vector.load %arg10[%c0_308, %c0_309] : memref<352x128xbf16, #tpu.memory_space<vmem>>, vector<32x128xbf16>
    tpu.vector_store %arg10[%c0_308, %c0_309], %266 {strides = array<i32>} : memref<352x128xbf16, #tpu.memory_space<vmem>>, vector<32x128xbf16>,
    %c0_310 = arith.constant 0 : index
    %c15 = arith.constant 15 : index
    %268 = vector.load %arg9[%c0_310, %c15] : memref<32x178xbf16, #tpu.memory_space<vmem>>, vector<32x128xbf16>
    %c32_311 = arith.constant 32 : index
    %c0_312 = arith.constant 0 : index
    %269 = vector.load %arg10[%c32_311, %c0_312] : memref<352x128xbf16, #tpu.memory_space<vmem>>, vector<32x128xbf16>
    tpu.vector_store %arg10[%c32_311, %c0_312], %268 {strides = array<i32>} : memref<352x128xbf16, #tpu.memory_space<vmem>>, vector<32x128xbf16>,
    %c0_313 = arith.constant 0 : index
    %c20_314 = arith.constant 20 : index
    %270 = vector.load %arg9[%c0_313, %c20_314] : memref<32x178xbf16, #tpu.memory_space<vmem>>, vector<32x128xbf16>
    %c64_315 = arith.constant 64 : index
    %c0_316 = arith.constant 0 : index
    %271 = vector.load %arg10[%c64_315, %c0_316] : memref<352x128xbf16, #tpu.memory_space<vmem>>, vector<32x128xbf16>
    tpu.vector_store %arg10[%c64_315, %c0_316], %270 {strides = array<i32>} : memref<352x128xbf16, #tpu.memory_space<vmem>>, vector<32x128xbf16>,
    %c0_317 = arith.constant 0 : index
    %c25_318 = arith.constant 25 : index
    %272 = vector.load %arg9[%c0_317, %c25_318] : memref<32x178xbf16, #tpu.memory_space<vmem>>, vector<32x128xbf16>
    %c96_319 = arith.constant 96 : index
    %c0_320 = arith.constant 0 : index
    %273 = vector.load %arg10[%c96_319, %c0_320] : memref<352x128xbf16, #tpu.memory_space<vmem>>, vector<32x128xbf16>
    tpu.vector_store %arg10[%c96_319, %c0_320], %272 {strides = array<i32>} : memref<352x128xbf16, #tpu.memory_space<vmem>>, vector<32x128xbf16>,
    %c0_321 = arith.constant 0 : index
    %c30_322 = arith.constant 30 : index
    %274 = vector.load %arg9[%c0_321, %c30_322] : memref<32x178xbf16, #tpu.memory_space<vmem>>, vector<32x128xbf16>
    %c128_323 = arith.constant 128 : index
    %c0_324 = arith.constant 0 : index
    %275 = vector.load %arg10[%c128_323, %c0_324] : memref<352x128xbf16, #tpu.memory_space<vmem>>, vector<32x128xbf16>
    tpu.vector_store %arg10[%c128_323, %c0_324], %274 {strides = array<i32>} : memref<352x128xbf16, #tpu.memory_space<vmem>>, vector<32x128xbf16>,
    %c0_325 = arith.constant 0 : index
    %c35 = arith.constant 35 : index
    %276 = vector.load %arg9[%c0_325, %c35] : memref<32x178xbf16, #tpu.memory_space<vmem>>, vector<32x128xbf16>
    %c160_326 = arith.constant 160 : index
    %c0_327 = arith.constant 0 : index
    %277 = vector.load %arg10[%c160_326, %c0_327] : memref<352x128xbf16, #tpu.memory_space<vmem>>, vector<32x128xbf16>
    tpu.vector_store %arg10[%c160_326, %c0_327], %276 {strides = array<i32>} : memref<352x128xbf16, #tpu.memory_space<vmem>>, vector<32x128xbf16>,
    %c0_328 = arith.constant 0 : index
    %c40 = arith.constant 40 : index
    %278 = vector.load %arg9[%c0_328, %c40] : memref<32x178xbf16, #tpu.memory_space<vmem>>, vector<32x128xbf16>
    %c192_329 = arith.constant 192 : index
    %c0_330 = arith.constant 0 : index
    %279 = vector.load %arg10[%c192_329, %c0_330] : memref<352x128xbf16, #tpu.memory_space<vmem>>, vector<32x128xbf16>
    tpu.vector_store %arg10[%c192_329, %c0_330], %278 {strides = array<i32>} : memref<352x128xbf16, #tpu.memory_space<vmem>>, vector<32x128xbf16>,
    %c0_331 = arith.constant 0 : index
    %c0_332 = arith.constant 0 : index
    %280 = vector.load %arg10[%c0_331, %c0_332] : memref<352x128xbf16, #tpu.memory_space<vmem>>, vector<224x128xbf16>
    %cst_333 = arith.constant dense<0.000000e+00> : vector<32x128xf32>
    %281 = tpu.matmul %261, %280, %cst_333 {dimension_numbers = #tpu.dot_dimension_numbers<[1], [0], [0], [1], [0, 0, 1, 1], [], []>} : vector<32x224xbf16>, vector<224x128xbf16>, vector<32x128xf32> -> vector<32x128xf32>
    %282 = vector.broadcast %263 : vector<32x1xf32> to vector<32x128xf32>
    %283 = arith.addf %281, %282 : vector<32x128xf32>
    %cst_334 = arith.constant 0.000000e+00 : f32
    %284 = vector.broadcast %cst_334 : f32 to vector<32x128xf32>
    %285 = arith.cmpf ogt, %283, %284 : vector<32x128xf32>
    %cst_335 = arith.constant 1.000000e-01 : f32
    %286 = vector.broadcast %cst_335 : f32 to vector<32x128xf32>
    %287 = arith.mulf %286, %283 : vector<32x128xf32>
    %288 = arith.select %285, %283, %287 : vector<32x128xi1>, vector<32x128xf32>
    %c5_336 = arith.constant 5 : index
    %c0_337 = arith.constant 0 : index
    %c0_338 = arith.constant 0 : index
    %289 = vector.load %arg4[%c5_336, %c0_337, %c0_338] : memref<6x32x224xbf16, #tpu.memory_space<vmem>>, vector<1x32x224xbf16>
    %290 = vector.shape_cast %289 : vector<1x32x224xbf16> to vector<32x224xbf16>
    %c5_339 = arith.constant 5 : index
    %c0_340 = arith.constant 0 : index
    %c0_341 = arith.constant 0 : index
    %291 = vector.load %arg5[%c5_339, %c0_340, %c0_341] : memref<6x32x1xf32, #tpu.memory_space<vmem>>, vector<1x32x1xf32>
    %292 = vector.shape_cast %291 : vector<1x32x1xf32> to vector<32x1xf32>
    %293 = arith.truncf %288 : vector<32x128xf32> to vector<32x128xbf16>
    %c0_342 = arith.constant 0 : index
    %c25_343 = arith.constant 25 : index
    %294 = vector.load %arg9[%c0_342, %c25_343] : memref<32x178xbf16, #tpu.memory_space<vmem>>, vector<32x128xbf16>
    tpu.vector_store %arg9[%c0_342, %c25_343], %293 {strides = array<i32>} : memref<32x178xbf16, #tpu.memory_space<vmem>>, vector<32x128xbf16>,
    %c0_344 = arith.constant 0 : index
    %c22_345 = arith.constant 22 : index
    %295 = vector.load %arg9[%c0_344, %c22_345] : memref<32x178xbf16, #tpu.memory_space<vmem>>, vector<32x128xbf16>
    %c0_346 = arith.constant 0 : index
    %c0_347 = arith.constant 0 : index
    %296 = vector.load %arg10[%c0_346, %c0_347] : memref<352x128xbf16, #tpu.memory_space<vmem>>, vector<32x128xbf16>
    tpu.vector_store %arg10[%c0_346, %c0_347], %295 {strides = array<i32>} : memref<352x128xbf16, #tpu.memory_space<vmem>>, vector<32x128xbf16>,
    %c0_348 = arith.constant 0 : index
    %c23_349 = arith.constant 23 : index
    %297 = vector.load %arg9[%c0_348, %c23_349] : memref<32x178xbf16, #tpu.memory_space<vmem>>, vector<32x128xbf16>
    %c32_350 = arith.constant 32 : index
    %c0_351 = arith.constant 0 : index
    %298 = vector.load %arg10[%c32_350, %c0_351] : memref<352x128xbf16, #tpu.memory_space<vmem>>, vector<32x128xbf16>
    tpu.vector_store %arg10[%c32_350, %c0_351], %297 {strides = array<i32>} : memref<352x128xbf16, #tpu.memory_space<vmem>>, vector<32x128xbf16>,
    %c0_352 = arith.constant 0 : index
    %c24_353 = arith.constant 24 : index
    %299 = vector.load %arg9[%c0_352, %c24_353] : memref<32x178xbf16, #tpu.memory_space<vmem>>, vector<32x128xbf16>
    %c64_354 = arith.constant 64 : index
    %c0_355 = arith.constant 0 : index
    %300 = vector.load %arg10[%c64_354, %c0_355] : memref<352x128xbf16, #tpu.memory_space<vmem>>, vector<32x128xbf16>
    tpu.vector_store %arg10[%c64_354, %c0_355], %299 {strides = array<i32>} : memref<352x128xbf16, #tpu.memory_space<vmem>>, vector<32x128xbf16>,
    %c0_356 = arith.constant 0 : index
    %c25_357 = arith.constant 25 : index
    %301 = vector.load %arg9[%c0_356, %c25_357] : memref<32x178xbf16, #tpu.memory_space<vmem>>, vector<32x128xbf16>
    %c96_358 = arith.constant 96 : index
    %c0_359 = arith.constant 0 : index
    %302 = vector.load %arg10[%c96_358, %c0_359] : memref<352x128xbf16, #tpu.memory_space<vmem>>, vector<32x128xbf16>
    tpu.vector_store %arg10[%c96_358, %c0_359], %301 {strides = array<i32>} : memref<352x128xbf16, #tpu.memory_space<vmem>>, vector<32x128xbf16>,
    %c0_360 = arith.constant 0 : index
    %c26_361 = arith.constant 26 : index
    %303 = vector.load %arg9[%c0_360, %c26_361] : memref<32x178xbf16, #tpu.memory_space<vmem>>, vector<32x128xbf16>
    %c128_362 = arith.constant 128 : index
    %c0_363 = arith.constant 0 : index
    %304 = vector.load %arg10[%c128_362, %c0_363] : memref<352x128xbf16, #tpu.memory_space<vmem>>, vector<32x128xbf16>
    tpu.vector_store %arg10[%c128_362, %c0_363], %303 {strides = array<i32>} : memref<352x128xbf16, #tpu.memory_space<vmem>>, vector<32x128xbf16>,
    %c0_364 = arith.constant 0 : index
    %c27_365 = arith.constant 27 : index
    %305 = vector.load %arg9[%c0_364, %c27_365] : memref<32x178xbf16, #tpu.memory_space<vmem>>, vector<32x128xbf16>
    %c160_366 = arith.constant 160 : index
    %c0_367 = arith.constant 0 : index
    %306 = vector.load %arg10[%c160_366, %c0_367] : memref<352x128xbf16, #tpu.memory_space<vmem>>, vector<32x128xbf16>
    tpu.vector_store %arg10[%c160_366, %c0_367], %305 {strides = array<i32>} : memref<352x128xbf16, #tpu.memory_space<vmem>>, vector<32x128xbf16>,
    %c0_368 = arith.constant 0 : index
    %c28_369 = arith.constant 28 : index
    %307 = vector.load %arg9[%c0_368, %c28_369] : memref<32x178xbf16, #tpu.memory_space<vmem>>, vector<32x128xbf16>
    %c192_370 = arith.constant 192 : index
    %c0_371 = arith.constant 0 : index
    %308 = vector.load %arg10[%c192_370, %c0_371] : memref<352x128xbf16, #tpu.memory_space<vmem>>, vector<32x128xbf16>
    tpu.vector_store %arg10[%c192_370, %c0_371], %307 {strides = array<i32>} : memref<352x128xbf16, #tpu.memory_space<vmem>>, vector<32x128xbf16>,
    %c0_372 = arith.constant 0 : index
    %c0_373 = arith.constant 0 : index
    %309 = vector.load %arg10[%c0_372, %c0_373] : memref<352x128xbf16, #tpu.memory_space<vmem>>, vector<224x128xbf16>
    %cst_374 = arith.constant dense<0.000000e+00> : vector<32x128xf32>
    %310 = tpu.matmul %290, %309, %cst_374 {dimension_numbers = #tpu.dot_dimension_numbers<[1], [0], [0], [1], [0, 0, 1, 1], [], []>} : vector<32x224xbf16>, vector<224x128xbf16>, vector<32x128xf32> -> vector<32x128xf32>
    %311 = vector.broadcast %292 : vector<32x1xf32> to vector<32x128xf32>
    %312 = arith.addf %310, %311 : vector<32x128xf32>
    %313 = arith.addf %312, %254 : vector<32x128xf32>
    %314 = arith.addf %136, %313 : vector<32x128xf32>
    %cst_375 = arith.constant 0.000000e+00 : f32
    %315 = vector.broadcast %cst_375 : f32 to vector<32x128xf32>
    %316 = arith.cmpf ogt, %5, %315 : vector<32x128xf32>
    %cst_376 = arith.constant 1.000000e-01 : f32
    %317 = vector.broadcast %cst_376 : f32 to vector<32x128xf32>
    %318 = arith.mulf %317, %5 : vector<32x128xf32>
    %319 = arith.select %316, %5, %318 : vector<32x128xi1>, vector<32x128xf32>
    %c0_377 = arith.constant 0 : index
    %c0_378 = arith.constant 0 : index
    %c0_379 = arith.constant 0 : index
    %320 = vector.load %arg6[%c0_377, %c0_378, %c0_379] : memref<6x32x352xbf16, #tpu.memory_space<vmem>>, vector<1x32x352xbf16>
    %321 = vector.shape_cast %320 : vector<1x32x352xbf16> to vector<32x352xbf16>
    %c0_380 = arith.constant 0 : index
    %c0_381 = arith.constant 0 : index
    %c0_382 = arith.constant 0 : index
    %322 = vector.load %arg7[%c0_380, %c0_381, %c0_382] : memref<6x32x1xf32, #tpu.memory_space<vmem>>, vector<1x32x1xf32>
    %323 = vector.shape_cast %322 : vector<1x32x1xf32> to vector<32x1xf32>
    %324 = arith.truncf %319 : vector<32x128xf32> to vector<32x128xbf16>
    %c0_383 = arith.constant 0 : index
    %c25_384 = arith.constant 25 : index
    %325 = vector.load %arg9[%c0_383, %c25_384] : memref<32x178xbf16, #tpu.memory_space<vmem>>, vector<32x128xbf16>
    tpu.vector_store %arg9[%c0_383, %c25_384], %324 {strides = array<i32>} : memref<32x178xbf16, #tpu.memory_space<vmem>>, vector<32x128xbf16>,
    %c0_385 = arith.constant 0 : index
    %c20_386 = arith.constant 20 : index
    %326 = vector.load %arg9[%c0_385, %c20_386] : memref<32x178xbf16, #tpu.memory_space<vmem>>, vector<32x128xbf16>
    %c0_387 = arith.constant 0 : index
    %c0_388 = arith.constant 0 : index
    %327 = vector.load %arg10[%c0_387, %c0_388] : memref<352x128xbf16, #tpu.memory_space<vmem>>, vector<32x128xbf16>
    tpu.vector_store %arg10[%c0_387, %c0_388], %326 {strides = array<i32>} : memref<352x128xbf16, #tpu.memory_space<vmem>>, vector<32x128xbf16>,
    %c0_389 = arith.constant 0 : index
    %c21 = arith.constant 21 : index
    %328 = vector.load %arg9[%c0_389, %c21] : memref<32x178xbf16, #tpu.memory_space<vmem>>, vector<32x128xbf16>
    %c32_390 = arith.constant 32 : index
    %c0_391 = arith.constant 0 : index
    %329 = vector.load %arg10[%c32_390, %c0_391] : memref<352x128xbf16, #tpu.memory_space<vmem>>, vector<32x128xbf16>
    tpu.vector_store %arg10[%c32_390, %c0_391], %328 {strides = array<i32>} : memref<352x128xbf16, #tpu.memory_space<vmem>>, vector<32x128xbf16>,
    %c0_392 = arith.constant 0 : index
    %c22_393 = arith.constant 22 : index
    %330 = vector.load %arg9[%c0_392, %c22_393] : memref<32x178xbf16, #tpu.memory_space<vmem>>, vector<32x128xbf16>
    %c64_394 = arith.constant 64 : index
    %c0_395 = arith.constant 0 : index
    %331 = vector.load %arg10[%c64_394, %c0_395] : memref<352x128xbf16, #tpu.memory_space<vmem>>, vector<32x128xbf16>
    tpu.vector_store %arg10[%c64_394, %c0_395], %330 {strides = array<i32>} : memref<352x128xbf16, #tpu.memory_space<vmem>>, vector<32x128xbf16>,
    %c0_396 = arith.constant 0 : index
    %c23_397 = arith.constant 23 : index
    %332 = vector.load %arg9[%c0_396, %c23_397] : memref<32x178xbf16, #tpu.memory_space<vmem>>, vector<32x128xbf16>
    %c96_398 = arith.constant 96 : index
    %c0_399 = arith.constant 0 : index
    %333 = vector.load %arg10[%c96_398, %c0_399] : memref<352x128xbf16, #tpu.memory_space<vmem>>, vector<32x128xbf16>
    tpu.vector_store %arg10[%c96_398, %c0_399], %332 {strides = array<i32>} : memref<352x128xbf16, #tpu.memory_space<vmem>>, vector<32x128xbf16>,
    %c0_400 = arith.constant 0 : index
    %c24_401 = arith.constant 24 : index
    %334 = vector.load %arg9[%c0_400, %c24_401] : memref<32x178xbf16, #tpu.memory_space<vmem>>, vector<32x128xbf16>
    %c128_402 = arith.constant 128 : index
    %c0_403 = arith.constant 0 : index
    %335 = vector.load %arg10[%c128_402, %c0_403] : memref<352x128xbf16, #tpu.memory_space<vmem>>, vector<32x128xbf16>
    tpu.vector_store %arg10[%c128_402, %c0_403], %334 {strides = array<i32>} : memref<352x128xbf16, #tpu.memory_space<vmem>>, vector<32x128xbf16>,
    %c0_404 = arith.constant 0 : index
    %c25_405 = arith.constant 25 : index
    %336 = vector.load %arg9[%c0_404, %c25_405] : memref<32x178xbf16, #tpu.memory_space<vmem>>, vector<32x128xbf16>
    %c160_406 = arith.constant 160 : index
    %c0_407 = arith.constant 0 : index
    %337 = vector.load %arg10[%c160_406, %c0_407] : memref<352x128xbf16, #tpu.memory_space<vmem>>, vector<32x128xbf16>
    tpu.vector_store %arg10[%c160_406, %c0_407], %336 {strides = array<i32>} : memref<352x128xbf16, #tpu.memory_space<vmem>>, vector<32x128xbf16>,
    %c0_408 = arith.constant 0 : index
    %c26_409 = arith.constant 26 : index
    %338 = vector.load %arg9[%c0_408, %c26_409] : memref<32x178xbf16, #tpu.memory_space<vmem>>, vector<32x128xbf16>
    %c192_410 = arith.constant 192 : index
    %c0_411 = arith.constant 0 : index
    %339 = vector.load %arg10[%c192_410, %c0_411] : memref<352x128xbf16, #tpu.memory_space<vmem>>, vector<32x128xbf16>
    tpu.vector_store %arg10[%c192_410, %c0_411], %338 {strides = array<i32>} : memref<352x128xbf16, #tpu.memory_space<vmem>>, vector<32x128xbf16>,
    %c0_412 = arith.constant 0 : index
    %c27_413 = arith.constant 27 : index
    %340 = vector.load %arg9[%c0_412, %c27_413] : memref<32x178xbf16, #tpu.memory_space<vmem>>, vector<32x128xbf16>
    %c224 = arith.constant 224 : index
    %c0_414 = arith.constant 0 : index
    %341 = vector.load %arg10[%c224, %c0_414] : memref<352x128xbf16, #tpu.memory_space<vmem>>, vector<32x128xbf16>
    tpu.vector_store %arg10[%c224, %c0_414], %340 {strides = array<i32>} : memref<352x128xbf16, #tpu.memory_space<vmem>>, vector<32x128xbf16>,
    %c0_415 = arith.constant 0 : index
    %c28_416 = arith.constant 28 : index
    %342 = vector.load %arg9[%c0_415, %c28_416] : memref<32x178xbf16, #tpu.memory_space<vmem>>, vector<32x128xbf16>
    %c256 = arith.constant 256 : index
    %c0_417 = arith.constant 0 : index
    %343 = vector.load %arg10[%c256, %c0_417] : memref<352x128xbf16, #tpu.memory_space<vmem>>, vector<32x128xbf16>
    tpu.vector_store %arg10[%c256, %c0_417], %342 {strides = array<i32>} : memref<352x128xbf16, #tpu.memory_space<vmem>>, vector<32x128xbf16>,
    %c0_418 = arith.constant 0 : index
    %c29 = arith.constant 29 : index
    %344 = vector.load %arg9[%c0_418, %c29] : memref<32x178xbf16, #tpu.memory_space<vmem>>, vector<32x128xbf16>
    %c288 = arith.constant 288 : index
    %c0_419 = arith.constant 0 : index
    %345 = vector.load %arg10[%c288, %c0_419] : memref<352x128xbf16, #tpu.memory_space<vmem>>, vector<32x128xbf16>
    tpu.vector_store %arg10[%c288, %c0_419], %344 {strides = array<i32>} : memref<352x128xbf16, #tpu.memory_space<vmem>>, vector<32x128xbf16>,
    %c0_420 = arith.constant 0 : index
    %c30_421 = arith.constant 30 : index
    %346 = vector.load %arg9[%c0_420, %c30_421] : memref<32x178xbf16, #tpu.memory_space<vmem>>, vector<32x128xbf16>
    %c320 = arith.constant 320 : index
    %c0_422 = arith.constant 0 : index
    %347 = vector.load %arg10[%c320, %c0_422] : memref<352x128xbf16, #tpu.memory_space<vmem>>, vector<32x128xbf16>
    tpu.vector_store %arg10[%c320, %c0_422], %346 {strides = array<i32>} : memref<352x128xbf16, #tpu.memory_space<vmem>>, vector<32x128xbf16>,
    %c0_423 = arith.constant 0 : index
    %c0_424 = arith.constant 0 : index
    %348 = vector.load %arg10[%c0_423, %c0_424] : memref<352x128xbf16, #tpu.memory_space<vmem>>, vector<352x128xbf16>
    %cst_425 = arith.constant dense<0.000000e+00> : vector<32x128xf32>
    %349 = tpu.matmul %321, %348, %cst_425 {dimension_numbers = #tpu.dot_dimension_numbers<[1], [0], [0], [1], [0, 0, 1, 1], [], []>} : vector<32x352xbf16>, vector<352x128xbf16>, vector<32x128xf32> -> vector<32x128xf32>
    %350 = vector.broadcast %323 : vector<32x1xf32> to vector<32x128xf32>
    %351 = arith.addf %349, %350 : vector<32x128xf32>
    %cst_426 = arith.constant 0.000000e+00 : f32
    %352 = vector.broadcast %cst_426 : f32 to vector<32x128xf32>
    %353 = arith.cmpf ogt, %351, %352 : vector<32x128xf32>
    %cst_427 = arith.constant 1.000000e-01 : f32
    %354 = vector.broadcast %cst_427 : f32 to vector<32x128xf32>
    %355 = arith.mulf %354, %351 : vector<32x128xf32>
    %356 = arith.select %353, %351, %355 : vector<32x128xi1>, vector<32x128xf32>
    %c1_428 = arith.constant 1 : index
    %c0_429 = arith.constant 0 : index
    %c0_430 = arith.constant 0 : index
    %357 = vector.load %arg6[%c1_428, %c0_429, %c0_430] : memref<6x32x352xbf16, #tpu.memory_space<vmem>>, vector<1x32x352xbf16>
    %358 = vector.shape_cast %357 : vector<1x32x352xbf16> to vector<32x352xbf16>
    %c1_431 = arith.constant 1 : index
    %c0_432 = arith.constant 0 : index
    %c0_433 = arith.constant 0 : index
    %359 = vector.load %arg7[%c1_431, %c0_432, %c0_433] : memref<6x32x1xf32, #tpu.memory_space<vmem>>, vector<1x32x1xf32>
    %360 = vector.shape_cast %359 : vector<1x32x1xf32> to vector<32x1xf32>
    %361 = arith.truncf %356 : vector<32x128xf32> to vector<32x128xbf16>
    %c0_434 = arith.constant 0 : index
    %c25_435 = arith.constant 25 : index
    %362 = vector.load %arg9[%c0_434, %c25_435] : memref<32x178xbf16, #tpu.memory_space<vmem>>, vector<32x128xbf16>
    tpu.vector_store %arg9[%c0_434, %c25_435], %361 {strides = array<i32>} : memref<32x178xbf16, #tpu.memory_space<vmem>>, vector<32x128xbf16>,
    %c0_436 = arith.constant 0 : index
    %c20_437 = arith.constant 20 : index
    %363 = vector.load %arg9[%c0_436, %c20_437] : memref<32x178xbf16, #tpu.memory_space<vmem>>, vector<32x128xbf16>
    %c0_438 = arith.constant 0 : index
    %c0_439 = arith.constant 0 : index
    %364 = vector.load %arg10[%c0_438, %c0_439] : memref<352x128xbf16, #tpu.memory_space<vmem>>, vector<32x128xbf16>
    tpu.vector_store %arg10[%c0_438, %c0_439], %363 {strides = array<i32>} : memref<352x128xbf16, #tpu.memory_space<vmem>>, vector<32x128xbf16>,
    %c0_440 = arith.constant 0 : index
    %c21_441 = arith.constant 21 : index
    %365 = vector.load %arg9[%c0_440, %c21_441] : memref<32x178xbf16, #tpu.memory_space<vmem>>, vector<32x128xbf16>
    %c32_442 = arith.constant 32 : index
    %c0_443 = arith.constant 0 : index
    %366 = vector.load %arg10[%c32_442, %c0_443] : memref<352x128xbf16, #tpu.memory_space<vmem>>, vector<32x128xbf16>
    tpu.vector_store %arg10[%c32_442, %c0_443], %365 {strides = array<i32>} : memref<352x128xbf16, #tpu.memory_space<vmem>>, vector<32x128xbf16>,
    %c0_444 = arith.constant 0 : index
    %c22_445 = arith.constant 22 : index
    %367 = vector.load %arg9[%c0_444, %c22_445] : memref<32x178xbf16, #tpu.memory_space<vmem>>, vector<32x128xbf16>
    %c64_446 = arith.constant 64 : index
    %c0_447 = arith.constant 0 : index
    %368 = vector.load %arg10[%c64_446, %c0_447] : memref<352x128xbf16, #tpu.memory_space<vmem>>, vector<32x128xbf16>
    tpu.vector_store %arg10[%c64_446, %c0_447], %367 {strides = array<i32>} : memref<352x128xbf16, #tpu.memory_space<vmem>>, vector<32x128xbf16>,
    %c0_448 = arith.constant 0 : index
    %c23_449 = arith.constant 23 : index
    %369 = vector.load %arg9[%c0_448, %c23_449] : memref<32x178xbf16, #tpu.memory_space<vmem>>, vector<32x128xbf16>
    %c96_450 = arith.constant 96 : index
    %c0_451 = arith.constant 0 : index
    %370 = vector.load %arg10[%c96_450, %c0_451] : memref<352x128xbf16, #tpu.memory_space<vmem>>, vector<32x128xbf16>
    tpu.vector_store %arg10[%c96_450, %c0_451], %369 {strides = array<i32>} : memref<352x128xbf16, #tpu.memory_space<vmem>>, vector<32x128xbf16>,
    %c0_452 = arith.constant 0 : index
    %c24_453 = arith.constant 24 : index
    %371 = vector.load %arg9[%c0_452, %c24_453] : memref<32x178xbf16, #tpu.memory_space<vmem>>, vector<32x128xbf16>
    %c128_454 = arith.constant 128 : index
    %c0_455 = arith.constant 0 : index
    %372 = vector.load %arg10[%c128_454, %c0_455] : memref<352x128xbf16, #tpu.memory_space<vmem>>, vector<32x128xbf16>
    tpu.vector_store %arg10[%c128_454, %c0_455], %371 {strides = array<i32>} : memref<352x128xbf16, #tpu.memory_space<vmem>>, vector<32x128xbf16>,
    %c0_456 = arith.constant 0 : index
    %c25_457 = arith.constant 25 : index
    %373 = vector.load %arg9[%c0_456, %c25_457] : memref<32x178xbf16, #tpu.memory_space<vmem>>, vector<32x128xbf16>
    %c160_458 = arith.constant 160 : index
    %c0_459 = arith.constant 0 : index
    %374 = vector.load %arg10[%c160_458, %c0_459] : memref<352x128xbf16, #tpu.memory_space<vmem>>, vector<32x128xbf16>
    tpu.vector_store %arg10[%c160_458, %c0_459], %373 {strides = array<i32>} : memref<352x128xbf16, #tpu.memory_space<vmem>>, vector<32x128xbf16>,
    %c0_460 = arith.constant 0 : index
    %c26_461 = arith.constant 26 : index
    %375 = vector.load %arg9[%c0_460, %c26_461] : memref<32x178xbf16, #tpu.memory_space<vmem>>, vector<32x128xbf16>
    %c192_462 = arith.constant 192 : index
    %c0_463 = arith.constant 0 : index
    %376 = vector.load %arg10[%c192_462, %c0_463] : memref<352x128xbf16, #tpu.memory_space<vmem>>, vector<32x128xbf16>
    tpu.vector_store %arg10[%c192_462, %c0_463], %375 {strides = array<i32>} : memref<352x128xbf16, #tpu.memory_space<vmem>>, vector<32x128xbf16>,
    %c0_464 = arith.constant 0 : index
    %c27_465 = arith.constant 27 : index
    %377 = vector.load %arg9[%c0_464, %c27_465] : memref<32x178xbf16, #tpu.memory_space<vmem>>, vector<32x128xbf16>
    %c224_466 = arith.constant 224 : index
    %c0_467 = arith.constant 0 : index
    %378 = vector.load %arg10[%c224_466, %c0_467] : memref<352x128xbf16, #tpu.memory_space<vmem>>, vector<32x128xbf16>
    tpu.vector_store %arg10[%c224_466, %c0_467], %377 {strides = array<i32>} : memref<352x128xbf16, #tpu.memory_space<vmem>>, vector<32x128xbf16>,
    %c0_468 = arith.constant 0 : index
    %c28_469 = arith.constant 28 : index
    %379 = vector.load %arg9[%c0_468, %c28_469] : memref<32x178xbf16, #tpu.memory_space<vmem>>, vector<32x128xbf16>
    %c256_470 = arith.constant 256 : index
    %c0_471 = arith.constant 0 : index
    %380 = vector.load %arg10[%c256_470, %c0_471] : memref<352x128xbf16, #tpu.memory_space<vmem>>, vector<32x128xbf16>
    tpu.vector_store %arg10[%c256_470, %c0_471], %379 {strides = array<i32>} : memref<352x128xbf16, #tpu.memory_space<vmem>>, vector<32x128xbf16>,
    %c0_472 = arith.constant 0 : index
    %c29_473 = arith.constant 29 : index
    %381 = vector.load %arg9[%c0_472, %c29_473] : memref<32x178xbf16, #tpu.memory_space<vmem>>, vector<32x128xbf16>
    %c288_474 = arith.constant 288 : index
    %c0_475 = arith.constant 0 : index
    %382 = vector.load %arg10[%c288_474, %c0_475] : memref<352x128xbf16, #tpu.memory_space<vmem>>, vector<32x128xbf16>
    tpu.vector_store %arg10[%c288_474, %c0_475], %381 {strides = array<i32>} : memref<352x128xbf16, #tpu.memory_space<vmem>>, vector<32x128xbf16>,
    %c0_476 = arith.constant 0 : index
    %c30_477 = arith.constant 30 : index
    %383 = vector.load %arg9[%c0_476, %c30_477] : memref<32x178xbf16, #tpu.memory_space<vmem>>, vector<32x128xbf16>
    %c320_478 = arith.constant 320 : index
    %c0_479 = arith.constant 0 : index
    %384 = vector.load %arg10[%c320_478, %c0_479] : memref<352x128xbf16, #tpu.memory_space<vmem>>, vector<32x128xbf16>
    tpu.vector_store %arg10[%c320_478, %c0_479], %383 {strides = array<i32>} : memref<352x128xbf16, #tpu.memory_space<vmem>>, vector<32x128xbf16>,
    %c0_480 = arith.constant 0 : index
    %c0_481 = arith.constant 0 : index
    %385 = vector.load %arg10[%c0_480, %c0_481] : memref<352x128xbf16, #tpu.memory_space<vmem>>, vector<352x128xbf16>
    %cst_482 = arith.constant dense<0.000000e+00> : vector<32x128xf32>
    %386 = tpu.matmul %358, %385, %cst_482 {dimension_numbers = #tpu.dot_dimension_numbers<[1], [0], [0], [1], [0, 0, 1, 1], [], []>} : vector<32x352xbf16>, vector<352x128xbf16>, vector<32x128xf32> -> vector<32x128xf32>
    %387 = vector.broadcast %360 : vector<32x1xf32> to vector<32x128xf32>
    %388 = arith.addf %386, %387 : vector<32x128xf32>
    %389 = arith.addf %388, %5 : vector<32x128xf32>
    %cst_483 = arith.constant 0.000000e+00 : f32
    %390 = vector.broadcast %cst_483 : f32 to vector<32x128xf32>
    %391 = arith.cmpf ogt, %389, %390 : vector<32x128xf32>
    %cst_484 = arith.constant 1.000000e-01 : f32
    %392 = vector.broadcast %cst_484 : f32 to vector<32x128xf32>
    %393 = arith.mulf %392, %389 : vector<32x128xf32>
    %394 = arith.select %391, %389, %393 : vector<32x128xi1>, vector<32x128xf32>
    %c2_485 = arith.constant 2 : index
    %c0_486 = arith.constant 0 : index
    %c0_487 = arith.constant 0 : index
    %395 = vector.load %arg6[%c2_485, %c0_486, %c0_487] : memref<6x32x352xbf16, #tpu.memory_space<vmem>>, vector<1x32x352xbf16>
    %396 = vector.shape_cast %395 : vector<1x32x352xbf16> to vector<32x352xbf16>
    %c2_488 = arith.constant 2 : index
    %c0_489 = arith.constant 0 : index
    %c0_490 = arith.constant 0 : index
    %397 = vector.load %arg7[%c2_488, %c0_489, %c0_490] : memref<6x32x1xf32, #tpu.memory_space<vmem>>, vector<1x32x1xf32>
    %398 = vector.shape_cast %397 : vector<1x32x1xf32> to vector<32x1xf32>
    %399 = arith.truncf %394 : vector<32x128xf32> to vector<32x128xbf16>
    %c0_491 = arith.constant 0 : index
    %c25_492 = arith.constant 25 : index
    %400 = vector.load %arg9[%c0_491, %c25_492] : memref<32x178xbf16, #tpu.memory_space<vmem>>, vector<32x128xbf16>
    tpu.vector_store %arg9[%c0_491, %c25_492], %399 {strides = array<i32>} : memref<32x178xbf16, #tpu.memory_space<vmem>>, vector<32x128xbf16>,
    %c0_493 = arith.constant 0 : index
    %c10_494 = arith.constant 10 : index
    %401 = vector.load %arg9[%c0_493, %c10_494] : memref<32x178xbf16, #tpu.memory_space<vmem>>, vector<32x128xbf16>
    %c0_495 = arith.constant 0 : index
    %c0_496 = arith.constant 0 : index
    %402 = vector.load %arg10[%c0_495, %c0_496] : memref<352x128xbf16, #tpu.memory_space<vmem>>, vector<32x128xbf16>
    tpu.vector_store %arg10[%c0_495, %c0_496], %401 {strides = array<i32>} : memref<352x128xbf16, #tpu.memory_space<vmem>>, vector<32x128xbf16>,
    %c0_497 = arith.constant 0 : index
    %c13 = arith.constant 13 : index
    %403 = vector.load %arg9[%c0_497, %c13] : memref<32x178xbf16, #tpu.memory_space<vmem>>, vector<32x128xbf16>
    %c32_498 = arith.constant 32 : index
    %c0_499 = arith.constant 0 : index
    %404 = vector.load %arg10[%c32_498, %c0_499] : memref<352x128xbf16, #tpu.memory_space<vmem>>, vector<32x128xbf16>
    tpu.vector_store %arg10[%c32_498, %c0_499], %403 {strides = array<i32>} : memref<352x128xbf16, #tpu.memory_space<vmem>>, vector<32x128xbf16>,
    %c0_500 = arith.constant 0 : index
    %c16_501 = arith.constant 16 : index
    %405 = vector.load %arg9[%c0_500, %c16_501] : memref<32x178xbf16, #tpu.memory_space<vmem>>, vector<32x128xbf16>
    %c64_502 = arith.constant 64 : index
    %c0_503 = arith.constant 0 : index
    %406 = vector.load %arg10[%c64_502, %c0_503] : memref<352x128xbf16, #tpu.memory_space<vmem>>, vector<32x128xbf16>
    tpu.vector_store %arg10[%c64_502, %c0_503], %405 {strides = array<i32>} : memref<352x128xbf16, #tpu.memory_space<vmem>>, vector<32x128xbf16>,
    %c0_504 = arith.constant 0 : index
    %c19_505 = arith.constant 19 : index
    %407 = vector.load %arg9[%c0_504, %c19_505] : memref<32x178xbf16, #tpu.memory_space<vmem>>, vector<32x128xbf16>
    %c96_506 = arith.constant 96 : index
    %c0_507 = arith.constant 0 : index
    %408 = vector.load %arg10[%c96_506, %c0_507] : memref<352x128xbf16, #tpu.memory_space<vmem>>, vector<32x128xbf16>
    tpu.vector_store %arg10[%c96_506, %c0_507], %407 {strides = array<i32>} : memref<352x128xbf16, #tpu.memory_space<vmem>>, vector<32x128xbf16>,
    %c0_508 = arith.constant 0 : index
    %c22_509 = arith.constant 22 : index
    %409 = vector.load %arg9[%c0_508, %c22_509] : memref<32x178xbf16, #tpu.memory_space<vmem>>, vector<32x128xbf16>
    %c128_510 = arith.constant 128 : index
    %c0_511 = arith.constant 0 : index
    %410 = vector.load %arg10[%c128_510, %c0_511] : memref<352x128xbf16, #tpu.memory_space<vmem>>, vector<32x128xbf16>
    tpu.vector_store %arg10[%c128_510, %c0_511], %409 {strides = array<i32>} : memref<352x128xbf16, #tpu.memory_space<vmem>>, vector<32x128xbf16>,
    %c0_512 = arith.constant 0 : index
    %c25_513 = arith.constant 25 : index
    %411 = vector.load %arg9[%c0_512, %c25_513] : memref<32x178xbf16, #tpu.memory_space<vmem>>, vector<32x128xbf16>
    %c160_514 = arith.constant 160 : index
    %c0_515 = arith.constant 0 : index
    %412 = vector.load %arg10[%c160_514, %c0_515] : memref<352x128xbf16, #tpu.memory_space<vmem>>, vector<32x128xbf16>
    tpu.vector_store %arg10[%c160_514, %c0_515], %411 {strides = array<i32>} : memref<352x128xbf16, #tpu.memory_space<vmem>>, vector<32x128xbf16>,
    %c0_516 = arith.constant 0 : index
    %c28_517 = arith.constant 28 : index
    %413 = vector.load %arg9[%c0_516, %c28_517] : memref<32x178xbf16, #tpu.memory_space<vmem>>, vector<32x128xbf16>
    %c192_518 = arith.constant 192 : index
    %c0_519 = arith.constant 0 : index
    %414 = vector.load %arg10[%c192_518, %c0_519] : memref<352x128xbf16, #tpu.memory_space<vmem>>, vector<32x128xbf16>
    tpu.vector_store %arg10[%c192_518, %c0_519], %413 {strides = array<i32>} : memref<352x128xbf16, #tpu.memory_space<vmem>>, vector<32x128xbf16>,
    %c0_520 = arith.constant 0 : index
    %c31_521 = arith.constant 31 : index
    %415 = vector.load %arg9[%c0_520, %c31_521] : memref<32x178xbf16, #tpu.memory_space<vmem>>, vector<32x128xbf16>
    %c224_522 = arith.constant 224 : index
    %c0_523 = arith.constant 0 : index
    %416 = vector.load %arg10[%c224_522, %c0_523] : memref<352x128xbf16, #tpu.memory_space<vmem>>, vector<32x128xbf16>
    tpu.vector_store %arg10[%c224_522, %c0_523], %415 {strides = array<i32>} : memref<352x128xbf16, #tpu.memory_space<vmem>>, vector<32x128xbf16>,
    %c0_524 = arith.constant 0 : index
    %c34_525 = arith.constant 34 : index
    %417 = vector.load %arg9[%c0_524, %c34_525] : memref<32x178xbf16, #tpu.memory_space<vmem>>, vector<32x128xbf16>
    %c256_526 = arith.constant 256 : index
    %c0_527 = arith.constant 0 : index
    %418 = vector.load %arg10[%c256_526, %c0_527] : memref<352x128xbf16, #tpu.memory_space<vmem>>, vector<32x128xbf16>
    tpu.vector_store %arg10[%c256_526, %c0_527], %417 {strides = array<i32>} : memref<352x128xbf16, #tpu.memory_space<vmem>>, vector<32x128xbf16>,
    %c0_528 = arith.constant 0 : index
    %c37 = arith.constant 37 : index
    %419 = vector.load %arg9[%c0_528, %c37] : memref<32x178xbf16, #tpu.memory_space<vmem>>, vector<32x128xbf16>
    %c288_529 = arith.constant 288 : index
    %c0_530 = arith.constant 0 : index
    %420 = vector.load %arg10[%c288_529, %c0_530] : memref<352x128xbf16, #tpu.memory_space<vmem>>, vector<32x128xbf16>
    tpu.vector_store %arg10[%c288_529, %c0_530], %419 {strides = array<i32>} : memref<352x128xbf16, #tpu.memory_space<vmem>>, vector<32x128xbf16>,
    %c0_531 = arith.constant 0 : index
    %c40_532 = arith.constant 40 : index
    %421 = vector.load %arg9[%c0_531, %c40_532] : memref<32x178xbf16, #tpu.memory_space<vmem>>, vector<32x128xbf16>
    %c320_533 = arith.constant 320 : index
    %c0_534 = arith.constant 0 : index
    %422 = vector.load %arg10[%c320_533, %c0_534] : memref<352x128xbf16, #tpu.memory_space<vmem>>, vector<32x128xbf16>
    tpu.vector_store %arg10[%c320_533, %c0_534], %421 {strides = array<i32>} : memref<352x128xbf16, #tpu.memory_space<vmem>>, vector<32x128xbf16>,
    %c0_535 = arith.constant 0 : index
    %c0_536 = arith.constant 0 : index
    %423 = vector.load %arg10[%c0_535, %c0_536] : memref<352x128xbf16, #tpu.memory_space<vmem>>, vector<352x128xbf16>
    %cst_537 = arith.constant dense<0.000000e+00> : vector<32x128xf32>
    %424 = tpu.matmul %396, %423, %cst_537 {dimension_numbers = #tpu.dot_dimension_numbers<[1], [0], [0], [1], [0, 0, 1, 1], [], []>} : vector<32x352xbf16>, vector<352x128xbf16>, vector<32x128xf32> -> vector<32x128xf32>
    %425 = vector.broadcast %398 : vector<32x1xf32> to vector<32x128xf32>
    %426 = arith.addf %424, %425 : vector<32x128xf32>
    %cst_538 = arith.constant 0.000000e+00 : f32
    %427 = vector.broadcast %cst_538 : f32 to vector<32x128xf32>
    %428 = arith.cmpf ogt, %426, %427 : vector<32x128xf32>
    %cst_539 = arith.constant 1.000000e-01 : f32
    %429 = vector.broadcast %cst_539 : f32 to vector<32x128xf32>
    %430 = arith.mulf %429, %426 : vector<32x128xf32>
    %431 = arith.select %428, %426, %430 : vector<32x128xi1>, vector<32x128xf32>
    %c3_540 = arith.constant 3 : index
    %c0_541 = arith.constant 0 : index
    %c0_542 = arith.constant 0 : index
    %432 = vector.load %arg6[%c3_540, %c0_541, %c0_542] : memref<6x32x352xbf16, #tpu.memory_space<vmem>>, vector<1x32x352xbf16>
    %433 = vector.shape_cast %432 : vector<1x32x352xbf16> to vector<32x352xbf16>
    %c3_543 = arith.constant 3 : index
    %c0_544 = arith.constant 0 : index
    %c0_545 = arith.constant 0 : index
    %434 = vector.load %arg7[%c3_543, %c0_544, %c0_545] : memref<6x32x1xf32, #tpu.memory_space<vmem>>, vector<1x32x1xf32>
    %435 = vector.shape_cast %434 : vector<1x32x1xf32> to vector<32x1xf32>
    %436 = arith.truncf %431 : vector<32x128xf32> to vector<32x128xbf16>
    %c0_546 = arith.constant 0 : index
    %c25_547 = arith.constant 25 : index
    %437 = vector.load %arg9[%c0_546, %c25_547] : memref<32x178xbf16, #tpu.memory_space<vmem>>, vector<32x128xbf16>
    tpu.vector_store %arg9[%c0_546, %c25_547], %436 {strides = array<i32>} : memref<32x178xbf16, #tpu.memory_space<vmem>>, vector<32x128xbf16>,
    %c0_548 = arith.constant 0 : index
    %c20_549 = arith.constant 20 : index
    %438 = vector.load %arg9[%c0_548, %c20_549] : memref<32x178xbf16, #tpu.memory_space<vmem>>, vector<32x128xbf16>
    %c0_550 = arith.constant 0 : index
    %c0_551 = arith.constant 0 : index
    %439 = vector.load %arg10[%c0_550, %c0_551] : memref<352x128xbf16, #tpu.memory_space<vmem>>, vector<32x128xbf16>
    tpu.vector_store %arg10[%c0_550, %c0_551], %438 {strides = array<i32>} : memref<352x128xbf16, #tpu.memory_space<vmem>>, vector<32x128xbf16>,
    %c0_552 = arith.constant 0 : index
    %c21_553 = arith.constant 21 : index
    %440 = vector.load %arg9[%c0_552, %c21_553] : memref<32x178xbf16, #tpu.memory_space<vmem>>, vector<32x128xbf16>
    %c32_554 = arith.constant 32 : index
    %c0_555 = arith.constant 0 : index
    %441 = vector.load %arg10[%c32_554, %c0_555] : memref<352x128xbf16, #tpu.memory_space<vmem>>, vector<32x128xbf16>
    tpu.vector_store %arg10[%c32_554, %c0_555], %440 {strides = array<i32>} : memref<352x128xbf16, #tpu.memory_space<vmem>>, vector<32x128xbf16>,
    %c0_556 = arith.constant 0 : index
    %c22_557 = arith.constant 22 : index
    %442 = vector.load %arg9[%c0_556, %c22_557] : memref<32x178xbf16, #tpu.memory_space<vmem>>, vector<32x128xbf16>
    %c64_558 = arith.constant 64 : index
    %c0_559 = arith.constant 0 : index
    %443 = vector.load %arg10[%c64_558, %c0_559] : memref<352x128xbf16, #tpu.memory_space<vmem>>, vector<32x128xbf16>
    tpu.vector_store %arg10[%c64_558, %c0_559], %442 {strides = array<i32>} : memref<352x128xbf16, #tpu.memory_space<vmem>>, vector<32x128xbf16>,
    %c0_560 = arith.constant 0 : index
    %c23_561 = arith.constant 23 : index
    %444 = vector.load %arg9[%c0_560, %c23_561] : memref<32x178xbf16, #tpu.memory_space<vmem>>, vector<32x128xbf16>
    %c96_562 = arith.constant 96 : index
    %c0_563 = arith.constant 0 : index
    %445 = vector.load %arg10[%c96_562, %c0_563] : memref<352x128xbf16, #tpu.memory_space<vmem>>, vector<32x128xbf16>
    tpu.vector_store %arg10[%c96_562, %c0_563], %444 {strides = array<i32>} : memref<352x128xbf16, #tpu.memory_space<vmem>>, vector<32x128xbf16>,
    %c0_564 = arith.constant 0 : index
    %c24_565 = arith.constant 24 : index
    %446 = vector.load %arg9[%c0_564, %c24_565] : memref<32x178xbf16, #tpu.memory_space<vmem>>, vector<32x128xbf16>
    %c128_566 = arith.constant 128 : index
    %c0_567 = arith.constant 0 : index
    %447 = vector.load %arg10[%c128_566, %c0_567] : memref<352x128xbf16, #tpu.memory_space<vmem>>, vector<32x128xbf16>
    tpu.vector_store %arg10[%c128_566, %c0_567], %446 {strides = array<i32>} : memref<352x128xbf16, #tpu.memory_space<vmem>>, vector<32x128xbf16>,
    %c0_568 = arith.constant 0 : index
    %c25_569 = arith.constant 25 : index
    %448 = vector.load %arg9[%c0_568, %c25_569] : memref<32x178xbf16, #tpu.memory_space<vmem>>, vector<32x128xbf16>
    %c160_570 = arith.constant 160 : index
    %c0_571 = arith.constant 0 : index
    %449 = vector.load %arg10[%c160_570, %c0_571] : memref<352x128xbf16, #tpu.memory_space<vmem>>, vector<32x128xbf16>
    tpu.vector_store %arg10[%c160_570, %c0_571], %448 {strides = array<i32>} : memref<352x128xbf16, #tpu.memory_space<vmem>>, vector<32x128xbf16>,
    %c0_572 = arith.constant 0 : index
    %c26_573 = arith.constant 26 : index
    %450 = vector.load %arg9[%c0_572, %c26_573] : memref<32x178xbf16, #tpu.memory_space<vmem>>, vector<32x128xbf16>
    %c192_574 = arith.constant 192 : index
    %c0_575 = arith.constant 0 : index
    %451 = vector.load %arg10[%c192_574, %c0_575] : memref<352x128xbf16, #tpu.memory_space<vmem>>, vector<32x128xbf16>
    tpu.vector_store %arg10[%c192_574, %c0_575], %450 {strides = array<i32>} : memref<352x128xbf16, #tpu.memory_space<vmem>>, vector<32x128xbf16>,
    %c0_576 = arith.constant 0 : index
    %c27_577 = arith.constant 27 : index
    %452 = vector.load %arg9[%c0_576, %c27_577] : memref<32x178xbf16, #tpu.memory_space<vmem>>, vector<32x128xbf16>
    %c224_578 = arith.constant 224 : index
    %c0_579 = arith.constant 0 : index
    %453 = vector.load %arg10[%c224_578, %c0_579] : memref<352x128xbf16, #tpu.memory_space<vmem>>, vector<32x128xbf16>
    tpu.vector_store %arg10[%c224_578, %c0_579], %452 {strides = array<i32>} : memref<352x128xbf16, #tpu.memory_space<vmem>>, vector<32x128xbf16>,
    %c0_580 = arith.constant 0 : index
    %c28_581 = arith.constant 28 : index
    %454 = vector.load %arg9[%c0_580, %c28_581] : memref<32x178xbf16, #tpu.memory_space<vmem>>, vector<32x128xbf16>
    %c256_582 = arith.constant 256 : index
    %c0_583 = arith.constant 0 : index
    %455 = vector.load %arg10[%c256_582, %c0_583] : memref<352x128xbf16, #tpu.memory_space<vmem>>, vector<32x128xbf16>
    tpu.vector_store %arg10[%c256_582, %c0_583], %454 {strides = array<i32>} : memref<352x128xbf16, #tpu.memory_space<vmem>>, vector<32x128xbf16>,
    %c0_584 = arith.constant 0 : index
    %c29_585 = arith.constant 29 : index
    %456 = vector.load %arg9[%c0_584, %c29_585] : memref<32x178xbf16, #tpu.memory_space<vmem>>, vector<32x128xbf16>
    %c288_586 = arith.constant 288 : index
    %c0_587 = arith.constant 0 : index
    %457 = vector.load %arg10[%c288_586, %c0_587] : memref<352x128xbf16, #tpu.memory_space<vmem>>, vector<32x128xbf16>
    tpu.vector_store %arg10[%c288_586, %c0_587], %456 {strides = array<i32>} : memref<352x128xbf16, #tpu.memory_space<vmem>>, vector<32x128xbf16>,
    %c0_588 = arith.constant 0 : index
    %c30_589 = arith.constant 30 : index
    %458 = vector.load %arg9[%c0_588, %c30_589] : memref<32x178xbf16, #tpu.memory_space<vmem>>, vector<32x128xbf16>
    %c320_590 = arith.constant 320 : index
    %c0_591 = arith.constant 0 : index
    %459 = vector.load %arg10[%c320_590, %c0_591] : memref<352x128xbf16, #tpu.memory_space<vmem>>, vector<32x128xbf16>
    tpu.vector_store %arg10[%c320_590, %c0_591], %458 {strides = array<i32>} : memref<352x128xbf16, #tpu.memory_space<vmem>>, vector<32x128xbf16>,
    %c0_592 = arith.constant 0 : index
    %c0_593 = arith.constant 0 : index
    %460 = vector.load %arg10[%c0_592, %c0_593] : memref<352x128xbf16, #tpu.memory_space<vmem>>, vector<352x128xbf16>
    %cst_594 = arith.constant dense<0.000000e+00> : vector<32x128xf32>
    %461 = tpu.matmul %433, %460, %cst_594 {dimension_numbers = #tpu.dot_dimension_numbers<[1], [0], [0], [1], [0, 0, 1, 1], [], []>} : vector<32x352xbf16>, vector<352x128xbf16>, vector<32x128xf32> -> vector<32x128xf32>
    %462 = vector.broadcast %435 : vector<32x1xf32> to vector<32x128xf32>
    %463 = arith.addf %461, %462 : vector<32x128xf32>
    %464 = arith.addf %463, %389 : vector<32x128xf32>
    %cst_595 = arith.constant 0.000000e+00 : f32
    %465 = vector.broadcast %cst_595 : f32 to vector<32x128xf32>
    %466 = arith.cmpf ogt, %464, %465 : vector<32x128xf32>
    %cst_596 = arith.constant 1.000000e-01 : f32
    %467 = vector.broadcast %cst_596 : f32 to vector<32x128xf32>
    %468 = arith.mulf %467, %464 : vector<32x128xf32>
    %469 = arith.select %466, %464, %468 : vector<32x128xi1>, vector<32x128xf32>
    %c4_597 = arith.constant 4 : index
    %c0_598 = arith.constant 0 : index
    %c0_599 = arith.constant 0 : index
    %470 = vector.load %arg6[%c4_597, %c0_598, %c0_599] : memref<6x32x352xbf16, #tpu.memory_space<vmem>>, vector<1x32x352xbf16>
    %471 = vector.shape_cast %470 : vector<1x32x352xbf16> to vector<32x352xbf16>
    %c4_600 = arith.constant 4 : index
    %c0_601 = arith.constant 0 : index
    %c0_602 = arith.constant 0 : index
    %472 = vector.load %arg7[%c4_600, %c0_601, %c0_602] : memref<6x32x1xf32, #tpu.memory_space<vmem>>, vector<1x32x1xf32>
    %473 = vector.shape_cast %472 : vector<1x32x1xf32> to vector<32x1xf32>
    %474 = arith.truncf %469 : vector<32x128xf32> to vector<32x128xbf16>
    %c0_603 = arith.constant 0 : index
    %c25_604 = arith.constant 25 : index
    %475 = vector.load %arg9[%c0_603, %c25_604] : memref<32x178xbf16, #tpu.memory_space<vmem>>, vector<32x128xbf16>
    tpu.vector_store %arg9[%c0_603, %c25_604], %474 {strides = array<i32>} : memref<32x178xbf16, #tpu.memory_space<vmem>>, vector<32x128xbf16>,
    %c0_605 = arith.constant 0 : index
    %c0_606 = arith.constant 0 : index
    %476 = vector.load %arg9[%c0_605, %c0_606] : memref<32x178xbf16, #tpu.memory_space<vmem>>, vector<32x128xbf16>
    %c0_607 = arith.constant 0 : index
    %c0_608 = arith.constant 0 : index
    %477 = vector.load %arg10[%c0_607, %c0_608] : memref<352x128xbf16, #tpu.memory_space<vmem>>, vector<32x128xbf16>
    tpu.vector_store %arg10[%c0_607, %c0_608], %476 {strides = array<i32>} : memref<352x128xbf16, #tpu.memory_space<vmem>>, vector<32x128xbf16>,
    %c0_609 = arith.constant 0 : index
    %c5_610 = arith.constant 5 : index
    %478 = vector.load %arg9[%c0_609, %c5_610] : memref<32x178xbf16, #tpu.memory_space<vmem>>, vector<32x128xbf16>
    %c32_611 = arith.constant 32 : index
    %c0_612 = arith.constant 0 : index
    %479 = vector.load %arg10[%c32_611, %c0_612] : memref<352x128xbf16, #tpu.memory_space<vmem>>, vector<32x128xbf16>
    tpu.vector_store %arg10[%c32_611, %c0_612], %478 {strides = array<i32>} : memref<352x128xbf16, #tpu.memory_space<vmem>>, vector<32x128xbf16>,
    %c0_613 = arith.constant 0 : index
    %c10_614 = arith.constant 10 : index
    %480 = vector.load %arg9[%c0_613, %c10_614] : memref<32x178xbf16, #tpu.memory_space<vmem>>, vector<32x128xbf16>
    %c64_615 = arith.constant 64 : index
    %c0_616 = arith.constant 0 : index
    %481 = vector.load %arg10[%c64_615, %c0_616] : memref<352x128xbf16, #tpu.memory_space<vmem>>, vector<32x128xbf16>
    tpu.vector_store %arg10[%c64_615, %c0_616], %480 {strides = array<i32>} : memref<352x128xbf16, #tpu.memory_space<vmem>>, vector<32x128xbf16>,
    %c0_617 = arith.constant 0 : index
    %c15_618 = arith.constant 15 : index
    %482 = vector.load %arg9[%c0_617, %c15_618] : memref<32x178xbf16, #tpu.memory_space<vmem>>, vector<32x128xbf16>
    %c96_619 = arith.constant 96 : index
    %c0_620 = arith.constant 0 : index
    %483 = vector.load %arg10[%c96_619, %c0_620] : memref<352x128xbf16, #tpu.memory_space<vmem>>, vector<32x128xbf16>
    tpu.vector_store %arg10[%c96_619, %c0_620], %482 {strides = array<i32>} : memref<352x128xbf16, #tpu.memory_space<vmem>>, vector<32x128xbf16>,
    %c0_621 = arith.constant 0 : index
    %c20_622 = arith.constant 20 : index
    %484 = vector.load %arg9[%c0_621, %c20_622] : memref<32x178xbf16, #tpu.memory_space<vmem>>, vector<32x128xbf16>
    %c128_623 = arith.constant 128 : index
    %c0_624 = arith.constant 0 : index
    %485 = vector.load %arg10[%c128_623, %c0_624] : memref<352x128xbf16, #tpu.memory_space<vmem>>, vector<32x128xbf16>
    tpu.vector_store %arg10[%c128_623, %c0_624], %484 {strides = array<i32>} : memref<352x128xbf16, #tpu.memory_space<vmem>>, vector<32x128xbf16>,
    %c0_625 = arith.constant 0 : index
    %c25_626 = arith.constant 25 : index
    %486 = vector.load %arg9[%c0_625, %c25_626] : memref<32x178xbf16, #tpu.memory_space<vmem>>, vector<32x128xbf16>
    %c160_627 = arith.constant 160 : index
    %c0_628 = arith.constant 0 : index
    %487 = vector.load %arg10[%c160_627, %c0_628] : memref<352x128xbf16, #tpu.memory_space<vmem>>, vector<32x128xbf16>
    tpu.vector_store %arg10[%c160_627, %c0_628], %486 {strides = array<i32>} : memref<352x128xbf16, #tpu.memory_space<vmem>>, vector<32x128xbf16>,
    %c0_629 = arith.constant 0 : index
    %c30_630 = arith.constant 30 : index
    %488 = vector.load %arg9[%c0_629, %c30_630] : memref<32x178xbf16, #tpu.memory_space<vmem>>, vector<32x128xbf16>
    %c192_631 = arith.constant 192 : index
    %c0_632 = arith.constant 0 : index
    %489 = vector.load %arg10[%c192_631, %c0_632] : memref<352x128xbf16, #tpu.memory_space<vmem>>, vector<32x128xbf16>
    tpu.vector_store %arg10[%c192_631, %c0_632], %488 {strides = array<i32>} : memref<352x128xbf16, #tpu.memory_space<vmem>>, vector<32x128xbf16>,
    %c0_633 = arith.constant 0 : index
    %c35_634 = arith.constant 35 : index
    %490 = vector.load %arg9[%c0_633, %c35_634] : memref<32x178xbf16, #tpu.memory_space<vmem>>, vector<32x128xbf16>
    %c224_635 = arith.constant 224 : index
    %c0_636 = arith.constant 0 : index
    %491 = vector.load %arg10[%c224_635, %c0_636] : memref<352x128xbf16, #tpu.memory_space<vmem>>, vector<32x128xbf16>
    tpu.vector_store %arg10[%c224_635, %c0_636], %490 {strides = array<i32>} : memref<352x128xbf16, #tpu.memory_space<vmem>>, vector<32x128xbf16>,
    %c0_637 = arith.constant 0 : index
    %c40_638 = arith.constant 40 : index
    %492 = vector.load %arg9[%c0_637, %c40_638] : memref<32x178xbf16, #tpu.memory_space<vmem>>, vector<32x128xbf16>
    %c256_639 = arith.constant 256 : index
    %c0_640 = arith.constant 0 : index
    %493 = vector.load %arg10[%c256_639, %c0_640] : memref<352x128xbf16, #tpu.memory_space<vmem>>, vector<32x128xbf16>
    tpu.vector_store %arg10[%c256_639, %c0_640], %492 {strides = array<i32>} : memref<352x128xbf16, #tpu.memory_space<vmem>>, vector<32x128xbf16>,
    %c0_641 = arith.constant 0 : index
    %c45 = arith.constant 45 : index
    %494 = vector.load %arg9[%c0_641, %c45] : memref<32x178xbf16, #tpu.memory_space<vmem>>, vector<32x128xbf16>
    %c288_642 = arith.constant 288 : index
    %c0_643 = arith.constant 0 : index
    %495 = vector.load %arg10[%c288_642, %c0_643] : memref<352x128xbf16, #tpu.memory_space<vmem>>, vector<32x128xbf16>
    tpu.vector_store %arg10[%c288_642, %c0_643], %494 {strides = array<i32>} : memref<352x128xbf16, #tpu.memory_space<vmem>>, vector<32x128xbf16>,
    %c0_644 = arith.constant 0 : index
    %c50 = arith.constant 50 : index
    %496 = vector.load %arg9[%c0_644, %c50] : memref<32x178xbf16, #tpu.memory_space<vmem>>, vector<32x128xbf16>
    %c320_645 = arith.constant 320 : index
    %c0_646 = arith.constant 0 : index
    %497 = vector.load %arg10[%c320_645, %c0_646] : memref<352x128xbf16, #tpu.memory_space<vmem>>, vector<32x128xbf16>
    tpu.vector_store %arg10[%c320_645, %c0_646], %496 {strides = array<i32>} : memref<352x128xbf16, #tpu.memory_space<vmem>>, vector<32x128xbf16>,
    %c0_647 = arith.constant 0 : index
    %c0_648 = arith.constant 0 : index
    %498 = vector.load %arg10[%c0_647, %c0_648] : memref<352x128xbf16, #tpu.memory_space<vmem>>, vector<352x128xbf16>
    %cst_649 = arith.constant dense<0.000000e+00> : vector<32x128xf32>
    %499 = tpu.matmul %471, %498, %cst_649 {dimension_numbers = #tpu.dot_dimension_numbers<[1], [0], [0], [1], [0, 0, 1, 1], [], []>} : vector<32x352xbf16>, vector<352x128xbf16>, vector<32x128xf32> -> vector<32x128xf32>
    %500 = vector.broadcast %473 : vector<32x1xf32> to vector<32x128xf32>
    %501 = arith.addf %499, %500 : vector<32x128xf32>
    %cst_650 = arith.constant 0.000000e+00 : f32
    %502 = vector.broadcast %cst_650 : f32 to vector<32x128xf32>
    %503 = arith.cmpf ogt, %501, %502 : vector<32x128xf32>
    %cst_651 = arith.constant 1.000000e-01 : f32
    %504 = vector.broadcast %cst_651 : f32 to vector<32x128xf32>
    %505 = arith.mulf %504, %501 : vector<32x128xf32>
    %506 = arith.select %503, %501, %505 : vector<32x128xi1>, vector<32x128xf32>
    %c5_652 = arith.constant 5 : index
    %c0_653 = arith.constant 0 : index
    %c0_654 = arith.constant 0 : index
    %507 = vector.load %arg6[%c5_652, %c0_653, %c0_654] : memref<6x32x352xbf16, #tpu.memory_space<vmem>>, vector<1x32x352xbf16>
    %508 = vector.shape_cast %507 : vector<1x32x352xbf16> to vector<32x352xbf16>
    %c5_655 = arith.constant 5 : index
    %c0_656 = arith.constant 0 : index
    %c0_657 = arith.constant 0 : index
    %509 = vector.load %arg7[%c5_655, %c0_656, %c0_657] : memref<6x32x1xf32, #tpu.memory_space<vmem>>, vector<1x32x1xf32>
    %510 = vector.shape_cast %509 : vector<1x32x1xf32> to vector<32x1xf32>
    %511 = arith.truncf %506 : vector<32x128xf32> to vector<32x128xbf16>
    %c0_658 = arith.constant 0 : index
    %c25_659 = arith.constant 25 : index
    %512 = vector.load %arg9[%c0_658, %c25_659] : memref<32x178xbf16, #tpu.memory_space<vmem>>, vector<32x128xbf16>
    tpu.vector_store %arg9[%c0_658, %c25_659], %511 {strides = array<i32>} : memref<32x178xbf16, #tpu.memory_space<vmem>>, vector<32x128xbf16>,
    %c0_660 = arith.constant 0 : index
    %c20_661 = arith.constant 20 : index
    %513 = vector.load %arg9[%c0_660, %c20_661] : memref<32x178xbf16, #tpu.memory_space<vmem>>, vector<32x128xbf16>
    %c0_662 = arith.constant 0 : index
    %c0_663 = arith.constant 0 : index
    %514 = vector.load %arg10[%c0_662, %c0_663] : memref<352x128xbf16, #tpu.memory_space<vmem>>, vector<32x128xbf16>
    tpu.vector_store %arg10[%c0_662, %c0_663], %513 {strides = array<i32>} : memref<352x128xbf16, #tpu.memory_space<vmem>>, vector<32x128xbf16>,
    %c0_664 = arith.constant 0 : index
    %c21_665 = arith.constant 21 : index
    %515 = vector.load %arg9[%c0_664, %c21_665] : memref<32x178xbf16, #tpu.memory_space<vmem>>, vector<32x128xbf16>
    %c32_666 = arith.constant 32 : index
    %c0_667 = arith.constant 0 : index
    %516 = vector.load %arg10[%c32_666, %c0_667] : memref<352x128xbf16, #tpu.memory_space<vmem>>, vector<32x128xbf16>
    tpu.vector_store %arg10[%c32_666, %c0_667], %515 {strides = array<i32>} : memref<352x128xbf16, #tpu.memory_space<vmem>>, vector<32x128xbf16>,
    %c0_668 = arith.constant 0 : index
    %c22_669 = arith.constant 22 : index
    %517 = vector.load %arg9[%c0_668, %c22_669] : memref<32x178xbf16, #tpu.memory_space<vmem>>, vector<32x128xbf16>
    %c64_670 = arith.constant 64 : index
    %c0_671 = arith.constant 0 : index
    %518 = vector.load %arg10[%c64_670, %c0_671] : memref<352x128xbf16, #tpu.memory_space<vmem>>, vector<32x128xbf16>
    tpu.vector_store %arg10[%c64_670, %c0_671], %517 {strides = array<i32>} : memref<352x128xbf16, #tpu.memory_space<vmem>>, vector<32x128xbf16>,
    %c0_672 = arith.constant 0 : index
    %c23_673 = arith.constant 23 : index
    %519 = vector.load %arg9[%c0_672, %c23_673] : memref<32x178xbf16, #tpu.memory_space<vmem>>, vector<32x128xbf16>
    %c96_674 = arith.constant 96 : index
    %c0_675 = arith.constant 0 : index
    %520 = vector.load %arg10[%c96_674, %c0_675] : memref<352x128xbf16, #tpu.memory_space<vmem>>, vector<32x128xbf16>
    tpu.vector_store %arg10[%c96_674, %c0_675], %519 {strides = array<i32>} : memref<352x128xbf16, #tpu.memory_space<vmem>>, vector<32x128xbf16>,
    %c0_676 = arith.constant 0 : index
    %c24_677 = arith.constant 24 : index
    %521 = vector.load %arg9[%c0_676, %c24_677] : memref<32x178xbf16, #tpu.memory_space<vmem>>, vector<32x128xbf16>
    %c128_678 = arith.constant 128 : index
    %c0_679 = arith.constant 0 : index
    %522 = vector.load %arg10[%c128_678, %c0_679] : memref<352x128xbf16, #tpu.memory_space<vmem>>, vector<32x128xbf16>
    tpu.vector_store %arg10[%c128_678, %c0_679], %521 {strides = array<i32>} : memref<352x128xbf16, #tpu.memory_space<vmem>>, vector<32x128xbf16>,
    %c0_680 = arith.constant 0 : index
    %c25_681 = arith.constant 25 : index
    %523 = vector.load %arg9[%c0_680, %c25_681] : memref<32x178xbf16, #tpu.memory_space<vmem>>, vector<32x128xbf16>
    %c160_682 = arith.constant 160 : index
    %c0_683 = arith.constant 0 : index
    %524 = vector.load %arg10[%c160_682, %c0_683] : memref<352x128xbf16, #tpu.memory_space<vmem>>, vector<32x128xbf16>
    tpu.vector_store %arg10[%c160_682, %c0_683], %523 {strides = array<i32>} : memref<352x128xbf16, #tpu.memory_space<vmem>>, vector<32x128xbf16>,
    %c0_684 = arith.constant 0 : index
    %c26_685 = arith.constant 26 : index
    %525 = vector.load %arg9[%c0_684, %c26_685] : memref<32x178xbf16, #tpu.memory_space<vmem>>, vector<32x128xbf16>
    %c192_686 = arith.constant 192 : index
    %c0_687 = arith.constant 0 : index
    %526 = vector.load %arg10[%c192_686, %c0_687] : memref<352x128xbf16, #tpu.memory_space<vmem>>, vector<32x128xbf16>
    tpu.vector_store %arg10[%c192_686, %c0_687], %525 {strides = array<i32>} : memref<352x128xbf16, #tpu.memory_space<vmem>>, vector<32x128xbf16>,
    %c0_688 = arith.constant 0 : index
    %c27_689 = arith.constant 27 : index
    %527 = vector.load %arg9[%c0_688, %c27_689] : memref<32x178xbf16, #tpu.memory_space<vmem>>, vector<32x128xbf16>
    %c224_690 = arith.constant 224 : index
    %c0_691 = arith.constant 0 : index
    %528 = vector.load %arg10[%c224_690, %c0_691] : memref<352x128xbf16, #tpu.memory_space<vmem>>, vector<32x128xbf16>
    tpu.vector_store %arg10[%c224_690, %c0_691], %527 {strides = array<i32>} : memref<352x128xbf16, #tpu.memory_space<vmem>>, vector<32x128xbf16>,
    %c0_692 = arith.constant 0 : index
    %c28_693 = arith.constant 28 : index
    %529 = vector.load %arg9[%c0_692, %c28_693] : memref<32x178xbf16, #tpu.memory_space<vmem>>, vector<32x128xbf16>
    %c256_694 = arith.constant 256 : index
    %c0_695 = arith.constant 0 : index
    %530 = vector.load %arg10[%c256_694, %c0_695] : memref<352x128xbf16, #tpu.memory_space<vmem>>, vector<32x128xbf16>
    tpu.vector_store %arg10[%c256_694, %c0_695], %529 {strides = array<i32>} : memref<352x128xbf16, #tpu.memory_space<vmem>>, vector<32x128xbf16>,
    %c0_696 = arith.constant 0 : index
    %c29_697 = arith.constant 29 : index
    %531 = vector.load %arg9[%c0_696, %c29_697] : memref<32x178xbf16, #tpu.memory_space<vmem>>, vector<32x128xbf16>
    %c288_698 = arith.constant 288 : index
    %c0_699 = arith.constant 0 : index
    %532 = vector.load %arg10[%c288_698, %c0_699] : memref<352x128xbf16, #tpu.memory_space<vmem>>, vector<32x128xbf16>
    tpu.vector_store %arg10[%c288_698, %c0_699], %531 {strides = array<i32>} : memref<352x128xbf16, #tpu.memory_space<vmem>>, vector<32x128xbf16>,
    %c0_700 = arith.constant 0 : index
    %c30_701 = arith.constant 30 : index
    %533 = vector.load %arg9[%c0_700, %c30_701] : memref<32x178xbf16, #tpu.memory_space<vmem>>, vector<32x128xbf16>
    %c320_702 = arith.constant 320 : index
    %c0_703 = arith.constant 0 : index
    %534 = vector.load %arg10[%c320_702, %c0_703] : memref<352x128xbf16, #tpu.memory_space<vmem>>, vector<32x128xbf16>
    tpu.vector_store %arg10[%c320_702, %c0_703], %533 {strides = array<i32>} : memref<352x128xbf16, #tpu.memory_space<vmem>>, vector<32x128xbf16>,
    %c0_704 = arith.constant 0 : index
    %c0_705 = arith.constant 0 : index
    %535 = vector.load %arg10[%c0_704, %c0_705] : memref<352x128xbf16, #tpu.memory_space<vmem>>, vector<352x128xbf16>
    %cst_706 = arith.constant dense<0.000000e+00> : vector<32x128xf32>
    %536 = tpu.matmul %508, %535, %cst_706 {dimension_numbers = #tpu.dot_dimension_numbers<[1], [0], [0], [1], [0, 0, 1, 1], [], []>} : vector<32x352xbf16>, vector<352x128xbf16>, vector<32x128xf32> -> vector<32x128xf32>
    %537 = vector.broadcast %510 : vector<32x1xf32> to vector<32x128xf32>
    %538 = arith.addf %536, %537 : vector<32x128xf32>
    %539 = arith.addf %538, %464 : vector<32x128xf32>
    %540 = arith.addf %314, %539 : vector<32x128xf32>
    %cst_707 = arith.constant 0.333333343 : f32
    %541 = vector.broadcast %cst_707 : f32 to vector<32x128xf32>
    %542 = arith.mulf %540, %541 : vector<32x128xf32>
    %c0_708 = arith.constant 0 : index
    %c0_709 = arith.constant 0 : index
    %c0_710 = arith.constant 0 : index
    %543 = vector.load %arg8[%c0_708, %c0_709, %c0_710] : memref<1x32x128xf32, #tpu.memory_space<vmem>>, vector<1x32x128xf32>
    %544 = vector.shape_cast %543 : vector<1x32x128xf32> to vector<32x128xf32>
    %545 = vector.shape_cast %542 : vector<32x128xf32> to vector<1x32x128xf32>
    tpu.vector_store %arg8[%c0_708, %c0_709, %c0_710], %545 {strides = array<i32>} : memref<1x32x128xf32, #tpu.memory_space<vmem>>, vector<1x32x128xf32>,
    return
  }
  func.func @transform_0(%arg0: i32) -> (i32, i32, i32) {
    %c0_i32 = arith.constant 0 : i32
    %c0_i32_0 = arith.constant 0 : i32
    %c0_i32_1 = arith.constant 0 : i32
    return %arg0, %c0_i32, %c0_i32_0 : i32, i32, i32
  }
  func.func @transform_1(%arg0: i32) -> (i32, i32, i32) {
    %c0_i32 = arith.constant 0 : i32
    %c0_i32_0 = arith.constant 0 : i32
    %c0_i32_1 = arith.constant 0 : i32
    %c0_i32_2 = arith.constant 0 : i32
    return %c0_i32, %c0_i32_0, %c0_i32_1 : i32, i32, i32
  }
  func.func @transform_2(%arg0: i32) -> (i32, i32, i32) {
    %c0_i32 = arith.constant 0 : i32
    %c0_i32_0 = arith.constant 0 : i32
    %c0_i32_1 = arith.constant 0 : i32
    %c0_i32_2 = arith.constant 0 : i32
    return %c0_i32, %c0_i32_0, %c0_i32_1 : i32, i32, i32
  }
  func.func @transform_3(%arg0: i32) -> (i32, i32, i32) {
    %c0_i32 = arith.constant 0 : i32
    %c0_i32_0 = arith.constant 0 : i32
    %c0_i32_1 = arith.constant 0 : i32
    %c0_i32_2 = arith.constant 0 : i32
    return %c0_i32, %c0_i32_0, %c0_i32_1 : i32, i32, i32
  }
  func.func @transform_4(%arg0: i32) -> (i32, i32, i32) {
    %c0_i32 = arith.constant 0 : i32
    %c0_i32_0 = arith.constant 0 : i32
    %c0_i32_1 = arith.constant 0 : i32
    %c0_i32_2 = arith.constant 0 : i32
    return %c0_i32, %c0_i32_0, %c0_i32_1 : i32, i32, i32
  }
  func.func @transform_5(%arg0: i32) -> (i32, i32, i32) {
    %c0_i32 = arith.constant 0 : i32
    %c0_i32_0 = arith.constant 0 : i32
    %c0_i32_1 = arith.constant 0 : i32
    %c0_i32_2 = arith.constant 0 : i32
    return %c0_i32, %c0_i32_0, %c0_i32_1 : i32, i32, i32
  }
  func.func @transform_6(%arg0: i32) -> (i32, i32, i32) {
    %c0_i32 = arith.constant 0 : i32
    %c0_i32_0 = arith.constant 0 : i32
    %c0_i32_1 = arith.constant 0 : i32
    %c0_i32_2 = arith.constant 0 : i32
    return %c0_i32, %c0_i32_0, %c0_i32_1 : i32, i32, i32
  }
  func.func @transform_7(%arg0: i32) -> (i32, i32, i32) {
    %c0_i32 = arith.constant 0 : i32
    %c0_i32_0 = arith.constant 0 : i32
    %c0_i32_1 = arith.constant 0 : i32
    return %arg0, %c0_i32, %c0_i32_0 : i32, i32, i32
  }
}

</mosaic_0001>

<llo_original>
// kernel: tpu_custom_call.1
$region0: #{tpu_custom_call.1}
  #allocation0 [shape = 'u32[]', space=smem, size = 0x4, offset = 0x4, fixed_abs, tag = 'smem constant byte address 0x4 - core index']
  #allocation1 [shape = 'u32[144,128]{1,0:T(1,128)}', space=vmem, size = 0x12000, scoped, tag = 'internal scratch']
  #allocation2 [shape = 'bf16[32,178]{1,0:T(16,128)(2,1)}', space=vmem, size = 0x4000, scoped, tag = 'scratch operand']
  #allocation3 [shape = 'bf16[352,128]{1,0:T(16,128)(2,1)}', space=vmem, size = 0x16000, scoped, tag = 'scratch operand']
  %s0 = inlined_call_operand.hbm [shape: f32[2,32,128], index: 0, kind: input, shape index: {}]
  %s1 = inlined_call_operand.vmem [shape: bf16[6,32,96], index: 1, kind: input, shape index: {}]
  %s2 = inlined_call_operand.vmem [shape: f32[6,32,1], index: 2, kind: input, shape index: {}]
  %s3 = inlined_call_operand.vmem [shape: bf16[6,32,224], index: 3, kind: input, shape index: {}]
  %s4 = inlined_call_operand.vmem [shape: f32[6,32,1], index: 4, kind: input, shape index: {}]
  %s5 = inlined_call_operand.vmem [shape: bf16[6,32,352], index: 5, kind: input, shape index: {}]
  %s6 = inlined_call_operand.vmem [shape: f32[6,32,1], index: 6, kind: input, shape index: {}]
  %s7 = inlined_call_operand.hbm [shape: f32[2,32,128], index: 7, kind: output, shape index: {}]
  %s8 = sld [smem:[#allocation0]]
  $region65: #{tpu_custom_call.1} parent=0
    _
  %s10 = ssub.s32 1, %s8
  %s11 = scalar_select 0, %s10, %s8
  $region1: #{tpu_custom_call.1} parent=0
    #allocation4 [shape = 'u8[32768]{0}', space=vmem, size = 0x8000, scoped, tag = 'input window, operand 0']
    #allocation5 [shape = 's32[2]{0}', space=sflag, size = 0x8, scoped, tag = 'scoped memory for tpu_custom_call.1']
    #allocation6 [shape = 's32[2]{0}', space=sflag, size = 0x8, scoped, tag = 'scoped memory for tpu_custom_call.1']
    #allocation7 [shape = 'u8[32768]{0}', space=vmem, size = 0x8000, scoped, tag = 'output window, operand 0']
    %12 = vsyncpa [#allocation5], 0
    %s13 = scalar_lea.sflag [#allocation5], 1
    %14 = vsyncpa %s13, 0
    %15 = vsyncpa [#allocation6], 0
    %s16 = scalar_lea.sflag [#allocation6], 1
    %17 = vsyncpa %s16, 0
    loop: start=0, step=1, limit=4
    $region2: #{tpu_custom_call.1} parent=1 // loop_pre_header
      _
    $region3: #{tpu_custom_call.1} parent=1 // loop_header
      %s19 = sphi 0, %s23
      %p20 = scmp.ge.s32.totalorder %s19, 4
      %s29 = sphi 0, %s31
      %s32 = sphi 0, %s29
      %s33 = sphi 0, %s32
      %s49 = sphi 0, %s33
      %s53 = sphi 0, %s53
      %s55 = sphi 0, %s53
      %s56 = sphi 0, %s55
      %s70 = sphi 0, %s56
      %s74 = sphi 0, %s74
      %s76 = sphi 0, %s74
      %s77 = sphi 0, %s76
      %s91 = sphi 0, %s77
      %s95 = sphi 0, %s95
      %s97 = sphi 0, %s95
      %s98 = sphi 0, %s97
      %s112 = sphi 0, %s98
      %s116 = sphi 0, %s116
      %s118 = sphi 0, %s116
      %s119 = sphi 0, %s118
      %s133 = sphi 0, %s119
      %s137 = sphi 0, %s137
      %s139 = sphi 0, %s137
      %s140 = sphi 0, %s139
      %s154 = sphi 0, %s140
      %s158 = sphi 0, %s158
      %s160 = sphi 0, %s158
      %s161 = sphi 0, %s160
      %s175 = sphi 0, %s161
      %s181 = sphi 0, %s183
      %s184 = sphi 0, %s181
      %s185 = sphi 0, %s184
      %s201 = sphi 0, %s185
    $region4: #{tpu_custom_call.1} parent=1 // loop_header_branch
      %22 = sbr.rel (%p20) target = $region8
    $region5: #{tpu_custom_call.1} parent=1 // loop_body
      %s24 = ssub.s32 %s19, 1
      %s25 = ssub.s32 %s19, 2
      %s26 = sadd.s32 %s19, 1
      %s27 = ssub.s32 %s19, %s26
      %p28 = scmp.eq.s32.totalorder %s27, 0
      %s30 = sadd.s32 %s29, 1
      %s31 = scalar_select %p28, %s29, %s30
      %p34 = pneg %p28
      %p35 = scmp.eq.s32.totalorder %s19, 1
      %p36 = por %p34, %p35
      %p37 = scmp.ne.s32.totalorder %s29, %s32
      %p38 = scmp.eq.s32.totalorder %s19, 0
      %p39 = por %p37, %p38
      %p40 = scmp.ne.s32.totalorder %s29, %s32
      %p41 = scmp.eq.s32.totalorder %s24, 1
      %p42 = por %p40, %p41
      %p43 = scmp.ne.s32.totalorder %s32, %s33
      %p44 = scmp.eq.s32.totalorder %s24, 0
      %p45 = por %p43, %p44
      %p46 = scmp.ne.s32.totalorder %s32, %s33
      %p47 = scmp.eq.s32.totalorder %s25, 1
      %p48 = por %p46, %p47
      %p50 = scmp.ne.s32.totalorder %s33, %s49
      %p51 = scmp.eq.s32.totalorder %s25, 0
      %p52 = por %p50, %p51
      %s54 = sadd.s32 %s53, 1
      %p57 = scmp.eq.s32.totalorder %s19, 1
      %p58 = scmp.ne.s32.totalorder %s53, %s55
      %p59 = scmp.eq.s32.totalorder %s19, 0
      %p60 = por %p58, %p59
      %p61 = scmp.ne.s32.totalorder %s53, %s55
      %p62 = scmp.eq.s32.totalorder %s24, 1
      %p63 = por %p61, %p62
      %p64 = scmp.ne.s32.totalorder %s55, %s56
      %p65 = scmp.eq.s32.totalorder %s24, 0
      %p66 = por %p64, %p65
      %p67 = scmp.ne.s32.totalorder %s55, %s56
      %p68 = scmp.eq.s32.totalorder %s25, 1
      %p69 = por %p67, %p68
      %p71 = scmp.ne.s32.totalorder %s56, %s70
      %p72 = scmp.eq.s32.totalorder %s25, 0
      %p73 = por %p71, %p72
      %s75 = sadd.s32 %s74, 1
      %p78 = scmp.eq.s32.totalorder %s19, 1
      %p79 = scmp.ne.s32.totalorder %s74, %s76
      %p80 = scmp.eq.s32.totalorder %s19, 0
      %p81 = por %p79, %p80
      %p82 = scmp.ne.s32.totalorder %s74, %s76
      %p83 = scmp.eq.s32.totalorder %s24, 1
      %p84 = por %p82, %p83
      %p85 = scmp.ne.s32.totalorder %s76, %s77
      %p86 = scmp.eq.s32.totalorder %s24, 0
      %p87 = por %p85, %p86
      %p88 = scmp.ne.s32.totalorder %s76, %s77
      %p89 = scmp.eq.s32.totalorder %s25, 1
      %p90 = por %p88, %p89
      %p92 = scmp.ne.s32.totalorder %s77, %s91
      %p93 = scmp.eq.s32.totalorder %s25, 0
      %p94 = por %p92, %p93
      %s96 = sadd.s32 %s95, 1
      %p99 = scmp.eq.s32.totalorder %s19, 1
      %p100 = scmp.ne.s32.totalorder %s95, %s97
      %p101 = scmp.eq.s32.totalorder %s19, 0
      %p102 = por %p100, %p101
      %p103 = scmp.ne.s32.totalorder %s95, %s97
      %p104 = scmp.eq.s32.totalorder %s24, 1
      %p105 = por %p103, %p104
      %p106 = scmp.ne.s32.totalorder %s97, %s98
      %p107 = scmp.eq.s32.totalorder %s24, 0
      %p108 = por %p106, %p107
      %p109 = scmp.ne.s32.totalorder %s97, %s98
      %p110 = scmp.eq.s32.totalorder %s25, 1
      %p111 = por %p109, %p110
      %p113 = scmp.ne.s32.totalorder %s98, %s112
      %p114 = scmp.eq.s32.totalorder %s25, 0
      %p115 = por %p113, %p114
      %s117 = sadd.s32 %s116, 1
      %p120 = scmp.eq.s32.totalorder %s19, 1
      %p121 = scmp.ne.s32.totalorder %s116, %s118
      %p122 = scmp.eq.s32.totalorder %s19, 0
      %p123 = por %p121, %p122
      %p124 = scmp.ne.s32.totalorder %s116, %s118
      %p125 = scmp.eq.s32.totalorder %s24, 1
      %p126 = por %p124, %p125
      %p127 = scmp.ne.s32.totalorder %s118, %s119
      %p128 = scmp.eq.s32.totalorder %s24, 0
      %p129 = por %p127, %p128
      %p130 = scmp.ne.s32.totalorder %s118, %s119
      %p131 = scmp.eq.s32.totalorder %s25, 1
      %p132 = por %p130, %p131
      %p134 = scmp.ne.s32.totalorder %s119, %s133
      %p135 = scmp.eq.s32.totalorder %s25, 0
      %p136 = por %p134, %p135
      %s138 = sadd.s32 %s137, 1
      %p141 = scmp.eq.s32.totalorder %s19, 1
      %p142 = scmp.ne.s32.totalorder %s137, %s139
      %p143 = scmp.eq.s32.totalorder %s19, 0
      %p144 = por %p142, %p143
      %p145 = scmp.ne.s32.totalorder %s137, %s139
      %p146 = scmp.eq.s32.totalorder %s24, 1
      %p147 = por %p145, %p146
      %p148 = scmp.ne.s32.totalorder %s139, %s140
      %p149 = scmp.eq.s32.totalorder %s24, 0
      %p150 = por %p148, %p149
      %p151 = scmp.ne.s32.totalorder %s139, %s140
      %p152 = scmp.eq.s32.totalorder %s25, 1
      %p153 = por %p151, %p152
      %p155 = scmp.ne.s32.totalorder %s140, %s154
      %p156 = scmp.eq.s32.totalorder %s25, 0
      %p157 = por %p155, %p156
      %s159 = sadd.s32 %s158, 1
      %p162 = scmp.eq.s32.totalorder %s19, 1
      %p163 = scmp.ne.s32.totalorder %s158, %s160
      %p164 = scmp.eq.s32.totalorder %s19, 0
      %p165 = por %p163, %p164
      %p166 = scmp.ne.s32.totalorder %s158, %s160
      %p167 = scmp.eq.s32.totalorder %s24, 1
      %p168 = por %p166, %p167
      %p169 = scmp.ne.s32.totalorder %s160, %s161
      %p170 = scmp.eq.s32.totalorder %s24, 0
      %p171 = por %p169, %p170
      %p172 = scmp.ne.s32.totalorder %s160, %s161
      %p173 = scmp.eq.s32.totalorder %s25, 1
      %p174 = por %p172, %p173
      %p176 = scmp.ne.s32.totalorder %s161, %s175
      %p177 = scmp.eq.s32.totalorder %s25, 0
      %p178 = por %p176, %p177
      %s179 = ssub.s32 %s19, %s26
      %p180 = scmp.eq.s32.totalorder %s179, 0
      %s182 = sadd.s32 %s181, 1
      %s183 = scalar_select %p180, %s181, %s182
      %p186 = pneg %p180
      %p187 = scmp.eq.s32.totalorder %s19, 1
      %p188 = por %p186, %p187
      %p189 = scmp.ne.s32.totalorder %s181, %s184
      %p190 = scmp.eq.s32.totalorder %s19, 0
      %p191 = por %p189, %p190
      %p192 = scmp.ne.s32.totalorder %s181, %s184
      %p193 = scmp.eq.s32.totalorder %s24, 1
      %p194 = por %p192, %p193
      %p195 = scmp.ne.s32.totalorder %s184, %s185
      %p196 = scmp.eq.s32.totalorder %s24, 0
      %p197 = por %p195, %p196
      %p198 = scmp.ne.s32.totalorder %s184, %s185
      %p199 = scmp.eq.s32.totalorder %s25, 1
      %p200 = por %p198, %p199
      %p202 = scmp.ne.s32.totalorder %s185, %s201
      %p203 = scmp.eq.s32.totalorder %s25, 0
      %p204 = por %p202, %p203
      %p205 = scmp.le.s32.totalorder 1, %s19
      %p206 = scmp.lt.s32.totalorder %s19, 3
      %p207 = pnand %p205, %p206
      %p208 = pneg %p207
      // Predicated region
      $region9: #{tpu_custom_call.1} parent=5 // pred_check
        _
      $region10: #{tpu_custom_call.1} parent=5 // pred_check_branch
        %210 = sbr.rel (%p207) target = $region12
      $region11: #{tpu_custom_call.1} parent=5 // pred_region
        %s211 = ssub.s32 %s19, 1
        // Predicated region
        $region13: #{tpu_custom_call.1} parent=11 // pred_check
          %p212 = pneg %p66
        $region14: #{tpu_custom_call.1} parent=11 // pred_check_branch
          %214 = sbr.rel (%p212) target = $region16
        $region15: #{tpu_custom_call.1} parent=11 // pred_region
          _
        $region16: #{tpu_custom_call.1} parent=11 // pred_fallthru
          _
        // Predicated region
        $region17: #{tpu_custom_call.1} parent=11 // pred_check
          %p215 = pneg %p87
        $region18: #{tpu_custom_call.1} parent=11 // pred_check_branch
          %217 = sbr.rel (%p215) target = $region20
        $region19: #{tpu_custom_call.1} parent=11 // pred_region
          _
        $region20: #{tpu_custom_call.1} parent=11 // pred_fallthru
          _
        // Predicated region
        $region21: #{tpu_custom_call.1} parent=11 // pred_check
          %p218 = pneg %p108
        $region22: #{tpu_custom_call.1} parent=11 // pred_check_branch
          %220 = sbr.rel (%p218) target = $region24
        $region23: #{tpu_custom_call.1} parent=11 // pred_region
          _
        $region24: #{tpu_custom_call.1} parent=11 // pred_fallthru
          _
        // Predicated region
        $region25: #{tpu_custom_call.1} parent=11 // pred_check
          %p221 = pneg %p129
        $region26: #{tpu_custom_call.1} parent=11 // pred_check_branch
          %223 = sbr.rel (%p221) target = $region28
        $region27: #{tpu_custom_call.1} parent=11 // pred_region
          _
        $region28: #{tpu_custom_call.1} parent=11 // pred_fallthru
          _
        // Predicated region
        $region29: #{tpu_custom_call.1} parent=11 // pred_check
          %p224 = pneg %p150
        $region30: #{tpu_custom_call.1} parent=11 // pred_check_branch
          %226 = sbr.rel (%p224) target = $region32
        $region31: #{tpu_custom_call.1} parent=11 // pred_region
          _
        $region32: #{tpu_custom_call.1} parent=11 // pred_fallthru
          _
        // Predicated region
        $region33: #{tpu_custom_call.1} parent=11 // pred_check
          %p227 = pneg %p171
        $region34: #{tpu_custom_call.1} parent=11 // pred_check_branch
          %229 = sbr.rel (%p227) target = $region36
        $region35: #{tpu_custom_call.1} parent=11 // pred_region
          _
        $region36: #{tpu_custom_call.1} parent=11 // pred_fallthru
          _
      $region12: #{tpu_custom_call.1} parent=5 // pred_fallthru
        _
      %p230 = scmp.lt.s32.totalorder %s19, 2
      // Predicated region
      $region37: #{tpu_custom_call.1} parent=5 // pred_check
        %p231 = pneg %p230
      $region38: #{tpu_custom_call.1} parent=5 // pred_check_branch
        %233 = sbr.rel (%p231) target = $region40
      $region39: #{tpu_custom_call.1} parent=5 // pred_region
        // Predicated region
        $region41: #{tpu_custom_call.1} parent=39 // pred_check
          %p234 = pneg %p39
        $region42: #{tpu_custom_call.1} parent=39 // pred_check_branch
          %236 = sbr.rel (%p234) target = $region44
        $region43: #{tpu_custom_call.1} parent=39 // pred_region
          %s237 = sand.u32 %s29, 1
          %s238 = scalar_lea.sflag [#allocation5], %s237
          %s239 = sand.u32 %s29, 1
          %s240 = smul.addr %s239, 32
          %s241 = scalar_lea.vmem [#allocation4], %s240
          %s243 = ssub.s32 512, 512
          %244 = vsyncadd %s238, %s243
          %s245 = smul.addr %s19, 4
          %s246 = smul.addr %s245, 128
          %s247 = scalar_lea.hbm %s0, %s246
          %s248 = sshll.u32 %s241, 4
          %s249 = int_to_ptr.vmem [resolvable:$true] %s248
          %254 = dma.hbm_to_vmem [thread:$0]  %s247, 512, %s249, %s238, 128, 128, 8
        $region44: #{tpu_custom_call.1} parent=39 // pred_fallthru
          _
      $region40: #{tpu_custom_call.1} parent=5 // pred_fallthru
        _
      %p255 = scmp.le.s32.totalorder 1, %s19
      %p256 = scmp.lt.s32.totalorder %s19, 3
      %p257 = pnand %p255, %p256
      %p258 = pneg %p257
      // Predicated region
      $region45: #{tpu_custom_call.1} parent=5 // pred_check
        _
      $region46: #{tpu_custom_call.1} parent=5 // pred_check_branch
        %260 = sbr.rel (%p257) target = $region48
      $region47: #{tpu_custom_call.1} parent=5 // pred_region
        %s261 = ssub.s32 %s19, 1
        %s262 = sand.u32 %s32, 1
        %s263 = scalar_lea.sflag [#allocation5], %s262
        %s264 = sand.u32 %s32, 1
        %s265 = smul.addr %s264, 32
        %s266 = scalar_lea.vmem [#allocation4], %s265
        // Predicated region
        $region49: #{tpu_custom_call.1} parent=47 // pred_check
          %p267 = pneg %p45
        $region50: #{tpu_custom_call.1} parent=47 // pred_check_branch
          %269 = sbr.rel (%p267) target = $region52
        $region51: #{tpu_custom_call.1} parent=47 // pred_region
          %270 = dma.done %s263, 512
        $region52: #{tpu_custom_call.1} parent=47 // pred_fallthru
          _
        %s271 = sand.u32 %s32, 1
        %s272 = scalar_lea.sflag [#allocation5], %s271
        %s273 = sand.u32 %s32, 1
        %s274 = smul.addr %s273, 32
        %s275 = scalar_lea.vmem [#allocation4], %s274
        %p276 = pneg %p45
        %p277 = pneg %p42
        %p278 = pneg %p66
        %p279 = pneg %p63
        %p280 = pneg %p87
        %p281 = pneg %p84
        %p282 = pneg %p108
        %p283 = pneg %p105
        %p284 = pneg %p129
        %p285 = pneg %p126
        %p286 = pneg %p150
        %p287 = pneg %p147
        %p288 = pneg %p171
        %p289 = pneg %p168
        %p290 = pneg %p197
        %p291 = pneg %p194
        %s292 = sand.u32 %s184, 1
        %s293 = scalar_lea.sflag [#allocation6], %s292
        %s294 = sand.u32 %s184, 1
        %s295 = smul.addr %s294, 32
        %s296 = scalar_lea.vmem [#allocation7], %s295
        %vm298 = vcmask 203776
        %299 = vst.msk [vmem:[#allocation2] sm:$0xff] %vm298, 0
        %300 = vst.msk [vmem:[#allocation2 + $0x10] sm:$0xff] %vm298, 0
        %vm301 = vcmask 408776
        %302 = vst.msk [vmem:[#allocation2 + $0x8] sm:$0xff] %vm301, 0
        %303 = vst.msk [vmem:[#allocation2 + $0x18] sm:$0xff] %vm301, 0
        %v304 = vld [vmem:[%s266] sm:$0xff]
        %v305 = vld [vmem:[%s266 + $0x8] sm:$0xff]
        %v306 = vld [vmem:[%s266 + $0x10] sm:$0xff]
        %v307 = vld [vmem:[%s266 + $0x18] sm:$0xff]
        %vm308 = vcmp.gt.f32.partialorder %v304, 0.0
        %vm309 = vcmp.gt.f32.partialorder %v305, 0.0
        %vm310 = vcmp.gt.f32.partialorder %v306, 0.0
        %vm311 = vcmp.gt.f32.partialorder %v307, 0.0
        %v312 = vmul.f32 %v304, 0.1
        %v313 = vmul.f32 %v305, 0.1
        %v314 = vmul.f32 %v306, 0.1
        %v315 = vmul.f32 %v307, 0.1
        %v316 = vsel %vm308, %v304, %v312
        %v317 = vsel %vm309, %v305, %v313
        %v318 = vsel %vm310, %v306, %v314
        %v319 = vsel %vm311, %v307, %v315
        %v320 = vld [vmem:[%s1] sm:$0xf]
        %v321 = vld [vmem:[%s1 + $0x4] sm:$0xf]
        %v322 = vld [vmem:[%s1 + $0x8] sm:$0xf]
        %v323 = vld [vmem:[%s1 + $0xc] sm:$0xf]
        %v324 = vld [vmem:[%s2] sm:$0xff]
        %v325 = vld [vmem:[%s2 + $0x8] sm:$0xff]
        %v326 = vld [vmem:[%s2 + $0x10] sm:$0xff]
        %v327 = vld [vmem:[%s2 + $0x18] sm:$0xff]
        %v328 = vpack.c.bf16 %v317, %v316
        %v329 = vpack.c.bf16 %v319, %v318
        %332 = vrot.lane.b32.xlu0 %v328, 25
        %v333 = vpop.permute.xlu0 %332
        %334 = vrot.lane.b32.xlu0 %v329, 25
        %v335 = vpop.permute.xlu0 %334
        %vm338 = vcmask 1047752
        %339 = vst.msk [vmem:[#allocation2] sm:$0xff] %vm338, %v333
        %340 = vst.msk [vmem:[#allocation2 + $0x8] sm:$0xff] %vm298, %v333
        %341 = vst.msk [vmem:[#allocation2 + $0x10] sm:$0xff] %vm338, %v335
        %342 = vst.msk [vmem:[#allocation2 + $0x18] sm:$0xff] %vm298, %v335
        %v343 = vld [vmem:[#allocation2] sm:$0xff]
        %v344 = vld [vmem:[#allocation2 + $0x8] sm:$0xff]
        %v345 = vld [vmem:[#allocation2 + $0x10] sm:$0xff]
        %v346 = vld [vmem:[#allocation2 + $0x18] sm:$0xff]
        %351 = vrot.lane.b32.xlu0 %v343, 104
        %v352 = vpop.permute.xlu0 %351
        %353 = vrot.lane.b32.xlu0 %v344, 104
        %v354 = vpop.permute.xlu0 %353
        %355 = vrot.lane.b32.xlu0 %v345, 104
        %v356 = vpop.permute.xlu0 %355
        %357 = vrot.lane.b32.xlu0 %v346, 104
        %v358 = vpop.permute.xlu0 %357
        %vm359 = vcmask 850944
        %v360 = vsel %vm359, %v352, %v354
        %v361 = vsel %vm359, %v356, %v358
        %364 = vst [vmem:[#allocation3] sm:$0xff] %v360
        %365 = vst [vmem:[#allocation3 + $0x8] sm:$0xff] %v361
        %v366 = vld [vmem:[#allocation2] sm:$0xff]
        %v367 = vld [vmem:[#allocation2 + $0x8] sm:$0xff]
        %v368 = vld [vmem:[#allocation2 + $0x10] sm:$0xff]
        %v369 = vld [vmem:[#allocation2 + $0x18] sm:$0xff]
        %374 = vrot.lane.b32.xlu0 %v366, 103
        %v375 = vpop.permute.xlu0 %374
        %376 = vrot.lane.b32.xlu0 %v367, 103
        %v377 = vpop.permute.xlu0 %376
        %378 = vrot.lane.b32.xlu0 %v368, 103
        %v379 = vpop.permute.xlu0 %378
        %380 = vrot.lane.b32.xlu0 %v369, 103
        %v381 = vpop.permute.xlu0 %380
        %vm382 = vcmask 842752
        %v383 = vsel %vm382, %v375, %v377
        %v384 = vsel %vm382, %v379, %v381
        %387 = vst [vmem:[#allocation3 + $0x10] sm:$0xff] %v383
        %388 = vst [vmem:[#allocation3 + $0x18] sm:$0xff] %v384
        %v389 = vld [vmem:[#allocation2] sm:$0xff]
        %v390 = vld [vmem:[#allocation2 + $0x8] sm:$0xff]
        %v391 = vld [vmem:[#allocation2 + $0x10] sm:$0xff]
        %v392 = vld [vmem:[#allocation2 + $0x18] sm:$0xff]
        %397 = vrot.lane.b32.xlu0 %v389, 102
        %v398 = vpop.permute.xlu0 %397
        %399 = vrot.lane.b32.xlu0 %v390, 102
        %v400 = vpop.permute.xlu0 %399
        %401 = vrot.lane.b32.xlu0 %v391, 102
        %v402 = vpop.permute.xlu0 %401
        %403 = vrot.lane.b32.xlu0 %v392, 102
        %v404 = vpop.permute.xlu0 %403
        %vm405 = vcmask 834560
        %v406 = vsel %vm405, %v398, %v400
        %v407 = vsel %vm405, %v402, %v404
        %410 = vst [vmem:[#allocation3 + $0x20] sm:$0xff] %v406
        %411 = vst [vmem:[#allocation3 + $0x28] sm:$0xff] %v407
        %v412 = vld [vmem:[#allocation3] sm:$0xff]
        %v413 = vld [vmem:[#allocation3 + $0x8] sm:$0xff]
        %v414 = vld [vmem:[#allocation3 + $0x10] sm:$0xff]
        %v415 = vld [vmem:[#allocation3 + $0x18] sm:$0xff]
        %v416 = vld [vmem:[#allocation3 + $0x20] sm:$0xff]
        %v417 = vld [vmem:[#allocation3 + $0x28] sm:$0xff]
        %419 = vset.pattern.permute.xlu0 0
        %420 = vperm.xlu0 %419, %v324
        %v421 = vpop.permute.xlu0 %420
        %424 = vset.pattern.permute.xlu0 0
        %425 = vperm.xlu0 %424, %v325
        %v426 = vpop.permute.xlu0 %425
        %429 = vset.pattern.permute.xlu0 0
        %430 = vperm.xlu0 %429, %v326
        %v431 = vpop.permute.xlu0 %430
        %434 = vset.pattern.permute.xlu0 0
        %435 = vperm.xlu0 %434, %v327
        %v436 = vpop.permute.xlu0 %435
        %v442 = vunpack.c.l.b16 %v320
        %v443 = vunpack.c.l.b16 %v321
        %v444 = vunpack.c.l.b16 %v322
        %v445 = vunpack.c.l.b16 %v323
        %v446 = vpack.c.b16 %v443, %v442
        %v447 = vpack.c.b16 %v445, %v444
        %vm448 = vcmask 785408
        %v450 = vsel %vm448, %v446, 0
        %v453 = vsel %vm448, %v447, 0
        %455 = vmatprep.subr.bf16.mxu0 0
        %456 = vmatpush1.bf16.msra.mxu0 %v412
        %457 = vmatprep.subr.bf16.mxu0 0
        %458 = vmatpush1.bf16.msra.mxu0 %v413
        %459 = vmatprep.subr.bf16.mxu0 0
        %460 = vmatpush1.bf16.msra.mxu0 %v414
        %461 = vmatprep.subr.bf16.mxu0 0
        %462 = vmatpush1.bf16.msra.mxu0 %v415
        %463 = vmatprep.subr.bf16.mxu0 0
        %464 = vmatpush1.bf16.msra.mxu0 %v416
        %465 = vmatprep.subr.bf16.mxu0 0
        %466 = vmatpush1.bf16.msra.mxu0 %v417
        %467 = vmatprep.subr.bf16.mxu0 0
        %468 = vmatpush1.bf16.msra.mxu0 0
        %469 = vmatprep.subr.bf16.mxu0 0
        %470 = vmatpush1.bf16.msra.mxu0 0
        %471 = vmatprep.subr.bf16.mxu0 0
        %472 = vmatpush1.bf16.msra.mxu0 0
        %473 = vmatprep.subr.bf16.mxu0 0
        %474 = vmatpush1.bf16.msra.mxu0 0
        %475 = vmatprep.subr.bf16.mxu0 0
        %476 = vmatpush1.bf16.msra.mxu0 0
        %477 = vmatprep.subr.bf16.mxu0 0
        %478 = vmatpush1.bf16.msra.mxu0 0
        %479 = vmatprep.subr.bf16.mxu0 0
        %480 = vmatpush1.bf16.msra.mxu0 0
        %481 = vmatprep.subr.bf16.mxu0 0
        %482 = vmatpush1.bf16.msra.mxu0 0
        %483 = vmatprep.subr.bf16.mxu0 0
        %484 = vmatpush1.bf16.msra.mxu0 0
        %485 = vmatprep.subr.bf16.mxu0 0
        %486 = vmatpush1.bf16.msra.mxu0 0
        %487 = vmatprep.mubr.bf16.mxu0 0
        %488 = vmatmul.mubr.bf16.gmra.mrb[0].mxu0 %v450
        %v489 = vpop.f32.mrb[0].mxu0
        %v490 = vadd.f32 %v421, %v489
        %v491 = vpop.f32.mrb[0].mxu0
        %v492 = vpop.f32.mrb[0].mxu0
        %v493 = vadd.f32 %v426, %v492
        %v494 = vpop.f32.mrb[0].mxu0
        %495 = vmatprep.mubr.bf16.mxu0 0
        %496 = vmatmul.mubr.bf16.gmra.mrb[0].mxu0 %v453
        %v497 = vpop.f32.mrb[0].mxu0
        %v498 = vadd.f32 %v431, %v497
        %v499 = vpop.f32.mrb[0].mxu0
        %v500 = vpop.f32.mrb[0].mxu0
        %v501 = vadd.f32 %v436, %v500
        %v502 = vpop.f32.mrb[0].mxu0
        %503 = vdwg.mxu0
        %vm504 = vcmp.gt.f32.partialorder %v490, 0.0
        %vm505 = vcmp.gt.f32.partialorder %v493, 0.0
        %vm506 = vcmp.gt.f32.partialorder %v498, 0.0
        %vm507 = vcmp.gt.f32.partialorder %v501, 0.0
        %v508 = vmul.f32 %v490, 0.1
        %v509 = vmul.f32 %v493, 0.1
        %v510 = vmul.f32 %v498, 0.1
        %v511 = vmul.f32 %v501, 0.1
        %v512 = vsel %vm504, %v490, %v508
        %v513 = vsel %vm505, %v493, %v509
        %v514 = vsel %vm506, %v498, %v510
        %v515 = vsel %vm507, %v501, %v511
        %s516 = scalar_lea.vmem %s1, 16
        %v517 = vld [vmem:[%s516] sm:$0xf]
        %v518 = vld [vmem:[%s516 + $0x4] sm:$0xf]
        %v519 = vld [vmem:[%s516 + $0x8] sm:$0xf]
        %v520 = vld [vmem:[%s516 + $0xc] sm:$0xf]
        %s521 = scalar_lea.vmem %s2, 32
        %v522 = vld [vmem:[%s521] sm:$0xff]
        %v523 = vld [vmem:[%s521 + $0x8] sm:$0xff]
        %v524 = vld [vmem:[%s521 + $0x10] sm:$0xff]
        %v525 = vld [vmem:[%s521 + $0x18] sm:$0xff]
        %v526 = vpack.c.bf16 %v513, %v512
        %v527 = vpack.c.bf16 %v515, %v514
        %530 = vrot.lane.b32.xlu0 %v526, 25
        %v531 = vpop.permute.xlu0 %530
        %532 = vrot.lane.b32.xlu0 %v527, 25
        %v533 = vpop.permute.xlu0 %532
        %536 = vst.msk [vmem:[#allocation2] sm:$0xff] %vm338, %v531
        %537 = vst.msk [vmem:[#allocation2 + $0x8] sm:$0xff] %vm298, %v531
        %538 = vst.msk [vmem:[#allocation2 + $0x10] sm:$0xff] %vm338, %v533
        %539 = vst.msk [vmem:[#allocation2 + $0x18] sm:$0xff] %vm298, %v533
        %v540 = vld [vmem:[#allocation2] sm:$0xff]
        %v541 = vld [vmem:[#allocation2 + $0x8] sm:$0xff]
        %v542 = vld [vmem:[#allocation2 + $0x10] sm:$0xff]
        %v543 = vld [vmem:[#allocation2 + $0x18] sm:$0xff]
        %548 = vrot.lane.b32.xlu0 %v540, 104
        %v549 = vpop.permute.xlu0 %548
        %550 = vrot.lane.b32.xlu0 %v541, 104
        %v551 = vpop.permute.xlu0 %550
        %552 = vrot.lane.b32.xlu0 %v542, 104
        %v553 = vpop.permute.xlu0 %552
        %554 = vrot.lane.b32.xlu0 %v543, 104
        %v555 = vpop.permute.xlu0 %554
        %v556 = vsel %vm359, %v549, %v551
        %v557 = vsel %vm359, %v553, %v555
        %560 = vst [vmem:[#allocation3] sm:$0xff] %v556
        %561 = vst [vmem:[#allocation3 + $0x8] sm:$0xff] %v557
        %v562 = vld [vmem:[#allocation2] sm:$0xff]
        %v563 = vld [vmem:[#allocation2 + $0x8] sm:$0xff]
        %v564 = vld [vmem:[#allocation2 + $0x10] sm:$0xff]
        %v565 = vld [vmem:[#allocation2 + $0x18] sm:$0xff]
        %570 = vrot.lane.b32.xlu0 %v562, 103
        %v571 = vpop.permute.xlu0 %570
        %572 = vrot.lane.b32.xlu0 %v563, 103
        %v573 = vpop.permute.xlu0 %572
        %574 = vrot.lane.b32.xlu0 %v564, 103
        %v575 = vpop.permute.xlu0 %574
        %576 = vrot.lane.b32.xlu0 %v565, 103
        %v577 = vpop.permute.xlu0 %576
        %v578 = vsel %vm382, %v571, %v573
        %v579 = vsel %vm382, %v575, %v577
        %582 = vst [vmem:[#allocation3 + $0x10] sm:$0xff] %v578
        %583 = vst [vmem:[#allocation3 + $0x18] sm:$0xff] %v579
        %v584 = vld [vmem:[#allocation2] sm:$0xff]
        %v585 = vld [vmem:[#allocation2 + $0x8] sm:$0xff]
        %v586 = vld [vmem:[#allocation2 + $0x10] sm:$0xff]
        %v587 = vld [vmem:[#allocation2 + $0x18] sm:$0xff]
        %592 = vrot.lane.b32.xlu0 %v584, 102
        %v593 = vpop.permute.xlu0 %592
        %594 = vrot.lane.b32.xlu0 %v585, 102
        %v595 = vpop.permute.xlu0 %594
        %596 = vrot.lane.b32.xlu0 %v586, 102
        %v597 = vpop.permute.xlu0 %596
        %598 = vrot.lane.b32.xlu0 %v587, 102
        %v599 = vpop.permute.xlu0 %598
        %v600 = vsel %vm405, %v593, %v595
        %v601 = vsel %vm405, %v597, %v599
        %604 = vst [vmem:[#allocation3 + $0x20] sm:$0xff] %v600
        %605 = vst [vmem:[#allocation3 + $0x28] sm:$0xff] %v601
        %v606 = vld [vmem:[#allocation3] sm:$0xff]
        %v607 = vld [vmem:[#allocation3 + $0x8] sm:$0xff]
        %v608 = vld [vmem:[#allocation3 + $0x10] sm:$0xff]
        %v609 = vld [vmem:[#allocation3 + $0x18] sm:$0xff]
        %v610 = vld [vmem:[#allocation3 + $0x20] sm:$0xff]
        %v611 = vld [vmem:[#allocation3 + $0x28] sm:$0xff]
        %613 = vset.pattern.permute.xlu0 0
        %614 = vperm.xlu0 %613, %v522
        %v615 = vpop.permute.xlu0 %614
        %618 = vset.pattern.permute.xlu0 0
        %619 = vperm.xlu0 %618, %v523
        %v620 = vpop.permute.xlu0 %619
        %623 = vset.pattern.permute.xlu0 0
        %624 = vperm.xlu0 %623, %v524
        %v625 = vpop.permute.xlu0 %624
        %628 = vset.pattern.permute.xlu0 0
        %629 = vperm.xlu0 %628, %v525
        %v630 = vpop.permute.xlu0 %629
        %v636 = vunpack.c.l.b16 %v517
        %v637 = vunpack.c.l.b16 %v518
        %v638 = vunpack.c.l.b16 %v519
        %v639 = vunpack.c.l.b16 %v520
        %v640 = vpack.c.b16 %v637, %v636
        %v641 = vpack.c.b16 %v639, %v638
        %v643 = vsel %vm448, %v640, 0
        %v646 = vsel %vm448, %v641, 0
        %648 = vmatprep.subr.bf16.mxu0 0
        %649 = vmatpush1.bf16.msra.mxu0 %v606
        %650 = vmatprep.subr.bf16.mxu0 0
        %651 = vmatpush1.bf16.msra.mxu0 %v607
        %652 = vmatprep.subr.bf16.mxu0 0
        %653 = vmatpush1.bf16.msra.mxu0 %v608
        %654 = vmatprep.subr.bf16.mxu0 0
        %655 = vmatpush1.bf16.msra.mxu0 %v609
        %656 = vmatprep.subr.bf16.mxu0 0
        %657 = vmatpush1.bf16.msra.mxu0 %v610
        %658 = vmatprep.subr.bf16.mxu0 0
        %659 = vmatpush1.bf16.msra.mxu0 %v611
        %660 = vmatprep.subr.bf16.mxu0 0
        %661 = vmatpush1.bf16.msra.mxu0 0
        %662 = vmatprep.subr.bf16.mxu0 0
        %663 = vmatpush1.bf16.msra.mxu0 0
        %664 = vmatprep.subr.bf16.mxu0 0
        %665 = vmatpush1.bf16.msra.mxu0 0
        %666 = vmatprep.subr.bf16.mxu0 0
        %667 = vmatpush1.bf16.msra.mxu0 0
        %668 = vmatprep.subr.bf16.mxu0 0
        %669 = vmatpush1.bf16.msra.mxu0 0
        %670 = vmatprep.subr.bf16.mxu0 0
        %671 = vmatpush1.bf16.msra.mxu0 0
        %672 = vmatprep.subr.bf16.mxu0 0
        %673 = vmatpush1.bf16.msra.mxu0 0
        %674 = vmatprep.subr.bf16.mxu0 0
        %675 = vmatpush1.bf16.msra.mxu0 0
        %676 = vmatprep.subr.bf16.mxu0 0
        %677 = vmatpush1.bf16.msra.mxu0 0
        %678 = vmatprep.subr.bf16.mxu0 0
        %679 = vmatpush1.bf16.msra.mxu0 0
        %680 = vmatprep.mubr.bf16.mxu0 0
        %681 = vmatmul.mubr.bf16.gmra.mrb[0].mxu0 %v643
        %v682 = vpop.f32.mrb[0].mxu0
        %v683 = vadd.f32 %v615, %v682
        %v684 = vpop.f32.mrb[0].mxu0
        %v685 = vpop.f32.mrb[0].mxu0
        %v686 = vadd.f32 %v620, %v685
        %v687 = vpop.f32.mrb[0].mxu0
        %688 = vmatprep.mubr.bf16.mxu0 0
        %689 = vmatmul.mubr.bf16.gmra.mrb[0].mxu0 %v646
        %v690 = vpop.f32.mrb[0].mxu0
        %v691 = vadd.f32 %v625, %v690
        %v692 = vpop.f32.mrb[0].mxu0
        %v693 = vpop.f32.mrb[0].mxu0
        %v694 = vadd.f32 %v630, %v693
        %v695 = vpop.f32.mrb[0].mxu0
        %696 = vdwg.mxu0
        %v697 = vadd.f32 %v683, %v304
        %v698 = vadd.f32 %v686, %v305
        %v699 = vadd.f32 %v691, %v306
        %v700 = vadd.f32 %v694, %v307
        %vm701 = vcmp.gt.f32.partialorder %v697, 0.0
        %vm702 = vcmp.gt.f32.partialorder %v698, 0.0
        %vm703 = vcmp.gt.f32.partialorder %v699, 0.0
        %vm704 = vcmp.gt.f32.partialorder %v700, 0.0
        %v705 = vmul.f32 %v697, 0.1
        %v706 = vmul.f32 %v698, 0.1
        %v707 = vmul.f32 %v699, 0.1
        %v708 = vmul.f32 %v700, 0.1
        %v709 = vsel %vm701, %v697, %v705
        %v710 = vsel %vm702, %v698, %v706
        %v711 = vsel %vm703, %v699, %v707
        %v712 = vsel %vm704, %v700, %v708
        %s713 = scalar_lea.vmem %s1, 32
        %v714 = vld [vmem:[%s713] sm:$0xf]
        %v715 = vld [vmem:[%s713 + $0x4] sm:$0xf]
        %v716 = vld [vmem:[%s713 + $0x8] sm:$0xf]
        %v717 = vld [vmem:[%s713 + $0xc] sm:$0xf]
        %s718 = scalar_lea.vmem %s2, 64
        %v719 = vld [vmem:[%s718] sm:$0xff]
        %v720 = vld [vmem:[%s718 + $0x8] sm:$0xff]
        %v721 = vld [vmem:[%s718 + $0x10] sm:$0xff]
        %v722 = vld [vmem:[%s718 + $0x18] sm:$0xff]
        %v723 = vpack.c.bf16 %v710, %v709
        %v724 = vpack.c.bf16 %v712, %v711
        %727 = vrot.lane.b32.xlu0 %v723, 25
        %v728 = vpop.permute.xlu0 %727
        %729 = vrot.lane.b32.xlu0 %v724, 25
        %v730 = vpop.permute.xlu0 %729
        %733 = vst.msk [vmem:[#allocation2] sm:$0xff] %vm338, %v728
        %734 = vst.msk [vmem:[#allocation2 + $0x8] sm:$0xff] %vm298, %v728
        %735 = vst.msk [vmem:[#allocation2 + $0x10] sm:$0xff] %vm338, %v730
        %736 = vst.msk [vmem:[#allocation2 + $0x18] sm:$0xff] %vm298, %v730
        %v737 = vld [vmem:[#allocation2] sm:$0xff]
        %v738 = vld [vmem:[#allocation2 + $0x8] sm:$0xff]
        %v739 = vld [vmem:[#allocation2 + $0x10] sm:$0xff]
        %v740 = vld [vmem:[#allocation2 + $0x18] sm:$0xff]
        %745 = vrot.lane.b32.xlu0 %v737, 106
        %v746 = vpop.permute.xlu0 %745
        %747 = vrot.lane.b32.xlu0 %v738, 106
        %v748 = vpop.permute.xlu0 %747
        %749 = vrot.lane.b32.xlu0 %v739, 106
        %v750 = vpop.permute.xlu0 %749
        %751 = vrot.lane.b32.xlu0 %v740, 106
        %v752 = vpop.permute.xlu0 %751
        %vm753 = vcmask 867328
        %v754 = vsel %vm753, %v746, %v748
        %v755 = vsel %vm753, %v750, %v752
        %758 = vst [vmem:[#allocation3] sm:$0xff] %v754
        %759 = vst [vmem:[#allocation3 + $0x8] sm:$0xff] %v755
        %v760 = vld [vmem:[#allocation2] sm:$0xff]
        %v761 = vld [vmem:[#allocation2 + $0x8] sm:$0xff]
        %v762 = vld [vmem:[#allocation2 + $0x10] sm:$0xff]
        %v763 = vld [vmem:[#allocation2 + $0x18] sm:$0xff]
        %768 = vrot.lane.b32.xlu0 %v760, 103
        %v769 = vpop.permute.xlu0 %768
        %770 = vrot.lane.b32.xlu0 %v761, 103
        %v771 = vpop.permute.xlu0 %770
        %772 = vrot.lane.b32.xlu0 %v762, 103
        %v773 = vpop.permute.xlu0 %772
        %774 = vrot.lane.b32.xlu0 %v763, 103
        %v775 = vpop.permute.xlu0 %774
        %v776 = vsel %vm382, %v769, %v771
        %v777 = vsel %vm382, %v773, %v775
        %780 = vst [vmem:[#allocation3 + $0x10] sm:$0xff] %v776
        %781 = vst [vmem:[#allocation3 + $0x18] sm:$0xff] %v777
        %v782 = vld [vmem:[#allocation2] sm:$0xff]
        %v783 = vld [vmem:[#allocation2 + $0x8] sm:$0xff]
        %v784 = vld [vmem:[#allocation2 + $0x10] sm:$0xff]
        %v785 = vld [vmem:[#allocation2 + $0x18] sm:$0xff]
        %790 = vrot.lane.b32.xlu0 %v782, 100
        %v791 = vpop.permute.xlu0 %790
        %792 = vrot.lane.b32.xlu0 %v783, 100
        %v793 = vpop.permute.xlu0 %792
        %794 = vrot.lane.b32.xlu0 %v784, 100
        %v795 = vpop.permute.xlu0 %794
        %796 = vrot.lane.b32.xlu0 %v785, 100
        %v797 = vpop.permute.xlu0 %796
        %vm798 = vcmask 818176
        %v799 = vsel %vm798, %v791, %v793
        %v800 = vsel %vm798, %v795, %v797
        %803 = vst [vmem:[#allocation3 + $0x20] sm:$0xff] %v799
        %804 = vst [vmem:[#allocation3 + $0x28] sm:$0xff] %v800
        %v805 = vld [vmem:[#allocation3] sm:$0xff]
        %v806 = vld [vmem:[#allocation3 + $0x8] sm:$0xff]
        %v807 = vld [vmem:[#allocation3 + $0x10] sm:$0xff]
        %v808 = vld [vmem:[#allocation3 + $0x18] sm:$0xff]
        %v809 = vld [vmem:[#allocation3 + $0x20] sm:$0xff]
        %v810 = vld [vmem:[#allocation3 + $0x28] sm:$0xff]
        %812 = vset.pattern.permute.xlu0 0
        %813 = vperm.xlu0 %812, %v719
        %v814 = vpop.permute.xlu0 %813
        %817 = vset.pattern.permute.xlu0 0
        %818 = vperm.xlu0 %817, %v720
        %v819 = vpop.permute.xlu0 %818
        %822 = vset.pattern.permute.xlu0 0
        %823 = vperm.xlu0 %822, %v721
        %v824 = vpop.permute.xlu0 %823
        %827 = vset.pattern.permute.xlu0 0
        %828 = vperm.xlu0 %827, %v722
        %v829 = vpop.permute.xlu0 %828
        %v835 = vunpack.c.l.b16 %v714
        %v836 = vunpack.c.l.b16 %v715
        %v837 = vunpack.c.l.b16 %v716
        %v838 = vunpack.c.l.b16 %v717
        %v839 = vpack.c.b16 %v836, %v835
        %v840 = vpack.c.b16 %v838, %v837
        %v842 = vsel %vm448, %v839, 0
        %v845 = vsel %vm448, %v840, 0
        %847 = vmatprep.subr.bf16.mxu0 0
        %848 = vmatpush1.bf16.msra.mxu0 %v805
        %849 = vmatprep.subr.bf16.mxu0 0
        %850 = vmatpush1.bf16.msra.mxu0 %v806
        %851 = vmatprep.subr.bf16.mxu0 0
        %852 = vmatpush1.bf16.msra.mxu0 %v807
        %853 = vmatprep.subr.bf16.mxu0 0
        %854 = vmatpush1.bf16.msra.mxu0 %v808
        %855 = vmatprep.subr.bf16.mxu0 0
        %856 = vmatpush1.bf16.msra.mxu0 %v809
        %857 = vmatprep.subr.bf16.mxu0 0
        %858 = vmatpush1.bf16.msra.mxu0 %v810
        %859 = vmatprep.subr.bf16.mxu0 0
        %860 = vmatpush1.bf16.msra.mxu0 0
        %861 = vmatprep.subr.bf16.mxu0 0
        %862 = vmatpush1.bf16.msra.mxu0 0
        %863 = vmatprep.subr.bf16.mxu0 0
        %864 = vmatpush1.bf16.msra.mxu0 0
        %865 = vmatprep.subr.bf16.mxu0 0
        %866 = vmatpush1.bf16.msra.mxu0 0
        %867 = vmatprep.subr.bf16.mxu0 0
        %868 = vmatpush1.bf16.msra.mxu0 0
        %869 = vmatprep.subr.bf16.mxu0 0
        %870 = vmatpush1.bf16.msra.mxu0 0
        %871 = vmatprep.subr.bf16.mxu0 0
        %872 = vmatpush1.bf16.msra.mxu0 0
        %873 = vmatprep.subr.bf16.mxu0 0
        %874 = vmatpush1.bf16.msra.mxu0 0
        %875 = vmatprep.subr.bf16.mxu0 0
        %876 = vmatpush1.bf16.msra.mxu0 0
        %877 = vmatprep.subr.bf16.mxu0 0
        %878 = vmatpush1.bf16.msra.mxu0 0
        %879 = vmatprep.mubr.bf16.mxu0 0
        %880 = vmatmul.mubr.bf16.gmra.mrb[0].mxu0 %v842
        %v881 = vpop.f32.mrb[0].mxu0
        %v882 = vadd.f32 %v814, %v881
        %v883 = vpop.f32.mrb[0].mxu0
        %v884 = vpop.f32.mrb[0].mxu0
        %v885 = vadd.f32 %v819, %v884
        %v886 = vpop.f32.mrb[0].mxu0
        %887 = vmatprep.mubr.bf16.mxu0 0
        %888 = vmatmul.mubr.bf16.gmra.mrb[0].mxu0 %v845
        %v889 = vpop.f32.mrb[0].mxu0
        %v890 = vadd.f32 %v824, %v889
        %v891 = vpop.f32.mrb[0].mxu0
        %v892 = vpop.f32.mrb[0].mxu0
        %v893 = vadd.f32 %v829, %v892
        %v894 = vpop.f32.mrb[0].mxu0
        %895 = vdwg.mxu0
        %vm896 = vcmp.gt.f32.partialorder %v882, 0.0
        %vm897 = vcmp.gt.f32.partialorder %v885, 0.0
        %vm898 = vcmp.gt.f32.partialorder %v890, 0.0
        %vm899 = vcmp.gt.f32.partialorder %v893, 0.0
        %v900 = vmul.f32 %v882, 0.1
        %v901 = vmul.f32 %v885, 0.1
        %v902 = vmul.f32 %v890, 0.1
        %v903 = vmul.f32 %v893, 0.1
        %v904 = vsel %vm896, %v882, %v900
        %v905 = vsel %vm897, %v885, %v901
        %v906 = vsel %vm898, %v890, %v902
        %v907 = vsel %vm899, %v893, %v903
        %s908 = scalar_lea.vmem %s1, 48
        %v909 = vld [vmem:[%s908] sm:$0xf]
        %v910 = vld [vmem:[%s908 + $0x4] sm:$0xf]
        %v911 = vld [vmem:[%s908 + $0x8] sm:$0xf]
        %v912 = vld [vmem:[%s908 + $0xc] sm:$0xf]
        %s913 = scalar_lea.vmem %s2, 96
        %v914 = vld [vmem:[%s913] sm:$0xff]
        %v915 = vld [vmem:[%s913 + $0x8] sm:$0xff]
        %v916 = vld [vmem:[%s913 + $0x10] sm:$0xff]
        %v917 = vld [vmem:[%s913 + $0x18] sm:$0xff]
        %v918 = vpack.c.bf16 %v905, %v904
        %v919 = vpack.c.bf16 %v907, %v906
        %922 = vrot.lane.b32.xlu0 %v918, 25
        %v923 = vpop.permute.xlu0 %922
        %924 = vrot.lane.b32.xlu0 %v919, 25
        %v925 = vpop.permute.xlu0 %924
        %928 = vst.msk [vmem:[#allocation2] sm:$0xff] %vm338, %v923
        %929 = vst.msk [vmem:[#allocation2 + $0x8] sm:$0xff] %vm298, %v923
        %930 = vst.msk [vmem:[#allocation2 + $0x10] sm:$0xff] %vm338, %v925
        %931 = vst.msk [vmem:[#allocation2 + $0x18] sm:$0xff] %vm298, %v925
        %v932 = vld [vmem:[#allocation2] sm:$0xff]
        %v933 = vld [vmem:[#allocation2 + $0x8] sm:$0xff]
        %v934 = vld [vmem:[#allocation2 + $0x10] sm:$0xff]
        %v935 = vld [vmem:[#allocation2 + $0x18] sm:$0xff]
        %940 = vrot.lane.b32.xlu0 %v932, 104
        %v941 = vpop.permute.xlu0 %940
        %942 = vrot.lane.b32.xlu0 %v933, 104
        %v943 = vpop.permute.xlu0 %942
        %944 = vrot.lane.b32.xlu0 %v934, 104
        %v945 = vpop.permute.xlu0 %944
        %946 = vrot.lane.b32.xlu0 %v935, 104
        %v947 = vpop.permute.xlu0 %946
        %v948 = vsel %vm359, %v941, %v943
        %v949 = vsel %vm359, %v945, %v947
        %952 = vst [vmem:[#allocation3] sm:$0xff] %v948
        %953 = vst [vmem:[#allocation3 + $0x8] sm:$0xff] %v949
        %v954 = vld [vmem:[#allocation2] sm:$0xff]
        %v955 = vld [vmem:[#allocation2 + $0x8] sm:$0xff]
        %v956 = vld [vmem:[#allocation2 + $0x10] sm:$0xff]
        %v957 = vld [vmem:[#allocation2 + $0x18] sm:$0xff]
        %962 = vrot.lane.b32.xlu0 %v954, 103
        %v963 = vpop.permute.xlu0 %962
        %964 = vrot.lane.b32.xlu0 %v955, 103
        %v965 = vpop.permute.xlu0 %964
        %966 = vrot.lane.b32.xlu0 %v956, 103
        %v967 = vpop.permute.xlu0 %966
        %968 = vrot.lane.b32.xlu0 %v957, 103
        %v969 = vpop.permute.xlu0 %968
        %v970 = vsel %vm382, %v963, %v965
        %v971 = vsel %vm382, %v967, %v969
        %974 = vst [vmem:[#allocation3 + $0x10] sm:$0xff] %v970
        %975 = vst [vmem:[#allocation3 + $0x18] sm:$0xff] %v971
        %v976 = vld [vmem:[#allocation2] sm:$0xff]
        %v977 = vld [vmem:[#allocation2 + $0x8] sm:$0xff]
        %v978 = vld [vmem:[#allocation2 + $0x10] sm:$0xff]
        %v979 = vld [vmem:[#allocation2 + $0x18] sm:$0xff]
        %984 = vrot.lane.b32.xlu0 %v976, 102
        %v985 = vpop.permute.xlu0 %984
        %986 = vrot.lane.b32.xlu0 %v977, 102
        %v987 = vpop.permute.xlu0 %986
        %988 = vrot.lane.b32.xlu0 %v978, 102
        %v989 = vpop.permute.xlu0 %988
        %990 = vrot.lane.b32.xlu0 %v979, 102
        %v991 = vpop.permute.xlu0 %990
        %v992 = vsel %vm405, %v985, %v987
        %v993 = vsel %vm405, %v989, %v991
        %996 = vst [vmem:[#allocation3 + $0x20] sm:$0xff] %v992
        %997 = vst [vmem:[#allocation3 + $0x28] sm:$0xff] %v993
        %v998 = vld [vmem:[#allocation3] sm:$0xff]
        %v999 = vld [vmem:[#allocation3 + $0x8] sm:$0xff]
        %v1000 = vld [vmem:[#allocation3 + $0x10] sm:$0xff]
        %v1001 = vld [vmem:[#allocation3 + $0x18] sm:$0xff]
        %v1002 = vld [vmem:[#allocation3 + $0x20] sm:$0xff]
        %v1003 = vld [vmem:[#allocation3 + $0x28] sm:$0xff]
        %1005 = vset.pattern.permute.xlu0 0
        %1006 = vperm.xlu0 %1005, %v914
        %v1007 = vpop.permute.xlu0 %1006
        %1010 = vset.pattern.permute.xlu0 0
        %1011 = vperm.xlu0 %1010, %v915
        %v1012 = vpop.permute.xlu0 %1011
        %1015 = vset.pattern.permute.xlu0 0
        %1016 = vperm.xlu0 %1015, %v916
        %v1017 = vpop.permute.xlu0 %1016
        %1020 = vset.pattern.permute.xlu0 0
        %1021 = vperm.xlu0 %1020, %v917
        %v1022 = vpop.permute.xlu0 %1021
        %v1028 = vunpack.c.l.b16 %v909
        %v1029 = vunpack.c.l.b16 %v910
        %v1030 = vunpack.c.l.b16 %v911
        %v1031 = vunpack.c.l.b16 %v912
        %v1032 = vpack.c.b16 %v1029, %v1028
        %v1033 = vpack.c.b16 %v1031, %v1030
        %v1035 = vsel %vm448, %v1032, 0
        %v1038 = vsel %vm448, %v1033, 0
        %1040 = vmatprep.subr.bf16.mxu0 0
        %1041 = vmatpush1.bf16.msra.mxu0 %v998
        %1042 = vmatprep.subr.bf16.mxu0 0
        %1043 = vmatpush1.bf16.msra.mxu0 %v999
        %1044 = vmatprep.subr.bf16.mxu0 0
        %1045 = vmatpush1.bf16.msra.mxu0 %v1000
        %1046 = vmatprep.subr.bf16.mxu0 0
        %1047 = vmatpush1.bf16.msra.mxu0 %v1001
        %1048 = vmatprep.subr.bf16.mxu0 0
        %1049 = vmatpush1.bf16.msra.mxu0 %v1002
        %1050 = vmatprep.subr.bf16.mxu0 0
        %1051 = vmatpush1.bf16.msra.mxu0 %v1003
        %1052 = vmatprep.subr.bf16.mxu0 0
        %1053 = vmatpush1.bf16.msra.mxu0 0
        %1054 = vmatprep.subr.bf16.mxu0 0
        %1055 = vmatpush1.bf16.msra.mxu0 0
        %1056 = vmatprep.subr.bf16.mxu0 0
        %1057 = vmatpush1.bf16.msra.mxu0 0
        %1058 = vmatprep.subr.bf16.mxu0 0
        %1059 = vmatpush1.bf16.msra.mxu0 0
        %1060 = vmatprep.subr.bf16.mxu0 0
        %1061 = vmatpush1.bf16.msra.mxu0 0
        %1062 = vmatprep.subr.bf16.mxu0 0
        %1063 = vmatpush1.bf16.msra.mxu0 0
        %1064 = vmatprep.subr.bf16.mxu0 0
        %1065 = vmatpush1.bf16.msra.mxu0 0
        %1066 = vmatprep.subr.bf16.mxu0 0
        %1067 = vmatpush1.bf16.msra.mxu0 0
        %1068 = vmatprep.subr.bf16.mxu0 0
        %1069 = vmatpush1.bf16.msra.mxu0 0
        %1070 = vmatprep.subr.bf16.mxu0 0
        %1071 = vmatpush1.bf16.msra.mxu0 0
        %1072 = vmatprep.mubr.bf16.mxu0 0
        %1073 = vmatmul.mubr.bf16.gmra.mrb[0].mxu0 %v1035
        %v1074 = vpop.f32.mrb[0].mxu0
        %v1075 = vadd.f32 %v1007, %v1074
        %v1076 = vpop.f32.mrb[0].mxu0
        %v1077 = vpop.f32.mrb[0].mxu0
        %v1078 = vadd.f32 %v1012, %v1077
        %v1079 = vpop.f32.mrb[0].mxu0
        %1080 = vmatprep.mubr.bf16.mxu0 0
        %1081 = vmatmul.mubr.bf16.gmra.mrb[0].mxu0 %v1038
        %v1082 = vpop.f32.mrb[0].mxu0
        %v1083 = vadd.f32 %v1017, %v1082
        %v1084 = vpop.f32.mrb[0].mxu0
        %v1085 = vpop.f32.mrb[0].mxu0
        %v1086 = vadd.f32 %v1022, %v1085
        %v1087 = vpop.f32.mrb[0].mxu0
        %1088 = vdwg.mxu0
        %v1089 = vadd.f32 %v1075, %v697
        %v1090 = vadd.f32 %v1078, %v698
        %v1091 = vadd.f32 %v1083, %v699
        %v1092 = vadd.f32 %v1086, %v700
        %vm1093 = vcmp.gt.f32.partialorder %v1089, 0.0
        %vm1094 = vcmp.gt.f32.partialorder %v1090, 0.0
        %vm1095 = vcmp.gt.f32.partialorder %v1091, 0.0
        %vm1096 = vcmp.gt.f32.partialorder %v1092, 0.0
        %v1097 = vmul.f32 %v1089, 0.1
        %v1098 = vmul.f32 %v1090, 0.1
        %v1099 = vmul.f32 %v1091, 0.1
        %v1100 = vmul.f32 %v1092, 0.1
        %v1101 = vsel %vm1093, %v1089, %v1097
        %v1102 = vsel %vm1094, %v1090, %v1098
        %v1103 = vsel %vm1095, %v1091, %v1099
        %v1104 = vsel %vm1096, %v1092, %v1100
        %s1105 = scalar_lea.vmem %s1, 64
        %v1106 = vld [vmem:[%s1105] sm:$0xf]
        %v1107 = vld [vmem:[%s1105 + $0x4] sm:$0xf]
        %v1108 = vld [vmem:[%s1105 + $0x8] sm:$0xf]
        %v1109 = vld [vmem:[%s1105 + $0xc] sm:$0xf]
        %s1110 = scalar_lea.vmem %s2, 128
        %v1111 = vld [vmem:[%s1110] sm:$0xff]
        %v1112 = vld [vmem:[%s1110 + $0x8] sm:$0xff]
        %v1113 = vld [vmem:[%s1110 + $0x10] sm:$0xff]
        %v1114 = vld [vmem:[%s1110 + $0x18] sm:$0xff]
        %v1115 = vpack.c.bf16 %v1102, %v1101
        %v1116 = vpack.c.bf16 %v1104, %v1103
        %1119 = vrot.lane.b32.xlu0 %v1115, 25
        %v1120 = vpop.permute.xlu0 %1119
        %1121 = vrot.lane.b32.xlu0 %v1116, 25
        %v1122 = vpop.permute.xlu0 %1121
        %1125 = vst.msk [vmem:[#allocation2] sm:$0xff] %vm338, %v1120
        %1126 = vst.msk [vmem:[#allocation2 + $0x8] sm:$0xff] %vm298, %v1120
        %1127 = vst.msk [vmem:[#allocation2 + $0x10] sm:$0xff] %vm338, %v1122
        %1128 = vst.msk [vmem:[#allocation2 + $0x18] sm:$0xff] %vm298, %v1122
        %v1129 = vld [vmem:[#allocation2] sm:$0xff]
        %v1130 = vld [vmem:[#allocation2 + $0x8] sm:$0xff]
        %v1131 = vld [vmem:[#allocation2 + $0x10] sm:$0xff]
        %v1132 = vld [vmem:[#allocation2 + $0x18] sm:$0xff]
        %1137 = vrot.lane.b32.xlu0 %v1129, 108
        %v1138 = vpop.permute.xlu0 %1137
        %1139 = vrot.lane.b32.xlu0 %v1130, 108
        %v1140 = vpop.permute.xlu0 %1139
        %1141 = vrot.lane.b32.xlu0 %v1131, 108
        %v1142 = vpop.permute.xlu0 %1141
        %1143 = vrot.lane.b32.xlu0 %v1132, 108
        %v1144 = vpop.permute.xlu0 %1143
        %vm1145 = vcmask 883712
        %v1146 = vsel %vm1145, %v1138, %v1140
        %v1147 = vsel %vm1145, %v1142, %v1144
        %1150 = vst [vmem:[#allocation3] sm:$0xff] %v1146
        %1151 = vst [vmem:[#allocation3 + $0x8] sm:$0xff] %v1147
        %v1152 = vld [vmem:[#allocation2] sm:$0xff]
        %v1153 = vld [vmem:[#allocation2 + $0x8] sm:$0xff]
        %v1154 = vld [vmem:[#allocation2 + $0x10] sm:$0xff]
        %v1155 = vld [vmem:[#allocation2 + $0x18] sm:$0xff]
        %1160 = vrot.lane.b32.xlu0 %v1152, 103
        %v1161 = vpop.permute.xlu0 %1160
        %1162 = vrot.lane.b32.xlu0 %v1153, 103
        %v1163 = vpop.permute.xlu0 %1162
        %1164 = vrot.lane.b32.xlu0 %v1154, 103
        %v1165 = vpop.permute.xlu0 %1164
        %1166 = vrot.lane.b32.xlu0 %v1155, 103
        %v1167 = vpop.permute.xlu0 %1166
        %v1168 = vsel %vm382, %v1161, %v1163
        %v1169 = vsel %vm382, %v1165, %v1167
        %1172 = vst [vmem:[#allocation3 + $0x10] sm:$0xff] %v1168
        %1173 = vst [vmem:[#allocation3 + $0x18] sm:$0xff] %v1169
        %v1174 = vld [vmem:[#allocation2] sm:$0xff]
        %v1175 = vld [vmem:[#allocation2 + $0x8] sm:$0xff]
        %v1176 = vld [vmem:[#allocation2 + $0x10] sm:$0xff]
        %v1177 = vld [vmem:[#allocation2 + $0x18] sm:$0xff]
        %1182 = vrot.lane.b32.xlu0 %v1174, 98
        %v1183 = vpop.permute.xlu0 %1182
        %1184 = vrot.lane.b32.xlu0 %v1175, 98
        %v1185 = vpop.permute.xlu0 %1184
        %1186 = vrot.lane.b32.xlu0 %v1176, 98
        %v1187 = vpop.permute.xlu0 %1186
        %1188 = vrot.lane.b32.xlu0 %v1177, 98
        %v1189 = vpop.permute.xlu0 %1188
        %vm1190 = vcmask 801792
        %v1191 = vsel %vm1190, %v1183, %v1185
        %v1192 = vsel %vm1190, %v1187, %v1189
        %1195 = vst [vmem:[#allocation3 + $0x20] sm:$0xff] %v1191
        %1196 = vst [vmem:[#allocation3 + $0x28] sm:$0xff] %v1192
        %v1197 = vld [vmem:[#allocation3] sm:$0xff]
        %v1198 = vld [vmem:[#allocation3 + $0x8] sm:$0xff]
        %v1199 = vld [vmem:[#allocation3 + $0x10] sm:$0xff]
        %v1200 = vld [vmem:[#allocation3 + $0x18] sm:$0xff]
        %v1201 = vld [vmem:[#allocation3 + $0x20] sm:$0xff]
        %v1202 = vld [vmem:[#allocation3 + $0x28] sm:$0xff]
        %1204 = vset.pattern.permute.xlu0 0
        %1205 = vperm.xlu0 %1204, %v1111
        %v1206 = vpop.permute.xlu0 %1205
        %1209 = vset.pattern.permute.xlu0 0
        %1210 = vperm.xlu0 %1209, %v1112
        %v1211 = vpop.permute.xlu0 %1210
        %1214 = vset.pattern.permute.xlu0 0
        %1215 = vperm.xlu0 %1214, %v1113
        %v1216 = vpop.permute.xlu0 %1215
        %1219 = vset.pattern.permute.xlu0 0
        %1220 = vperm.xlu0 %1219, %v1114
        %v1221 = vpop.permute.xlu0 %1220
        %v1227 = vunpack.c.l.b16 %v1106
        %v1228 = vunpack.c.l.b16 %v1107
        %v1229 = vunpack.c.l.b16 %v1108
        %v1230 = vunpack.c.l.b16 %v1109
        %v1231 = vpack.c.b16 %v1228, %v1227
        %v1232 = vpack.c.b16 %v1230, %v1229
        %v1234 = vsel %vm448, %v1231, 0
        %v1237 = vsel %vm448, %v1232, 0
        %1239 = vmatprep.subr.bf16.mxu0 0
        %1240 = vmatpush1.bf16.msra.mxu0 %v1197
        %1241 = vmatprep.subr.bf16.mxu0 0
        %1242 = vmatpush1.bf16.msra.mxu0 %v1198
        %1243 = vmatprep.subr.bf16.mxu0 0
        %1244 = vmatpush1.bf16.msra.mxu0 %v1199
        %1245 = vmatprep.subr.bf16.mxu0 0
        %1246 = vmatpush1.bf16.msra.mxu0 %v1200
        %1247 = vmatprep.subr.bf16.mxu0 0
        %1248 = vmatpush1.bf16.msra.mxu0 %v1201
        %1249 = vmatprep.subr.bf16.mxu0 0
        %1250 = vmatpush1.bf16.msra.mxu0 %v1202
        %1251 = vmatprep.subr.bf16.mxu0 0
        %1252 = vmatpush1.bf16.msra.mxu0 0
        %1253 = vmatprep.subr.bf16.mxu0 0
        %1254 = vmatpush1.bf16.msra.mxu0 0
        %1255 = vmatprep.subr.bf16.mxu0 0
        %1256 = vmatpush1.bf16.msra.mxu0 0
        %1257 = vmatprep.subr.bf16.mxu0 0
        %1258 = vmatpush1.bf16.msra.mxu0 0
        %1259 = vmatprep.subr.bf16.mxu0 0
        %1260 = vmatpush1.bf16.msra.mxu0 0
        %1261 = vmatprep.subr.bf16.mxu0 0
        %1262 = vmatpush1.bf16.msra.mxu0 0
        %1263 = vmatprep.subr.bf16.mxu0 0
        %1264 = vmatpush1.bf16.msra.mxu0 0
        %1265 = vmatprep.subr.bf16.mxu0 0
        %1266 = vmatpush1.bf16.msra.mxu0 0
        %1267 = vmatprep.subr.bf16.mxu0 0
        %1268 = vmatpush1.bf16.msra.mxu0 0
        %1269 = vmatprep.subr.bf16.mxu0 0
        %1270 = vmatpush1.bf16.msra.mxu0 0
        %1271 = vmatprep.mubr.bf16.mxu0 0
        %1272 = vmatmul.mubr.bf16.gmra.mrb[0].mxu0 %v1234
        %v1273 = vpop.f32.mrb[0].mxu0
        %v1274 = vadd.f32 %v1206, %v1273
        %v1275 = vpop.f32.mrb[0].mxu0
        %v1276 = vpop.f32.mrb[0].mxu0
        %v1277 = vadd.f32 %v1211, %v1276
        %v1278 = vpop.f32.mrb[0].mxu0
        %1279 = vmatprep.mubr.bf16.mxu0 0
        %1280 = vmatmul.mubr.bf16.gmra.mrb[0].mxu0 %v1237
        %v1281 = vpop.f32.mrb[0].mxu0
        %v1282 = vadd.f32 %v1216, %v1281
        %v1283 = vpop.f32.mrb[0].mxu0
        %v1284 = vpop.f32.mrb[0].mxu0
        %v1285 = vadd.f32 %v1221, %v1284
        %v1286 = vpop.f32.mrb[0].mxu0
        %1287 = vdwg.mxu0
        %vm1288 = vcmp.gt.f32.partialorder %v1274, 0.0
        %vm1289 = vcmp.gt.f32.partialorder %v1277, 0.0
        %vm1290 = vcmp.gt.f32.partialorder %v1282, 0.0
        %vm1291 = vcmp.gt.f32.partialorder %v1285, 0.0
        %v1292 = vmul.f32 %v1274, 0.1
        %v1293 = vmul.f32 %v1277, 0.1
        %v1294 = vmul.f32 %v1282, 0.1
        %v1295 = vmul.f32 %v1285, 0.1
        %v1296 = vsel %vm1288, %v1274, %v1292
        %v1297 = vsel %vm1289, %v1277, %v1293
        %v1298 = vsel %vm1290, %v1282, %v1294
        %v1299 = vsel %vm1291, %v1285, %v1295
        %s1300 = scalar_lea.vmem %s1, 80
        %v1301 = vld [vmem:[%s1300] sm:$0xf]
        %v1302 = vld [vmem:[%s1300 + $0x4] sm:$0xf]
        %v1303 = vld [vmem:[%s1300 + $0x8] sm:$0xf]
        %v1304 = vld [vmem:[%s1300 + $0xc] sm:$0xf]
        %s1305 = scalar_lea.vmem %s2, 160
        %v1306 = vld [vmem:[%s1305] sm:$0xff]
        %v1307 = vld [vmem:[%s1305 + $0x8] sm:$0xff]
        %v1308 = vld [vmem:[%s1305 + $0x10] sm:$0xff]
        %v1309 = vld [vmem:[%s1305 + $0x18] sm:$0xff]
        %v1310 = vpack.c.bf16 %v1297, %v1296
        %v1311 = vpack.c.bf16 %v1299, %v1298
        %1314 = vrot.lane.b32.xlu0 %v1310, 25
        %v1315 = vpop.permute.xlu0 %1314
        %1316 = vrot.lane.b32.xlu0 %v1311, 25
        %v1317 = vpop.permute.xlu0 %1316
        %1320 = vst.msk [vmem:[#allocation2] sm:$0xff] %vm338, %v1315
        %1321 = vst.msk [vmem:[#allocation2 + $0x8] sm:$0xff] %vm298, %v1315
        %1322 = vst.msk [vmem:[#allocation2 + $0x10] sm:$0xff] %vm338, %v1317
        %1323 = vst.msk [vmem:[#allocation2 + $0x18] sm:$0xff] %vm298, %v1317
        %v1324 = vld [vmem:[#allocation2] sm:$0xff]
        %v1325 = vld [vmem:[#allocation2 + $0x8] sm:$0xff]
        %v1326 = vld [vmem:[#allocation2 + $0x10] sm:$0xff]
        %v1327 = vld [vmem:[#allocation2 + $0x18] sm:$0xff]
        %1332 = vrot.lane.b32.xlu0 %v1324, 104
        %v1333 = vpop.permute.xlu0 %1332
        %1334 = vrot.lane.b32.xlu0 %v1325, 104
        %v1335 = vpop.permute.xlu0 %1334
        %1336 = vrot.lane.b32.xlu0 %v1326, 104
        %v1337 = vpop.permute.xlu0 %1336
        %1338 = vrot.lane.b32.xlu0 %v1327, 104
        %v1339 = vpop.permute.xlu0 %1338
        %v1340 = vsel %vm359, %v1333, %v1335
        %v1341 = vsel %vm359, %v1337, %v1339
        %1344 = vst [vmem:[#allocation3] sm:$0xff] %v1340
        %1345 = vst [vmem:[#allocation3 + $0x8] sm:$0xff] %v1341
        %v1346 = vld [vmem:[#allocation2] sm:$0xff]
        %v1347 = vld [vmem:[#allocation2 + $0x8] sm:$0xff]
        %v1348 = vld [vmem:[#allocation2 + $0x10] sm:$0xff]
        %v1349 = vld [vmem:[#allocation2 + $0x18] sm:$0xff]
        %1354 = vrot.lane.b32.xlu0 %v1346, 103
        %v1355 = vpop.permute.xlu0 %1354
        %1356 = vrot.lane.b32.xlu0 %v1347, 103
        %v1357 = vpop.permute.xlu0 %1356
        %1358 = vrot.lane.b32.xlu0 %v1348, 103
        %v1359 = vpop.permute.xlu0 %1358
        %1360 = vrot.lane.b32.xlu0 %v1349, 103
        %v1361 = vpop.permute.xlu0 %1360
        %v1362 = vsel %vm382, %v1355, %v1357
        %v1363 = vsel %vm382, %v1359, %v1361
        %1366 = vst [vmem:[#allocation3 + $0x10] sm:$0xff] %v1362
        %1367 = vst [vmem:[#allocation3 + $0x18] sm:$0xff] %v1363
        %v1368 = vld [vmem:[#allocation2] sm:$0xff]
        %v1369 = vld [vmem:[#allocation2 + $0x8] sm:$0xff]
        %v1370 = vld [vmem:[#allocation2 + $0x10] sm:$0xff]
        %v1371 = vld [vmem:[#allocation2 + $0x18] sm:$0xff]
        %1376 = vrot.lane.b32.xlu0 %v1368, 102
        %v1377 = vpop.permute.xlu0 %1376
        %1378 = vrot.lane.b32.xlu0 %v1369, 102
        %v1379 = vpop.permute.xlu0 %1378
        %1380 = vrot.lane.b32.xlu0 %v1370, 102
        %v1381 = vpop.permute.xlu0 %1380
        %1382 = vrot.lane.b32.xlu0 %v1371, 102
        %v1383 = vpop.permute.xlu0 %1382
        %v1384 = vsel %vm405, %v1377, %v1379
        %v1385 = vsel %vm405, %v1381, %v1383
        %1388 = vst [vmem:[#allocation3 + $0x20] sm:$0xff] %v1384
        %1389 = vst [vmem:[#allocation3 + $0x28] sm:$0xff] %v1385
        %v1390 = vld [vmem:[#allocation3] sm:$0xff]
        %v1391 = vld [vmem:[#allocation3 + $0x8] sm:$0xff]
        %v1392 = vld [vmem:[#allocation3 + $0x10] sm:$0xff]
        %v1393 = vld [vmem:[#allocation3 + $0x18] sm:$0xff]
        %v1394 = vld [vmem:[#allocation3 + $0x20] sm:$0xff]
        %v1395 = vld [vmem:[#allocation3 + $0x28] sm:$0xff]
        %1397 = vset.pattern.permute.xlu0 0
        %1398 = vperm.xlu0 %1397, %v1306
        %v1399 = vpop.permute.xlu0 %1398
        %1402 = vset.pattern.permute.xlu0 0
        %1403 = vperm.xlu0 %1402, %v1307
        %v1404 = vpop.permute.xlu0 %1403
        %1407 = vset.pattern.permute.xlu0 0
        %1408 = vperm.xlu0 %1407, %v1308
        %v1409 = vpop.permute.xlu0 %1408
        %1412 = vset.pattern.permute.xlu0 0
        %1413 = vperm.xlu0 %1412, %v1309
        %v1414 = vpop.permute.xlu0 %1413
        %v1420 = vunpack.c.l.b16 %v1301
        %v1421 = vunpack.c.l.b16 %v1302
        %v1422 = vunpack.c.l.b16 %v1303
        %v1423 = vunpack.c.l.b16 %v1304
        %v1424 = vpack.c.b16 %v1421, %v1420
        %v1425 = vpack.c.b16 %v1423, %v1422
        %v1427 = vsel %vm448, %v1424, 0
        %v1430 = vsel %vm448, %v1425, 0
        %1432 = vmatprep.subr.bf16.mxu0 0
        %1433 = vmatpush1.bf16.msra.mxu0 %v1390
        %1434 = vmatprep.subr.bf16.mxu0 0
        %1435 = vmatpush1.bf16.msra.mxu0 %v1391
        %1436 = vmatprep.subr.bf16.mxu0 0
        %1437 = vmatpush1.bf16.msra.mxu0 %v1392
        %1438 = vmatprep.subr.bf16.mxu0 0
        %1439 = vmatpush1.bf16.msra.mxu0 %v1393
        %1440 = vmatprep.subr.bf16.mxu0 0
        %1441 = vmatpush1.bf16.msra.mxu0 %v1394
        %1442 = vmatprep.subr.bf16.mxu0 0
        %1443 = vmatpush1.bf16.msra.mxu0 %v1395
        %1444 = vmatprep.subr.bf16.mxu0 0
        %1445 = vmatpush1.bf16.msra.mxu0 0
        %1446 = vmatprep.subr.bf16.mxu0 0
        %1447 = vmatpush1.bf16.msra.mxu0 0
        %1448 = vmatprep.subr.bf16.mxu0 0
        %1449 = vmatpush1.bf16.msra.mxu0 0
        %1450 = vmatprep.subr.bf16.mxu0 0
        %1451 = vmatpush1.bf16.msra.mxu0 0
        %1452 = vmatprep.subr.bf16.mxu0 0
        %1453 = vmatpush1.bf16.msra.mxu0 0
        %1454 = vmatprep.subr.bf16.mxu0 0
        %1455 = vmatpush1.bf16.msra.mxu0 0
        %1456 = vmatprep.subr.bf16.mxu0 0
        %1457 = vmatpush1.bf16.msra.mxu0 0
        %1458 = vmatprep.subr.bf16.mxu0 0
        %1459 = vmatpush1.bf16.msra.mxu0 0
        %1460 = vmatprep.subr.bf16.mxu0 0
        %1461 = vmatpush1.bf16.msra.mxu0 0
        %1462 = vmatprep.subr.bf16.mxu0 0
        %1463 = vmatpush1.bf16.msra.mxu0 0
        %1464 = vmatprep.mubr.bf16.mxu0 0
        %1465 = vmatmul.mubr.bf16.gmra.mrb[0].mxu0 %v1427
        %v1466 = vpop.f32.mrb[0].mxu0
        %v1467 = vadd.f32 %v1399, %v1466
        %v1468 = vpop.f32.mrb[0].mxu0
        %v1469 = vpop.f32.mrb[0].mxu0
        %v1470 = vadd.f32 %v1404, %v1469
        %v1471 = vpop.f32.mrb[0].mxu0
        %1472 = vmatprep.mubr.bf16.mxu0 0
        %1473 = vmatmul.mubr.bf16.gmra.mrb[0].mxu0 %v1430
        %v1474 = vpop.f32.mrb[0].mxu0
        %v1475 = vadd.f32 %v1409, %v1474
        %v1476 = vpop.f32.mrb[0].mxu0
        %v1477 = vpop.f32.mrb[0].mxu0
        %v1478 = vadd.f32 %v1414, %v1477
        %v1479 = vpop.f32.mrb[0].mxu0
        %1480 = vdwg.mxu0
        %v1481 = vadd.f32 %v1467, %v1089
        %v1482 = vadd.f32 %v1470, %v1090
        %v1483 = vadd.f32 %v1475, %v1091
        %v1484 = vadd.f32 %v1478, %v1092
        %v1485 = vadd.f32 %v1481, 0.0
        %v1486 = vadd.f32 %v1482, 0.0
        %v1487 = vadd.f32 %v1483, 0.0
        %v1488 = vadd.f32 %v1484, 0.0
        %v1489 = vld [vmem:[%s3] sm:$0xff]
        %v1490 = vld [vmem:[%s3 + $0x8] sm:$0xff]
        %v1491 = vld [vmem:[%s3 + $0x10] sm:$0xff]
        %v1492 = vld [vmem:[%s3 + $0x18] sm:$0xff]
        %v1493 = vld [vmem:[%s4] sm:$0xff]
        %v1494 = vld [vmem:[%s4 + $0x8] sm:$0xff]
        %v1495 = vld [vmem:[%s4 + $0x10] sm:$0xff]
        %v1496 = vld [vmem:[%s4 + $0x18] sm:$0xff]
        %1497 = vst.msk [vmem:[#allocation2] sm:$0xff] %vm338, %v333
        %1498 = vst.msk [vmem:[#allocation2 + $0x8] sm:$0xff] %vm298, %v333
        %1499 = vst.msk [vmem:[#allocation2 + $0x10] sm:$0xff] %vm338, %v335
        %1500 = vst.msk [vmem:[#allocation2 + $0x18] sm:$0xff] %vm298, %v335
        %v1501 = vld [vmem:[#allocation2] sm:$0xff]
        %v1502 = vld [vmem:[#allocation2 + $0x8] sm:$0xff]
        %v1503 = vld [vmem:[#allocation2 + $0x10] sm:$0xff]
        %v1504 = vld [vmem:[#allocation2 + $0x18] sm:$0xff]
        %1509 = vrot.lane.b32.xlu0 %v1501, 106
        %v1510 = vpop.permute.xlu0 %1509
        %1511 = vrot.lane.b32.xlu0 %v1502, 106
        %v1512 = vpop.permute.xlu0 %1511
        %1513 = vrot.lane.b32.xlu0 %v1503, 106
        %v1514 = vpop.permute.xlu0 %1513
        %1515 = vrot.lane.b32.xlu0 %v1504, 106
        %v1516 = vpop.permute.xlu0 %1515
        %v1517 = vsel %vm753, %v1510, %v1512
        %v1518 = vsel %vm753, %v1514, %v1516
        %1521 = vst [vmem:[#allocation3] sm:$0xff] %v1517
        %1522 = vst [vmem:[#allocation3 + $0x8] sm:$0xff] %v1518
        %v1523 = vld [vmem:[#allocation2] sm:$0xff]
        %v1524 = vld [vmem:[#allocation2 + $0x8] sm:$0xff]
        %v1525 = vld [vmem:[#allocation2 + $0x10] sm:$0xff]
        %v1526 = vld [vmem:[#allocation2 + $0x18] sm:$0xff]
        %1531 = vrot.lane.b32.xlu0 %v1523, 105
        %v1532 = vpop.permute.xlu0 %1531
        %1533 = vrot.lane.b32.xlu0 %v1524, 105
        %v1534 = vpop.permute.xlu0 %1533
        %1535 = vrot.lane.b32.xlu0 %v1525, 105
        %v1536 = vpop.permute.xlu0 %1535
        %1537 = vrot.lane.b32.xlu0 %v1526, 105
        %v1538 = vpop.permute.xlu0 %1537
        %vm1539 = vcmask 859136
        %v1540 = vsel %vm1539, %v1532, %v1534
        %v1541 = vsel %vm1539, %v1536, %v1538
        %1544 = vst [vmem:[#allocation3 + $0x10] sm:$0xff] %v1540
        %1545 = vst [vmem:[#allocation3 + $0x18] sm:$0xff] %v1541
        %v1546 = vld [vmem:[#allocation2] sm:$0xff]
        %v1547 = vld [vmem:[#allocation2 + $0x8] sm:$0xff]
        %v1548 = vld [vmem:[#allocation2 + $0x10] sm:$0xff]
        %v1549 = vld [vmem:[#allocation2 + $0x18] sm:$0xff]
        %1554 = vrot.lane.b32.xlu0 %v1546, 104
        %v1555 = vpop.permute.xlu0 %1554
        %1556 = vrot.lane.b32.xlu0 %v1547, 104
        %v1557 = vpop.permute.xlu0 %1556
        %1558 = vrot.lane.b32.xlu0 %v1548, 104
        %v1559 = vpop.permute.xlu0 %1558
        %1560 = vrot.lane.b32.xlu0 %v1549, 104
        %v1561 = vpop.permute.xlu0 %1560
        %v1562 = vsel %vm359, %v1555, %v1557
        %v1563 = vsel %vm359, %v1559, %v1561
        %1566 = vst [vmem:[#allocation3 + $0x20] sm:$0xff] %v1562
        %1567 = vst [vmem:[#allocation3 + $0x28] sm:$0xff] %v1563
        %v1568 = vld [vmem:[#allocation2] sm:$0xff]
        %v1569 = vld [vmem:[#allocation2 + $0x8] sm:$0xff]
        %v1570 = vld [vmem:[#allocation2 + $0x10] sm:$0xff]
        %v1571 = vld [vmem:[#allocation2 + $0x18] sm:$0xff]
        %1576 = vrot.lane.b32.xlu0 %v1568, 103
        %v1577 = vpop.permute.xlu0 %1576
        %1578 = vrot.lane.b32.xlu0 %v1569, 103
        %v1579 = vpop.permute.xlu0 %1578
        %1580 = vrot.lane.b32.xlu0 %v1570, 103
        %v1581 = vpop.permute.xlu0 %1580
        %1582 = vrot.lane.b32.xlu0 %v1571, 103
        %v1583 = vpop.permute.xlu0 %1582
        %v1584 = vsel %vm382, %v1577, %v1579
        %v1585 = vsel %vm382, %v1581, %v1583
        %1588 = vst [vmem:[#allocation3 + $0x30] sm:$0xff] %v1584
        %1589 = vst [vmem:[#allocation3 + $0x38] sm:$0xff] %v1585
        %v1590 = vld [vmem:[#allocation2] sm:$0xff]
        %v1591 = vld [vmem:[#allocation2 + $0x8] sm:$0xff]
        %v1592 = vld [vmem:[#allocation2 + $0x10] sm:$0xff]
        %v1593 = vld [vmem:[#allocation2 + $0x18] sm:$0xff]
        %1598 = vrot.lane.b32.xlu0 %v1590, 102
        %v1599 = vpop.permute.xlu0 %1598
        %1600 = vrot.lane.b32.xlu0 %v1591, 102
        %v1601 = vpop.permute.xlu0 %1600
        %1602 = vrot.lane.b32.xlu0 %v1592, 102
        %v1603 = vpop.permute.xlu0 %1602
        %1604 = vrot.lane.b32.xlu0 %v1593, 102
        %v1605 = vpop.permute.xlu0 %1604
        %v1606 = vsel %vm405, %v1599, %v1601
        %v1607 = vsel %vm405, %v1603, %v1605
        %1610 = vst [vmem:[#allocation3 + $0x40] sm:$0xff] %v1606
        %1611 = vst [vmem:[#allocation3 + $0x48] sm:$0xff] %v1607
        %v1612 = vld [vmem:[#allocation2] sm:$0xff]
        %v1613 = vld [vmem:[#allocation2 + $0x8] sm:$0xff]
        %v1614 = vld [vmem:[#allocation2 + $0x10] sm:$0xff]
        %v1615 = vld [vmem:[#allocation2 + $0x18] sm:$0xff]
        %1620 = vrot.lane.b32.xlu0 %v1612, 101
        %v1621 = vpop.permute.xlu0 %1620
        %1622 = vrot.lane.b32.xlu0 %v1613, 101
        %v1623 = vpop.permute.xlu0 %1622
        %1624 = vrot.lane.b32.xlu0 %v1614, 101
        %v1625 = vpop.permute.xlu0 %1624
        %1626 = vrot.lane.b32.xlu0 %v1615, 101
        %v1627 = vpop.permute.xlu0 %1626
        %vm1628 = vcmask 826368
        %v1629 = vsel %vm1628, %v1621, %v1623
        %v1630 = vsel %vm1628, %v1625, %v1627
        %1633 = vst [vmem:[#allocation3 + $0x50] sm:$0xff] %v1629
        %1634 = vst [vmem:[#allocation3 + $0x58] sm:$0xff] %v1630
        %v1635 = vld [vmem:[#allocation2] sm:$0xff]
        %v1636 = vld [vmem:[#allocation2 + $0x8] sm:$0xff]
        %v1637 = vld [vmem:[#allocation2 + $0x10] sm:$0xff]
        %v1638 = vld [vmem:[#allocation2 + $0x18] sm:$0xff]
        %1643 = vrot.lane.b32.xlu0 %v1635, 100
        %v1644 = vpop.permute.xlu0 %1643
        %1645 = vrot.lane.b32.xlu0 %v1636, 100
        %v1646 = vpop.permute.xlu0 %1645
        %1647 = vrot.lane.b32.xlu0 %v1637, 100
        %v1648 = vpop.permute.xlu0 %1647
        %1649 = vrot.lane.b32.xlu0 %v1638, 100
        %v1650 = vpop.permute.xlu0 %1649
        %v1651 = vsel %vm798, %v1644, %v1646
        %v1652 = vsel %vm798, %v1648, %v1650
        %1655 = vst [vmem:[#allocation3 + $0x60] sm:$0xff] %v1651
        %1656 = vst [vmem:[#allocation3 + $0x68] sm:$0xff] %v1652
        %v1657 = vld [vmem:[#allocation3] sm:$0xff]
        %v1658 = vld [vmem:[#allocation3 + $0x8] sm:$0xff]
        %v1659 = vld [vmem:[#allocation3 + $0x10] sm:$0xff]
        %v1660 = vld [vmem:[#allocation3 + $0x18] sm:$0xff]
        %v1661 = vld [vmem:[#allocation3 + $0x20] sm:$0xff]
        %v1662 = vld [vmem:[#allocation3 + $0x28] sm:$0xff]
        %v1663 = vld [vmem:[#allocation3 + $0x30] sm:$0xff]
        %v1664 = vld [vmem:[#allocation3 + $0x38] sm:$0xff]
        %v1665 = vld [vmem:[#allocation3 + $0x40] sm:$0xff]
        %v1666 = vld [vmem:[#allocation3 + $0x48] sm:$0xff]
        %v1667 = vld [vmem:[#allocation3 + $0x50] sm:$0xff]
        %v1668 = vld [vmem:[#allocation3 + $0x58] sm:$0xff]
        %v1669 = vld [vmem:[#allocation3 + $0x60] sm:$0xff]
        %v1670 = vld [vmem:[#allocation3 + $0x68] sm:$0xff]
        %1672 = vset.pattern.permute.xlu0 0
        %1673 = vperm.xlu0 %1672, %v1493
        %v1674 = vpop.permute.xlu0 %1673
        %1677 = vset.pattern.permute.xlu0 0
        %1678 = vperm.xlu0 %1677, %v1494
        %v1679 = vpop.permute.xlu0 %1678
        %1682 = vset.pattern.permute.xlu0 0
        %1683 = vperm.xlu0 %1682, %v1495
        %v1684 = vpop.permute.xlu0 %1683
        %1687 = vset.pattern.permute.xlu0 0
        %1688 = vperm.xlu0 %1687, %v1496
        %v1689 = vpop.permute.xlu0 %1688
        %v1695 = vunpack.c.l.b16 %v1489
        %v1696 = vunpack.c.h.b16 %v1489
        %v1697 = vunpack.c.l.b16 %v1490
        %v1698 = vunpack.c.h.b16 %v1490
        %v1699 = vunpack.c.l.b16 %v1491
        %v1700 = vunpack.c.h.b16 %v1491
        %v1701 = vunpack.c.l.b16 %v1492
        %v1702 = vunpack.c.h.b16 %v1492
        %v1703 = vpack.c.b16 %v1697, %v1695
        %v1704 = vpack.c.b16 %v1698, %v1696
        %v1705 = vpack.c.b16 %v1701, %v1699
        %v1706 = vpack.c.b16 %v1702, %v1700
        %v1710 = vsel %vm448, %v1704, 0
        %v1713 = vsel %vm448, %v1706, 0
        %1715 = vmatprep.subr.bf16.mxu0 0
        %1716 = vmatpush1.bf16.msra.mxu0 %v1657
        %1717 = vmatprep.subr.bf16.mxu0 0
        %1718 = vmatpush1.bf16.msra.mxu0 %v1658
        %1719 = vmatprep.subr.bf16.mxu0 0
        %1720 = vmatpush1.bf16.msra.mxu0 %v1659
        %1721 = vmatprep.subr.bf16.mxu0 0
        %1722 = vmatpush1.bf16.msra.mxu0 %v1660
        %1723 = vmatprep.subr.bf16.mxu0 0
        %1724 = vmatpush1.bf16.msra.mxu0 %v1661
        %1725 = vmatprep.subr.bf16.mxu0 0
        %1726 = vmatpush1.bf16.msra.mxu0 %v1662
        %1727 = vmatprep.subr.bf16.mxu0 0
        %1728 = vmatpush1.bf16.msra.mxu0 %v1663
        %1729 = vmatprep.subr.bf16.mxu0 0
        %1730 = vmatpush1.bf16.msra.mxu0 %v1664
        %1731 = vmatprep.subr.bf16.mxu0 0
        %1732 = vmatpush1.bf16.msra.mxu0 %v1665
        %1733 = vmatprep.subr.bf16.mxu0 0
        %1734 = vmatpush1.bf16.msra.mxu0 %v1666
        %1735 = vmatprep.subr.bf16.mxu0 0
        %1736 = vmatpush1.bf16.msra.mxu0 %v1667
        %1737 = vmatprep.subr.bf16.mxu0 0
        %1738 = vmatpush1.bf16.msra.mxu0 %v1668
        %1739 = vmatprep.subr.bf16.mxu0 0
        %1740 = vmatpush1.bf16.msra.mxu0 %v1669
        %1741 = vmatprep.subr.bf16.mxu0 0
        %1742 = vmatpush1.bf16.msra.mxu0 %v1670
        %1743 = vmatprep.subr.bf16.mxu0 0
        %1744 = vmatpush1.bf16.msra.mxu0 0
        %1745 = vmatprep.subr.bf16.mxu0 0
        %1746 = vmatpush1.bf16.msra.mxu0 0
        %1747 = vmatprep.mubr.bf16.mxu0 %v1710
        %1748 = vmatmul.mubr.bf16.gmra.mrb[0].mxu0 %v1703
        %v1749 = vpop.f32.mrb[0].mxu0
        %v1750 = vadd.f32 %v1674, %v1749
        %v1751 = vpop.f32.mrb[0].mxu0
        %v1752 = vpop.f32.mrb[0].mxu0
        %v1753 = vadd.f32 %v1679, %v1752
        %v1754 = vpop.f32.mrb[0].mxu0
        %1755 = vmatprep.mubr.bf16.mxu0 %v1713
        %1756 = vmatmul.mubr.bf16.gmra.mrb[0].mxu0 %v1705
        %v1757 = vpop.f32.mrb[0].mxu0
        %v1758 = vadd.f32 %v1684, %v1757
        %v1759 = vpop.f32.mrb[0].mxu0
        %v1760 = vpop.f32.mrb[0].mxu0
        %v1761 = vadd.f32 %v1689, %v1760
        %v1762 = vpop.f32.mrb[0].mxu0
        %1763 = vdwg.mxu0
        %vm1764 = vcmp.gt.f32.partialorder %v1750, 0.0
        %vm1765 = vcmp.gt.f32.partialorder %v1753, 0.0
        %vm1766 = vcmp.gt.f32.partialorder %v1758, 0.0
        %vm1767 = vcmp.gt.f32.partialorder %v1761, 0.0
        %v1768 = vmul.f32 %v1750, 0.1
        %v1769 = vmul.f32 %v1753, 0.1
        %v1770 = vmul.f32 %v1758, 0.1
        %v1771 = vmul.f32 %v1761, 0.1
        %v1772 = vsel %vm1764, %v1750, %v1768
        %v1773 = vsel %vm1765, %v1753, %v1769
        %v1774 = vsel %vm1766, %v1758, %v1770
        %v1775 = vsel %vm1767, %v1761, %v1771
        %s1776 = scalar_lea.vmem %s3, 32
        %v1777 = vld [vmem:[%s1776] sm:$0xff]
        %v1778 = vld [vmem:[%s1776 + $0x8] sm:$0xff]
        %v1779 = vld [vmem:[%s1776 + $0x10] sm:$0xff]
        %v1780 = vld [vmem:[%s1776 + $0x18] sm:$0xff]
        %s1781 = scalar_lea.vmem %s4, 32
        %v1782 = vld [vmem:[%s1781] sm:$0xff]
        %v1783 = vld [vmem:[%s1781 + $0x8] sm:$0xff]
        %v1784 = vld [vmem:[%s1781 + $0x10] sm:$0xff]
        %v1785 = vld [vmem:[%s1781 + $0x18] sm:$0xff]
        %v1786 = vpack.c.bf16 %v1773, %v1772
        %v1787 = vpack.c.bf16 %v1775, %v1774
        %1790 = vrot.lane.b32.xlu0 %v1786, 25
        %v1791 = vpop.permute.xlu0 %1790
        %1792 = vrot.lane.b32.xlu0 %v1787, 25
        %v1793 = vpop.permute.xlu0 %1792
        %1796 = vst.msk [vmem:[#allocation2] sm:$0xff] %vm338, %v1791
        %1797 = vst.msk [vmem:[#allocation2 + $0x8] sm:$0xff] %vm298, %v1791
        %1798 = vst.msk [vmem:[#allocation2 + $0x10] sm:$0xff] %vm338, %v1793
        %1799 = vst.msk [vmem:[#allocation2 + $0x18] sm:$0xff] %vm298, %v1793
        %v1800 = vld [vmem:[#allocation2] sm:$0xff]
        %v1801 = vld [vmem:[#allocation2 + $0x8] sm:$0xff]
        %v1802 = vld [vmem:[#allocation2 + $0x10] sm:$0xff]
        %v1803 = vld [vmem:[#allocation2 + $0x18] sm:$0xff]
        %1808 = vrot.lane.b32.xlu0 %v1800, 106
        %v1809 = vpop.permute.xlu0 %1808
        %1810 = vrot.lane.b32.xlu0 %v1801, 106
        %v1811 = vpop.permute.xlu0 %1810
        %1812 = vrot.lane.b32.xlu0 %v1802, 106
        %v1813 = vpop.permute.xlu0 %1812
        %1814 = vrot.lane.b32.xlu0 %v1803, 106
        %v1815 = vpop.permute.xlu0 %1814
        %v1816 = vsel %vm753, %v1809, %v1811
        %v1817 = vsel %vm753, %v1813, %v1815
        %1820 = vst [vmem:[#allocation3] sm:$0xff] %v1816
        %1821 = vst [vmem:[#allocation3 + $0x8] sm:$0xff] %v1817
        %v1822 = vld [vmem:[#allocation2] sm:$0xff]
        %v1823 = vld [vmem:[#allocation2 + $0x8] sm:$0xff]
        %v1824 = vld [vmem:[#allocation2 + $0x10] sm:$0xff]
        %v1825 = vld [vmem:[#allocation2 + $0x18] sm:$0xff]
        %1830 = vrot.lane.b32.xlu0 %v1822, 105
        %v1831 = vpop.permute.xlu0 %1830
        %1832 = vrot.lane.b32.xlu0 %v1823, 105
        %v1833 = vpop.permute.xlu0 %1832
        %1834 = vrot.lane.b32.xlu0 %v1824, 105
        %v1835 = vpop.permute.xlu0 %1834
        %1836 = vrot.lane.b32.xlu0 %v1825, 105
        %v1837 = vpop.permute.xlu0 %1836
        %v1838 = vsel %vm1539, %v1831, %v1833
        %v1839 = vsel %vm1539, %v1835, %v1837
        %1842 = vst [vmem:[#allocation3 + $0x10] sm:$0xff] %v1838
        %1843 = vst [vmem:[#allocation3 + $0x18] sm:$0xff] %v1839
        %v1844 = vld [vmem:[#allocation2] sm:$0xff]
        %v1845 = vld [vmem:[#allocation2 + $0x8] sm:$0xff]
        %v1846 = vld [vmem:[#allocation2 + $0x10] sm:$0xff]
        %v1847 = vld [vmem:[#allocation2 + $0x18] sm:$0xff]
        %1852 = vrot.lane.b32.xlu0 %v1844, 104
        %v1853 = vpop.permute.xlu0 %1852
        %1854 = vrot.lane.b32.xlu0 %v1845, 104
        %v1855 = vpop.permute.xlu0 %1854
        %1856 = vrot.lane.b32.xlu0 %v1846, 104
        %v1857 = vpop.permute.xlu0 %1856
        %1858 = vrot.lane.b32.xlu0 %v1847, 104
        %v1859 = vpop.permute.xlu0 %1858
        %v1860 = vsel %vm359, %v1853, %v1855
        %v1861 = vsel %vm359, %v1857, %v1859
        %1864 = vst [vmem:[#allocation3 + $0x20] sm:$0xff] %v1860
        %1865 = vst [vmem:[#allocation3 + $0x28] sm:$0xff] %v1861
        %v1866 = vld [vmem:[#allocation2] sm:$0xff]
        %v1867 = vld [vmem:[#allocation2 + $0x8] sm:$0xff]
        %v1868 = vld [vmem:[#allocation2 + $0x10] sm:$0xff]
        %v1869 = vld [vmem:[#allocation2 + $0x18] sm:$0xff]
        %1874 = vrot.lane.b32.xlu0 %v1866, 103
        %v1875 = vpop.permute.xlu0 %1874
        %1876 = vrot.lane.b32.xlu0 %v1867, 103
        %v1877 = vpop.permute.xlu0 %1876
        %1878 = vrot.lane.b32.xlu0 %v1868, 103
        %v1879 = vpop.permute.xlu0 %1878
        %1880 = vrot.lane.b32.xlu0 %v1869, 103
        %v1881 = vpop.permute.xlu0 %1880
        %v1882 = vsel %vm382, %v1875, %v1877
        %v1883 = vsel %vm382, %v1879, %v1881
        %1886 = vst [vmem:[#allocation3 + $0x30] sm:$0xff] %v1882
        %1887 = vst [vmem:[#allocation3 + $0x38] sm:$0xff] %v1883
        %v1888 = vld [vmem:[#allocation2] sm:$0xff]
        %v1889 = vld [vmem:[#allocation2 + $0x8] sm:$0xff]
        %v1890 = vld [vmem:[#allocation2 + $0x10] sm:$0xff]
        %v1891 = vld [vmem:[#allocation2 + $0x18] sm:$0xff]
        %1896 = vrot.lane.b32.xlu0 %v1888, 102
        %v1897 = vpop.permute.xlu0 %1896
        %1898 = vrot.lane.b32.xlu0 %v1889, 102
        %v1899 = vpop.permute.xlu0 %1898
        %1900 = vrot.lane.b32.xlu0 %v1890, 102
        %v1901 = vpop.permute.xlu0 %1900
        %1902 = vrot.lane.b32.xlu0 %v1891, 102
        %v1903 = vpop.permute.xlu0 %1902
        %v1904 = vsel %vm405, %v1897, %v1899
        %v1905 = vsel %vm405, %v1901, %v1903
        %1908 = vst [vmem:[#allocation3 + $0x40] sm:$0xff] %v1904
        %1909 = vst [vmem:[#allocation3 + $0x48] sm:$0xff] %v1905
        %v1910 = vld [vmem:[#allocation2] sm:$0xff]
        %v1911 = vld [vmem:[#allocation2 + $0x8] sm:$0xff]
        %v1912 = vld [vmem:[#allocation2 + $0x10] sm:$0xff]
        %v1913 = vld [vmem:[#allocation2 + $0x18] sm:$0xff]
        %1918 = vrot.lane.b32.xlu0 %v1910, 101
        %v1919 = vpop.permute.xlu0 %1918
        %1920 = vrot.lane.b32.xlu0 %v1911, 101
        %v1921 = vpop.permute.xlu0 %1920
        %1922 = vrot.lane.b32.xlu0 %v1912, 101
        %v1923 = vpop.permute.xlu0 %1922
        %1924 = vrot.lane.b32.xlu0 %v1913, 101
        %v1925 = vpop.permute.xlu0 %1924
        %v1926 = vsel %vm1628, %v1919, %v1921
        %v1927 = vsel %vm1628, %v1923, %v1925
        %1930 = vst [vmem:[#allocation3 + $0x50] sm:$0xff] %v1926
        %1931 = vst [vmem:[#allocation3 + $0x58] sm:$0xff] %v1927
        %v1932 = vld [vmem:[#allocation2] sm:$0xff]
        %v1933 = vld [vmem:[#allocation2 + $0x8] sm:$0xff]
        %v1934 = vld [vmem:[#allocation2 + $0x10] sm:$0xff]
        %v1935 = vld [vmem:[#allocation2 + $0x18] sm:$0xff]
        %1940 = vrot.lane.b32.xlu0 %v1932, 100
        %v1941 = vpop.permute.xlu0 %1940
        %1942 = vrot.lane.b32.xlu0 %v1933, 100
        %v1943 = vpop.permute.xlu0 %1942
        %1944 = vrot.lane.b32.xlu0 %v1934, 100
        %v1945 = vpop.permute.xlu0 %1944
        %1946 = vrot.lane.b32.xlu0 %v1935, 100
        %v1947 = vpop.permute.xlu0 %1946
        %v1948 = vsel %vm798, %v1941, %v1943
        %v1949 = vsel %vm798, %v1945, %v1947
        %1952 = vst [vmem:[#allocation3 + $0x60] sm:$0xff] %v1948
        %1953 = vst [vmem:[#allocation3 + $0x68] sm:$0xff] %v1949
        %v1954 = vld [vmem:[#allocation3] sm:$0xff]
        %v1955 = vld [vmem:[#allocation3 + $0x8] sm:$0xff]
        %v1956 = vld [vmem:[#allocation3 + $0x10] sm:$0xff]
        %v1957 = vld [vmem:[#allocation3 + $0x18] sm:$0xff]
        %v1958 = vld [vmem:[#allocation3 + $0x20] sm:$0xff]
        %v1959 = vld [vmem:[#allocation3 + $0x28] sm:$0xff]
        %v1960 = vld [vmem:[#allocation3 + $0x30] sm:$0xff]
        %v1961 = vld [vmem:[#allocation3 + $0x38] sm:$0xff]
        %v1962 = vld [vmem:[#allocation3 + $0x40] sm:$0xff]
        %v1963 = vld [vmem:[#allocation3 + $0x48] sm:$0xff]
        %v1964 = vld [vmem:[#allocation3 + $0x50] sm:$0xff]
        %v1965 = vld [vmem:[#allocation3 + $0x58] sm:$0xff]
        %v1966 = vld [vmem:[#allocation3 + $0x60] sm:$0xff]
        %v1967 = vld [vmem:[#allocation3 + $0x68] sm:$0xff]
        %1969 = vset.pattern.permute.xlu0 0
        %1970 = vperm.xlu0 %1969, %v1782
        %v1971 = vpop.permute.xlu0 %1970
        %1974 = vset.pattern.permute.xlu0 0
        %1975 = vperm.xlu0 %1974, %v1783
        %v1976 = vpop.permute.xlu0 %1975
        %1979 = vset.pattern.permute.xlu0 0
        %1980 = vperm.xlu0 %1979, %v1784
        %v1981 = vpop.permute.xlu0 %1980
        %1984 = vset.pattern.permute.xlu0 0
        %1985 = vperm.xlu0 %1984, %v1785
        %v1986 = vpop.permute.xlu0 %1985
        %v1992 = vunpack.c.l.b16 %v1777
        %v1993 = vunpack.c.h.b16 %v1777
        %v1994 = vunpack.c.l.b16 %v1778
        %v1995 = vunpack.c.h.b16 %v1778
        %v1996 = vunpack.c.l.b16 %v1779
        %v1997 = vunpack.c.h.b16 %v1779
        %v1998 = vunpack.c.l.b16 %v1780
        %v1999 = vunpack.c.h.b16 %v1780
        %v2000 = vpack.c.b16 %v1994, %v1992
        %v2001 = vpack.c.b16 %v1995, %v1993
        %v2002 = vpack.c.b16 %v1998, %v1996
        %v2003 = vpack.c.b16 %v1999, %v1997
        %v2007 = vsel %vm448, %v2001, 0
        %v2010 = vsel %vm448, %v2003, 0
        %2012 = vmatprep.subr.bf16.mxu0 0
        %2013 = vmatpush1.bf16.msra.mxu0 %v1954
        %2014 = vmatprep.subr.bf16.mxu0 0
        %2015 = vmatpush1.bf16.msra.mxu0 %v1955
        %2016 = vmatprep.subr.bf16.mxu0 0
        %2017 = vmatpush1.bf16.msra.mxu0 %v1956
        %2018 = vmatprep.subr.bf16.mxu0 0
        %2019 = vmatpush1.bf16.msra.mxu0 %v1957
        %2020 = vmatprep.subr.bf16.mxu0 0
        %2021 = vmatpush1.bf16.msra.mxu0 %v1958
        %2022 = vmatprep.subr.bf16.mxu0 0
        %2023 = vmatpush1.bf16.msra.mxu0 %v1959
        %2024 = vmatprep.subr.bf16.mxu0 0
        %2025 = vmatpush1.bf16.msra.mxu0 %v1960
        %2026 = vmatprep.subr.bf16.mxu0 0
        %2027 = vmatpush1.bf16.msra.mxu0 %v1961
        %2028 = vmatprep.subr.bf16.mxu0 0
        %2029 = vmatpush1.bf16.msra.mxu0 %v1962
        %2030 = vmatprep.subr.bf16.mxu0 0
        %2031 = vmatpush1.bf16.msra.mxu0 %v1963
        %2032 = vmatprep.subr.bf16.mxu0 0
        %2033 = vmatpush1.bf16.msra.mxu0 %v1964
        %2034 = vmatprep.subr.bf16.mxu0 0
        %2035 = vmatpush1.bf16.msra.mxu0 %v1965
        %2036 = vmatprep.subr.bf16.mxu0 0
        %2037 = vmatpush1.bf16.msra.mxu0 %v1966
        %2038 = vmatprep.subr.bf16.mxu0 0
        %2039 = vmatpush1.bf16.msra.mxu0 %v1967
        %2040 = vmatprep.subr.bf16.mxu0 0
        %2041 = vmatpush1.bf16.msra.mxu0 0
        %2042 = vmatprep.subr.bf16.mxu0 0
        %2043 = vmatpush1.bf16.msra.mxu0 0
        %2044 = vmatprep.mubr.bf16.mxu0 %v2007
        %2045 = vmatmul.mubr.bf16.gmra.mrb[0].mxu0 %v2000
        %v2046 = vpop.f32.mrb[0].mxu0
        %v2047 = vadd.f32 %v1971, %v2046
        %v2048 = vpop.f32.mrb[0].mxu0
        %v2049 = vpop.f32.mrb[0].mxu0
        %v2050 = vadd.f32 %v1976, %v2049
        %v2051 = vpop.f32.mrb[0].mxu0
        %2052 = vmatprep.mubr.bf16.mxu0 %v2010
        %2053 = vmatmul.mubr.bf16.gmra.mrb[0].mxu0 %v2002
        %v2054 = vpop.f32.mrb[0].mxu0
        %v2055 = vadd.f32 %v1981, %v2054
        %v2056 = vpop.f32.mrb[0].mxu0
        %v2057 = vpop.f32.mrb[0].mxu0
        %v2058 = vadd.f32 %v1986, %v2057
        %v2059 = vpop.f32.mrb[0].mxu0
        %2060 = vdwg.mxu0
        %v2061 = vadd.f32 %v2047, %v304
        %v2062 = vadd.f32 %v2050, %v305
        %v2063 = vadd.f32 %v2055, %v306
        %v2064 = vadd.f32 %v2058, %v307
        %vm2065 = vcmp.gt.f32.partialorder %v2061, 0.0
        %vm2066 = vcmp.gt.f32.partialorder %v2062, 0.0
        %vm2067 = vcmp.gt.f32.partialorder %v2063, 0.0
        %vm2068 = vcmp.gt.f32.partialorder %v2064, 0.0
        %v2069 = vmul.f32 %v2061, 0.1
        %v2070 = vmul.f32 %v2062, 0.1
        %v2071 = vmul.f32 %v2063, 0.1
        %v2072 = vmul.f32 %v2064, 0.1
        %v2073 = vsel %vm2065, %v2061, %v2069
        %v2074 = vsel %vm2066, %v2062, %v2070
        %v2075 = vsel %vm2067, %v2063, %v2071
        %v2076 = vsel %vm2068, %v2064, %v2072
        %s2077 = scalar_lea.vmem %s3, 64
        %v2078 = vld [vmem:[%s2077] sm:$0xff]
        %v2079 = vld [vmem:[%s2077 + $0x8] sm:$0xff]
        %v2080 = vld [vmem:[%s2077 + $0x10] sm:$0xff]
        %v2081 = vld [vmem:[%s2077 + $0x18] sm:$0xff]
        %s2082 = scalar_lea.vmem %s4, 64
        %v2083 = vld [vmem:[%s2082] sm:$0xff]
        %v2084 = vld [vmem:[%s2082 + $0x8] sm:$0xff]
        %v2085 = vld [vmem:[%s2082 + $0x10] sm:$0xff]
        %v2086 = vld [vmem:[%s2082 + $0x18] sm:$0xff]
        %v2087 = vpack.c.bf16 %v2074, %v2073
        %v2088 = vpack.c.bf16 %v2076, %v2075
        %2091 = vrot.lane.b32.xlu0 %v2087, 25
        %v2092 = vpop.permute.xlu0 %2091
        %2093 = vrot.lane.b32.xlu0 %v2088, 25
        %v2094 = vpop.permute.xlu0 %2093
        %2097 = vst.msk [vmem:[#allocation2] sm:$0xff] %vm338, %v2092
        %2098 = vst.msk [vmem:[#allocation2 + $0x8] sm:$0xff] %vm298, %v2092
        %2099 = vst.msk [vmem:[#allocation2 + $0x10] sm:$0xff] %vm338, %v2094
        %2100 = vst.msk [vmem:[#allocation2 + $0x18] sm:$0xff] %vm298, %v2094
        %v2101 = vld [vmem:[#allocation2] sm:$0xff]
        %v2102 = vld [vmem:[#allocation2 + $0x8] sm:$0xff]
        %v2103 = vld [vmem:[#allocation2 + $0x10] sm:$0xff]
        %v2104 = vld [vmem:[#allocation2 + $0x18] sm:$0xff]
        %2109 = vrot.lane.b32.xlu0 %v2101, 112
        %v2110 = vpop.permute.xlu0 %2109
        %2111 = vrot.lane.b32.xlu0 %v2102, 112
        %v2112 = vpop.permute.xlu0 %2111
        %2113 = vrot.lane.b32.xlu0 %v2103, 112
        %v2114 = vpop.permute.xlu0 %2113
        %2115 = vrot.lane.b32.xlu0 %v2104, 112
        %v2116 = vpop.permute.xlu0 %2115
        %vm2117 = vcmask 916480
        %v2118 = vsel %vm2117, %v2110, %v2112
        %v2119 = vsel %vm2117, %v2114, %v2116
        %2122 = vst [vmem:[#allocation3] sm:$0xff] %v2118
        %2123 = vst [vmem:[#allocation3 + $0x8] sm:$0xff] %v2119
        %v2124 = vld [vmem:[#allocation2] sm:$0xff]
        %v2125 = vld [vmem:[#allocation2 + $0x8] sm:$0xff]
        %v2126 = vld [vmem:[#allocation2 + $0x10] sm:$0xff]
        %v2127 = vld [vmem:[#allocation2 + $0x18] sm:$0xff]
        %2132 = vrot.lane.b32.xlu0 %v2124, 109
        %v2133 = vpop.permute.xlu0 %2132
        %2134 = vrot.lane.b32.xlu0 %v2125, 109
        %v2135 = vpop.permute.xlu0 %2134
        %2136 = vrot.lane.b32.xlu0 %v2126, 109
        %v2137 = vpop.permute.xlu0 %2136
        %2138 = vrot.lane.b32.xlu0 %v2127, 109
        %v2139 = vpop.permute.xlu0 %2138
        %vm2140 = vcmask 891904
        %v2141 = vsel %vm2140, %v2133, %v2135
        %v2142 = vsel %vm2140, %v2137, %v2139
        %2145 = vst [vmem:[#allocation3 + $0x10] sm:$0xff] %v2141
        %2146 = vst [vmem:[#allocation3 + $0x18] sm:$0xff] %v2142
        %v2147 = vld [vmem:[#allocation2] sm:$0xff]
        %v2148 = vld [vmem:[#allocation2 + $0x8] sm:$0xff]
        %v2149 = vld [vmem:[#allocation2 + $0x10] sm:$0xff]
        %v2150 = vld [vmem:[#allocation2 + $0x18] sm:$0xff]
        %2155 = vrot.lane.b32.xlu0 %v2147, 106
        %v2156 = vpop.permute.xlu0 %2155
        %2157 = vrot.lane.b32.xlu0 %v2148, 106
        %v2158 = vpop.permute.xlu0 %2157
        %2159 = vrot.lane.b32.xlu0 %v2149, 106
        %v2160 = vpop.permute.xlu0 %2159
        %2161 = vrot.lane.b32.xlu0 %v2150, 106
        %v2162 = vpop.permute.xlu0 %2161
        %v2163 = vsel %vm753, %v2156, %v2158
        %v2164 = vsel %vm753, %v2160, %v2162
        %2167 = vst [vmem:[#allocation3 + $0x20] sm:$0xff] %v2163
        %2168 = vst [vmem:[#allocation3 + $0x28] sm:$0xff] %v2164
        %v2169 = vld [vmem:[#allocation2] sm:$0xff]
        %v2170 = vld [vmem:[#allocation2 + $0x8] sm:$0xff]
        %v2171 = vld [vmem:[#allocation2 + $0x10] sm:$0xff]
        %v2172 = vld [vmem:[#allocation2 + $0x18] sm:$0xff]
        %2177 = vrot.lane.b32.xlu0 %v2169, 103
        %v2178 = vpop.permute.xlu0 %2177
        %2179 = vrot.lane.b32.xlu0 %v2170, 103
        %v2180 = vpop.permute.xlu0 %2179
        %2181 = vrot.lane.b32.xlu0 %v2171, 103
        %v2182 = vpop.permute.xlu0 %2181
        %2183 = vrot.lane.b32.xlu0 %v2172, 103
        %v2184 = vpop.permute.xlu0 %2183
        %v2185 = vsel %vm382, %v2178, %v2180
        %v2186 = vsel %vm382, %v2182, %v2184
        %2189 = vst [vmem:[#allocation3 + $0x30] sm:$0xff] %v2185
        %2190 = vst [vmem:[#allocation3 + $0x38] sm:$0xff] %v2186
        %v2191 = vld [vmem:[#allocation2] sm:$0xff]
        %v2192 = vld [vmem:[#allocation2 + $0x8] sm:$0xff]
        %v2193 = vld [vmem:[#allocation2 + $0x10] sm:$0xff]
        %v2194 = vld [vmem:[#allocation2 + $0x18] sm:$0xff]
        %2199 = vrot.lane.b32.xlu0 %v2191, 100
        %v2200 = vpop.permute.xlu0 %2199
        %2201 = vrot.lane.b32.xlu0 %v2192, 100
        %v2202 = vpop.permute.xlu0 %2201
        %2203 = vrot.lane.b32.xlu0 %v2193, 100
        %v2204 = vpop.permute.xlu0 %2203
        %2205 = vrot.lane.b32.xlu0 %v2194, 100
        %v2206 = vpop.permute.xlu0 %2205
        %v2207 = vsel %vm798, %v2200, %v2202
        %v2208 = vsel %vm798, %v2204, %v2206
        %2211 = vst [vmem:[#allocation3 + $0x40] sm:$0xff] %v2207
        %2212 = vst [vmem:[#allocation3 + $0x48] sm:$0xff] %v2208
        %v2213 = vld [vmem:[#allocation2] sm:$0xff]
        %v2214 = vld [vmem:[#allocation2 + $0x8] sm:$0xff]
        %v2215 = vld [vmem:[#allocation2 + $0x10] sm:$0xff]
        %v2216 = vld [vmem:[#allocation2 + $0x18] sm:$0xff]
        %2221 = vrot.lane.b32.xlu0 %v2213, 97
        %v2222 = vpop.permute.xlu0 %2221
        %2223 = vrot.lane.b32.xlu0 %v2214, 97
        %v2224 = vpop.permute.xlu0 %2223
        %2225 = vrot.lane.b32.xlu0 %v2215, 97
        %v2226 = vpop.permute.xlu0 %2225
        %2227 = vrot.lane.b32.xlu0 %v2216, 97
        %v2228 = vpop.permute.xlu0 %2227
        %vm2229 = vcmask 793600
        %v2230 = vsel %vm2229, %v2222, %v2224
        %v2231 = vsel %vm2229, %v2226, %v2228
        %2234 = vst [vmem:[#allocation3 + $0x50] sm:$0xff] %v2230
        %2235 = vst [vmem:[#allocation3 + $0x58] sm:$0xff] %v2231
        %v2236 = vld [vmem:[#allocation2] sm:$0xff]
        %v2237 = vld [vmem:[#allocation2 + $0x8] sm:$0xff]
        %v2238 = vld [vmem:[#allocation2 + $0x10] sm:$0xff]
        %v2239 = vld [vmem:[#allocation2 + $0x18] sm:$0xff]
        %2244 = vrot.lane.b32.xlu0 %v2236, 94
        %v2245 = vpop.permute.xlu0 %2244
        %2246 = vrot.lane.b32.xlu0 %v2237, 94
        %v2247 = vpop.permute.xlu0 %2246
        %2248 = vrot.lane.b32.xlu0 %v2238, 94
        %v2249 = vpop.permute.xlu0 %2248
        %2250 = vrot.lane.b32.xlu0 %v2239, 94
        %v2251 = vpop.permute.xlu0 %2250
        %vm2252 = vcmask 769024
        %v2253 = vsel %vm2252, %v2245, %v2247
        %v2254 = vsel %vm2252, %v2249, %v2251
        %2257 = vst [vmem:[#allocation3 + $0x60] sm:$0xff] %v2253
        %2258 = vst [vmem:[#allocation3 + $0x68] sm:$0xff] %v2254
        %v2259 = vld [vmem:[#allocation3] sm:$0xff]
        %v2260 = vld [vmem:[#allocation3 + $0x8] sm:$0xff]
        %v2261 = vld [vmem:[#allocation3 + $0x10] sm:$0xff]
        %v2262 = vld [vmem:[#allocation3 + $0x18] sm:$0xff]
        %v2263 = vld [vmem:[#allocation3 + $0x20] sm:$0xff]
        %v2264 = vld [vmem:[#allocation3 + $0x28] sm:$0xff]
        %v2265 = vld [vmem:[#allocation3 + $0x30] sm:$0xff]
        %v2266 = vld [vmem:[#allocation3 + $0x38] sm:$0xff]
        %v2267 = vld [vmem:[#allocation3 + $0x40] sm:$0xff]
        %v2268 = vld [vmem:[#allocation3 + $0x48] sm:$0xff]
        %v2269 = vld [vmem:[#allocation3 + $0x50] sm:$0xff]
        %v2270 = vld [vmem:[#allocation3 + $0x58] sm:$0xff]
        %v2271 = vld [vmem:[#allocation3 + $0x60] sm:$0xff]
        %v2272 = vld [vmem:[#allocation3 + $0x68] sm:$0xff]
        %2274 = vset.pattern.permute.xlu0 0
        %2275 = vperm.xlu0 %2274, %v2083
        %v2276 = vpop.permute.xlu0 %2275
        %2279 = vset.pattern.permute.xlu0 0
        %2280 = vperm.xlu0 %2279, %v2084
        %v2281 = vpop.permute.xlu0 %2280
        %2284 = vset.pattern.permute.xlu0 0
        %2285 = vperm.xlu0 %2284, %v2085
        %v2286 = vpop.permute.xlu0 %2285
        %2289 = vset.pattern.permute.xlu0 0
        %2290 = vperm.xlu0 %2289, %v2086
        %v2291 = vpop.permute.xlu0 %2290
        %v2297 = vunpack.c.l.b16 %v2078
        %v2298 = vunpack.c.h.b16 %v2078
        %v2299 = vunpack.c.l.b16 %v2079
        %v2300 = vunpack.c.h.b16 %v2079
        %v2301 = vunpack.c.l.b16 %v2080
        %v2302 = vunpack.c.h.b16 %v2080
        %v2303 = vunpack.c.l.b16 %v2081
        %v2304 = vunpack.c.h.b16 %v2081
        %v2305 = vpack.c.b16 %v2299, %v2297
        %v2306 = vpack.c.b16 %v2300, %v2298
        %v2307 = vpack.c.b16 %v2303, %v2301
        %v2308 = vpack.c.b16 %v2304, %v2302
        %v2312 = vsel %vm448, %v2306, 0
        %v2315 = vsel %vm448, %v2308, 0
        %2317 = vmatprep.subr.bf16.mxu0 0
        %2318 = vmatpush1.bf16.msra.mxu0 %v2259
        %2319 = vmatprep.subr.bf16.mxu0 0
        %2320 = vmatpush1.bf16.msra.mxu0 %v2260
        %2321 = vmatprep.subr.bf16.mxu0 0
        %2322 = vmatpush1.bf16.msra.mxu0 %v2261
        %2323 = vmatprep.subr.bf16.mxu0 0
        %2324 = vmatpush1.bf16.msra.mxu0 %v2262
        %2325 = vmatprep.subr.bf16.mxu0 0
        %2326 = vmatpush1.bf16.msra.mxu0 %v2263
        %2327 = vmatprep.subr.bf16.mxu0 0
        %2328 = vmatpush1.bf16.msra.mxu0 %v2264
        %2329 = vmatprep.subr.bf16.mxu0 0
        %2330 = vmatpush1.bf16.msra.mxu0 %v2265
        %2331 = vmatprep.subr.bf16.mxu0 0
        %2332 = vmatpush1.bf16.msra.mxu0 %v2266
        %2333 = vmatprep.subr.bf16.mxu0 0
        %2334 = vmatpush1.bf16.msra.mxu0 %v2267
        %2335 = vmatprep.subr.bf16.mxu0 0
        %2336 = vmatpush1.bf16.msra.mxu0 %v2268
        %2337 = vmatprep.subr.bf16.mxu0 0
        %2338 = vmatpush1.bf16.msra.mxu0 %v2269
        %2339 = vmatprep.subr.bf16.mxu0 0
        %2340 = vmatpush1.bf16.msra.mxu0 %v2270
        %2341 = vmatprep.subr.bf16.mxu0 0
        %2342 = vmatpush1.bf16.msra.mxu0 %v2271
        %2343 = vmatprep.subr.bf16.mxu0 0
        %2344 = vmatpush1.bf16.msra.mxu0 %v2272
        %2345 = vmatprep.subr.bf16.mxu0 0
        %2346 = vmatpush1.bf16.msra.mxu0 0
        %2347 = vmatprep.subr.bf16.mxu0 0
        %2348 = vmatpush1.bf16.msra.mxu0 0
        %2349 = vmatprep.mubr.bf16.mxu0 %v2312
        %2350 = vmatmul.mubr.bf16.gmra.mrb[0].mxu0 %v2305
        %v2351 = vpop.f32.mrb[0].mxu0
        %v2352 = vadd.f32 %v2276, %v2351
        %v2353 = vpop.f32.mrb[0].mxu0
        %v2354 = vpop.f32.mrb[0].mxu0
        %v2355 = vadd.f32 %v2281, %v2354
        %v2356 = vpop.f32.mrb[0].mxu0
        %2357 = vmatprep.mubr.bf16.mxu0 %v2315
        %2358 = vmatmul.mubr.bf16.gmra.mrb[0].mxu0 %v2307
        %v2359 = vpop.f32.mrb[0].mxu0
        %v2360 = vadd.f32 %v2286, %v2359
        %v2361 = vpop.f32.mrb[0].mxu0
        %v2362 = vpop.f32.mrb[0].mxu0
        %v2363 = vadd.f32 %v2291, %v2362
        %v2364 = vpop.f32.mrb[0].mxu0
        %2365 = vdwg.mxu0
        %vm2366 = vcmp.gt.f32.partialorder %v2352, 0.0
        %vm2367 = vcmp.gt.f32.partialorder %v2355, 0.0
        %vm2368 = vcmp.gt.f32.partialorder %v2360, 0.0
        %vm2369 = vcmp.gt.f32.partialorder %v2363, 0.0
        %v2370 = vmul.f32 %v2352, 0.1
        %v2371 = vmul.f32 %v2355, 0.1
        %v2372 = vmul.f32 %v2360, 0.1
        %v2373 = vmul.f32 %v2363, 0.1
        %v2374 = vsel %vm2366, %v2352, %v2370
        %v2375 = vsel %vm2367, %v2355, %v2371
        %v2376 = vsel %vm2368, %v2360, %v2372
        %v2377 = vsel %vm2369, %v2363, %v2373
        %s2378 = scalar_lea.vmem %s3, 96
        %v2379 = vld [vmem:[%s2378] sm:$0xff]
        %v2380 = vld [vmem:[%s2378 + $0x8] sm:$0xff]
        %v2381 = vld [vmem:[%s2378 + $0x10] sm:$0xff]
        %v2382 = vld [vmem:[%s2378 + $0x18] sm:$0xff]
        %s2383 = scalar_lea.vmem %s4, 96
        %v2384 = vld [vmem:[%s2383] sm:$0xff]
        %v2385 = vld [vmem:[%s2383 + $0x8] sm:$0xff]
        %v2386 = vld [vmem:[%s2383 + $0x10] sm:$0xff]
        %v2387 = vld [vmem:[%s2383 + $0x18] sm:$0xff]
        %v2388 = vpack.c.bf16 %v2375, %v2374
        %v2389 = vpack.c.bf16 %v2377, %v2376
        %2392 = vrot.lane.b32.xlu0 %v2388, 25
        %v2393 = vpop.permute.xlu0 %2392
        %2394 = vrot.lane.b32.xlu0 %v2389, 25
        %v2395 = vpop.permute.xlu0 %2394
        %2398 = vst.msk [vmem:[#allocation2] sm:$0xff] %vm338, %v2393
        %2399 = vst.msk [vmem:[#allocation2 + $0x8] sm:$0xff] %vm298, %v2393
        %2400 = vst.msk [vmem:[#allocation2 + $0x10] sm:$0xff] %vm338, %v2395
        %2401 = vst.msk [vmem:[#allocation2 + $0x18] sm:$0xff] %vm298, %v2395
        %v2402 = vld [vmem:[#allocation2] sm:$0xff]
        %v2403 = vld [vmem:[#allocation2 + $0x8] sm:$0xff]
        %v2404 = vld [vmem:[#allocation2 + $0x10] sm:$0xff]
        %v2405 = vld [vmem:[#allocation2 + $0x18] sm:$0xff]
        %2410 = vrot.lane.b32.xlu0 %v2402, 106
        %v2411 = vpop.permute.xlu0 %2410
        %2412 = vrot.lane.b32.xlu0 %v2403, 106
        %v2413 = vpop.permute.xlu0 %2412
        %2414 = vrot.lane.b32.xlu0 %v2404, 106
        %v2415 = vpop.permute.xlu0 %2414
        %2416 = vrot.lane.b32.xlu0 %v2405, 106
        %v2417 = vpop.permute.xlu0 %2416
        %v2418 = vsel %vm753, %v2411, %v2413
        %v2419 = vsel %vm753, %v2415, %v2417
        %2422 = vst [vmem:[#allocation3] sm:$0xff] %v2418
        %2423 = vst [vmem:[#allocation3 + $0x8] sm:$0xff] %v2419
        %v2424 = vld [vmem:[#allocation2] sm:$0xff]
        %v2425 = vld [vmem:[#allocation2 + $0x8] sm:$0xff]
        %v2426 = vld [vmem:[#allocation2 + $0x10] sm:$0xff]
        %v2427 = vld [vmem:[#allocation2 + $0x18] sm:$0xff]
        %2432 = vrot.lane.b32.xlu0 %v2424, 105
        %v2433 = vpop.permute.xlu0 %2432
        %2434 = vrot.lane.b32.xlu0 %v2425, 105
        %v2435 = vpop.permute.xlu0 %2434
        %2436 = vrot.lane.b32.xlu0 %v2426, 105
        %v2437 = vpop.permute.xlu0 %2436
        %2438 = vrot.lane.b32.xlu0 %v2427, 105
        %v2439 = vpop.permute.xlu0 %2438
        %v2440 = vsel %vm1539, %v2433, %v2435
        %v2441 = vsel %vm1539, %v2437, %v2439
        %2444 = vst [vmem:[#allocation3 + $0x10] sm:$0xff] %v2440
        %2445 = vst [vmem:[#allocation3 + $0x18] sm:$0xff] %v2441
        %v2446 = vld [vmem:[#allocation2] sm:$0xff]
        %v2447 = vld [vmem:[#allocation2 + $0x8] sm:$0xff]
        %v2448 = vld [vmem:[#allocation2 + $0x10] sm:$0xff]
        %v2449 = vld [vmem:[#allocation2 + $0x18] sm:$0xff]
        %2454 = vrot.lane.b32.xlu0 %v2446, 104
        %v2455 = vpop.permute.xlu0 %2454
        %2456 = vrot.lane.b32.xlu0 %v2447, 104
        %v2457 = vpop.permute.xlu0 %2456
        %2458 = vrot.lane.b32.xlu0 %v2448, 104
        %v2459 = vpop.permute.xlu0 %2458
        %2460 = vrot.lane.b32.xlu0 %v2449, 104
        %v2461 = vpop.permute.xlu0 %2460
        %v2462 = vsel %vm359, %v2455, %v2457
        %v2463 = vsel %vm359, %v2459, %v2461
        %2466 = vst [vmem:[#allocation3 + $0x20] sm:$0xff] %v2462
        %2467 = vst [vmem:[#allocation3 + $0x28] sm:$0xff] %v2463
        %v2468 = vld [vmem:[#allocation2] sm:$0xff]
        %v2469 = vld [vmem:[#allocation2 + $0x8] sm:$0xff]
        %v2470 = vld [vmem:[#allocation2 + $0x10] sm:$0xff]
        %v2471 = vld [vmem:[#allocation2 + $0x18] sm:$0xff]
        %2476 = vrot.lane.b32.xlu0 %v2468, 103
        %v2477 = vpop.permute.xlu0 %2476
        %2478 = vrot.lane.b32.xlu0 %v2469, 103
        %v2479 = vpop.permute.xlu0 %2478
        %2480 = vrot.lane.b32.xlu0 %v2470, 103
        %v2481 = vpop.permute.xlu0 %2480
        %2482 = vrot.lane.b32.xlu0 %v2471, 103
        %v2483 = vpop.permute.xlu0 %2482
        %v2484 = vsel %vm382, %v2477, %v2479
        %v2485 = vsel %vm382, %v2481, %v2483
        %2488 = vst [vmem:[#allocation3 + $0x30] sm:$0xff] %v2484
        %2489 = vst [vmem:[#allocation3 + $0x38] sm:$0xff] %v2485
        %v2490 = vld [vmem:[#allocation2] sm:$0xff]
        %v2491 = vld [vmem:[#allocation2 + $0x8] sm:$0xff]
        %v2492 = vld [vmem:[#allocation2 + $0x10] sm:$0xff]
        %v2493 = vld [vmem:[#allocation2 + $0x18] sm:$0xff]
        %2498 = vrot.lane.b32.xlu0 %v2490, 102
        %v2499 = vpop.permute.xlu0 %2498
        %2500 = vrot.lane.b32.xlu0 %v2491, 102
        %v2501 = vpop.permute.xlu0 %2500
        %2502 = vrot.lane.b32.xlu0 %v2492, 102
        %v2503 = vpop.permute.xlu0 %2502
        %2504 = vrot.lane.b32.xlu0 %v2493, 102
        %v2505 = vpop.permute.xlu0 %2504
        %v2506 = vsel %vm405, %v2499, %v2501
        %v2507 = vsel %vm405, %v2503, %v2505
        %2510 = vst [vmem:[#allocation3 + $0x40] sm:$0xff] %v2506
        %2511 = vst [vmem:[#allocation3 + $0x48] sm:$0xff] %v2507
        %v2512 = vld [vmem:[#allocation2] sm:$0xff]
        %v2513 = vld [vmem:[#allocation2 + $0x8] sm:$0xff]
        %v2514 = vld [vmem:[#allocation2 + $0x10] sm:$0xff]
        %v2515 = vld [vmem:[#allocation2 + $0x18] sm:$0xff]
        %2520 = vrot.lane.b32.xlu0 %v2512, 101
        %v2521 = vpop.permute.xlu0 %2520
        %2522 = vrot.lane.b32.xlu0 %v2513, 101
        %v2523 = vpop.permute.xlu0 %2522
        %2524 = vrot.lane.b32.xlu0 %v2514, 101
        %v2525 = vpop.permute.xlu0 %2524
        %2526 = vrot.lane.b32.xlu0 %v2515, 101
        %v2527 = vpop.permute.xlu0 %2526
        %v2528 = vsel %vm1628, %v2521, %v2523
        %v2529 = vsel %vm1628, %v2525, %v2527
        %2532 = vst [vmem:[#allocation3 + $0x50] sm:$0xff] %v2528
        %2533 = vst [vmem:[#allocation3 + $0x58] sm:$0xff] %v2529
        %v2534 = vld [vmem:[#allocation2] sm:$0xff]
        %v2535 = vld [vmem:[#allocation2 + $0x8] sm:$0xff]
        %v2536 = vld [vmem:[#allocation2 + $0x10] sm:$0xff]
        %v2537 = vld [vmem:[#allocation2 + $0x18] sm:$0xff]
        %2542 = vrot.lane.b32.xlu0 %v2534, 100
        %v2543 = vpop.permute.xlu0 %2542
        %2544 = vrot.lane.b32.xlu0 %v2535, 100
        %v2545 = vpop.permute.xlu0 %2544
        %2546 = vrot.lane.b32.xlu0 %v2536, 100
        %v2547 = vpop.permute.xlu0 %2546
        %2548 = vrot.lane.b32.xlu0 %v2537, 100
        %v2549 = vpop.permute.xlu0 %2548
        %v2550 = vsel %vm798, %v2543, %v2545
        %v2551 = vsel %vm798, %v2547, %v2549
        %2554 = vst [vmem:[#allocation3 + $0x60] sm:$0xff] %v2550
        %2555 = vst [vmem:[#allocation3 + $0x68] sm:$0xff] %v2551
        %v2556 = vld [vmem:[#allocation3] sm:$0xff]
        %v2557 = vld [vmem:[#allocation3 + $0x8] sm:$0xff]
        %v2558 = vld [vmem:[#allocation3 + $0x10] sm:$0xff]
        %v2559 = vld [vmem:[#allocation3 + $0x18] sm:$0xff]
        %v2560 = vld [vmem:[#allocation3 + $0x20] sm:$0xff]
        %v2561 = vld [vmem:[#allocation3 + $0x28] sm:$0xff]
        %v2562 = vld [vmem:[#allocation3 + $0x30] sm:$0xff]
        %v2563 = vld [vmem:[#allocation3 + $0x38] sm:$0xff]
        %v2564 = vld [vmem:[#allocation3 + $0x40] sm:$0xff]
        %v2565 = vld [vmem:[#allocation3 + $0x48] sm:$0xff]
        %v2566 = vld [vmem:[#allocation3 + $0x50] sm:$0xff]
        %v2567 = vld [vmem:[#allocation3 + $0x58] sm:$0xff]
        %v2568 = vld [vmem:[#allocation3 + $0x60] sm:$0xff]
        %v2569 = vld [vmem:[#allocation3 + $0x68] sm:$0xff]
        %2571 = vset.pattern.permute.xlu0 0
        %2572 = vperm.xlu0 %2571, %v2384
        %v2573 = vpop.permute.xlu0 %2572
        %2576 = vset.pattern.permute.xlu0 0
        %2577 = vperm.xlu0 %2576, %v2385
        %v2578 = vpop.permute.xlu0 %2577
        %2581 = vset.pattern.permute.xlu0 0
        %2582 = vperm.xlu0 %2581, %v2386
        %v2583 = vpop.permute.xlu0 %2582
        %2586 = vset.pattern.permute.xlu0 0
        %2587 = vperm.xlu0 %2586, %v2387
        %v2588 = vpop.permute.xlu0 %2587
        %v2594 = vunpack.c.l.b16 %v2379
        %v2595 = vunpack.c.h.b16 %v2379
        %v2596 = vunpack.c.l.b16 %v2380
        %v2597 = vunpack.c.h.b16 %v2380
        %v2598 = vunpack.c.l.b16 %v2381
        %v2599 = vunpack.c.h.b16 %v2381
        %v2600 = vunpack.c.l.b16 %v2382
        %v2601 = vunpack.c.h.b16 %v2382
        %v2602 = vpack.c.b16 %v2596, %v2594
        %v2603 = vpack.c.b16 %v2597, %v2595
        %v2604 = vpack.c.b16 %v2600, %v2598
        %v2605 = vpack.c.b16 %v2601, %v2599
        %v2609 = vsel %vm448, %v2603, 0
        %v2612 = vsel %vm448, %v2605, 0
        %2614 = vmatprep.subr.bf16.mxu0 0
        %2615 = vmatpush1.bf16.msra.mxu0 %v2556
        %2616 = vmatprep.subr.bf16.mxu0 0
        %2617 = vmatpush1.bf16.msra.mxu0 %v2557
        %2618 = vmatprep.subr.bf16.mxu0 0
        %2619 = vmatpush1.bf16.msra.mxu0 %v2558
        %2620 = vmatprep.subr.bf16.mxu0 0
        %2621 = vmatpush1.bf16.msra.mxu0 %v2559
        %2622 = vmatprep.subr.bf16.mxu0 0
        %2623 = vmatpush1.bf16.msra.mxu0 %v2560
        %2624 = vmatprep.subr.bf16.mxu0 0
        %2625 = vmatpush1.bf16.msra.mxu0 %v2561
        %2626 = vmatprep.subr.bf16.mxu0 0
        %2627 = vmatpush1.bf16.msra.mxu0 %v2562
        %2628 = vmatprep.subr.bf16.mxu0 0
        %2629 = vmatpush1.bf16.msra.mxu0 %v2563
        %2630 = vmatprep.subr.bf16.mxu0 0
        %2631 = vmatpush1.bf16.msra.mxu0 %v2564
        %2632 = vmatprep.subr.bf16.mxu0 0
        %2633 = vmatpush1.bf16.msra.mxu0 %v2565
        %2634 = vmatprep.subr.bf16.mxu0 0
        %2635 = vmatpush1.bf16.msra.mxu0 %v2566
        %2636 = vmatprep.subr.bf16.mxu0 0
        %2637 = vmatpush1.bf16.msra.mxu0 %v2567
        %2638 = vmatprep.subr.bf16.mxu0 0
        %2639 = vmatpush1.bf16.msra.mxu0 %v2568
        %2640 = vmatprep.subr.bf16.mxu0 0
        %2641 = vmatpush1.bf16.msra.mxu0 %v2569
        %2642 = vmatprep.subr.bf16.mxu0 0
        %2643 = vmatpush1.bf16.msra.mxu0 0
        %2644 = vmatprep.subr.bf16.mxu0 0
        %2645 = vmatpush1.bf16.msra.mxu0 0
        %2646 = vmatprep.mubr.bf16.mxu0 %v2609
        %2647 = vmatmul.mubr.bf16.gmra.mrb[0].mxu0 %v2602
        %v2648 = vpop.f32.mrb[0].mxu0
        %v2649 = vadd.f32 %v2573, %v2648
        %v2650 = vpop.f32.mrb[0].mxu0
        %v2651 = vpop.f32.mrb[0].mxu0
        %v2652 = vadd.f32 %v2578, %v2651
        %v2653 = vpop.f32.mrb[0].mxu0
        %2654 = vmatprep.mubr.bf16.mxu0 %v2612
        %2655 = vmatmul.mubr.bf16.gmra.mrb[0].mxu0 %v2604
        %v2656 = vpop.f32.mrb[0].mxu0
        %v2657 = vadd.f32 %v2583, %v2656
        %v2658 = vpop.f32.mrb[0].mxu0
        %v2659 = vpop.f32.mrb[0].mxu0
        %v2660 = vadd.f32 %v2588, %v2659
        %v2661 = vpop.f32.mrb[0].mxu0
        %2662 = vdwg.mxu0
        %v2663 = vadd.f32 %v2649, %v2061
        %v2664 = vadd.f32 %v2652, %v2062
        %v2665 = vadd.f32 %v2657, %v2063
        %v2666 = vadd.f32 %v2660, %v2064
        %vm2667 = vcmp.gt.f32.partialorder %v2663, 0.0
        %vm2668 = vcmp.gt.f32.partialorder %v2664, 0.0
        %vm2669 = vcmp.gt.f32.partialorder %v2665, 0.0
        %vm2670 = vcmp.gt.f32.partialorder %v2666, 0.0
        %v2671 = vmul.f32 %v2663, 0.1
        %v2672 = vmul.f32 %v2664, 0.1
        %v2673 = vmul.f32 %v2665, 0.1
        %v2674 = vmul.f32 %v2666, 0.1
        %v2675 = vsel %vm2667, %v2663, %v2671
        %v2676 = vsel %vm2668, %v2664, %v2672
        %v2677 = vsel %vm2669, %v2665, %v2673
        %v2678 = vsel %vm2670, %v2666, %v2674
        %s2679 = scalar_lea.vmem %s3, 128
        %v2680 = vld [vmem:[%s2679] sm:$0xff]
        %v2681 = vld [vmem:[%s2679 + $0x8] sm:$0xff]
        %v2682 = vld [vmem:[%s2679 + $0x10] sm:$0xff]
        %v2683 = vld [vmem:[%s2679 + $0x18] sm:$0xff]
        %s2684 = scalar_lea.vmem %s4, 128
        %v2685 = vld [vmem:[%s2684] sm:$0xff]
        %v2686 = vld [vmem:[%s2684 + $0x8] sm:$0xff]
        %v2687 = vld [vmem:[%s2684 + $0x10] sm:$0xff]
        %v2688 = vld [vmem:[%s2684 + $0x18] sm:$0xff]
        %v2689 = vpack.c.bf16 %v2676, %v2675
        %v2690 = vpack.c.bf16 %v2678, %v2677
        %2693 = vrot.lane.b32.xlu0 %v2689, 25
        %v2694 = vpop.permute.xlu0 %2693
        %2695 = vrot.lane.b32.xlu0 %v2690, 25
        %v2696 = vpop.permute.xlu0 %2695
        %2699 = vst.msk [vmem:[#allocation2] sm:$0xff] %vm338, %v2694
        %2700 = vst.msk [vmem:[#allocation2 + $0x8] sm:$0xff] %vm298, %v2694
        %2701 = vst.msk [vmem:[#allocation2 + $0x10] sm:$0xff] %vm338, %v2696
        %2702 = vst.msk [vmem:[#allocation2 + $0x18] sm:$0xff] %vm298, %v2696
        %v2703 = vld [vmem:[#allocation2] sm:$0xff]
        %v2704 = vld [vmem:[#allocation2 + $0x8] sm:$0xff]
        %v2705 = vld [vmem:[#allocation2 + $0x10] sm:$0xff]
        %v2706 = vld [vmem:[#allocation2 + $0x18] sm:$0xff]
        %2711 = vrot.lane.b32.xlu0 %v2703, 118
        %v2712 = vpop.permute.xlu0 %2711
        %2713 = vrot.lane.b32.xlu0 %v2704, 118
        %v2714 = vpop.permute.xlu0 %2713
        %2715 = vrot.lane.b32.xlu0 %v2705, 118
        %v2716 = vpop.permute.xlu0 %2715
        %2717 = vrot.lane.b32.xlu0 %v2706, 118
        %v2718 = vpop.permute.xlu0 %2717
        %vm2719 = vcmask 965632
        %v2720 = vsel %vm2719, %v2712, %v2714
        %v2721 = vsel %vm2719, %v2716, %v2718
        %2724 = vst [vmem:[#allocation3] sm:$0xff] %v2720
        %2725 = vst [vmem:[#allocation3 + $0x8] sm:$0xff] %v2721
        %v2726 = vld [vmem:[#allocation2] sm:$0xff]
        %v2727 = vld [vmem:[#allocation2 + $0x8] sm:$0xff]
        %v2728 = vld [vmem:[#allocation2 + $0x10] sm:$0xff]
        %v2729 = vld [vmem:[#allocation2 + $0x18] sm:$0xff]
        %2734 = vrot.lane.b32.xlu0 %v2726, 113
        %v2735 = vpop.permute.xlu0 %2734
        %2736 = vrot.lane.b32.xlu0 %v2727, 113
        %v2737 = vpop.permute.xlu0 %2736
        %2738 = vrot.lane.b32.xlu0 %v2728, 113
        %v2739 = vpop.permute.xlu0 %2738
        %2740 = vrot.lane.b32.xlu0 %v2729, 113
        %v2741 = vpop.permute.xlu0 %2740
        %vm2742 = vcmask 924672
        %v2743 = vsel %vm2742, %v2735, %v2737
        %v2744 = vsel %vm2742, %v2739, %v2741
        %2747 = vst [vmem:[#allocation3 + $0x10] sm:$0xff] %v2743
        %2748 = vst [vmem:[#allocation3 + $0x18] sm:$0xff] %v2744
        %v2749 = vld [vmem:[#allocation2] sm:$0xff]
        %v2750 = vld [vmem:[#allocation2 + $0x8] sm:$0xff]
        %v2751 = vld [vmem:[#allocation2 + $0x10] sm:$0xff]
        %v2752 = vld [vmem:[#allocation2 + $0x18] sm:$0xff]
        %2757 = vrot.lane.b32.xlu0 %v2749, 108
        %v2758 = vpop.permute.xlu0 %2757
        %2759 = vrot.lane.b32.xlu0 %v2750, 108
        %v2760 = vpop.permute.xlu0 %2759
        %2761 = vrot.lane.b32.xlu0 %v2751, 108
        %v2762 = vpop.permute.xlu0 %2761
        %2763 = vrot.lane.b32.xlu0 %v2752, 108
        %v2764 = vpop.permute.xlu0 %2763
        %v2765 = vsel %vm1145, %v2758, %v2760
        %v2766 = vsel %vm1145, %v2762, %v2764
        %2769 = vst [vmem:[#allocation3 + $0x20] sm:$0xff] %v2765
        %2770 = vst [vmem:[#allocation3 + $0x28] sm:$0xff] %v2766
        %v2771 = vld [vmem:[#allocation2] sm:$0xff]
        %v2772 = vld [vmem:[#allocation2 + $0x8] sm:$0xff]
        %v2773 = vld [vmem:[#allocation2 + $0x10] sm:$0xff]
        %v2774 = vld [vmem:[#allocation2 + $0x18] sm:$0xff]
        %2779 = vrot.lane.b32.xlu0 %v2771, 103
        %v2780 = vpop.permute.xlu0 %2779
        %2781 = vrot.lane.b32.xlu0 %v2772, 103
        %v2782 = vpop.permute.xlu0 %2781
        %2783 = vrot.lane.b32.xlu0 %v2773, 103
        %v2784 = vpop.permute.xlu0 %2783
        %2785 = vrot.lane.b32.xlu0 %v2774, 103
        %v2786 = vpop.permute.xlu0 %2785
        %v2787 = vsel %vm382, %v2780, %v2782
        %v2788 = vsel %vm382, %v2784, %v2786
        %2791 = vst [vmem:[#allocation3 + $0x30] sm:$0xff] %v2787
        %2792 = vst [vmem:[#allocation3 + $0x38] sm:$0xff] %v2788
        %v2793 = vld [vmem:[#allocation2] sm:$0xff]
        %v2794 = vld [vmem:[#allocation2 + $0x8] sm:$0xff]
        %v2795 = vld [vmem:[#allocation2 + $0x10] sm:$0xff]
        %v2796 = vld [vmem:[#allocation2 + $0x18] sm:$0xff]
        %2801 = vrot.lane.b32.xlu0 %v2793, 98
        %v2802 = vpop.permute.xlu0 %2801
        %2803 = vrot.lane.b32.xlu0 %v2794, 98
        %v2804 = vpop.permute.xlu0 %2803
        %2805 = vrot.lane.b32.xlu0 %v2795, 98
        %v2806 = vpop.permute.xlu0 %2805
        %2807 = vrot.lane.b32.xlu0 %v2796, 98
        %v2808 = vpop.permute.xlu0 %2807
        %v2809 = vsel %vm1190, %v2802, %v2804
        %v2810 = vsel %vm1190, %v2806, %v2808
        %2813 = vst [vmem:[#allocation3 + $0x40] sm:$0xff] %v2809
        %2814 = vst [vmem:[#allocation3 + $0x48] sm:$0xff] %v2810
        %v2815 = vld [vmem:[#allocation2] sm:$0xff]
        %v2816 = vld [vmem:[#allocation2 + $0x8] sm:$0xff]
        %v2817 = vld [vmem:[#allocation2 + $0x10] sm:$0xff]
        %v2818 = vld [vmem:[#allocation2 + $0x18] sm:$0xff]
        %2823 = vrot.lane.b32.xlu0 %v2815, 93
        %v2824 = vpop.permute.xlu0 %2823
        %2825 = vrot.lane.b32.xlu0 %v2816, 93
        %v2826 = vpop.permute.xlu0 %2825
        %2827 = vrot.lane.b32.xlu0 %v2817, 93
        %v2828 = vpop.permute.xlu0 %2827
        %2829 = vrot.lane.b32.xlu0 %v2818, 93
        %v2830 = vpop.permute.xlu0 %2829
        %vm2831 = vcmask 760832
        %v2832 = vsel %vm2831, %v2824, %v2826
        %v2833 = vsel %vm2831, %v2828, %v2830
        %2836 = vst [vmem:[#allocation3 + $0x50] sm:$0xff] %v2832
        %2837 = vst [vmem:[#allocation3 + $0x58] sm:$0xff] %v2833
        %v2838 = vld [vmem:[#allocation2] sm:$0xff]
        %v2839 = vld [vmem:[#allocation2 + $0x8] sm:$0xff]
        %v2840 = vld [vmem:[#allocation2 + $0x10] sm:$0xff]
        %v2841 = vld [vmem:[#allocation2 + $0x18] sm:$0xff]
        %2846 = vrot.lane.b32.xlu0 %v2838, 88
        %v2847 = vpop.permute.xlu0 %2846
        %2848 = vrot.lane.b32.xlu0 %v2839, 88
        %v2849 = vpop.permute.xlu0 %2848
        %2850 = vrot.lane.b32.xlu0 %v2840, 88
        %v2851 = vpop.permute.xlu0 %2850
        %2852 = vrot.lane.b32.xlu0 %v2841, 88
        %v2853 = vpop.permute.xlu0 %2852
        %vm2854 = vcmask 719872
        %v2855 = vsel %vm2854, %v2847, %v2849
        %v2856 = vsel %vm2854, %v2851, %v2853
        %2859 = vst [vmem:[#allocation3 + $0x60] sm:$0xff] %v2855
        %2860 = vst [vmem:[#allocation3 + $0x68] sm:$0xff] %v2856
        %v2861 = vld [vmem:[#allocation3] sm:$0xff]
        %v2862 = vld [vmem:[#allocation3 + $0x8] sm:$0xff]
        %v2863 = vld [vmem:[#allocation3 + $0x10] sm:$0xff]
        %v2864 = vld [vmem:[#allocation3 + $0x18] sm:$0xff]
        %v2865 = vld [vmem:[#allocation3 + $0x20] sm:$0xff]
        %v2866 = vld [vmem:[#allocation3 + $0x28] sm:$0xff]
        %v2867 = vld [vmem:[#allocation3 + $0x30] sm:$0xff]
        %v2868 = vld [vmem:[#allocation3 + $0x38] sm:$0xff]
        %v2869 = vld [vmem:[#allocation3 + $0x40] sm:$0xff]
        %v2870 = vld [vmem:[#allocation3 + $0x48] sm:$0xff]
        %v2871 = vld [vmem:[#allocation3 + $0x50] sm:$0xff]
        %v2872 = vld [vmem:[#allocation3 + $0x58] sm:$0xff]
        %v2873 = vld [vmem:[#allocation3 + $0x60] sm:$0xff]
        %v2874 = vld [vmem:[#allocation3 + $0x68] sm:$0xff]
        %2876 = vset.pattern.permute.xlu0 0
        %2877 = vperm.xlu0 %2876, %v2685
        %v2878 = vpop.permute.xlu0 %2877
        %2881 = vset.pattern.permute.xlu0 0
        %2882 = vperm.xlu0 %2881, %v2686
        %v2883 = vpop.permute.xlu0 %2882
        %2886 = vset.pattern.permute.xlu0 0
        %2887 = vperm.xlu0 %2886, %v2687
        %v2888 = vpop.permute.xlu0 %2887
        %2891 = vset.pattern.permute.xlu0 0
        %2892 = vperm.xlu0 %2891, %v2688
        %v2893 = vpop.permute.xlu0 %2892
        %v2899 = vunpack.c.l.b16 %v2680
        %v2900 = vunpack.c.h.b16 %v2680
        %v2901 = vunpack.c.l.b16 %v2681
        %v2902 = vunpack.c.h.b16 %v2681
        %v2903 = vunpack.c.l.b16 %v2682
        %v2904 = vunpack.c.h.b16 %v2682
        %v2905 = vunpack.c.l.b16 %v2683
        %v2906 = vunpack.c.h.b16 %v2683
        %v2907 = vpack.c.b16 %v2901, %v2899
        %v2908 = vpack.c.b16 %v2902, %v2900
        %v2909 = vpack.c.b16 %v2905, %v2903
        %v2910 = vpack.c.b16 %v2906, %v2904
        %v2914 = vsel %vm448, %v2908, 0
        %v2917 = vsel %vm448, %v2910, 0
        %2919 = vmatprep.subr.bf16.mxu0 0
        %2920 = vmatpush1.bf16.msra.mxu0 %v2861
        %2921 = vmatprep.subr.bf16.mxu0 0
        %2922 = vmatpush1.bf16.msra.mxu0 %v2862
        %2923 = vmatprep.subr.bf16.mxu0 0
        %2924 = vmatpush1.bf16.msra.mxu0 %v2863
        %2925 = vmatprep.subr.bf16.mxu0 0
        %2926 = vmatpush1.bf16.msra.mxu0 %v2864
        %2927 = vmatprep.subr.bf16.mxu0 0
        %2928 = vmatpush1.bf16.msra.mxu0 %v2865
        %2929 = vmatprep.subr.bf16.mxu0 0
        %2930 = vmatpush1.bf16.msra.mxu0 %v2866
        %2931 = vmatprep.subr.bf16.mxu0 0
        %2932 = vmatpush1.bf16.msra.mxu0 %v2867
        %2933 = vmatprep.subr.bf16.mxu0 0
        %2934 = vmatpush1.bf16.msra.mxu0 %v2868
        %2935 = vmatprep.subr.bf16.mxu0 0
        %2936 = vmatpush1.bf16.msra.mxu0 %v2869
        %2937 = vmatprep.subr.bf16.mxu0 0
        %2938 = vmatpush1.bf16.msra.mxu0 %v2870
        %2939 = vmatprep.subr.bf16.mxu0 0
        %2940 = vmatpush1.bf16.msra.mxu0 %v2871
        %2941 = vmatprep.subr.bf16.mxu0 0
        %2942 = vmatpush1.bf16.msra.mxu0 %v2872
        %2943 = vmatprep.subr.bf16.mxu0 0
        %2944 = vmatpush1.bf16.msra.mxu0 %v2873
        %2945 = vmatprep.subr.bf16.mxu0 0
        %2946 = vmatpush1.bf16.msra.mxu0 %v2874
        %2947 = vmatprep.subr.bf16.mxu0 0
        %2948 = vmatpush1.bf16.msra.mxu0 0
        %2949 = vmatprep.subr.bf16.mxu0 0
        %2950 = vmatpush1.bf16.msra.mxu0 0
        %2951 = vmatprep.mubr.bf16.mxu0 %v2914
        %2952 = vmatmul.mubr.bf16.gmra.mrb[0].mxu0 %v2907
        %v2953 = vpop.f32.mrb[0].mxu0
        %v2954 = vadd.f32 %v2878, %v2953
        %v2955 = vpop.f32.mrb[0].mxu0
        %v2956 = vpop.f32.mrb[0].mxu0
        %v2957 = vadd.f32 %v2883, %v2956
        %v2958 = vpop.f32.mrb[0].mxu0
        %2959 = vmatprep.mubr.bf16.mxu0 %v2917
        %2960 = vmatmul.mubr.bf16.gmra.mrb[0].mxu0 %v2909
        %v2961 = vpop.f32.mrb[0].mxu0
        %v2962 = vadd.f32 %v2888, %v2961
        %v2963 = vpop.f32.mrb[0].mxu0
        %v2964 = vpop.f32.mrb[0].mxu0
        %v2965 = vadd.f32 %v2893, %v2964
        %v2966 = vpop.f32.mrb[0].mxu0
        %2967 = vdwg.mxu0
        %vm2968 = vcmp.gt.f32.partialorder %v2954, 0.0
        %vm2969 = vcmp.gt.f32.partialorder %v2957, 0.0
        %vm2970 = vcmp.gt.f32.partialorder %v2962, 0.0
        %vm2971 = vcmp.gt.f32.partialorder %v2965, 0.0
        %v2972 = vmul.f32 %v2954, 0.1
        %v2973 = vmul.f32 %v2957, 0.1
        %v2974 = vmul.f32 %v2962, 0.1
        %v2975 = vmul.f32 %v2965, 0.1
        %v2976 = vsel %vm2968, %v2954, %v2972
        %v2977 = vsel %vm2969, %v2957, %v2973
        %v2978 = vsel %vm2970, %v2962, %v2974
        %v2979 = vsel %vm2971, %v2965, %v2975
        %s2980 = scalar_lea.vmem %s3, 160
        %v2981 = vld [vmem:[%s2980] sm:$0xff]
        %v2982 = vld [vmem:[%s2980 + $0x8] sm:$0xff]
        %v2983 = vld [vmem:[%s2980 + $0x10] sm:$0xff]
        %v2984 = vld [vmem:[%s2980 + $0x18] sm:$0xff]
        %s2985 = scalar_lea.vmem %s4, 160
        %v2986 = vld [vmem:[%s2985] sm:$0xff]
        %v2987 = vld [vmem:[%s2985 + $0x8] sm:$0xff]
        %v2988 = vld [vmem:[%s2985 + $0x10] sm:$0xff]
        %v2989 = vld [vmem:[%s2985 + $0x18] sm:$0xff]
        %v2990 = vpack.c.bf16 %v2977, %v2976
        %v2991 = vpack.c.bf16 %v2979, %v2978
        %2994 = vrot.lane.b32.xlu0 %v2990, 25
        %v2995 = vpop.permute.xlu0 %2994
        %2996 = vrot.lane.b32.xlu0 %v2991, 25
        %v2997 = vpop.permute.xlu0 %2996
        %3000 = vst.msk [vmem:[#allocation2] sm:$0xff] %vm338, %v2995
        %3001 = vst.msk [vmem:[#allocation2 + $0x8] sm:$0xff] %vm298, %v2995
        %3002 = vst.msk [vmem:[#allocation2 + $0x10] sm:$0xff] %vm338, %v2997
        %3003 = vst.msk [vmem:[#allocation2 + $0x18] sm:$0xff] %vm298, %v2997
        %v3004 = vld [vmem:[#allocation2] sm:$0xff]
        %v3005 = vld [vmem:[#allocation2 + $0x8] sm:$0xff]
        %v3006 = vld [vmem:[#allocation2 + $0x10] sm:$0xff]
        %v3007 = vld [vmem:[#allocation2 + $0x18] sm:$0xff]
        %3012 = vrot.lane.b32.xlu0 %v3004, 106
        %v3013 = vpop.permute.xlu0 %3012
        %3014 = vrot.lane.b32.xlu0 %v3005, 106
        %v3015 = vpop.permute.xlu0 %3014
        %3016 = vrot.lane.b32.xlu0 %v3006, 106
        %v3017 = vpop.permute.xlu0 %3016
        %3018 = vrot.lane.b32.xlu0 %v3007, 106
        %v3019 = vpop.permute.xlu0 %3018
        %v3020 = vsel %vm753, %v3013, %v3015
        %v3021 = vsel %vm753, %v3017, %v3019
        %3024 = vst [vmem:[#allocation3] sm:$0xff] %v3020
        %3025 = vst [vmem:[#allocation3 + $0x8] sm:$0xff] %v3021
        %v3026 = vld [vmem:[#allocation2] sm:$0xff]
        %v3027 = vld [vmem:[#allocation2 + $0x8] sm:$0xff]
        %v3028 = vld [vmem:[#allocation2 + $0x10] sm:$0xff]
        %v3029 = vld [vmem:[#allocation2 + $0x18] sm:$0xff]
        %3034 = vrot.lane.b32.xlu0 %v3026, 105
        %v3035 = vpop.permute.xlu0 %3034
        %3036 = vrot.lane.b32.xlu0 %v3027, 105
        %v3037 = vpop.permute.xlu0 %3036
        %3038 = vrot.lane.b32.xlu0 %v3028, 105
        %v3039 = vpop.permute.xlu0 %3038
        %3040 = vrot.lane.b32.xlu0 %v3029, 105
        %v3041 = vpop.permute.xlu0 %3040
        %v3042 = vsel %vm1539, %v3035, %v3037
        %v3043 = vsel %vm1539, %v3039, %v3041
        %3046 = vst [vmem:[#allocation3 + $0x10] sm:$0xff] %v3042
        %3047 = vst [vmem:[#allocation3 + $0x18] sm:$0xff] %v3043
        %v3048 = vld [vmem:[#allocation2] sm:$0xff]
        %v3049 = vld [vmem:[#allocation2 + $0x8] sm:$0xff]
        %v3050 = vld [vmem:[#allocation2 + $0x10] sm:$0xff]
        %v3051 = vld [vmem:[#allocation2 + $0x18] sm:$0xff]
        %3056 = vrot.lane.b32.xlu0 %v3048, 104
        %v3057 = vpop.permute.xlu0 %3056
        %3058 = vrot.lane.b32.xlu0 %v3049, 104
        %v3059 = vpop.permute.xlu0 %3058
        %3060 = vrot.lane.b32.xlu0 %v3050, 104
        %v3061 = vpop.permute.xlu0 %3060
        %3062 = vrot.lane.b32.xlu0 %v3051, 104
        %v3063 = vpop.permute.xlu0 %3062
        %v3064 = vsel %vm359, %v3057, %v3059
        %v3065 = vsel %vm359, %v3061, %v3063
        %3068 = vst [vmem:[#allocation3 + $0x20] sm:$0xff] %v3064
        %3069 = vst [vmem:[#allocation3 + $0x28] sm:$0xff] %v3065
        %v3070 = vld [vmem:[#allocation2] sm:$0xff]
        %v3071 = vld [vmem:[#allocation2 + $0x8] sm:$0xff]
        %v3072 = vld [vmem:[#allocation2 + $0x10] sm:$0xff]
        %v3073 = vld [vmem:[#allocation2 + $0x18] sm:$0xff]
        %3078 = vrot.lane.b32.xlu0 %v3070, 103
        %v3079 = vpop.permute.xlu0 %3078
        %3080 = vrot.lane.b32.xlu0 %v3071, 103
        %v3081 = vpop.permute.xlu0 %3080
        %3082 = vrot.lane.b32.xlu0 %v3072, 103
        %v3083 = vpop.permute.xlu0 %3082
        %3084 = vrot.lane.b32.xlu0 %v3073, 103
        %v3085 = vpop.permute.xlu0 %3084
        %v3086 = vsel %vm382, %v3079, %v3081
        %v3087 = vsel %vm382, %v3083, %v3085
        %3090 = vst [vmem:[#allocation3 + $0x30] sm:$0xff] %v3086
        %3091 = vst [vmem:[#allocation3 + $0x38] sm:$0xff] %v3087
        %v3092 = vld [vmem:[#allocation2] sm:$0xff]
        %v3093 = vld [vmem:[#allocation2 + $0x8] sm:$0xff]
        %v3094 = vld [vmem:[#allocation2 + $0x10] sm:$0xff]
        %v3095 = vld [vmem:[#allocation2 + $0x18] sm:$0xff]
        %3100 = vrot.lane.b32.xlu0 %v3092, 102
        %v3101 = vpop.permute.xlu0 %3100
        %3102 = vrot.lane.b32.xlu0 %v3093, 102
        %v3103 = vpop.permute.xlu0 %3102
        %3104 = vrot.lane.b32.xlu0 %v3094, 102
        %v3105 = vpop.permute.xlu0 %3104
        %3106 = vrot.lane.b32.xlu0 %v3095, 102
        %v3107 = vpop.permute.xlu0 %3106
        %v3108 = vsel %vm405, %v3101, %v3103
        %v3109 = vsel %vm405, %v3105, %v3107
        %3112 = vst [vmem:[#allocation3 + $0x40] sm:$0xff] %v3108
        %3113 = vst [vmem:[#allocation3 + $0x48] sm:$0xff] %v3109
        %v3114 = vld [vmem:[#allocation2] sm:$0xff]
        %v3115 = vld [vmem:[#allocation2 + $0x8] sm:$0xff]
        %v3116 = vld [vmem:[#allocation2 + $0x10] sm:$0xff]
        %v3117 = vld [vmem:[#allocation2 + $0x18] sm:$0xff]
        %3122 = vrot.lane.b32.xlu0 %v3114, 101
        %v3123 = vpop.permute.xlu0 %3122
        %3124 = vrot.lane.b32.xlu0 %v3115, 101
        %v3125 = vpop.permute.xlu0 %3124
        %3126 = vrot.lane.b32.xlu0 %v3116, 101
        %v3127 = vpop.permute.xlu0 %3126
        %3128 = vrot.lane.b32.xlu0 %v3117, 101
        %v3129 = vpop.permute.xlu0 %3128
        %v3130 = vsel %vm1628, %v3123, %v3125
        %v3131 = vsel %vm1628, %v3127, %v3129
        %3134 = vst [vmem:[#allocation3 + $0x50] sm:$0xff] %v3130
        %3135 = vst [vmem:[#allocation3 + $0x58] sm:$0xff] %v3131
        %v3136 = vld [vmem:[#allocation2] sm:$0xff]
        %v3137 = vld [vmem:[#allocation2 + $0x8] sm:$0xff]
        %v3138 = vld [vmem:[#allocation2 + $0x10] sm:$0xff]
        %v3139 = vld [vmem:[#allocation2 + $0x18] sm:$0xff]
        %3144 = vrot.lane.b32.xlu0 %v3136, 100
        %v3145 = vpop.permute.xlu0 %3144
        %3146 = vrot.lane.b32.xlu0 %v3137, 100
        %v3147 = vpop.permute.xlu0 %3146
        %3148 = vrot.lane.b32.xlu0 %v3138, 100
        %v3149 = vpop.permute.xlu0 %3148
        %3150 = vrot.lane.b32.xlu0 %v3139, 100
        %v3151 = vpop.permute.xlu0 %3150
        %v3152 = vsel %vm798, %v3145, %v3147
        %v3153 = vsel %vm798, %v3149, %v3151
        %3156 = vst [vmem:[#allocation3 + $0x60] sm:$0xff] %v3152
        %3157 = vst [vmem:[#allocation3 + $0x68] sm:$0xff] %v3153
        %v3158 = vld [vmem:[#allocation3] sm:$0xff]
        %v3159 = vld [vmem:[#allocation3 + $0x8] sm:$0xff]
        %v3160 = vld [vmem:[#allocation3 + $0x10] sm:$0xff]
        %v3161 = vld [vmem:[#allocation3 + $0x18] sm:$0xff]
        %v3162 = vld [vmem:[#allocation3 + $0x20] sm:$0xff]
        %v3163 = vld [vmem:[#allocation3 + $0x28] sm:$0xff]
        %v3164 = vld [vmem:[#allocation3 + $0x30] sm:$0xff]
        %v3165 = vld [vmem:[#allocation3 + $0x38] sm:$0xff]
        %v3166 = vld [vmem:[#allocation3 + $0x40] sm:$0xff]
        %v3167 = vld [vmem:[#allocation3 + $0x48] sm:$0xff]
        %v3168 = vld [vmem:[#allocation3 + $0x50] sm:$0xff]
        %v3169 = vld [vmem:[#allocation3 + $0x58] sm:$0xff]
        %v3170 = vld [vmem:[#allocation3 + $0x60] sm:$0xff]
        %v3171 = vld [vmem:[#allocation3 + $0x68] sm:$0xff]
        %3173 = vset.pattern.permute.xlu0 0
        %3174 = vperm.xlu0 %3173, %v2986
        %v3175 = vpop.permute.xlu0 %3174
        %3178 = vset.pattern.permute.xlu0 0
        %3179 = vperm.xlu0 %3178, %v2987
        %v3180 = vpop.permute.xlu0 %3179
        %3183 = vset.pattern.permute.xlu0 0
        %3184 = vperm.xlu0 %3183, %v2988
        %v3185 = vpop.permute.xlu0 %3184
        %3188 = vset.pattern.permute.xlu0 0
        %3189 = vperm.xlu0 %3188, %v2989
        %v3190 = vpop.permute.xlu0 %3189
        %v3196 = vunpack.c.l.b16 %v2981
        %v3197 = vunpack.c.h.b16 %v2981
        %v3198 = vunpack.c.l.b16 %v2982
        %v3199 = vunpack.c.h.b16 %v2982
        %v3200 = vunpack.c.l.b16 %v2983
        %v3201 = vunpack.c.h.b16 %v2983
        %v3202 = vunpack.c.l.b16 %v2984
        %v3203 = vunpack.c.h.b16 %v2984
        %v3204 = vpack.c.b16 %v3198, %v3196
        %v3205 = vpack.c.b16 %v3199, %v3197
        %v3206 = vpack.c.b16 %v3202, %v3200
        %v3207 = vpack.c.b16 %v3203, %v3201
        %v3211 = vsel %vm448, %v3205, 0
        %v3214 = vsel %vm448, %v3207, 0
        %3216 = vmatprep.subr.bf16.mxu0 0
        %3217 = vmatpush1.bf16.msra.mxu0 %v3158
        %3218 = vmatprep.subr.bf16.mxu0 0
        %3219 = vmatpush1.bf16.msra.mxu0 %v3159
        %3220 = vmatprep.subr.bf16.mxu0 0
        %3221 = vmatpush1.bf16.msra.mxu0 %v3160
        %3222 = vmatprep.subr.bf16.mxu0 0
        %3223 = vmatpush1.bf16.msra.mxu0 %v3161
        %3224 = vmatprep.subr.bf16.mxu0 0
        %3225 = vmatpush1.bf16.msra.mxu0 %v3162
        %3226 = vmatprep.subr.bf16.mxu0 0
        %3227 = vmatpush1.bf16.msra.mxu0 %v3163
        %3228 = vmatprep.subr.bf16.mxu0 0
        %3229 = vmatpush1.bf16.msra.mxu0 %v3164
        %3230 = vmatprep.subr.bf16.mxu0 0
        %3231 = vmatpush1.bf16.msra.mxu0 %v3165
        %3232 = vmatprep.subr.bf16.mxu0 0
        %3233 = vmatpush1.bf16.msra.mxu0 %v3166
        %3234 = vmatprep.subr.bf16.mxu0 0
        %3235 = vmatpush1.bf16.msra.mxu0 %v3167
        %3236 = vmatprep.subr.bf16.mxu0 0
        %3237 = vmatpush1.bf16.msra.mxu0 %v3168
        %3238 = vmatprep.subr.bf16.mxu0 0
        %3239 = vmatpush1.bf16.msra.mxu0 %v3169
        %3240 = vmatprep.subr.bf16.mxu0 0
        %3241 = vmatpush1.bf16.msra.mxu0 %v3170
        %3242 = vmatprep.subr.bf16.mxu0 0
        %3243 = vmatpush1.bf16.msra.mxu0 %v3171
        %3244 = vmatprep.subr.bf16.mxu0 0
        %3245 = vmatpush1.bf16.msra.mxu0 0
        %3246 = vmatprep.subr.bf16.mxu0 0
        %3247 = vmatpush1.bf16.msra.mxu0 0
        %3248 = vmatprep.mubr.bf16.mxu0 %v3211
        %3249 = vmatmul.mubr.bf16.gmra.mrb[0].mxu0 %v3204
        %v3250 = vpop.f32.mrb[0].mxu0
        %v3251 = vadd.f32 %v3175, %v3250
        %v3252 = vpop.f32.mrb[0].mxu0
        %v3253 = vpop.f32.mrb[0].mxu0
        %v3254 = vadd.f32 %v3180, %v3253
        %v3255 = vpop.f32.mrb[0].mxu0
        %3256 = vmatprep.mubr.bf16.mxu0 %v3214
        %3257 = vmatmul.mubr.bf16.gmra.mrb[0].mxu0 %v3206
        %v3258 = vpop.f32.mrb[0].mxu0
        %v3259 = vadd.f32 %v3185, %v3258
        %v3260 = vpop.f32.mrb[0].mxu0
        %v3261 = vpop.f32.mrb[0].mxu0
        %v3262 = vadd.f32 %v3190, %v3261
        %v3263 = vpop.f32.mrb[0].mxu0
        %3264 = vdwg.mxu0
        %v3265 = vadd.f32 %v3251, %v2663
        %v3266 = vadd.f32 %v3254, %v2664
        %v3267 = vadd.f32 %v3259, %v2665
        %v3268 = vadd.f32 %v3262, %v2666
        %v3269 = vadd.f32 %v1485, %v3265
        %v3270 = vadd.f32 %v1486, %v3266
        %v3271 = vadd.f32 %v1487, %v3267
        %v3272 = vadd.f32 %v1488, %v3268
        %v3273 = vld [vmem:[%s5] sm:$0xff]
        %v3274 = vld [vmem:[%s5 + $0x8] sm:$0xf]
        %v3275 = vld [vmem:[%s5 + $0xc] sm:$0xff]
        %v3276 = vld [vmem:[%s5 + $0x14] sm:$0xf]
        %v3277 = vld [vmem:[%s5 + $0x18] sm:$0xff]
        %v3278 = vld [vmem:[%s5 + $0x20] sm:$0xf]
        %v3279 = vld [vmem:[%s5 + $0x24] sm:$0xff]
        %v3280 = vld [vmem:[%s5 + $0x2c] sm:$0xf]
        %v3281 = vld [vmem:[%s6] sm:$0xff]
        %v3282 = vld [vmem:[%s6 + $0x8] sm:$0xff]
        %v3283 = vld [vmem:[%s6 + $0x10] sm:$0xff]
        %v3284 = vld [vmem:[%s6 + $0x18] sm:$0xff]
        %3285 = vst.msk [vmem:[#allocation2] sm:$0xff] %vm338, %v333
        %3286 = vst.msk [vmem:[#allocation2 + $0x8] sm:$0xff] %vm298, %v333
        %3287 = vst.msk [vmem:[#allocation2 + $0x10] sm:$0xff] %vm338, %v335
        %3288 = vst.msk [vmem:[#allocation2 + $0x18] sm:$0xff] %vm298, %v335
        %v3289 = vld [vmem:[#allocation2] sm:$0xff]
        %v3290 = vld [vmem:[#allocation2 + $0x8] sm:$0xff]
        %v3291 = vld [vmem:[#allocation2 + $0x10] sm:$0xff]
        %v3292 = vld [vmem:[#allocation2 + $0x18] sm:$0xff]
        %3297 = vrot.lane.b32.xlu0 %v3289, 108
        %v3298 = vpop.permute.xlu0 %3297
        %3299 = vrot.lane.b32.xlu0 %v3290, 108
        %v3300 = vpop.permute.xlu0 %3299
        %3301 = vrot.lane.b32.xlu0 %v3291, 108
        %v3302 = vpop.permute.xlu0 %3301
        %3303 = vrot.lane.b32.xlu0 %v3292, 108
        %v3304 = vpop.permute.xlu0 %3303
        %v3305 = vsel %vm1145, %v3298, %v3300
        %v3306 = vsel %vm1145, %v3302, %v3304
        %3309 = vst [vmem:[#allocation3] sm:$0xff] %v3305
        %3310 = vst [vmem:[#allocation3 + $0x8] sm:$0xff] %v3306
        %v3311 = vld [vmem:[#allocation2] sm:$0xff]
        %v3312 = vld [vmem:[#allocation2 + $0x8] sm:$0xff]
        %v3313 = vld [vmem:[#allocation2 + $0x10] sm:$0xff]
        %v3314 = vld [vmem:[#allocation2 + $0x18] sm:$0xff]
        %3319 = vrot.lane.b32.xlu0 %v3311, 107
        %v3320 = vpop.permute.xlu0 %3319
        %3321 = vrot.lane.b32.xlu0 %v3312, 107
        %v3322 = vpop.permute.xlu0 %3321
        %3323 = vrot.lane.b32.xlu0 %v3313, 107
        %v3324 = vpop.permute.xlu0 %3323
        %3325 = vrot.lane.b32.xlu0 %v3314, 107
        %v3326 = vpop.permute.xlu0 %3325
        %vm3327 = vcmask 875520
        %v3328 = vsel %vm3327, %v3320, %v3322
        %v3329 = vsel %vm3327, %v3324, %v3326
        %3332 = vst [vmem:[#allocation3 + $0x10] sm:$0xff] %v3328
        %3333 = vst [vmem:[#allocation3 + $0x18] sm:$0xff] %v3329
        %v3334 = vld [vmem:[#allocation2] sm:$0xff]
        %v3335 = vld [vmem:[#allocation2 + $0x8] sm:$0xff]
        %v3336 = vld [vmem:[#allocation2 + $0x10] sm:$0xff]
        %v3337 = vld [vmem:[#allocation2 + $0x18] sm:$0xff]
        %3342 = vrot.lane.b32.xlu0 %v3334, 106
        %v3343 = vpop.permute.xlu0 %3342
        %3344 = vrot.lane.b32.xlu0 %v3335, 106
        %v3345 = vpop.permute.xlu0 %3344
        %3346 = vrot.lane.b32.xlu0 %v3336, 106
        %v3347 = vpop.permute.xlu0 %3346
        %3348 = vrot.lane.b32.xlu0 %v3337, 106
        %v3349 = vpop.permute.xlu0 %3348
        %v3350 = vsel %vm753, %v3343, %v3345
        %v3351 = vsel %vm753, %v3347, %v3349
        %3354 = vst [vmem:[#allocation3 + $0x20] sm:$0xff] %v3350
        %3355 = vst [vmem:[#allocation3 + $0x28] sm:$0xff] %v3351
        %v3356 = vld [vmem:[#allocation2] sm:$0xff]
        %v3357 = vld [vmem:[#allocation2 + $0x8] sm:$0xff]
        %v3358 = vld [vmem:[#allocation2 + $0x10] sm:$0xff]
        %v3359 = vld [vmem:[#allocation2 + $0x18] sm:$0xff]
        %3364 = vrot.lane.b32.xlu0 %v3356, 105
        %v3365 = vpop.permute.xlu0 %3364
        %3366 = vrot.lane.b32.xlu0 %v3357, 105
        %v3367 = vpop.permute.xlu0 %3366
        %3368 = vrot.lane.b32.xlu0 %v3358, 105
        %v3369 = vpop.permute.xlu0 %3368
        %3370 = vrot.lane.b32.xlu0 %v3359, 105
        %v3371 = vpop.permute.xlu0 %3370
        %v3372 = vsel %vm1539, %v3365, %v3367
        %v3373 = vsel %vm1539, %v3369, %v3371
        %3376 = vst [vmem:[#allocation3 + $0x30] sm:$0xff] %v3372
        %3377 = vst [vmem:[#allocation3 + $0x38] sm:$0xff] %v3373
        %v3378 = vld [vmem:[#allocation2] sm:$0xff]
        %v3379 = vld [vmem:[#allocation2 + $0x8] sm:$0xff]
        %v3380 = vld [vmem:[#allocation2 + $0x10] sm:$0xff]
        %v3381 = vld [vmem:[#allocation2 + $0x18] sm:$0xff]
        %3386 = vrot.lane.b32.xlu0 %v3378, 104
        %v3387 = vpop.permute.xlu0 %3386
        %3388 = vrot.lane.b32.xlu0 %v3379, 104
        %v3389 = vpop.permute.xlu0 %3388
        %3390 = vrot.lane.b32.xlu0 %v3380, 104
        %v3391 = vpop.permute.xlu0 %3390
        %3392 = vrot.lane.b32.xlu0 %v3381, 104
        %v3393 = vpop.permute.xlu0 %3392
        %v3394 = vsel %vm359, %v3387, %v3389
        %v3395 = vsel %vm359, %v3391, %v3393
        %3398 = vst [vmem:[#allocation3 + $0x40] sm:$0xff] %v3394
        %3399 = vst [vmem:[#allocation3 + $0x48] sm:$0xff] %v3395
        %v3400 = vld [vmem:[#allocation2] sm:$0xff]
        %v3401 = vld [vmem:[#allocation2 + $0x8] sm:$0xff]
        %v3402 = vld [vmem:[#allocation2 + $0x10] sm:$0xff]
        %v3403 = vld [vmem:[#allocation2 + $0x18] sm:$0xff]
        %3408 = vrot.lane.b32.xlu0 %v3400, 103
        %v3409 = vpop.permute.xlu0 %3408
        %3410 = vrot.lane.b32.xlu0 %v3401, 103
        %v3411 = vpop.permute.xlu0 %3410
        %3412 = vrot.lane.b32.xlu0 %v3402, 103
        %v3413 = vpop.permute.xlu0 %3412
        %3414 = vrot.lane.b32.xlu0 %v3403, 103
        %v3415 = vpop.permute.xlu0 %3414
        %v3416 = vsel %vm382, %v3409, %v3411
        %v3417 = vsel %vm382, %v3413, %v3415
        %3420 = vst [vmem:[#allocation3 + $0x50] sm:$0xff] %v3416
        %3421 = vst [vmem:[#allocation3 + $0x58] sm:$0xff] %v3417
        %v3422 = vld [vmem:[#allocation2] sm:$0xff]
        %v3423 = vld [vmem:[#allocation2 + $0x8] sm:$0xff]
        %v3424 = vld [vmem:[#allocation2 + $0x10] sm:$0xff]
        %v3425 = vld [vmem:[#allocation2 + $0x18] sm:$0xff]
        %3430 = vrot.lane.b32.xlu0 %v3422, 102
        %v3431 = vpop.permute.xlu0 %3430
        %3432 = vrot.lane.b32.xlu0 %v3423, 102
        %v3433 = vpop.permute.xlu0 %3432
        %3434 = vrot.lane.b32.xlu0 %v3424, 102
        %v3435 = vpop.permute.xlu0 %3434
        %3436 = vrot.lane.b32.xlu0 %v3425, 102
        %v3437 = vpop.permute.xlu0 %3436
        %v3438 = vsel %vm405, %v3431, %v3433
        %v3439 = vsel %vm405, %v3435, %v3437
        %3442 = vst [vmem:[#allocation3 + $0x60] sm:$0xff] %v3438
        %3443 = vst [vmem:[#allocation3 + $0x68] sm:$0xff] %v3439
        %v3444 = vld [vmem:[#allocation2] sm:$0xff]
        %v3445 = vld [vmem:[#allocation2 + $0x8] sm:$0xff]
        %v3446 = vld [vmem:[#allocation2 + $0x10] sm:$0xff]
        %v3447 = vld [vmem:[#allocation2 + $0x18] sm:$0xff]
        %3452 = vrot.lane.b32.xlu0 %v3444, 101
        %v3453 = vpop.permute.xlu0 %3452
        %3454 = vrot.lane.b32.xlu0 %v3445, 101
        %v3455 = vpop.permute.xlu0 %3454
        %3456 = vrot.lane.b32.xlu0 %v3446, 101
        %v3457 = vpop.permute.xlu0 %3456
        %3458 = vrot.lane.b32.xlu0 %v3447, 101
        %v3459 = vpop.permute.xlu0 %3458
        %v3460 = vsel %vm1628, %v3453, %v3455
        %v3461 = vsel %vm1628, %v3457, %v3459
        %3464 = vst [vmem:[#allocation3 + $0x70] sm:$0xff] %v3460
        %3465 = vst [vmem:[#allocation3 + $0x78] sm:$0xff] %v3461
        %v3466 = vld [vmem:[#allocation2] sm:$0xff]
        %v3467 = vld [vmem:[#allocation2 + $0x8] sm:$0xff]
        %v3468 = vld [vmem:[#allocation2 + $0x10] sm:$0xff]
        %v3469 = vld [vmem:[#allocation2 + $0x18] sm:$0xff]
        %3474 = vrot.lane.b32.xlu0 %v3466, 100
        %v3475 = vpop.permute.xlu0 %3474
        %3476 = vrot.lane.b32.xlu0 %v3467, 100
        %v3477 = vpop.permute.xlu0 %3476
        %3478 = vrot.lane.b32.xlu0 %v3468, 100
        %v3479 = vpop.permute.xlu0 %3478
        %3480 = vrot.lane.b32.xlu0 %v3469, 100
        %v3481 = vpop.permute.xlu0 %3480
        %v3482 = vsel %vm798, %v3475, %v3477
        %v3483 = vsel %vm798, %v3479, %v3481
        %3486 = vst [vmem:[#allocation3 + $0x80] sm:$0xff] %v3482
        %3487 = vst [vmem:[#allocation3 + $0x88] sm:$0xff] %v3483
        %v3488 = vld [vmem:[#allocation2] sm:$0xff]
        %v3489 = vld [vmem:[#allocation2 + $0x8] sm:$0xff]
        %v3490 = vld [vmem:[#allocation2 + $0x10] sm:$0xff]
        %v3491 = vld [vmem:[#allocation2 + $0x18] sm:$0xff]
        %3496 = vrot.lane.b32.xlu0 %v3488, 99
        %v3497 = vpop.permute.xlu0 %3496
        %3498 = vrot.lane.b32.xlu0 %v3489, 99
        %v3499 = vpop.permute.xlu0 %3498
        %3500 = vrot.lane.b32.xlu0 %v3490, 99
        %v3501 = vpop.permute.xlu0 %3500
        %3502 = vrot.lane.b32.xlu0 %v3491, 99
        %v3503 = vpop.permute.xlu0 %3502
        %vm3504 = vcmask 809984
        %v3505 = vsel %vm3504, %v3497, %v3499
        %v3506 = vsel %vm3504, %v3501, %v3503
        %3509 = vst [vmem:[#allocation3 + $0x90] sm:$0xff] %v3505
        %3510 = vst [vmem:[#allocation3 + $0x98] sm:$0xff] %v3506
        %v3511 = vld [vmem:[#allocation2] sm:$0xff]
        %v3512 = vld [vmem:[#allocation2 + $0x8] sm:$0xff]
        %v3513 = vld [vmem:[#allocation2 + $0x10] sm:$0xff]
        %v3514 = vld [vmem:[#allocation2 + $0x18] sm:$0xff]
        %3519 = vrot.lane.b32.xlu0 %v3511, 98
        %v3520 = vpop.permute.xlu0 %3519
        %3521 = vrot.lane.b32.xlu0 %v3512, 98
        %v3522 = vpop.permute.xlu0 %3521
        %3523 = vrot.lane.b32.xlu0 %v3513, 98
        %v3524 = vpop.permute.xlu0 %3523
        %3525 = vrot.lane.b32.xlu0 %v3514, 98
        %v3526 = vpop.permute.xlu0 %3525
        %v3527 = vsel %vm1190, %v3520, %v3522
        %v3528 = vsel %vm1190, %v3524, %v3526
        %3531 = vst [vmem:[#allocation3 + $0xa0] sm:$0xff] %v3527
        %3532 = vst [vmem:[#allocation3 + $0xa8] sm:$0xff] %v3528
        %v3533 = vld [vmem:[#allocation3] sm:$0xff]
        %v3534 = vld [vmem:[#allocation3 + $0x8] sm:$0xff]
        %v3535 = vld [vmem:[#allocation3 + $0x10] sm:$0xff]
        %v3536 = vld [vmem:[#allocation3 + $0x18] sm:$0xff]
        %v3537 = vld [vmem:[#allocation3 + $0x20] sm:$0xff]
        %v3538 = vld [vmem:[#allocation3 + $0x28] sm:$0xff]
        %v3539 = vld [vmem:[#allocation3 + $0x30] sm:$0xff]
        %v3540 = vld [vmem:[#allocation3 + $0x38] sm:$0xff]
        %v3541 = vld [vmem:[#allocation3 + $0x40] sm:$0xff]
        %v3542 = vld [vmem:[#allocation3 + $0x48] sm:$0xff]
        %v3543 = vld [vmem:[#allocation3 + $0x50] sm:$0xff]
        %v3544 = vld [vmem:[#allocation3 + $0x58] sm:$0xff]
        %v3545 = vld [vmem:[#allocation3 + $0x60] sm:$0xff]
        %v3546 = vld [vmem:[#allocation3 + $0x68] sm:$0xff]
        %v3547 = vld [vmem:[#allocation3 + $0x70] sm:$0xff]
        %v3548 = vld [vmem:[#allocation3 + $0x78] sm:$0xff]
        %v3549 = vld [vmem:[#allocation3 + $0x80] sm:$0xff]
        %v3550 = vld [vmem:[#allocation3 + $0x88] sm:$0xff]
        %v3551 = vld [vmem:[#allocation3 + $0x90] sm:$0xff]
        %v3552 = vld [vmem:[#allocation3 + $0x98] sm:$0xff]
        %v3553 = vld [vmem:[#allocation3 + $0xa0] sm:$0xff]
        %v3554 = vld [vmem:[#allocation3 + $0xa8] sm:$0xff]
        %3556 = vset.pattern.permute.xlu0 0
        %3557 = vperm.xlu0 %3556, %v3281
        %v3558 = vpop.permute.xlu0 %3557
        %3561 = vset.pattern.permute.xlu0 0
        %3562 = vperm.xlu0 %3561, %v3282
        %v3563 = vpop.permute.xlu0 %3562
        %3566 = vset.pattern.permute.xlu0 0
        %3567 = vperm.xlu0 %3566, %v3283
        %v3568 = vpop.permute.xlu0 %3567
        %3571 = vset.pattern.permute.xlu0 0
        %3572 = vperm.xlu0 %3571, %v3284
        %v3573 = vpop.permute.xlu0 %3572
        %v3583 = vunpack.c.l.b16 %v3273
        %v3584 = vunpack.c.h.b16 %v3273
        %v3585 = vunpack.c.l.b16 %v3274
        %v3586 = vunpack.c.l.b16 %v3275
        %v3587 = vunpack.c.h.b16 %v3275
        %v3588 = vunpack.c.l.b16 %v3276
        %v3589 = vunpack.c.l.b16 %v3277
        %v3590 = vunpack.c.h.b16 %v3277
        %v3591 = vunpack.c.l.b16 %v3278
        %v3592 = vunpack.c.l.b16 %v3279
        %v3593 = vunpack.c.h.b16 %v3279
        %v3594 = vunpack.c.l.b16 %v3280
        %v3595 = vpack.c.b16 %v3586, %v3583
        %v3596 = vpack.c.b16 %v3587, %v3584
        %v3597 = vpack.c.b16 %v3588, %v3585
        %v3598 = vpack.c.b16 %v3592, %v3589
        %v3599 = vpack.c.b16 %v3593, %v3590
        %v3600 = vpack.c.b16 %v3594, %v3591
        %v3606 = vsel %vm448, %v3597, 0
        %v3609 = vsel %vm448, %v3600, 0
        %3611 = vmatprep.subr.bf16.mxu0 0
        %3612 = vmatpush1.bf16.msra.mxu0 %v3533
        %3613 = vmatprep.subr.bf16.mxu0 0
        %3614 = vmatpush1.bf16.msra.mxu0 %v3534
        %3615 = vmatprep.subr.bf16.mxu0 0
        %3616 = vmatpush1.bf16.msra.mxu0 %v3535
        %3617 = vmatprep.subr.bf16.mxu0 0
        %3618 = vmatpush1.bf16.msra.mxu0 %v3536
        %3619 = vmatprep.subr.bf16.mxu0 0
        %3620 = vmatpush1.bf16.msra.mxu0 %v3537
        %3621 = vmatprep.subr.bf16.mxu0 0
        %3622 = vmatpush1.bf16.msra.mxu0 %v3538
        %3623 = vmatprep.subr.bf16.mxu0 0
        %3624 = vmatpush1.bf16.msra.mxu0 %v3539
        %3625 = vmatprep.subr.bf16.mxu0 0
        %3626 = vmatpush1.bf16.msra.mxu0 %v3540
        %3627 = vmatprep.subr.bf16.mxu0 0
        %3628 = vmatpush1.bf16.msra.mxu0 %v3541
        %3629 = vmatprep.subr.bf16.mxu0 0
        %3630 = vmatpush1.bf16.msra.mxu0 %v3542
        %3631 = vmatprep.subr.bf16.mxu0 0
        %3632 = vmatpush1.bf16.msra.mxu0 %v3543
        %3633 = vmatprep.subr.bf16.mxu0 0
        %3634 = vmatpush1.bf16.msra.mxu0 %v3544
        %3635 = vmatprep.subr.bf16.mxu0 0
        %3636 = vmatpush1.bf16.msra.mxu0 %v3545
        %3637 = vmatprep.subr.bf16.mxu0 0
        %3638 = vmatpush1.bf16.msra.mxu0 %v3546
        %3639 = vmatprep.subr.bf16.mxu0 0
        %3640 = vmatpush1.bf16.msra.mxu0 %v3547
        %3641 = vmatprep.subr.bf16.mxu0 0
        %3642 = vmatpush1.bf16.msra.mxu0 %v3548
        %3643 = vmatprep.mubr.bf16.mxu0 %v3596
        %3644 = vmatmul.mubr.bf16.gmra.mrb[0].mxu0 %v3595
        %v3645 = vpop.f32.mrb[0].mxu0
        %v3646 = vadd.f32 %v3558, %v3645
        %v3647 = vpop.f32.mrb[0].mxu0
        %v3648 = vpop.f32.mrb[0].mxu0
        %v3649 = vadd.f32 %v3563, %v3648
        %v3650 = vpop.f32.mrb[0].mxu0
        %3651 = vmatprep.mubr.bf16.mxu0 %v3599
        %3652 = vmatmul.mubr.bf16.gmra.mrb[0].mxu0 %v3598
        %v3653 = vpop.f32.mrb[0].mxu0
        %v3654 = vadd.f32 %v3568, %v3653
        %v3655 = vpop.f32.mrb[0].mxu0
        %v3656 = vpop.f32.mrb[0].mxu0
        %v3657 = vadd.f32 %v3573, %v3656
        %v3658 = vpop.f32.mrb[0].mxu0
        %3659 = vdwg.mxu0
        %3660 = vmatprep.subr.bf16.mxu0 0
        %3661 = vmatpush1.bf16.msra.mxu0 %v3549
        %3662 = vmatprep.subr.bf16.mxu0 0
        %3663 = vmatpush1.bf16.msra.mxu0 %v3550
        %3664 = vmatprep.subr.bf16.mxu0 0
        %3665 = vmatpush1.bf16.msra.mxu0 %v3551
        %3666 = vmatprep.subr.bf16.mxu0 0
        %3667 = vmatpush1.bf16.msra.mxu0 %v3552
        %3668 = vmatprep.subr.bf16.mxu0 0
        %3669 = vmatpush1.bf16.msra.mxu0 %v3553
        %3670 = vmatprep.subr.bf16.mxu0 0
        %3671 = vmatpush1.bf16.msra.mxu0 %v3554
        %3672 = vmatprep.subr.bf16.mxu0 0
        %3673 = vmatpush1.bf16.msra.mxu0 0
        %3674 = vmatprep.subr.bf16.mxu0 0
        %3675 = vmatpush1.bf16.msra.mxu0 0
        %3676 = vmatprep.subr.bf16.mxu0 0
        %3677 = vmatpush1.bf16.msra.mxu0 0
        %3678 = vmatprep.subr.bf16.mxu0 0
        %3679 = vmatpush1.bf16.msra.mxu0 0
        %3680 = vmatprep.subr.bf16.mxu0 0
        %3681 = vmatpush1.bf16.msra.mxu0 0
        %3682 = vmatprep.subr.bf16.mxu0 0
        %3683 = vmatpush1.bf16.msra.mxu0 0
        %3684 = vmatprep.subr.bf16.mxu0 0
        %3685 = vmatpush1.bf16.msra.mxu0 0
        %3686 = vmatprep.subr.bf16.mxu0 0
        %3687 = vmatpush1.bf16.msra.mxu0 0
        %3688 = vmatprep.subr.bf16.mxu0 0
        %3689 = vmatpush1.bf16.msra.mxu0 0
        %3690 = vmatprep.subr.bf16.mxu0 0
        %3691 = vmatpush1.bf16.msra.mxu0 0
        %3692 = vmatprep.mubr.bf16.mxu0 0
        %3693 = vmatmul.mubr.bf16.gmra.mrb[0].mxu0 %v3606
        %v3694 = vpop.f32.mrb[0].mxu0
        %v3695 = vadd.f32 %v3646, %v3694
        %v3696 = vpop.f32.mrb[0].mxu0
        %v3697 = vpop.f32.mrb[0].mxu0
        %v3698 = vadd.f32 %v3649, %v3697
        %v3699 = vpop.f32.mrb[0].mxu0
        %3700 = vmatprep.mubr.bf16.mxu0 0
        %3701 = vmatmul.mubr.bf16.gmra.mrb[0].mxu0 %v3609
        %v3702 = vpop.f32.mrb[0].mxu0
        %v3703 = vadd.f32 %v3654, %v3702
        %v3704 = vpop.f32.mrb[0].mxu0
        %v3705 = vpop.f32.mrb[0].mxu0
        %v3706 = vadd.f32 %v3657, %v3705
        %v3707 = vpop.f32.mrb[0].mxu0
        %3708 = vdwg.mxu0
        %vm3709 = vcmp.gt.f32.partialorder %v3695, 0.0
        %vm3710 = vcmp.gt.f32.partialorder %v3698, 0.0
        %vm3711 = vcmp.gt.f32.partialorder %v3703, 0.0
        %vm3712 = vcmp.gt.f32.partialorder %v3706, 0.0
        %v3713 = vmul.f32 %v3695, 0.1
        %v3714 = vmul.f32 %v3698, 0.1
        %v3715 = vmul.f32 %v3703, 0.1
        %v3716 = vmul.f32 %v3706, 0.1
        %v3717 = vsel %vm3709, %v3695, %v3713
        %v3718 = vsel %vm3710, %v3698, %v3714
        %v3719 = vsel %vm3711, %v3703, %v3715
        %v3720 = vsel %vm3712, %v3706, %v3716
        %s3721 = scalar_lea.vmem %s5, 48
        %v3722 = vld [vmem:[%s3721] sm:$0xff]
        %v3723 = vld [vmem:[%s3721 + $0x8] sm:$0xf]
        %v3724 = vld [vmem:[%s3721 + $0xc] sm:$0xff]
        %v3725 = vld [vmem:[%s3721 + $0x14] sm:$0xf]
        %v3726 = vld [vmem:[%s3721 + $0x18] sm:$0xff]
        %v3727 = vld [vmem:[%s3721 + $0x20] sm:$0xf]
        %v3728 = vld [vmem:[%s3721 + $0x24] sm:$0xff]
        %v3729 = vld [vmem:[%s3721 + $0x2c] sm:$0xf]
        %s3730 = scalar_lea.vmem %s6, 32
        %v3731 = vld [vmem:[%s3730] sm:$0xff]
        %v3732 = vld [vmem:[%s3730 + $0x8] sm:$0xff]
        %v3733 = vld [vmem:[%s3730 + $0x10] sm:$0xff]
        %v3734 = vld [vmem:[%s3730 + $0x18] sm:$0xff]
        %v3735 = vpack.c.bf16 %v3718, %v3717
        %v3736 = vpack.c.bf16 %v3720, %v3719
        %3739 = vrot.lane.b32.xlu0 %v3735, 25
        %v3740 = vpop.permute.xlu0 %3739
        %3741 = vrot.lane.b32.xlu0 %v3736, 25
        %v3742 = vpop.permute.xlu0 %3741
        %3745 = vst.msk [vmem:[#allocation2] sm:$0xff] %vm338, %v3740
        %3746 = vst.msk [vmem:[#allocation2 + $0x8] sm:$0xff] %vm298, %v3740
        %3747 = vst.msk [vmem:[#allocation2 + $0x10] sm:$0xff] %vm338, %v3742
        %3748 = vst.msk [vmem:[#allocation2 + $0x18] sm:$0xff] %vm298, %v3742
        %v3749 = vld [vmem:[#allocation2] sm:$0xff]
        %v3750 = vld [vmem:[#allocation2 + $0x8] sm:$0xff]
        %v3751 = vld [vmem:[#allocation2 + $0x10] sm:$0xff]
        %v3752 = vld [vmem:[#allocation2 + $0x18] sm:$0xff]
        %3757 = vrot.lane.b32.xlu0 %v3749, 108
        %v3758 = vpop.permute.xlu0 %3757
        %3759 = vrot.lane.b32.xlu0 %v3750, 108
        %v3760 = vpop.permute.xlu0 %3759
        %3761 = vrot.lane.b32.xlu0 %v3751, 108
        %v3762 = vpop.permute.xlu0 %3761
        %3763 = vrot.lane.b32.xlu0 %v3752, 108
        %v3764 = vpop.permute.xlu0 %3763
        %v3765 = vsel %vm1145, %v3758, %v3760
        %v3766 = vsel %vm1145, %v3762, %v3764
        %3769 = vst [vmem:[#allocation3] sm:$0xff] %v3765
        %3770 = vst [vmem:[#allocation3 + $0x8] sm:$0xff] %v3766
        %v3771 = vld [vmem:[#allocation2] sm:$0xff]
        %v3772 = vld [vmem:[#allocation2 + $0x8] sm:$0xff]
        %v3773 = vld [vmem:[#allocation2 + $0x10] sm:$0xff]
        %v3774 = vld [vmem:[#allocation2 + $0x18] sm:$0xff]
        %3779 = vrot.lane.b32.xlu0 %v3771, 107
        %v3780 = vpop.permute.xlu0 %3779
        %3781 = vrot.lane.b32.xlu0 %v3772, 107
        %v3782 = vpop.permute.xlu0 %3781
        %3783 = vrot.lane.b32.xlu0 %v3773, 107
        %v3784 = vpop.permute.xlu0 %3783
        %3785 = vrot.lane.b32.xlu0 %v3774, 107
        %v3786 = vpop.permute.xlu0 %3785
        %v3787 = vsel %vm3327, %v3780, %v3782
        %v3788 = vsel %vm3327, %v3784, %v3786
        %3791 = vst [vmem:[#allocation3 + $0x10] sm:$0xff] %v3787
        %3792 = vst [vmem:[#allocation3 + $0x18] sm:$0xff] %v3788
        %v3793 = vld [vmem:[#allocation2] sm:$0xff]
        %v3794 = vld [vmem:[#allocation2 + $0x8] sm:$0xff]
        %v3795 = vld [vmem:[#allocation2 + $0x10] sm:$0xff]
        %v3796 = vld [vmem:[#allocation2 + $0x18] sm:$0xff]
        %3801 = vrot.lane.b32.xlu0 %v3793, 106
        %v3802 = vpop.permute.xlu0 %3801
        %3803 = vrot.lane.b32.xlu0 %v3794, 106
        %v3804 = vpop.permute.xlu0 %3803
        %3805 = vrot.lane.b32.xlu0 %v3795, 106
        %v3806 = vpop.permute.xlu0 %3805
        %3807 = vrot.lane.b32.xlu0 %v3796, 106
        %v3808 = vpop.permute.xlu0 %3807
        %v3809 = vsel %vm753, %v3802, %v3804
        %v3810 = vsel %vm753, %v3806, %v3808
        %3813 = vst [vmem:[#allocation3 + $0x20] sm:$0xff] %v3809
        %3814 = vst [vmem:[#allocation3 + $0x28] sm:$0xff] %v3810
        %v3815 = vld [vmem:[#allocation2] sm:$0xff]
        %v3816 = vld [vmem:[#allocation2 + $0x8] sm:$0xff]
        %v3817 = vld [vmem:[#allocation2 + $0x10] sm:$0xff]
        %v3818 = vld [vmem:[#allocation2 + $0x18] sm:$0xff]
        %3823 = vrot.lane.b32.xlu0 %v3815, 105
        %v3824 = vpop.permute.xlu0 %3823
        %3825 = vrot.lane.b32.xlu0 %v3816, 105
        %v3826 = vpop.permute.xlu0 %3825
        %3827 = vrot.lane.b32.xlu0 %v3817, 105
        %v3828 = vpop.permute.xlu0 %3827
        %3829 = vrot.lane.b32.xlu0 %v3818, 105
        %v3830 = vpop.permute.xlu0 %3829
        %v3831 = vsel %vm1539, %v3824, %v3826
        %v3832 = vsel %vm1539, %v3828, %v3830
        %3835 = vst [vmem:[#allocation3 + $0x30] sm:$0xff] %v3831
        %3836 = vst [vmem:[#allocation3 + $0x38] sm:$0xff] %v3832
        %v3837 = vld [vmem:[#allocation2] sm:$0xff]
        %v3838 = vld [vmem:[#allocation2 + $0x8] sm:$0xff]
        %v3839 = vld [vmem:[#allocation2 + $0x10] sm:$0xff]
        %v3840 = vld [vmem:[#allocation2 + $0x18] sm:$0xff]
        %3845 = vrot.lane.b32.xlu0 %v3837, 104
        %v3846 = vpop.permute.xlu0 %3845
        %3847 = vrot.lane.b32.xlu0 %v3838, 104
        %v3848 = vpop.permute.xlu0 %3847
        %3849 = vrot.lane.b32.xlu0 %v3839, 104
        %v3850 = vpop.permute.xlu0 %3849
        %3851 = vrot.lane.b32.xlu0 %v3840, 104
        %v3852 = vpop.permute.xlu0 %3851
        %v3853 = vsel %vm359, %v3846, %v3848
        %v3854 = vsel %vm359, %v3850, %v3852
        %3857 = vst [vmem:[#allocation3 + $0x40] sm:$0xff] %v3853
        %3858 = vst [vmem:[#allocation3 + $0x48] sm:$0xff] %v3854
        %v3859 = vld [vmem:[#allocation2] sm:$0xff]
        %v3860 = vld [vmem:[#allocation2 + $0x8] sm:$0xff]
        %v3861 = vld [vmem:[#allocation2 + $0x10] sm:$0xff]
        %v3862 = vld [vmem:[#allocation2 + $0x18] sm:$0xff]
        %3867 = vrot.lane.b32.xlu0 %v3859, 103
        %v3868 = vpop.permute.xlu0 %3867
        %3869 = vrot.lane.b32.xlu0 %v3860, 103
        %v3870 = vpop.permute.xlu0 %3869
        %3871 = vrot.lane.b32.xlu0 %v3861, 103
        %v3872 = vpop.permute.xlu0 %3871
        %3873 = vrot.lane.b32.xlu0 %v3862, 103
        %v3874 = vpop.permute.xlu0 %3873
        %v3875 = vsel %vm382, %v3868, %v3870
        %v3876 = vsel %vm382, %v3872, %v3874
        %3879 = vst [vmem:[#allocation3 + $0x50] sm:$0xff] %v3875
        %3880 = vst [vmem:[#allocation3 + $0x58] sm:$0xff] %v3876
        %v3881 = vld [vmem:[#allocation2] sm:$0xff]
        %v3882 = vld [vmem:[#allocation2 + $0x8] sm:$0xff]
        %v3883 = vld [vmem:[#allocation2 + $0x10] sm:$0xff]
        %v3884 = vld [vmem:[#allocation2 + $0x18] sm:$0xff]
        %3889 = vrot.lane.b32.xlu0 %v3881, 102
        %v3890 = vpop.permute.xlu0 %3889
        %3891 = vrot.lane.b32.xlu0 %v3882, 102
        %v3892 = vpop.permute.xlu0 %3891
        %3893 = vrot.lane.b32.xlu0 %v3883, 102
        %v3894 = vpop.permute.xlu0 %3893
        %3895 = vrot.lane.b32.xlu0 %v3884, 102
        %v3896 = vpop.permute.xlu0 %3895
        %v3897 = vsel %vm405, %v3890, %v3892
        %v3898 = vsel %vm405, %v3894, %v3896
        %3901 = vst [vmem:[#allocation3 + $0x60] sm:$0xff] %v3897
        %3902 = vst [vmem:[#allocation3 + $0x68] sm:$0xff] %v3898
        %v3903 = vld [vmem:[#allocation2] sm:$0xff]
        %v3904 = vld [vmem:[#allocation2 + $0x8] sm:$0xff]
        %v3905 = vld [vmem:[#allocation2 + $0x10] sm:$0xff]
        %v3906 = vld [vmem:[#allocation2 + $0x18] sm:$0xff]
        %3911 = vrot.lane.b32.xlu0 %v3903, 101
        %v3912 = vpop.permute.xlu0 %3911
        %3913 = vrot.lane.b32.xlu0 %v3904, 101
        %v3914 = vpop.permute.xlu0 %3913
        %3915 = vrot.lane.b32.xlu0 %v3905, 101
        %v3916 = vpop.permute.xlu0 %3915
        %3917 = vrot.lane.b32.xlu0 %v3906, 101
        %v3918 = vpop.permute.xlu0 %3917
        %v3919 = vsel %vm1628, %v3912, %v3914
        %v3920 = vsel %vm1628, %v3916, %v3918
        %3923 = vst [vmem:[#allocation3 + $0x70] sm:$0xff] %v3919
        %3924 = vst [vmem:[#allocation3 + $0x78] sm:$0xff] %v3920
        %v3925 = vld [vmem:[#allocation2] sm:$0xff]
        %v3926 = vld [vmem:[#allocation2 + $0x8] sm:$0xff]
        %v3927 = vld [vmem:[#allocation2 + $0x10] sm:$0xff]
        %v3928 = vld [vmem:[#allocation2 + $0x18] sm:$0xff]
        %3933 = vrot.lane.b32.xlu0 %v3925, 100
        %v3934 = vpop.permute.xlu0 %3933
        %3935 = vrot.lane.b32.xlu0 %v3926, 100
        %v3936 = vpop.permute.xlu0 %3935
        %3937 = vrot.lane.b32.xlu0 %v3927, 100
        %v3938 = vpop.permute.xlu0 %3937
        %3939 = vrot.lane.b32.xlu0 %v3928, 100
        %v3940 = vpop.permute.xlu0 %3939
        %v3941 = vsel %vm798, %v3934, %v3936
        %v3942 = vsel %vm798, %v3938, %v3940
        %3945 = vst [vmem:[#allocation3 + $0x80] sm:$0xff] %v3941
        %3946 = vst [vmem:[#allocation3 + $0x88] sm:$0xff] %v3942
        %v3947 = vld [vmem:[#allocation2] sm:$0xff]
        %v3948 = vld [vmem:[#allocation2 + $0x8] sm:$0xff]
        %v3949 = vld [vmem:[#allocation2 + $0x10] sm:$0xff]
        %v3950 = vld [vmem:[#allocation2 + $0x18] sm:$0xff]
        %3955 = vrot.lane.b32.xlu0 %v3947, 99
        %v3956 = vpop.permute.xlu0 %3955
        %3957 = vrot.lane.b32.xlu0 %v3948, 99
        %v3958 = vpop.permute.xlu0 %3957
        %3959 = vrot.lane.b32.xlu0 %v3949, 99
        %v3960 = vpop.permute.xlu0 %3959
        %3961 = vrot.lane.b32.xlu0 %v3950, 99
        %v3962 = vpop.permute.xlu0 %3961
        %v3963 = vsel %vm3504, %v3956, %v3958
        %v3964 = vsel %vm3504, %v3960, %v3962
        %3967 = vst [vmem:[#allocation3 + $0x90] sm:$0xff] %v3963
        %3968 = vst [vmem:[#allocation3 + $0x98] sm:$0xff] %v3964
        %v3969 = vld [vmem:[#allocation2] sm:$0xff]
        %v3970 = vld [vmem:[#allocation2 + $0x8] sm:$0xff]
        %v3971 = vld [vmem:[#allocation2 + $0x10] sm:$0xff]
        %v3972 = vld [vmem:[#allocation2 + $0x18] sm:$0xff]
        %3977 = vrot.lane.b32.xlu0 %v3969, 98
        %v3978 = vpop.permute.xlu0 %3977
        %3979 = vrot.lane.b32.xlu0 %v3970, 98
        %v3980 = vpop.permute.xlu0 %3979
        %3981 = vrot.lane.b32.xlu0 %v3971, 98
        %v3982 = vpop.permute.xlu0 %3981
        %3983 = vrot.lane.b32.xlu0 %v3972, 98
        %v3984 = vpop.permute.xlu0 %3983
        %v3985 = vsel %vm1190, %v3978, %v3980
        %v3986 = vsel %vm1190, %v3982, %v3984
        %3989 = vst [vmem:[#allocation3 + $0xa0] sm:$0xff] %v3985
        %3990 = vst [vmem:[#allocation3 + $0xa8] sm:$0xff] %v3986
        %v3991 = vld [vmem:[#allocation3] sm:$0xff]
        %v3992 = vld [vmem:[#allocation3 + $0x8] sm:$0xff]
        %v3993 = vld [vmem:[#allocation3 + $0x10] sm:$0xff]
        %v3994 = vld [vmem:[#allocation3 + $0x18] sm:$0xff]
        %v3995 = vld [vmem:[#allocation3 + $0x20] sm:$0xff]
        %v3996 = vld [vmem:[#allocation3 + $0x28] sm:$0xff]
        %v3997 = vld [vmem:[#allocation3 + $0x30] sm:$0xff]
        %v3998 = vld [vmem:[#allocation3 + $0x38] sm:$0xff]
        %v3999 = vld [vmem:[#allocation3 + $0x40] sm:$0xff]
        %v4000 = vld [vmem:[#allocation3 + $0x48] sm:$0xff]
        %v4001 = vld [vmem:[#allocation3 + $0x50] sm:$0xff]
        %v4002 = vld [vmem:[#allocation3 + $0x58] sm:$0xff]
        %v4003 = vld [vmem:[#allocation3 + $0x60] sm:$0xff]
        %v4004 = vld [vmem:[#allocation3 + $0x68] sm:$0xff]
        %v4005 = vld [vmem:[#allocation3 + $0x70] sm:$0xff]
        %v4006 = vld [vmem:[#allocation3 + $0x78] sm:$0xff]
        %v4007 = vld [vmem:[#allocation3 + $0x80] sm:$0xff]
        %v4008 = vld [vmem:[#allocation3 + $0x88] sm:$0xff]
        %v4009 = vld [vmem:[#allocation3 + $0x90] sm:$0xff]
        %v4010 = vld [vmem:[#allocation3 + $0x98] sm:$0xff]
        %v4011 = vld [vmem:[#allocation3 + $0xa0] sm:$0xff]
        %v4012 = vld [vmem:[#allocation3 + $0xa8] sm:$0xff]
        %4014 = vset.pattern.permute.xlu0 0
        %4015 = vperm.xlu0 %4014, %v3731
        %v4016 = vpop.permute.xlu0 %4015
        %4019 = vset.pattern.permute.xlu0 0
        %4020 = vperm.xlu0 %4019, %v3732
        %v4021 = vpop.permute.xlu0 %4020
        %4024 = vset.pattern.permute.xlu0 0
        %4025 = vperm.xlu0 %4024, %v3733
        %v4026 = vpop.permute.xlu0 %4025
        %4029 = vset.pattern.permute.xlu0 0
        %4030 = vperm.xlu0 %4029, %v3734
        %v4031 = vpop.permute.xlu0 %4030
        %v4041 = vunpack.c.l.b16 %v3722
        %v4042 = vunpack.c.h.b16 %v3722
        %v4043 = vunpack.c.l.b16 %v3723
        %v4044 = vunpack.c.l.b16 %v3724
        %v4045 = vunpack.c.h.b16 %v3724
        %v4046 = vunpack.c.l.b16 %v3725
        %v4047 = vunpack.c.l.b16 %v3726
        %v4048 = vunpack.c.h.b16 %v3726
        %v4049 = vunpack.c.l.b16 %v3727
        %v4050 = vunpack.c.l.b16 %v3728
        %v4051 = vunpack.c.h.b16 %v3728
        %v4052 = vunpack.c.l.b16 %v3729
        %v4053 = vpack.c.b16 %v4044, %v4041
        %v4054 = vpack.c.b16 %v4045, %v4042
        %v4055 = vpack.c.b16 %v4046, %v4043
        %v4056 = vpack.c.b16 %v4050, %v4047
        %v4057 = vpack.c.b16 %v4051, %v4048
        %v4058 = vpack.c.b16 %v4052, %v4049
        %v4064 = vsel %vm448, %v4055, 0
        %v4067 = vsel %vm448, %v4058, 0
        %4069 = vmatprep.subr.bf16.mxu0 0
        %4070 = vmatpush1.bf16.msra.mxu0 %v3991
        %4071 = vmatprep.subr.bf16.mxu0 0
        %4072 = vmatpush1.bf16.msra.mxu0 %v3992
        %4073 = vmatprep.subr.bf16.mxu0 0
        %4074 = vmatpush1.bf16.msra.mxu0 %v3993
        %4075 = vmatprep.subr.bf16.mxu0 0
        %4076 = vmatpush1.bf16.msra.mxu0 %v3994
        %4077 = vmatprep.subr.bf16.mxu0 0
        %4078 = vmatpush1.bf16.msra.mxu0 %v3995
        %4079 = vmatprep.subr.bf16.mxu0 0
        %4080 = vmatpush1.bf16.msra.mxu0 %v3996
        %4081 = vmatprep.subr.bf16.mxu0 0
        %4082 = vmatpush1.bf16.msra.mxu0 %v3997
        %4083 = vmatprep.subr.bf16.mxu0 0
        %4084 = vmatpush1.bf16.msra.mxu0 %v3998
        %4085 = vmatprep.subr.bf16.mxu0 0
        %4086 = vmatpush1.bf16.msra.mxu0 %v3999
        %4087 = vmatprep.subr.bf16.mxu0 0
        %4088 = vmatpush1.bf16.msra.mxu0 %v4000
        %4089 = vmatprep.subr.bf16.mxu0 0
        %4090 = vmatpush1.bf16.msra.mxu0 %v4001
        %4091 = vmatprep.subr.bf16.mxu0 0
        %4092 = vmatpush1.bf16.msra.mxu0 %v4002
        %4093 = vmatprep.subr.bf16.mxu0 0
        %4094 = vmatpush1.bf16.msra.mxu0 %v4003
        %4095 = vmatprep.subr.bf16.mxu0 0
        %4096 = vmatpush1.bf16.msra.mxu0 %v4004
        %4097 = vmatprep.subr.bf16.mxu0 0
        %4098 = vmatpush1.bf16.msra.mxu0 %v4005
        %4099 = vmatprep.subr.bf16.mxu0 0
        %4100 = vmatpush1.bf16.msra.mxu0 %v4006
        %4101 = vmatprep.mubr.bf16.mxu0 %v4054
        %4102 = vmatmul.mubr.bf16.gmra.mrb[0].mxu0 %v4053
        %v4103 = vpop.f32.mrb[0].mxu0
        %v4104 = vadd.f32 %v4016, %v4103
        %v4105 = vpop.f32.mrb[0].mxu0
        %v4106 = vpop.f32.mrb[0].mxu0
        %v4107 = vadd.f32 %v4021, %v4106
        %v4108 = vpop.f32.mrb[0].mxu0
        %4109 = vmatprep.mubr.bf16.mxu0 %v4057
        %4110 = vmatmul.mubr.bf16.gmra.mrb[0].mxu0 %v4056
        %v4111 = vpop.f32.mrb[0].mxu0
        %v4112 = vadd.f32 %v4026, %v4111
        %v4113 = vpop.f32.mrb[0].mxu0
        %v4114 = vpop.f32.mrb[0].mxu0
        %v4115 = vadd.f32 %v4031, %v4114
        %v4116 = vpop.f32.mrb[0].mxu0
        %4117 = vdwg.mxu0
        %4118 = vmatprep.subr.bf16.mxu0 0
        %4119 = vmatpush1.bf16.msra.mxu0 %v4007
        %4120 = vmatprep.subr.bf16.mxu0 0
        %4121 = vmatpush1.bf16.msra.mxu0 %v4008
        %4122 = vmatprep.subr.bf16.mxu0 0
        %4123 = vmatpush1.bf16.msra.mxu0 %v4009
        %4124 = vmatprep.subr.bf16.mxu0 0
        %4125 = vmatpush1.bf16.msra.mxu0 %v4010
        %4126 = vmatprep.subr.bf16.mxu0 0
        %4127 = vmatpush1.bf16.msra.mxu0 %v4011
        %4128 = vmatprep.subr.bf16.mxu0 0
        %4129 = vmatpush1.bf16.msra.mxu0 %v4012
        %4130 = vmatprep.subr.bf16.mxu0 0
        %4131 = vmatpush1.bf16.msra.mxu0 0
        %4132 = vmatprep.subr.bf16.mxu0 0
        %4133 = vmatpush1.bf16.msra.mxu0 0
        %4134 = vmatprep.subr.bf16.mxu0 0
        %4135 = vmatpush1.bf16.msra.mxu0 0
        %4136 = vmatprep.subr.bf16.mxu0 0
        %4137 = vmatpush1.bf16.msra.mxu0 0
        %4138 = vmatprep.subr.bf16.mxu0 0
        %4139 = vmatpush1.bf16.msra.mxu0 0
        %4140 = vmatprep.subr.bf16.mxu0 0
        %4141 = vmatpush1.bf16.msra.mxu0 0
        %4142 = vmatprep.subr.bf16.mxu0 0
        %4143 = vmatpush1.bf16.msra.mxu0 0
        %4144 = vmatprep.subr.bf16.mxu0 0
        %4145 = vmatpush1.bf16.msra.mxu0 0
        %4146 = vmatprep.subr.bf16.mxu0 0
        %4147 = vmatpush1.bf16.msra.mxu0 0
        %4148 = vmatprep.subr.bf16.mxu0 0
        %4149 = vmatpush1.bf16.msra.mxu0 0
        %4150 = vmatprep.mubr.bf16.mxu0 0
        %4151 = vmatmul.mubr.bf16.gmra.mrb[0].mxu0 %v4064
        %v4152 = vpop.f32.mrb[0].mxu0
        %v4153 = vadd.f32 %v4104, %v4152
        %v4154 = vpop.f32.mrb[0].mxu0
        %v4155 = vpop.f32.mrb[0].mxu0
        %v4156 = vadd.f32 %v4107, %v4155
        %v4157 = vpop.f32.mrb[0].mxu0
        %4158 = vmatprep.mubr.bf16.mxu0 0
        %4159 = vmatmul.mubr.bf16.gmra.mrb[0].mxu0 %v4067
        %v4160 = vpop.f32.mrb[0].mxu0
        %v4161 = vadd.f32 %v4112, %v4160
        %v4162 = vpop.f32.mrb[0].mxu0
        %v4163 = vpop.f32.mrb[0].mxu0
        %v4164 = vadd.f32 %v4115, %v4163
        %v4165 = vpop.f32.mrb[0].mxu0
        %4166 = vdwg.mxu0
        %v4167 = vadd.f32 %v4153, %v304
        %v4168 = vadd.f32 %v4156, %v305
        %v4169 = vadd.f32 %v4161, %v306
        %v4170 = vadd.f32 %v4164, %v307
        %vm4171 = vcmp.gt.f32.partialorder %v4167, 0.0
        %vm4172 = vcmp.gt.f32.partialorder %v4168, 0.0
        %vm4173 = vcmp.gt.f32.partialorder %v4169, 0.0
        %vm4174 = vcmp.gt.f32.partialorder %v4170, 0.0
        %v4175 = vmul.f32 %v4167, 0.1
        %v4176 = vmul.f32 %v4168, 0.1
        %v4177 = vmul.f32 %v4169, 0.1
        %v4178 = vmul.f32 %v4170, 0.1
        %v4179 = vsel %vm4171, %v4167, %v4175
        %v4180 = vsel %vm4172, %v4168, %v4176
        %v4181 = vsel %vm4173, %v4169, %v4177
        %v4182 = vsel %vm4174, %v4170, %v4178
        %s4183 = scalar_lea.vmem %s5, 96
        %v4184 = vld [vmem:[%s4183] sm:$0xff]
        %v4185 = vld [vmem:[%s4183 + $0x8] sm:$0xf]
        %v4186 = vld [vmem:[%s4183 + $0xc] sm:$0xff]
        %v4187 = vld [vmem:[%s4183 + $0x14] sm:$0xf]
        %v4188 = vld [vmem:[%s4183 + $0x18] sm:$0xff]
        %v4189 = vld [vmem:[%s4183 + $0x20] sm:$0xf]
        %v4190 = vld [vmem:[%s4183 + $0x24] sm:$0xff]
        %v4191 = vld [vmem:[%s4183 + $0x2c] sm:$0xf]
        %s4192 = scalar_lea.vmem %s6, 64
        %v4193 = vld [vmem:[%s4192] sm:$0xff]
        %v4194 = vld [vmem:[%s4192 + $0x8] sm:$0xff]
        %v4195 = vld [vmem:[%s4192 + $0x10] sm:$0xff]
        %v4196 = vld [vmem:[%s4192 + $0x18] sm:$0xff]
        %v4197 = vpack.c.bf16 %v4180, %v4179
        %v4198 = vpack.c.bf16 %v4182, %v4181
        %4201 = vrot.lane.b32.xlu0 %v4197, 25
        %v4202 = vpop.permute.xlu0 %4201
        %4203 = vrot.lane.b32.xlu0 %v4198, 25
        %v4204 = vpop.permute.xlu0 %4203
        %4207 = vst.msk [vmem:[#allocation2] sm:$0xff] %vm338, %v4202
        %4208 = vst.msk [vmem:[#allocation2 + $0x8] sm:$0xff] %vm298, %v4202
        %4209 = vst.msk [vmem:[#allocation2 + $0x10] sm:$0xff] %vm338, %v4204
        %4210 = vst.msk [vmem:[#allocation2 + $0x18] sm:$0xff] %vm298, %v4204
        %v4211 = vld [vmem:[#allocation2] sm:$0xff]
        %v4212 = vld [vmem:[#allocation2 + $0x8] sm:$0xff]
        %v4213 = vld [vmem:[#allocation2 + $0x10] sm:$0xff]
        %v4214 = vld [vmem:[#allocation2 + $0x18] sm:$0xff]
        %4219 = vrot.lane.b32.xlu0 %v4211, 118
        %v4220 = vpop.permute.xlu0 %4219
        %4221 = vrot.lane.b32.xlu0 %v4212, 118
        %v4222 = vpop.permute.xlu0 %4221
        %4223 = vrot.lane.b32.xlu0 %v4213, 118
        %v4224 = vpop.permute.xlu0 %4223
        %4225 = vrot.lane.b32.xlu0 %v4214, 118
        %v4226 = vpop.permute.xlu0 %4225
        %v4227 = vsel %vm2719, %v4220, %v4222
        %v4228 = vsel %vm2719, %v4224, %v4226
        %4231 = vst [vmem:[#allocation3] sm:$0xff] %v4227
        %4232 = vst [vmem:[#allocation3 + $0x8] sm:$0xff] %v4228
        %v4233 = vld [vmem:[#allocation2] sm:$0xff]
        %v4234 = vld [vmem:[#allocation2 + $0x8] sm:$0xff]
        %v4235 = vld [vmem:[#allocation2 + $0x10] sm:$0xff]
        %v4236 = vld [vmem:[#allocation2 + $0x18] sm:$0xff]
        %4241 = vrot.lane.b32.xlu0 %v4233, 115
        %v4242 = vpop.permute.xlu0 %4241
        %4243 = vrot.lane.b32.xlu0 %v4234, 115
        %v4244 = vpop.permute.xlu0 %4243
        %4245 = vrot.lane.b32.xlu0 %v4235, 115
        %v4246 = vpop.permute.xlu0 %4245
        %4247 = vrot.lane.b32.xlu0 %v4236, 115
        %v4248 = vpop.permute.xlu0 %4247
        %vm4249 = vcmask 941056
        %v4250 = vsel %vm4249, %v4242, %v4244
        %v4251 = vsel %vm4249, %v4246, %v4248
        %4254 = vst [vmem:[#allocation3 + $0x10] sm:$0xff] %v4250
        %4255 = vst [vmem:[#allocation3 + $0x18] sm:$0xff] %v4251
        %v4256 = vld [vmem:[#allocation2] sm:$0xff]
        %v4257 = vld [vmem:[#allocation2 + $0x8] sm:$0xff]
        %v4258 = vld [vmem:[#allocation2 + $0x10] sm:$0xff]
        %v4259 = vld [vmem:[#allocation2 + $0x18] sm:$0xff]
        %4264 = vrot.lane.b32.xlu0 %v4256, 112
        %v4265 = vpop.permute.xlu0 %4264
        %4266 = vrot.lane.b32.xlu0 %v4257, 112
        %v4267 = vpop.permute.xlu0 %4266
        %4268 = vrot.lane.b32.xlu0 %v4258, 112
        %v4269 = vpop.permute.xlu0 %4268
        %4270 = vrot.lane.b32.xlu0 %v4259, 112
        %v4271 = vpop.permute.xlu0 %4270
        %v4272 = vsel %vm2117, %v4265, %v4267
        %v4273 = vsel %vm2117, %v4269, %v4271
        %4276 = vst [vmem:[#allocation3 + $0x20] sm:$0xff] %v4272
        %4277 = vst [vmem:[#allocation3 + $0x28] sm:$0xff] %v4273
        %v4278 = vld [vmem:[#allocation2] sm:$0xff]
        %v4279 = vld [vmem:[#allocation2 + $0x8] sm:$0xff]
        %v4280 = vld [vmem:[#allocation2 + $0x10] sm:$0xff]
        %v4281 = vld [vmem:[#allocation2 + $0x18] sm:$0xff]
        %4286 = vrot.lane.b32.xlu0 %v4278, 109
        %v4287 = vpop.permute.xlu0 %4286
        %4288 = vrot.lane.b32.xlu0 %v4279, 109
        %v4289 = vpop.permute.xlu0 %4288
        %4290 = vrot.lane.b32.xlu0 %v4280, 109
        %v4291 = vpop.permute.xlu0 %4290
        %4292 = vrot.lane.b32.xlu0 %v4281, 109
        %v4293 = vpop.permute.xlu0 %4292
        %v4294 = vsel %vm2140, %v4287, %v4289
        %v4295 = vsel %vm2140, %v4291, %v4293
        %4298 = vst [vmem:[#allocation3 + $0x30] sm:$0xff] %v4294
        %4299 = vst [vmem:[#allocation3 + $0x38] sm:$0xff] %v4295
        %v4300 = vld [vmem:[#allocation2] sm:$0xff]
        %v4301 = vld [vmem:[#allocation2 + $0x8] sm:$0xff]
        %v4302 = vld [vmem:[#allocation2 + $0x10] sm:$0xff]
        %v4303 = vld [vmem:[#allocation2 + $0x18] sm:$0xff]
        %4308 = vrot.lane.b32.xlu0 %v4300, 106
        %v4309 = vpop.permute.xlu0 %4308
        %4310 = vrot.lane.b32.xlu0 %v4301, 106
        %v4311 = vpop.permute.xlu0 %4310
        %4312 = vrot.lane.b32.xlu0 %v4302, 106
        %v4313 = vpop.permute.xlu0 %4312
        %4314 = vrot.lane.b32.xlu0 %v4303, 106
        %v4315 = vpop.permute.xlu0 %4314
        %v4316 = vsel %vm753, %v4309, %v4311
        %v4317 = vsel %vm753, %v4313, %v4315
        %4320 = vst [vmem:[#allocation3 + $0x40] sm:$0xff] %v4316
        %4321 = vst [vmem:[#allocation3 + $0x48] sm:$0xff] %v4317
        %v4322 = vld [vmem:[#allocation2] sm:$0xff]
        %v4323 = vld [vmem:[#allocation2 + $0x8] sm:$0xff]
        %v4324 = vld [vmem:[#allocation2 + $0x10] sm:$0xff]
        %v4325 = vld [vmem:[#allocation2 + $0x18] sm:$0xff]
        %4330 = vrot.lane.b32.xlu0 %v4322, 103
        %v4331 = vpop.permute.xlu0 %4330
        %4332 = vrot.lane.b32.xlu0 %v4323, 103
        %v4333 = vpop.permute.xlu0 %4332
        %4334 = vrot.lane.b32.xlu0 %v4324, 103
        %v4335 = vpop.permute.xlu0 %4334
        %4336 = vrot.lane.b32.xlu0 %v4325, 103
        %v4337 = vpop.permute.xlu0 %4336
        %v4338 = vsel %vm382, %v4331, %v4333
        %v4339 = vsel %vm382, %v4335, %v4337
        %4342 = vst [vmem:[#allocation3 + $0x50] sm:$0xff] %v4338
        %4343 = vst [vmem:[#allocation3 + $0x58] sm:$0xff] %v4339
        %v4344 = vld [vmem:[#allocation2] sm:$0xff]
        %v4345 = vld [vmem:[#allocation2 + $0x8] sm:$0xff]
        %v4346 = vld [vmem:[#allocation2 + $0x10] sm:$0xff]
        %v4347 = vld [vmem:[#allocation2 + $0x18] sm:$0xff]
        %4352 = vrot.lane.b32.xlu0 %v4344, 100
        %v4353 = vpop.permute.xlu0 %4352
        %4354 = vrot.lane.b32.xlu0 %v4345, 100
        %v4355 = vpop.permute.xlu0 %4354
        %4356 = vrot.lane.b32.xlu0 %v4346, 100
        %v4357 = vpop.permute.xlu0 %4356
        %4358 = vrot.lane.b32.xlu0 %v4347, 100
        %v4359 = vpop.permute.xlu0 %4358
        %v4360 = vsel %vm798, %v4353, %v4355
        %v4361 = vsel %vm798, %v4357, %v4359
        %4364 = vst [vmem:[#allocation3 + $0x60] sm:$0xff] %v4360
        %4365 = vst [vmem:[#allocation3 + $0x68] sm:$0xff] %v4361
        %v4366 = vld [vmem:[#allocation2] sm:$0xff]
        %v4367 = vld [vmem:[#allocation2 + $0x8] sm:$0xff]
        %v4368 = vld [vmem:[#allocation2 + $0x10] sm:$0xff]
        %v4369 = vld [vmem:[#allocation2 + $0x18] sm:$0xff]
        %4374 = vrot.lane.b32.xlu0 %v4366, 97
        %v4375 = vpop.permute.xlu0 %4374
        %4376 = vrot.lane.b32.xlu0 %v4367, 97
        %v4377 = vpop.permute.xlu0 %4376
        %4378 = vrot.lane.b32.xlu0 %v4368, 97
        %v4379 = vpop.permute.xlu0 %4378
        %4380 = vrot.lane.b32.xlu0 %v4369, 97
        %v4381 = vpop.permute.xlu0 %4380
        %v4382 = vsel %vm2229, %v4375, %v4377
        %v4383 = vsel %vm2229, %v4379, %v4381
        %4386 = vst [vmem:[#allocation3 + $0x70] sm:$0xff] %v4382
        %4387 = vst [vmem:[#allocation3 + $0x78] sm:$0xff] %v4383
        %v4388 = vld [vmem:[#allocation2] sm:$0xff]
        %v4389 = vld [vmem:[#allocation2 + $0x8] sm:$0xff]
        %v4390 = vld [vmem:[#allocation2 + $0x10] sm:$0xff]
        %v4391 = vld [vmem:[#allocation2 + $0x18] sm:$0xff]
        %4396 = vrot.lane.b32.xlu0 %v4388, 94
        %v4397 = vpop.permute.xlu0 %4396
        %4398 = vrot.lane.b32.xlu0 %v4389, 94
        %v4399 = vpop.permute.xlu0 %4398
        %4400 = vrot.lane.b32.xlu0 %v4390, 94
        %v4401 = vpop.permute.xlu0 %4400
        %4402 = vrot.lane.b32.xlu0 %v4391, 94
        %v4403 = vpop.permute.xlu0 %4402
        %v4404 = vsel %vm2252, %v4397, %v4399
        %v4405 = vsel %vm2252, %v4401, %v4403
        %4408 = vst [vmem:[#allocation3 + $0x80] sm:$0xff] %v4404
        %4409 = vst [vmem:[#allocation3 + $0x88] sm:$0xff] %v4405
        %v4410 = vld [vmem:[#allocation2] sm:$0xff]
        %v4411 = vld [vmem:[#allocation2 + $0x8] sm:$0xff]
        %v4412 = vld [vmem:[#allocation2 + $0x10] sm:$0xff]
        %v4413 = vld [vmem:[#allocation2 + $0x18] sm:$0xff]
        %4418 = vrot.lane.b32.xlu0 %v4410, 91
        %v4419 = vpop.permute.xlu0 %4418
        %4420 = vrot.lane.b32.xlu0 %v4411, 91
        %v4421 = vpop.permute.xlu0 %4420
        %4422 = vrot.lane.b32.xlu0 %v4412, 91
        %v4423 = vpop.permute.xlu0 %4422
        %4424 = vrot.lane.b32.xlu0 %v4413, 91
        %v4425 = vpop.permute.xlu0 %4424
        %vm4426 = vcmask 744448
        %v4427 = vsel %vm4426, %v4419, %v4421
        %v4428 = vsel %vm4426, %v4423, %v4425
        %4431 = vst [vmem:[#allocation3 + $0x90] sm:$0xff] %v4427
        %4432 = vst [vmem:[#allocation3 + $0x98] sm:$0xff] %v4428
        %v4433 = vld [vmem:[#allocation2] sm:$0xff]
        %v4434 = vld [vmem:[#allocation2 + $0x8] sm:$0xff]
        %v4435 = vld [vmem:[#allocation2 + $0x10] sm:$0xff]
        %v4436 = vld [vmem:[#allocation2 + $0x18] sm:$0xff]
        %4441 = vrot.lane.b32.xlu0 %v4433, 88
        %v4442 = vpop.permute.xlu0 %4441
        %4443 = vrot.lane.b32.xlu0 %v4434, 88
        %v4444 = vpop.permute.xlu0 %4443
        %4445 = vrot.lane.b32.xlu0 %v4435, 88
        %v4446 = vpop.permute.xlu0 %4445
        %4447 = vrot.lane.b32.xlu0 %v4436, 88
        %v4448 = vpop.permute.xlu0 %4447
        %v4449 = vsel %vm2854, %v4442, %v4444
        %v4450 = vsel %vm2854, %v4446, %v4448
        %4453 = vst [vmem:[#allocation3 + $0xa0] sm:$0xff] %v4449
        %4454 = vst [vmem:[#allocation3 + $0xa8] sm:$0xff] %v4450
        %v4455 = vld [vmem:[#allocation3] sm:$0xff]
        %v4456 = vld [vmem:[#allocation3 + $0x8] sm:$0xff]
        %v4457 = vld [vmem:[#allocation3 + $0x10] sm:$0xff]
        %v4458 = vld [vmem:[#allocation3 + $0x18] sm:$0xff]
        %v4459 = vld [vmem:[#allocation3 + $0x20] sm:$0xff]
        %v4460 = vld [vmem:[#allocation3 + $0x28] sm:$0xff]
        %v4461 = vld [vmem:[#allocation3 + $0x30] sm:$0xff]
        %v4462 = vld [vmem:[#allocation3 + $0x38] sm:$0xff]
        %v4463 = vld [vmem:[#allocation3 + $0x40] sm:$0xff]
        %v4464 = vld [vmem:[#allocation3 + $0x48] sm:$0xff]
        %v4465 = vld [vmem:[#allocation3 + $0x50] sm:$0xff]
        %v4466 = vld [vmem:[#allocation3 + $0x58] sm:$0xff]
        %v4467 = vld [vmem:[#allocation3 + $0x60] sm:$0xff]
        %v4468 = vld [vmem:[#allocation3 + $0x68] sm:$0xff]
        %v4469 = vld [vmem:[#allocation3 + $0x70] sm:$0xff]
        %v4470 = vld [vmem:[#allocation3 + $0x78] sm:$0xff]
        %v4471 = vld [vmem:[#allocation3 + $0x80] sm:$0xff]
        %v4472 = vld [vmem:[#allocation3 + $0x88] sm:$0xff]
        %v4473 = vld [vmem:[#allocation3 + $0x90] sm:$0xff]
        %v4474 = vld [vmem:[#allocation3 + $0x98] sm:$0xff]
        %v4475 = vld [vmem:[#allocation3 + $0xa0] sm:$0xff]
        %v4476 = vld [vmem:[#allocation3 + $0xa8] sm:$0xff]
        %4478 = vset.pattern.permute.xlu0 0
        %4479 = vperm.xlu0 %4478, %v4193
        %v4480 = vpop.permute.xlu0 %4479
        %4483 = vset.pattern.permute.xlu0 0
        %4484 = vperm.xlu0 %4483, %v4194
        %v4485 = vpop.permute.xlu0 %4484
        %4488 = vset.pattern.permute.xlu0 0
        %4489 = vperm.xlu0 %4488, %v4195
        %v4490 = vpop.permute.xlu0 %4489
        %4493 = vset.pattern.permute.xlu0 0
        %4494 = vperm.xlu0 %4493, %v4196
        %v4495 = vpop.permute.xlu0 %4494
        %v4505 = vunpack.c.l.b16 %v4184
        %v4506 = vunpack.c.h.b16 %v4184
        %v4507 = vunpack.c.l.b16 %v4185
        %v4508 = vunpack.c.l.b16 %v4186
        %v4509 = vunpack.c.h.b16 %v4186
        %v4510 = vunpack.c.l.b16 %v4187
        %v4511 = vunpack.c.l.b16 %v4188
        %v4512 = vunpack.c.h.b16 %v4188
        %v4513 = vunpack.c.l.b16 %v4189
        %v4514 = vunpack.c.l.b16 %v4190
        %v4515 = vunpack.c.h.b16 %v4190
        %v4516 = vunpack.c.l.b16 %v4191
        %v4517 = vpack.c.b16 %v4508, %v4505
        %v4518 = vpack.c.b16 %v4509, %v4506
        %v4519 = vpack.c.b16 %v4510, %v4507
        %v4520 = vpack.c.b16 %v4514, %v4511
        %v4521 = vpack.c.b16 %v4515, %v4512
        %v4522 = vpack.c.b16 %v4516, %v4513
        %v4528 = vsel %vm448, %v4519, 0
        %v4531 = vsel %vm448, %v4522, 0
        %4533 = vmatprep.subr.bf16.mxu0 0
        %4534 = vmatpush1.bf16.msra.mxu0 %v4455
        %4535 = vmatprep.subr.bf16.mxu0 0
        %4536 = vmatpush1.bf16.msra.mxu0 %v4456
        %4537 = vmatprep.subr.bf16.mxu0 0
        %4538 = vmatpush1.bf16.msra.mxu0 %v4457
        %4539 = vmatprep.subr.bf16.mxu0 0
        %4540 = vmatpush1.bf16.msra.mxu0 %v4458
        %4541 = vmatprep.subr.bf16.mxu0 0
        %4542 = vmatpush1.bf16.msra.mxu0 %v4459
        %4543 = vmatprep.subr.bf16.mxu0 0
        %4544 = vmatpush1.bf16.msra.mxu0 %v4460
        %4545 = vmatprep.subr.bf16.mxu0 0
        %4546 = vmatpush1.bf16.msra.mxu0 %v4461
        %4547 = vmatprep.subr.bf16.mxu0 0
        %4548 = vmatpush1.bf16.msra.mxu0 %v4462
        %4549 = vmatprep.subr.bf16.mxu0 0
        %4550 = vmatpush1.bf16.msra.mxu0 %v4463
        %4551 = vmatprep.subr.bf16.mxu0 0
        %4552 = vmatpush1.bf16.msra.mxu0 %v4464
        %4553 = vmatprep.subr.bf16.mxu0 0
        %4554 = vmatpush1.bf16.msra.mxu0 %v4465
        %4555 = vmatprep.subr.bf16.mxu0 0
        %4556 = vmatpush1.bf16.msra.mxu0 %v4466
        %4557 = vmatprep.subr.bf16.mxu0 0
        %4558 = vmatpush1.bf16.msra.mxu0 %v4467
        %4559 = vmatprep.subr.bf16.mxu0 0
        %4560 = vmatpush1.bf16.msra.mxu0 %v4468
        %4561 = vmatprep.subr.bf16.mxu0 0
        %4562 = vmatpush1.bf16.msra.mxu0 %v4469
        %4563 = vmatprep.subr.bf16.mxu0 0
        %4564 = vmatpush1.bf16.msra.mxu0 %v4470
        %4565 = vmatprep.mubr.bf16.mxu0 %v4518
        %4566 = vmatmul.mubr.bf16.gmra.mrb[0].mxu0 %v4517
        %v4567 = vpop.f32.mrb[0].mxu0
        %v4568 = vadd.f32 %v4480, %v4567
        %v4569 = vpop.f32.mrb[0].mxu0
        %v4570 = vpop.f32.mrb[0].mxu0
        %v4571 = vadd.f32 %v4485, %v4570
        %v4572 = vpop.f32.mrb[0].mxu0
        %4573 = vmatprep.mubr.bf16.mxu0 %v4521
        %4574 = vmatmul.mubr.bf16.gmra.mrb[0].mxu0 %v4520
        %v4575 = vpop.f32.mrb[0].mxu0
        %v4576 = vadd.f32 %v4490, %v4575
        %v4577 = vpop.f32.mrb[0].mxu0
        %v4578 = vpop.f32.mrb[0].mxu0
        %v4579 = vadd.f32 %v4495, %v4578
        %v4580 = vpop.f32.mrb[0].mxu0
        %4581 = vdwg.mxu0
        %4582 = vmatprep.subr.bf16.mxu0 0
        %4583 = vmatpush1.bf16.msra.mxu0 %v4471
        %4584 = vmatprep.subr.bf16.mxu0 0
        %4585 = vmatpush1.bf16.msra.mxu0 %v4472
        %4586 = vmatprep.subr.bf16.mxu0 0
        %4587 = vmatpush1.bf16.msra.mxu0 %v4473
        %4588 = vmatprep.subr.bf16.mxu0 0
        %4589 = vmatpush1.bf16.msra.mxu0 %v4474
        %4590 = vmatprep.subr.bf16.mxu0 0
        %4591 = vmatpush1.bf16.msra.mxu0 %v4475
        %4592 = vmatprep.subr.bf16.mxu0 0
        %4593 = vmatpush1.bf16.msra.mxu0 %v4476
        %4594 = vmatprep.subr.bf16.mxu0 0
        %4595 = vmatpush1.bf16.msra.mxu0 0
        %4596 = vmatprep.subr.bf16.mxu0 0
        %4597 = vmatpush1.bf16.msra.mxu0 0
        %4598 = vmatprep.subr.bf16.mxu0 0
        %4599 = vmatpush1.bf16.msra.mxu0 0
        %4600 = vmatprep.subr.bf16.mxu0 0
        %4601 = vmatpush1.bf16.msra.mxu0 0
        %4602 = vmatprep.subr.bf16.mxu0 0
        %4603 = vmatpush1.bf16.msra.mxu0 0
        %4604 = vmatprep.subr.bf16.mxu0 0
        %4605 = vmatpush1.bf16.msra.mxu0 0
        %4606 = vmatprep.subr.bf16.mxu0 0
        %4607 = vmatpush1.bf16.msra.mxu0 0
        %4608 = vmatprep.subr.bf16.mxu0 0
        %4609 = vmatpush1.bf16.msra.mxu0 0
        %4610 = vmatprep.subr.bf16.mxu0 0
        %4611 = vmatpush1.bf16.msra.mxu0 0
        %4612 = vmatprep.subr.bf16.mxu0 0
        %4613 = vmatpush1.bf16.msra.mxu0 0
        %4614 = vmatprep.mubr.bf16.mxu0 0
        %4615 = vmatmul.mubr.bf16.gmra.mrb[0].mxu0 %v4528
        %v4616 = vpop.f32.mrb[0].mxu0
        %v4617 = vadd.f32 %v4568, %v4616
        %v4618 = vpop.f32.mrb[0].mxu0
        %v4619 = vpop.f32.mrb[0].mxu0
        %v4620 = vadd.f32 %v4571, %v4619
        %v4621 = vpop.f32.mrb[0].mxu0
        %4622 = vmatprep.mubr.bf16.mxu0 0
        %4623 = vmatmul.mubr.bf16.gmra.mrb[0].mxu0 %v4531
        %v4624 = vpop.f32.mrb[0].mxu0
        %v4625 = vadd.f32 %v4576, %v4624
        %v4626 = vpop.f32.mrb[0].mxu0
        %v4627 = vpop.f32.mrb[0].mxu0
        %v4628 = vadd.f32 %v4579, %v4627
        %v4629 = vpop.f32.mrb[0].mxu0
        %4630 = vdwg.mxu0
        %vm4631 = vcmp.gt.f32.partialorder %v4617, 0.0
        %vm4632 = vcmp.gt.f32.partialorder %v4620, 0.0
        %vm4633 = vcmp.gt.f32.partialorder %v4625, 0.0
        %vm4634 = vcmp.gt.f32.partialorder %v4628, 0.0
        %v4635 = vmul.f32 %v4617, 0.1
        %v4636 = vmul.f32 %v4620, 0.1
        %v4637 = vmul.f32 %v4625, 0.1
        %v4638 = vmul.f32 %v4628, 0.1
        %v4639 = vsel %vm4631, %v4617, %v4635
        %v4640 = vsel %vm4632, %v4620, %v4636
        %v4641 = vsel %vm4633, %v4625, %v4637
        %v4642 = vsel %vm4634, %v4628, %v4638
        %s4643 = scalar_lea.vmem %s5, 144
        %v4644 = vld [vmem:[%s4643] sm:$0xff]
        %v4645 = vld [vmem:[%s4643 + $0x8] sm:$0xf]
        %v4646 = vld [vmem:[%s4643 + $0xc] sm:$0xff]
        %v4647 = vld [vmem:[%s4643 + $0x14] sm:$0xf]
        %v4648 = vld [vmem:[%s4643 + $0x18] sm:$0xff]
        %v4649 = vld [vmem:[%s4643 + $0x20] sm:$0xf]
        %v4650 = vld [vmem:[%s4643 + $0x24] sm:$0xff]
        %v4651 = vld [vmem:[%s4643 + $0x2c] sm:$0xf]
        %s4652 = scalar_lea.vmem %s6, 96
        %v4653 = vld [vmem:[%s4652] sm:$0xff]
        %v4654 = vld [vmem:[%s4652 + $0x8] sm:$0xff]
        %v4655 = vld [vmem:[%s4652 + $0x10] sm:$0xff]
        %v4656 = vld [vmem:[%s4652 + $0x18] sm:$0xff]
        %v4657 = vpack.c.bf16 %v4640, %v4639
        %v4658 = vpack.c.bf16 %v4642, %v4641
        %4661 = vrot.lane.b32.xlu0 %v4657, 25
        %v4662 = vpop.permute.xlu0 %4661
        %4663 = vrot.lane.b32.xlu0 %v4658, 25
        %v4664 = vpop.permute.xlu0 %4663
        %4667 = vst.msk [vmem:[#allocation2] sm:$0xff] %vm338, %v4662
        %4668 = vst.msk [vmem:[#allocation2 + $0x8] sm:$0xff] %vm298, %v4662
        %4669 = vst.msk [vmem:[#allocation2 + $0x10] sm:$0xff] %vm338, %v4664
        %4670 = vst.msk [vmem:[#allocation2 + $0x18] sm:$0xff] %vm298, %v4664
        %v4671 = vld [vmem:[#allocation2] sm:$0xff]
        %v4672 = vld [vmem:[#allocation2 + $0x8] sm:$0xff]
        %v4673 = vld [vmem:[#allocation2 + $0x10] sm:$0xff]
        %v4674 = vld [vmem:[#allocation2 + $0x18] sm:$0xff]
        %4679 = vrot.lane.b32.xlu0 %v4671, 108
        %v4680 = vpop.permute.xlu0 %4679
        %4681 = vrot.lane.b32.xlu0 %v4672, 108
        %v4682 = vpop.permute.xlu0 %4681
        %4683 = vrot.lane.b32.xlu0 %v4673, 108
        %v4684 = vpop.permute.xlu0 %4683
        %4685 = vrot.lane.b32.xlu0 %v4674, 108
        %v4686 = vpop.permute.xlu0 %4685
        %v4687 = vsel %vm1145, %v4680, %v4682
        %v4688 = vsel %vm1145, %v4684, %v4686
        %4691 = vst [vmem:[#allocation3] sm:$0xff] %v4687
        %4692 = vst [vmem:[#allocation3 + $0x8] sm:$0xff] %v4688
        %v4693 = vld [vmem:[#allocation2] sm:$0xff]
        %v4694 = vld [vmem:[#allocation2 + $0x8] sm:$0xff]
        %v4695 = vld [vmem:[#allocation2 + $0x10] sm:$0xff]
        %v4696 = vld [vmem:[#allocation2 + $0x18] sm:$0xff]
        %4701 = vrot.lane.b32.xlu0 %v4693, 107
        %v4702 = vpop.permute.xlu0 %4701
        %4703 = vrot.lane.b32.xlu0 %v4694, 107
        %v4704 = vpop.permute.xlu0 %4703
        %4705 = vrot.lane.b32.xlu0 %v4695, 107
        %v4706 = vpop.permute.xlu0 %4705
        %4707 = vrot.lane.b32.xlu0 %v4696, 107
        %v4708 = vpop.permute.xlu0 %4707
        %v4709 = vsel %vm3327, %v4702, %v4704
        %v4710 = vsel %vm3327, %v4706, %v4708
        %4713 = vst [vmem:[#allocation3 + $0x10] sm:$0xff] %v4709
        %4714 = vst [vmem:[#allocation3 + $0x18] sm:$0xff] %v4710
        %v4715 = vld [vmem:[#allocation2] sm:$0xff]
        %v4716 = vld [vmem:[#allocation2 + $0x8] sm:$0xff]
        %v4717 = vld [vmem:[#allocation2 + $0x10] sm:$0xff]
        %v4718 = vld [vmem:[#allocation2 + $0x18] sm:$0xff]
        %4723 = vrot.lane.b32.xlu0 %v4715, 106
        %v4724 = vpop.permute.xlu0 %4723
        %4725 = vrot.lane.b32.xlu0 %v4716, 106
        %v4726 = vpop.permute.xlu0 %4725
        %4727 = vrot.lane.b32.xlu0 %v4717, 106
        %v4728 = vpop.permute.xlu0 %4727
        %4729 = vrot.lane.b32.xlu0 %v4718, 106
        %v4730 = vpop.permute.xlu0 %4729
        %v4731 = vsel %vm753, %v4724, %v4726
        %v4732 = vsel %vm753, %v4728, %v4730
        %4735 = vst [vmem:[#allocation3 + $0x20] sm:$0xff] %v4731
        %4736 = vst [vmem:[#allocation3 + $0x28] sm:$0xff] %v4732
        %v4737 = vld [vmem:[#allocation2] sm:$0xff]
        %v4738 = vld [vmem:[#allocation2 + $0x8] sm:$0xff]
        %v4739 = vld [vmem:[#allocation2 + $0x10] sm:$0xff]
        %v4740 = vld [vmem:[#allocation2 + $0x18] sm:$0xff]
        %4745 = vrot.lane.b32.xlu0 %v4737, 105
        %v4746 = vpop.permute.xlu0 %4745
        %4747 = vrot.lane.b32.xlu0 %v4738, 105
        %v4748 = vpop.permute.xlu0 %4747
        %4749 = vrot.lane.b32.xlu0 %v4739, 105
        %v4750 = vpop.permute.xlu0 %4749
        %4751 = vrot.lane.b32.xlu0 %v4740, 105
        %v4752 = vpop.permute.xlu0 %4751
        %v4753 = vsel %vm1539, %v4746, %v4748
        %v4754 = vsel %vm1539, %v4750, %v4752
        %4757 = vst [vmem:[#allocation3 + $0x30] sm:$0xff] %v4753
        %4758 = vst [vmem:[#allocation3 + $0x38] sm:$0xff] %v4754
        %v4759 = vld [vmem:[#allocation2] sm:$0xff]
        %v4760 = vld [vmem:[#allocation2 + $0x8] sm:$0xff]
        %v4761 = vld [vmem:[#allocation2 + $0x10] sm:$0xff]
        %v4762 = vld [vmem:[#allocation2 + $0x18] sm:$0xff]
        %4767 = vrot.lane.b32.xlu0 %v4759, 104
        %v4768 = vpop.permute.xlu0 %4767
        %4769 = vrot.lane.b32.xlu0 %v4760, 104
        %v4770 = vpop.permute.xlu0 %4769
        %4771 = vrot.lane.b32.xlu0 %v4761, 104
        %v4772 = vpop.permute.xlu0 %4771
        %4773 = vrot.lane.b32.xlu0 %v4762, 104
        %v4774 = vpop.permute.xlu0 %4773
        %v4775 = vsel %vm359, %v4768, %v4770
        %v4776 = vsel %vm359, %v4772, %v4774
        %4779 = vst [vmem:[#allocation3 + $0x40] sm:$0xff] %v4775
        %4780 = vst [vmem:[#allocation3 + $0x48] sm:$0xff] %v4776
        %v4781 = vld [vmem:[#allocation2] sm:$0xff]
        %v4782 = vld [vmem:[#allocation2 + $0x8] sm:$0xff]
        %v4783 = vld [vmem:[#allocation2 + $0x10] sm:$0xff]
        %v4784 = vld [vmem:[#allocation2 + $0x18] sm:$0xff]
        %4789 = vrot.lane.b32.xlu0 %v4781, 103
        %v4790 = vpop.permute.xlu0 %4789
        %4791 = vrot.lane.b32.xlu0 %v4782, 103
        %v4792 = vpop.permute.xlu0 %4791
        %4793 = vrot.lane.b32.xlu0 %v4783, 103
        %v4794 = vpop.permute.xlu0 %4793
        %4795 = vrot.lane.b32.xlu0 %v4784, 103
        %v4796 = vpop.permute.xlu0 %4795
        %v4797 = vsel %vm382, %v4790, %v4792
        %v4798 = vsel %vm382, %v4794, %v4796
        %4801 = vst [vmem:[#allocation3 + $0x50] sm:$0xff] %v4797
        %4802 = vst [vmem:[#allocation3 + $0x58] sm:$0xff] %v4798
        %v4803 = vld [vmem:[#allocation2] sm:$0xff]
        %v4804 = vld [vmem:[#allocation2 + $0x8] sm:$0xff]
        %v4805 = vld [vmem:[#allocation2 + $0x10] sm:$0xff]
        %v4806 = vld [vmem:[#allocation2 + $0x18] sm:$0xff]
        %4811 = vrot.lane.b32.xlu0 %v4803, 102
        %v4812 = vpop.permute.xlu0 %4811
        %4813 = vrot.lane.b32.xlu0 %v4804, 102
        %v4814 = vpop.permute.xlu0 %4813
        %4815 = vrot.lane.b32.xlu0 %v4805, 102
        %v4816 = vpop.permute.xlu0 %4815
        %4817 = vrot.lane.b32.xlu0 %v4806, 102
        %v4818 = vpop.permute.xlu0 %4817
        %v4819 = vsel %vm405, %v4812, %v4814
        %v4820 = vsel %vm405, %v4816, %v4818
        %4823 = vst [vmem:[#allocation3 + $0x60] sm:$0xff] %v4819
        %4824 = vst [vmem:[#allocation3 + $0x68] sm:$0xff] %v4820
        %v4825 = vld [vmem:[#allocation2] sm:$0xff]
        %v4826 = vld [vmem:[#allocation2 + $0x8] sm:$0xff]
        %v4827 = vld [vmem:[#allocation2 + $0x10] sm:$0xff]
        %v4828 = vld [vmem:[#allocation2 + $0x18] sm:$0xff]
        %4833 = vrot.lane.b32.xlu0 %v4825, 101
        %v4834 = vpop.permute.xlu0 %4833
        %4835 = vrot.lane.b32.xlu0 %v4826, 101
        %v4836 = vpop.permute.xlu0 %4835
        %4837 = vrot.lane.b32.xlu0 %v4827, 101
        %v4838 = vpop.permute.xlu0 %4837
        %4839 = vrot.lane.b32.xlu0 %v4828, 101
        %v4840 = vpop.permute.xlu0 %4839
        %v4841 = vsel %vm1628, %v4834, %v4836
        %v4842 = vsel %vm1628, %v4838, %v4840
        %4845 = vst [vmem:[#allocation3 + $0x70] sm:$0xff] %v4841
        %4846 = vst [vmem:[#allocation3 + $0x78] sm:$0xff] %v4842
        %v4847 = vld [vmem:[#allocation2] sm:$0xff]
        %v4848 = vld [vmem:[#allocation2 + $0x8] sm:$0xff]
        %v4849 = vld [vmem:[#allocation2 + $0x10] sm:$0xff]
        %v4850 = vld [vmem:[#allocation2 + $0x18] sm:$0xff]
        %4855 = vrot.lane.b32.xlu0 %v4847, 100
        %v4856 = vpop.permute.xlu0 %4855
        %4857 = vrot.lane.b32.xlu0 %v4848, 100
        %v4858 = vpop.permute.xlu0 %4857
        %4859 = vrot.lane.b32.xlu0 %v4849, 100
        %v4860 = vpop.permute.xlu0 %4859
        %4861 = vrot.lane.b32.xlu0 %v4850, 100
        %v4862 = vpop.permute.xlu0 %4861
        %v4863 = vsel %vm798, %v4856, %v4858
        %v4864 = vsel %vm798, %v4860, %v4862
        %4867 = vst [vmem:[#allocation3 + $0x80] sm:$0xff] %v4863
        %4868 = vst [vmem:[#allocation3 + $0x88] sm:$0xff] %v4864
        %v4869 = vld [vmem:[#allocation2] sm:$0xff]
        %v4870 = vld [vmem:[#allocation2 + $0x8] sm:$0xff]
        %v4871 = vld [vmem:[#allocation2 + $0x10] sm:$0xff]
        %v4872 = vld [vmem:[#allocation2 + $0x18] sm:$0xff]
        %4877 = vrot.lane.b32.xlu0 %v4869, 99
        %v4878 = vpop.permute.xlu0 %4877
        %4879 = vrot.lane.b32.xlu0 %v4870, 99
        %v4880 = vpop.permute.xlu0 %4879
        %4881 = vrot.lane.b32.xlu0 %v4871, 99
        %v4882 = vpop.permute.xlu0 %4881
        %4883 = vrot.lane.b32.xlu0 %v4872, 99
        %v4884 = vpop.permute.xlu0 %4883
        %v4885 = vsel %vm3504, %v4878, %v4880
        %v4886 = vsel %vm3504, %v4882, %v4884
        %4889 = vst [vmem:[#allocation3 + $0x90] sm:$0xff] %v4885
        %4890 = vst [vmem:[#allocation3 + $0x98] sm:$0xff] %v4886
        %v4891 = vld [vmem:[#allocation2] sm:$0xff]
        %v4892 = vld [vmem:[#allocation2 + $0x8] sm:$0xff]
        %v4893 = vld [vmem:[#allocation2 + $0x10] sm:$0xff]
        %v4894 = vld [vmem:[#allocation2 + $0x18] sm:$0xff]
        %4899 = vrot.lane.b32.xlu0 %v4891, 98
        %v4900 = vpop.permute.xlu0 %4899
        %4901 = vrot.lane.b32.xlu0 %v4892, 98
        %v4902 = vpop.permute.xlu0 %4901
        %4903 = vrot.lane.b32.xlu0 %v4893, 98
        %v4904 = vpop.permute.xlu0 %4903
        %4905 = vrot.lane.b32.xlu0 %v4894, 98
        %v4906 = vpop.permute.xlu0 %4905
        %v4907 = vsel %vm1190, %v4900, %v4902
        %v4908 = vsel %vm1190, %v4904, %v4906
        %4911 = vst [vmem:[#allocation3 + $0xa0] sm:$0xff] %v4907
        %4912 = vst [vmem:[#allocation3 + $0xa8] sm:$0xff] %v4908
        %v4913 = vld [vmem:[#allocation3] sm:$0xff]
        %v4914 = vld [vmem:[#allocation3 + $0x8] sm:$0xff]
        %v4915 = vld [vmem:[#allocation3 + $0x10] sm:$0xff]
        %v4916 = vld [vmem:[#allocation3 + $0x18] sm:$0xff]
        %v4917 = vld [vmem:[#allocation3 + $0x20] sm:$0xff]
        %v4918 = vld [vmem:[#allocation3 + $0x28] sm:$0xff]
        %v4919 = vld [vmem:[#allocation3 + $0x30] sm:$0xff]
        %v4920 = vld [vmem:[#allocation3 + $0x38] sm:$0xff]
        %v4921 = vld [vmem:[#allocation3 + $0x40] sm:$0xff]
        %v4922 = vld [vmem:[#allocation3 + $0x48] sm:$0xff]
        %v4923 = vld [vmem:[#allocation3 + $0x50] sm:$0xff]
        %v4924 = vld [vmem:[#allocation3 + $0x58] sm:$0xff]
        %v4925 = vld [vmem:[#allocation3 + $0x60] sm:$0xff]
        %v4926 = vld [vmem:[#allocation3 + $0x68] sm:$0xff]
        %v4927 = vld [vmem:[#allocation3 + $0x70] sm:$0xff]
        %v4928 = vld [vmem:[#allocation3 + $0x78] sm:$0xff]
        %v4929 = vld [vmem:[#allocation3 + $0x80] sm:$0xff]
        %v4930 = vld [vmem:[#allocation3 + $0x88] sm:$0xff]
        %v4931 = vld [vmem:[#allocation3 + $0x90] sm:$0xff]
        %v4932 = vld [vmem:[#allocation3 + $0x98] sm:$0xff]
        %v4933 = vld [vmem:[#allocation3 + $0xa0] sm:$0xff]
        %v4934 = vld [vmem:[#allocation3 + $0xa8] sm:$0xff]
        %4936 = vset.pattern.permute.xlu0 0
        %4937 = vperm.xlu0 %4936, %v4653
        %v4938 = vpop.permute.xlu0 %4937
        %4941 = vset.pattern.permute.xlu0 0
        %4942 = vperm.xlu0 %4941, %v4654
        %v4943 = vpop.permute.xlu0 %4942
        %4946 = vset.pattern.permute.xlu0 0
        %4947 = vperm.xlu0 %4946, %v4655
        %v4948 = vpop.permute.xlu0 %4947
        %4951 = vset.pattern.permute.xlu0 0
        %4952 = vperm.xlu0 %4951, %v4656
        %v4953 = vpop.permute.xlu0 %4952
        %v4963 = vunpack.c.l.b16 %v4644
        %v4964 = vunpack.c.h.b16 %v4644
        %v4965 = vunpack.c.l.b16 %v4645
        %v4966 = vunpack.c.l.b16 %v4646
        %v4967 = vunpack.c.h.b16 %v4646
        %v4968 = vunpack.c.l.b16 %v4647
        %v4969 = vunpack.c.l.b16 %v4648
        %v4970 = vunpack.c.h.b16 %v4648
        %v4971 = vunpack.c.l.b16 %v4649
        %v4972 = vunpack.c.l.b16 %v4650
        %v4973 = vunpack.c.h.b16 %v4650
        %v4974 = vunpack.c.l.b16 %v4651
        %v4975 = vpack.c.b16 %v4966, %v4963
        %v4976 = vpack.c.b16 %v4967, %v4964
        %v4977 = vpack.c.b16 %v4968, %v4965
        %v4978 = vpack.c.b16 %v4972, %v4969
        %v4979 = vpack.c.b16 %v4973, %v4970
        %v4980 = vpack.c.b16 %v4974, %v4971
        %v4986 = vsel %vm448, %v4977, 0
        %v4989 = vsel %vm448, %v4980, 0
        %4991 = vmatprep.subr.bf16.mxu0 0
        %4992 = vmatpush1.bf16.msra.mxu0 %v4913
        %4993 = vmatprep.subr.bf16.mxu0 0
        %4994 = vmatpush1.bf16.msra.mxu0 %v4914
        %4995 = vmatprep.subr.bf16.mxu0 0
        %4996 = vmatpush1.bf16.msra.mxu0 %v4915
        %4997 = vmatprep.subr.bf16.mxu0 0
        %4998 = vmatpush1.bf16.msra.mxu0 %v4916
        %4999 = vmatprep.subr.bf16.mxu0 0
        %5000 = vmatpush1.bf16.msra.mxu0 %v4917
        %5001 = vmatprep.subr.bf16.mxu0 0
        %5002 = vmatpush1.bf16.msra.mxu0 %v4918
        %5003 = vmatprep.subr.bf16.mxu0 0
        %5004 = vmatpush1.bf16.msra.mxu0 %v4919
        %5005 = vmatprep.subr.bf16.mxu0 0
        %5006 = vmatpush1.bf16.msra.mxu0 %v4920
        %5007 = vmatprep.subr.bf16.mxu0 0
        %5008 = vmatpush1.bf16.msra.mxu0 %v4921
        %5009 = vmatprep.subr.bf16.mxu0 0
        %5010 = vmatpush1.bf16.msra.mxu0 %v4922
        %5011 = vmatprep.subr.bf16.mxu0 0
        %5012 = vmatpush1.bf16.msra.mxu0 %v4923
        %5013 = vmatprep.subr.bf16.mxu0 0
        %5014 = vmatpush1.bf16.msra.mxu0 %v4924
        %5015 = vmatprep.subr.bf16.mxu0 0
        %5016 = vmatpush1.bf16.msra.mxu0 %v4925
        %5017 = vmatprep.subr.bf16.mxu0 0
        %5018 = vmatpush1.bf16.msra.mxu0 %v4926
        %5019 = vmatprep.subr.bf16.mxu0 0
        %5020 = vmatpush1.bf16.msra.mxu0 %v4927
        %5021 = vmatprep.subr.bf16.mxu0 0
        %5022 = vmatpush1.bf16.msra.mxu0 %v4928
        %5023 = vmatprep.mubr.bf16.mxu0 %v4976
        %5024 = vmatmul.mubr.bf16.gmra.mrb[0].mxu0 %v4975
        %v5025 = vpop.f32.mrb[0].mxu0
        %v5026 = vadd.f32 %v4938, %v5025
        %v5027 = vpop.f32.mrb[0].mxu0
        %v5028 = vpop.f32.mrb[0].mxu0
        %v5029 = vadd.f32 %v4943, %v5028
        %v5030 = vpop.f32.mrb[0].mxu0
        %5031 = vmatprep.mubr.bf16.mxu0 %v4979
        %5032 = vmatmul.mubr.bf16.gmra.mrb[0].mxu0 %v4978
        %v5033 = vpop.f32.mrb[0].mxu0
        %v5034 = vadd.f32 %v4948, %v5033
        %v5035 = vpop.f32.mrb[0].mxu0
        %v5036 = vpop.f32.mrb[0].mxu0
        %v5037 = vadd.f32 %v4953, %v5036
        %v5038 = vpop.f32.mrb[0].mxu0
        %5039 = vdwg.mxu0
        %5040 = vmatprep.subr.bf16.mxu0 0
        %5041 = vmatpush1.bf16.msra.mxu0 %v4929
        %5042 = vmatprep.subr.bf16.mxu0 0
        %5043 = vmatpush1.bf16.msra.mxu0 %v4930
        %5044 = vmatprep.subr.bf16.mxu0 0
        %5045 = vmatpush1.bf16.msra.mxu0 %v4931
        %5046 = vmatprep.subr.bf16.mxu0 0
        %5047 = vmatpush1.bf16.msra.mxu0 %v4932
        %5048 = vmatprep.subr.bf16.mxu0 0
        %5049 = vmatpush1.bf16.msra.mxu0 %v4933
        %5050 = vmatprep.subr.bf16.mxu0 0
        %5051 = vmatpush1.bf16.msra.mxu0 %v4934
        %5052 = vmatprep.subr.bf16.mxu0 0
        %5053 = vmatpush1.bf16.msra.mxu0 0
        %5054 = vmatprep.subr.bf16.mxu0 0
        %5055 = vmatpush1.bf16.msra.mxu0 0
        %5056 = vmatprep.subr.bf16.mxu0 0
        %5057 = vmatpush1.bf16.msra.mxu0 0
        %5058 = vmatprep.subr.bf16.mxu0 0
        %5059 = vmatpush1.bf16.msra.mxu0 0
        %5060 = vmatprep.subr.bf16.mxu0 0
        %5061 = vmatpush1.bf16.msra.mxu0 0
        %5062 = vmatprep.subr.bf16.mxu0 0
        %5063 = vmatpush1.bf16.msra.mxu0 0
        %5064 = vmatprep.subr.bf16.mxu0 0
        %5065 = vmatpush1.bf16.msra.mxu0 0
        %5066 = vmatprep.subr.bf16.mxu0 0
        %5067 = vmatpush1.bf16.msra.mxu0 0
        %5068 = vmatprep.subr.bf16.mxu0 0
        %5069 = vmatpush1.bf16.msra.mxu0 0
        %5070 = vmatprep.subr.bf16.mxu0 0
        %5071 = vmatpush1.bf16.msra.mxu0 0
        %5072 = vmatprep.mubr.bf16.mxu0 0
        %5073 = vmatmul.mubr.bf16.gmra.mrb[0].mxu0 %v4986
        %v5074 = vpop.f32.mrb[0].mxu0
        %v5075 = vadd.f32 %v5026, %v5074
        %v5076 = vpop.f32.mrb[0].mxu0
        %v5077 = vpop.f32.mrb[0].mxu0
        %v5078 = vadd.f32 %v5029, %v5077
        %v5079 = vpop.f32.mrb[0].mxu0
        %5080 = vmatprep.mubr.bf16.mxu0 0
        %5081 = vmatmul.mubr.bf16.gmra.mrb[0].mxu0 %v4989
        %v5082 = vpop.f32.mrb[0].mxu0
        %v5083 = vadd.f32 %v5034, %v5082
        %v5084 = vpop.f32.mrb[0].mxu0
        %v5085 = vpop.f32.mrb[0].mxu0
        %v5086 = vadd.f32 %v5037, %v5085
        %v5087 = vpop.f32.mrb[0].mxu0
        %5088 = vdwg.mxu0
        %v5089 = vadd.f32 %v5075, %v4167
        %v5090 = vadd.f32 %v5078, %v4168
        %v5091 = vadd.f32 %v5083, %v4169
        %v5092 = vadd.f32 %v5086, %v4170
        %vm5093 = vcmp.gt.f32.partialorder %v5089, 0.0
        %vm5094 = vcmp.gt.f32.partialorder %v5090, 0.0
        %vm5095 = vcmp.gt.f32.partialorder %v5091, 0.0
        %vm5096 = vcmp.gt.f32.partialorder %v5092, 0.0
        %v5097 = vmul.f32 %v5089, 0.1
        %v5098 = vmul.f32 %v5090, 0.1
        %v5099 = vmul.f32 %v5091, 0.1
        %v5100 = vmul.f32 %v5092, 0.1
        %v5101 = vsel %vm5093, %v5089, %v5097
        %v5102 = vsel %vm5094, %v5090, %v5098
        %v5103 = vsel %vm5095, %v5091, %v5099
        %v5104 = vsel %vm5096, %v5092, %v5100
        %s5105 = scalar_lea.vmem %s5, 192
        %v5106 = vld [vmem:[%s5105] sm:$0xff]
        %v5107 = vld [vmem:[%s5105 + $0x8] sm:$0xf]
        %v5108 = vld [vmem:[%s5105 + $0xc] sm:$0xff]
        %v5109 = vld [vmem:[%s5105 + $0x14] sm:$0xf]
        %v5110 = vld [vmem:[%s5105 + $0x18] sm:$0xff]
        %v5111 = vld [vmem:[%s5105 + $0x20] sm:$0xf]
        %v5112 = vld [vmem:[%s5105 + $0x24] sm:$0xff]
        %v5113 = vld [vmem:[%s5105 + $0x2c] sm:$0xf]
        %s5114 = scalar_lea.vmem %s6, 128
        %v5115 = vld [vmem:[%s5114] sm:$0xff]
        %v5116 = vld [vmem:[%s5114 + $0x8] sm:$0xff]
        %v5117 = vld [vmem:[%s5114 + $0x10] sm:$0xff]
        %v5118 = vld [vmem:[%s5114 + $0x18] sm:$0xff]
        %v5119 = vpack.c.bf16 %v5102, %v5101
        %v5120 = vpack.c.bf16 %v5104, %v5103
        %5123 = vrot.lane.b32.xlu0 %v5119, 25
        %v5124 = vpop.permute.xlu0 %5123
        %5125 = vrot.lane.b32.xlu0 %v5120, 25
        %v5126 = vpop.permute.xlu0 %5125
        %5129 = vst.msk [vmem:[#allocation2] sm:$0xff] %vm338, %v5124
        %5130 = vst.msk [vmem:[#allocation2 + $0x8] sm:$0xff] %vm298, %v5124
        %5131 = vst.msk [vmem:[#allocation2 + $0x10] sm:$0xff] %vm338, %v5126
        %5132 = vst.msk [vmem:[#allocation2 + $0x18] sm:$0xff] %vm298, %v5126
        %v5133 = vld [vmem:[#allocation2] sm:$0xff]
        %v5134 = vld [vmem:[#allocation2 + $0x10] sm:$0xff]
        %5135 = vst [vmem:[#allocation3] sm:$0xff] %v5133
        %5136 = vst [vmem:[#allocation3 + $0x8] sm:$0xff] %v5134
        %v5137 = vld [vmem:[#allocation2] sm:$0xff]
        %v5138 = vld [vmem:[#allocation2 + $0x8] sm:$0xff]
        %v5139 = vld [vmem:[#allocation2 + $0x10] sm:$0xff]
        %v5140 = vld [vmem:[#allocation2 + $0x18] sm:$0xff]
        %5145 = vrot.lane.b32.xlu0 %v5137, 123
        %v5146 = vpop.permute.xlu0 %5145
        %5147 = vrot.lane.b32.xlu0 %v5138, 123
        %v5148 = vpop.permute.xlu0 %5147
        %5149 = vrot.lane.b32.xlu0 %v5139, 123
        %v5150 = vpop.permute.xlu0 %5149
        %5151 = vrot.lane.b32.xlu0 %v5140, 123
        %v5152 = vpop.permute.xlu0 %5151
        %vm5153 = vcmask 1006592
        %v5154 = vsel %vm5153, %v5146, %v5148
        %v5155 = vsel %vm5153, %v5150, %v5152
        %5158 = vst [vmem:[#allocation3 + $0x10] sm:$0xff] %v5154
        %5159 = vst [vmem:[#allocation3 + $0x18] sm:$0xff] %v5155
        %v5160 = vld [vmem:[#allocation2] sm:$0xff]
        %v5161 = vld [vmem:[#allocation2 + $0x8] sm:$0xff]
        %v5162 = vld [vmem:[#allocation2 + $0x10] sm:$0xff]
        %v5163 = vld [vmem:[#allocation2 + $0x18] sm:$0xff]
        %5168 = vrot.lane.b32.xlu0 %v5160, 118
        %v5169 = vpop.permute.xlu0 %5168
        %5170 = vrot.lane.b32.xlu0 %v5161, 118
        %v5171 = vpop.permute.xlu0 %5170
        %5172 = vrot.lane.b32.xlu0 %v5162, 118
        %v5173 = vpop.permute.xlu0 %5172
        %5174 = vrot.lane.b32.xlu0 %v5163, 118
        %v5175 = vpop.permute.xlu0 %5174
        %v5176 = vsel %vm2719, %v5169, %v5171
        %v5177 = vsel %vm2719, %v5173, %v5175
        %5180 = vst [vmem:[#allocation3 + $0x20] sm:$0xff] %v5176
        %5181 = vst [vmem:[#allocation3 + $0x28] sm:$0xff] %v5177
        %v5182 = vld [vmem:[#allocation2] sm:$0xff]
        %v5183 = vld [vmem:[#allocation2 + $0x8] sm:$0xff]
        %v5184 = vld [vmem:[#allocation2 + $0x10] sm:$0xff]
        %v5185 = vld [vmem:[#allocation2 + $0x18] sm:$0xff]
        %5190 = vrot.lane.b32.xlu0 %v5182, 113
        %v5191 = vpop.permute.xlu0 %5190
        %5192 = vrot.lane.b32.xlu0 %v5183, 113
        %v5193 = vpop.permute.xlu0 %5192
        %5194 = vrot.lane.b32.xlu0 %v5184, 113
        %v5195 = vpop.permute.xlu0 %5194
        %5196 = vrot.lane.b32.xlu0 %v5185, 113
        %v5197 = vpop.permute.xlu0 %5196
        %v5198 = vsel %vm2742, %v5191, %v5193
        %v5199 = vsel %vm2742, %v5195, %v5197
        %5202 = vst [vmem:[#allocation3 + $0x30] sm:$0xff] %v5198
        %5203 = vst [vmem:[#allocation3 + $0x38] sm:$0xff] %v5199
        %v5204 = vld [vmem:[#allocation2] sm:$0xff]
        %v5205 = vld [vmem:[#allocation2 + $0x8] sm:$0xff]
        %v5206 = vld [vmem:[#allocation2 + $0x10] sm:$0xff]
        %v5207 = vld [vmem:[#allocation2 + $0x18] sm:$0xff]
        %5212 = vrot.lane.b32.xlu0 %v5204, 108
        %v5213 = vpop.permute.xlu0 %5212
        %5214 = vrot.lane.b32.xlu0 %v5205, 108
        %v5215 = vpop.permute.xlu0 %5214
        %5216 = vrot.lane.b32.xlu0 %v5206, 108
        %v5217 = vpop.permute.xlu0 %5216
        %5218 = vrot.lane.b32.xlu0 %v5207, 108
        %v5219 = vpop.permute.xlu0 %5218
        %v5220 = vsel %vm1145, %v5213, %v5215
        %v5221 = vsel %vm1145, %v5217, %v5219
        %5224 = vst [vmem:[#allocation3 + $0x40] sm:$0xff] %v5220
        %5225 = vst [vmem:[#allocation3 + $0x48] sm:$0xff] %v5221
        %v5226 = vld [vmem:[#allocation2] sm:$0xff]
        %v5227 = vld [vmem:[#allocation2 + $0x8] sm:$0xff]
        %v5228 = vld [vmem:[#allocation2 + $0x10] sm:$0xff]
        %v5229 = vld [vmem:[#allocation2 + $0x18] sm:$0xff]
        %5234 = vrot.lane.b32.xlu0 %v5226, 103
        %v5235 = vpop.permute.xlu0 %5234
        %5236 = vrot.lane.b32.xlu0 %v5227, 103
        %v5237 = vpop.permute.xlu0 %5236
        %5238 = vrot.lane.b32.xlu0 %v5228, 103
        %v5239 = vpop.permute.xlu0 %5238
        %5240 = vrot.lane.b32.xlu0 %v5229, 103
        %v5241 = vpop.permute.xlu0 %5240
        %v5242 = vsel %vm382, %v5235, %v5237
        %v5243 = vsel %vm382, %v5239, %v5241
        %5246 = vst [vmem:[#allocation3 + $0x50] sm:$0xff] %v5242
        %5247 = vst [vmem:[#allocation3 + $0x58] sm:$0xff] %v5243
        %v5248 = vld [vmem:[#allocation2] sm:$0xff]
        %v5249 = vld [vmem:[#allocation2 + $0x8] sm:$0xff]
        %v5250 = vld [vmem:[#allocation2 + $0x10] sm:$0xff]
        %v5251 = vld [vmem:[#allocation2 + $0x18] sm:$0xff]
        %5256 = vrot.lane.b32.xlu0 %v5248, 98
        %v5257 = vpop.permute.xlu0 %5256
        %5258 = vrot.lane.b32.xlu0 %v5249, 98
        %v5259 = vpop.permute.xlu0 %5258
        %5260 = vrot.lane.b32.xlu0 %v5250, 98
        %v5261 = vpop.permute.xlu0 %5260
        %5262 = vrot.lane.b32.xlu0 %v5251, 98
        %v5263 = vpop.permute.xlu0 %5262
        %v5264 = vsel %vm1190, %v5257, %v5259
        %v5265 = vsel %vm1190, %v5261, %v5263
        %5268 = vst [vmem:[#allocation3 + $0x60] sm:$0xff] %v5264
        %5269 = vst [vmem:[#allocation3 + $0x68] sm:$0xff] %v5265
        %v5270 = vld [vmem:[#allocation2] sm:$0xff]
        %v5271 = vld [vmem:[#allocation2 + $0x8] sm:$0xff]
        %v5272 = vld [vmem:[#allocation2 + $0x10] sm:$0xff]
        %v5273 = vld [vmem:[#allocation2 + $0x18] sm:$0xff]
        %5278 = vrot.lane.b32.xlu0 %v5270, 93
        %v5279 = vpop.permute.xlu0 %5278
        %5280 = vrot.lane.b32.xlu0 %v5271, 93
        %v5281 = vpop.permute.xlu0 %5280
        %5282 = vrot.lane.b32.xlu0 %v5272, 93
        %v5283 = vpop.permute.xlu0 %5282
        %5284 = vrot.lane.b32.xlu0 %v5273, 93
        %v5285 = vpop.permute.xlu0 %5284
        %v5286 = vsel %vm2831, %v5279, %v5281
        %v5287 = vsel %vm2831, %v5283, %v5285
        %5290 = vst [vmem:[#allocation3 + $0x70] sm:$0xff] %v5286
        %5291 = vst [vmem:[#allocation3 + $0x78] sm:$0xff] %v5287
        %v5292 = vld [vmem:[#allocation2] sm:$0xff]
        %v5293 = vld [vmem:[#allocation2 + $0x8] sm:$0xff]
        %v5294 = vld [vmem:[#allocation2 + $0x10] sm:$0xff]
        %v5295 = vld [vmem:[#allocation2 + $0x18] sm:$0xff]
        %5300 = vrot.lane.b32.xlu0 %v5292, 88
        %v5301 = vpop.permute.xlu0 %5300
        %5302 = vrot.lane.b32.xlu0 %v5293, 88
        %v5303 = vpop.permute.xlu0 %5302
        %5304 = vrot.lane.b32.xlu0 %v5294, 88
        %v5305 = vpop.permute.xlu0 %5304
        %5306 = vrot.lane.b32.xlu0 %v5295, 88
        %v5307 = vpop.permute.xlu0 %5306
        %v5308 = vsel %vm2854, %v5301, %v5303
        %v5309 = vsel %vm2854, %v5305, %v5307
        %5312 = vst [vmem:[#allocation3 + $0x80] sm:$0xff] %v5308
        %5313 = vst [vmem:[#allocation3 + $0x88] sm:$0xff] %v5309
        %v5314 = vld [vmem:[#allocation2] sm:$0xff]
        %v5315 = vld [vmem:[#allocation2 + $0x8] sm:$0xff]
        %v5316 = vld [vmem:[#allocation2 + $0x10] sm:$0xff]
        %v5317 = vld [vmem:[#allocation2 + $0x18] sm:$0xff]
        %5322 = vrot.lane.b32.xlu0 %v5314, 83
        %v5323 = vpop.permute.xlu0 %5322
        %5324 = vrot.lane.b32.xlu0 %v5315, 83
        %v5325 = vpop.permute.xlu0 %5324
        %5326 = vrot.lane.b32.xlu0 %v5316, 83
        %v5327 = vpop.permute.xlu0 %5326
        %5328 = vrot.lane.b32.xlu0 %v5317, 83
        %v5329 = vpop.permute.xlu0 %5328
        %vm5330 = vcmask 678912
        %v5331 = vsel %vm5330, %v5323, %v5325
        %v5332 = vsel %vm5330, %v5327, %v5329
        %5335 = vst [vmem:[#allocation3 + $0x90] sm:$0xff] %v5331
        %5336 = vst [vmem:[#allocation3 + $0x98] sm:$0xff] %v5332
        %v5337 = vld [vmem:[#allocation2] sm:$0xff]
        %v5338 = vld [vmem:[#allocation2 + $0x8] sm:$0xff]
        %v5339 = vld [vmem:[#allocation2 + $0x10] sm:$0xff]
        %v5340 = vld [vmem:[#allocation2 + $0x18] sm:$0xff]
        %5345 = vrot.lane.b32.xlu0 %v5337, 78
        %v5346 = vpop.permute.xlu0 %5345
        %5347 = vrot.lane.b32.xlu0 %v5338, 78
        %v5348 = vpop.permute.xlu0 %5347
        %5349 = vrot.lane.b32.xlu0 %v5339, 78
        %v5350 = vpop.permute.xlu0 %5349
        %5351 = vrot.lane.b32.xlu0 %v5340, 78
        %v5352 = vpop.permute.xlu0 %5351
        %vm5353 = vcmask 637952
        %v5354 = vsel %vm5353, %v5346, %v5348
        %v5355 = vsel %vm5353, %v5350, %v5352
        %5358 = vst [vmem:[#allocation3 + $0xa0] sm:$0xff] %v5354
        %5359 = vst [vmem:[#allocation3 + $0xa8] sm:$0xff] %v5355
        %v5360 = vld [vmem:[#allocation3] sm:$0xff]
        %v5361 = vld [vmem:[#allocation3 + $0x8] sm:$0xff]
        %v5362 = vld [vmem:[#allocation3 + $0x10] sm:$0xff]
        %v5363 = vld [vmem:[#allocation3 + $0x18] sm:$0xff]
        %v5364 = vld [vmem:[#allocation3 + $0x20] sm:$0xff]
        %v5365 = vld [vmem:[#allocation3 + $0x28] sm:$0xff]
        %v5366 = vld [vmem:[#allocation3 + $0x30] sm:$0xff]
        %v5367 = vld [vmem:[#allocation3 + $0x38] sm:$0xff]
        %v5368 = vld [vmem:[#allocation3 + $0x40] sm:$0xff]
        %v5369 = vld [vmem:[#allocation3 + $0x48] sm:$0xff]
        %v5370 = vld [vmem:[#allocation3 + $0x50] sm:$0xff]
        %v5371 = vld [vmem:[#allocation3 + $0x58] sm:$0xff]
        %v5372 = vld [vmem:[#allocation3 + $0x60] sm:$0xff]
        %v5373 = vld [vmem:[#allocation3 + $0x68] sm:$0xff]
        %v5374 = vld [vmem:[#allocation3 + $0x70] sm:$0xff]
        %v5375 = vld [vmem:[#allocation3 + $0x78] sm:$0xff]
        %v5376 = vld [vmem:[#allocation3 + $0x80] sm:$0xff]
        %v5377 = vld [vmem:[#allocation3 + $0x88] sm:$0xff]
        %v5378 = vld [vmem:[#allocation3 + $0x90] sm:$0xff]
        %v5379 = vld [vmem:[#allocation3 + $0x98] sm:$0xff]
        %v5380 = vld [vmem:[#allocation3 + $0xa0] sm:$0xff]
        %v5381 = vld [vmem:[#allocation3 + $0xa8] sm:$0xff]
        %5383 = vset.pattern.permute.xlu0 0
        %5384 = vperm.xlu0 %5383, %v5115
        %v5385 = vpop.permute.xlu0 %5384
        %5388 = vset.pattern.permute.xlu0 0
        %5389 = vperm.xlu0 %5388, %v5116
        %v5390 = vpop.permute.xlu0 %5389
        %5393 = vset.pattern.permute.xlu0 0
        %5394 = vperm.xlu0 %5393, %v5117
        %v5395 = vpop.permute.xlu0 %5394
        %5398 = vset.pattern.permute.xlu0 0
        %5399 = vperm.xlu0 %5398, %v5118
        %v5400 = vpop.permute.xlu0 %5399
        %v5410 = vunpack.c.l.b16 %v5106
        %v5411 = vunpack.c.h.b16 %v5106
        %v5412 = vunpack.c.l.b16 %v5107
        %v5413 = vunpack.c.l.b16 %v5108
        %v5414 = vunpack.c.h.b16 %v5108
        %v5415 = vunpack.c.l.b16 %v5109
        %v5416 = vunpack.c.l.b16 %v5110
        %v5417 = vunpack.c.h.b16 %v5110
        %v5418 = vunpack.c.l.b16 %v5111
        %v5419 = vunpack.c.l.b16 %v5112
        %v5420 = vunpack.c.h.b16 %v5112
        %v5421 = vunpack.c.l.b16 %v5113
        %v5422 = vpack.c.b16 %v5413, %v5410
        %v5423 = vpack.c.b16 %v5414, %v5411
        %v5424 = vpack.c.b16 %v5415, %v5412
        %v5425 = vpack.c.b16 %v5419, %v5416
        %v5426 = vpack.c.b16 %v5420, %v5417
        %v5427 = vpack.c.b16 %v5421, %v5418
        %v5433 = vsel %vm448, %v5424, 0
        %v5436 = vsel %vm448, %v5427, 0
        %5438 = vmatprep.subr.bf16.mxu0 0
        %5439 = vmatpush1.bf16.msra.mxu0 %v5360
        %5440 = vmatprep.subr.bf16.mxu0 0
        %5441 = vmatpush1.bf16.msra.mxu0 %v5361
        %5442 = vmatprep.subr.bf16.mxu0 0
        %5443 = vmatpush1.bf16.msra.mxu0 %v5362
        %5444 = vmatprep.subr.bf16.mxu0 0
        %5445 = vmatpush1.bf16.msra.mxu0 %v5363
        %5446 = vmatprep.subr.bf16.mxu0 0
        %5447 = vmatpush1.bf16.msra.mxu0 %v5364
        %5448 = vmatprep.subr.bf16.mxu0 0
        %5449 = vmatpush1.bf16.msra.mxu0 %v5365
        %5450 = vmatprep.subr.bf16.mxu0 0
        %5451 = vmatpush1.bf16.msra.mxu0 %v5366
        %5452 = vmatprep.subr.bf16.mxu0 0
        %5453 = vmatpush1.bf16.msra.mxu0 %v5367
        %5454 = vmatprep.subr.bf16.mxu0 0
        %5455 = vmatpush1.bf16.msra.mxu0 %v5368
        %5456 = vmatprep.subr.bf16.mxu0 0
        %5457 = vmatpush1.bf16.msra.mxu0 %v5369
        %5458 = vmatprep.subr.bf16.mxu0 0
        %5459 = vmatpush1.bf16.msra.mxu0 %v5370
        %5460 = vmatprep.subr.bf16.mxu0 0
        %5461 = vmatpush1.bf16.msra.mxu0 %v5371
        %5462 = vmatprep.subr.bf16.mxu0 0
        %5463 = vmatpush1.bf16.msra.mxu0 %v5372
        %5464 = vmatprep.subr.bf16.mxu0 0
        %5465 = vmatpush1.bf16.msra.mxu0 %v5373
        %5466 = vmatprep.subr.bf16.mxu0 0
        %5467 = vmatpush1.bf16.msra.mxu0 %v5374
        %5468 = vmatprep.subr.bf16.mxu0 0
        %5469 = vmatpush1.bf16.msra.mxu0 %v5375
        %5470 = vmatprep.mubr.bf16.mxu0 %v5423
        %5471 = vmatmul.mubr.bf16.gmra.mrb[0].mxu0 %v5422
        %v5472 = vpop.f32.mrb[0].mxu0
        %v5473 = vadd.f32 %v5385, %v5472
        %v5474 = vpop.f32.mrb[0].mxu0
        %v5475 = vpop.f32.mrb[0].mxu0
        %v5476 = vadd.f32 %v5390, %v5475
        %v5477 = vpop.f32.mrb[0].mxu0
        %5478 = vmatprep.mubr.bf16.mxu0 %v5426
        %5479 = vmatmul.mubr.bf16.gmra.mrb[0].mxu0 %v5425
        %v5480 = vpop.f32.mrb[0].mxu0
        %v5481 = vadd.f32 %v5395, %v5480
        %v5482 = vpop.f32.mrb[0].mxu0
        %v5483 = vpop.f32.mrb[0].mxu0
        %v5484 = vadd.f32 %v5400, %v5483
        %v5485 = vpop.f32.mrb[0].mxu0
        %5486 = vdwg.mxu0
        %5487 = vmatprep.subr.bf16.mxu0 0
        %5488 = vmatpush1.bf16.msra.mxu0 %v5376
        %5489 = vmatprep.subr.bf16.mxu0 0
        %5490 = vmatpush1.bf16.msra.mxu0 %v5377
        %5491 = vmatprep.subr.bf16.mxu0 0
        %5492 = vmatpush1.bf16.msra.mxu0 %v5378
        %5493 = vmatprep.subr.bf16.mxu0 0
        %5494 = vmatpush1.bf16.msra.mxu0 %v5379
        %5495 = vmatprep.subr.bf16.mxu0 0
        %5496 = vmatpush1.bf16.msra.mxu0 %v5380
        %5497 = vmatprep.subr.bf16.mxu0 0
        %5498 = vmatpush1.bf16.msra.mxu0 %v5381
        %5499 = vmatprep.subr.bf16.mxu0 0
        %5500 = vmatpush1.bf16.msra.mxu0 0
        %5501 = vmatprep.subr.bf16.mxu0 0
        %5502 = vmatpush1.bf16.msra.mxu0 0
        %5503 = vmatprep.subr.bf16.mxu0 0
        %5504 = vmatpush1.bf16.msra.mxu0 0
        %5505 = vmatprep.subr.bf16.mxu0 0
        %5506 = vmatpush1.bf16.msra.mxu0 0
        %5507 = vmatprep.subr.bf16.mxu0 0
        %5508 = vmatpush1.bf16.msra.mxu0 0
        %5509 = vmatprep.subr.bf16.mxu0 0
        %5510 = vmatpush1.bf16.msra.mxu0 0
        %5511 = vmatprep.subr.bf16.mxu0 0
        %5512 = vmatpush1.bf16.msra.mxu0 0
        %5513 = vmatprep.subr.bf16.mxu0 0
        %5514 = vmatpush1.bf16.msra.mxu0 0
        %5515 = vmatprep.subr.bf16.mxu0 0
        %5516 = vmatpush1.bf16.msra.mxu0 0
        %5517 = vmatprep.subr.bf16.mxu0 0
        %5518 = vmatpush1.bf16.msra.mxu0 0
        %5519 = vmatprep.mubr.bf16.mxu0 0
        %5520 = vmatmul.mubr.bf16.gmra.mrb[0].mxu0 %v5433
        %v5521 = vpop.f32.mrb[0].mxu0
        %v5522 = vadd.f32 %v5473, %v5521
        %v5523 = vpop.f32.mrb[0].mxu0
        %v5524 = vpop.f32.mrb[0].mxu0
        %v5525 = vadd.f32 %v5476, %v5524
        %v5526 = vpop.f32.mrb[0].mxu0
        %5527 = vmatprep.mubr.bf16.mxu0 0
        %5528 = vmatmul.mubr.bf16.gmra.mrb[0].mxu0 %v5436
        %v5529 = vpop.f32.mrb[0].mxu0
        %v5530 = vadd.f32 %v5481, %v5529
        %v5531 = vpop.f32.mrb[0].mxu0
        %v5532 = vpop.f32.mrb[0].mxu0
        %v5533 = vadd.f32 %v5484, %v5532
        %v5534 = vpop.f32.mrb[0].mxu0
        %5535 = vdwg.mxu0
        %vm5536 = vcmp.gt.f32.partialorder %v5522, 0.0
        %vm5537 = vcmp.gt.f32.partialorder %v5525, 0.0
        %vm5538 = vcmp.gt.f32.partialorder %v5530, 0.0
        %vm5539 = vcmp.gt.f32.partialorder %v5533, 0.0
        %v5540 = vmul.f32 %v5522, 0.1
        %v5541 = vmul.f32 %v5525, 0.1
        %v5542 = vmul.f32 %v5530, 0.1
        %v5543 = vmul.f32 %v5533, 0.1
        %v5544 = vsel %vm5536, %v5522, %v5540
        %v5545 = vsel %vm5537, %v5525, %v5541
        %v5546 = vsel %vm5538, %v5530, %v5542
        %v5547 = vsel %vm5539, %v5533, %v5543
        %s5548 = scalar_lea.vmem %s5, 240
        %v5549 = vld [vmem:[%s5548] sm:$0xff]
        %v5550 = vld [vmem:[%s5548 + $0x8] sm:$0xf]
        %v5551 = vld [vmem:[%s5548 + $0xc] sm:$0xff]
        %v5552 = vld [vmem:[%s5548 + $0x14] sm:$0xf]
        %v5553 = vld [vmem:[%s5548 + $0x18] sm:$0xff]
        %v5554 = vld [vmem:[%s5548 + $0x20] sm:$0xf]
        %v5555 = vld [vmem:[%s5548 + $0x24] sm:$0xff]
        %v5556 = vld [vmem:[%s5548 + $0x2c] sm:$0xf]
        %s5557 = scalar_lea.vmem %s6, 160
        %v5558 = vld [vmem:[%s5557] sm:$0xff]
        %v5559 = vld [vmem:[%s5557 + $0x8] sm:$0xff]
        %v5560 = vld [vmem:[%s5557 + $0x10] sm:$0xff]
        %v5561 = vld [vmem:[%s5557 + $0x18] sm:$0xff]
        %v5562 = vpack.c.bf16 %v5545, %v5544
        %v5563 = vpack.c.bf16 %v5547, %v5546
        %5566 = vrot.lane.b32.xlu0 %v5562, 25
        %v5567 = vpop.permute.xlu0 %5566
        %5568 = vrot.lane.b32.xlu0 %v5563, 25
        %v5569 = vpop.permute.xlu0 %5568
        %5572 = vst.msk [vmem:[#allocation2] sm:$0xff] %vm338, %v5567
        %5573 = vst.msk [vmem:[#allocation2 + $0x8] sm:$0xff] %vm298, %v5567
        %5574 = vst.msk [vmem:[#allocation2 + $0x10] sm:$0xff] %vm338, %v5569
        %5575 = vst.msk [vmem:[#allocation2 + $0x18] sm:$0xff] %vm298, %v5569
        %v5576 = vld [vmem:[#allocation2] sm:$0xff]
        %v5577 = vld [vmem:[#allocation2 + $0x8] sm:$0xff]
        %v5578 = vld [vmem:[#allocation2 + $0x10] sm:$0xff]
        %v5579 = vld [vmem:[#allocation2 + $0x18] sm:$0xff]
        %5584 = vrot.lane.b32.xlu0 %v5576, 108
        %v5585 = vpop.permute.xlu0 %5584
        %5586 = vrot.lane.b32.xlu0 %v5577, 108
        %v5587 = vpop.permute.xlu0 %5586
        %5588 = vrot.lane.b32.xlu0 %v5578, 108
        %v5589 = vpop.permute.xlu0 %5588
        %5590 = vrot.lane.b32.xlu0 %v5579, 108
        %v5591 = vpop.permute.xlu0 %5590
        %v5592 = vsel %vm1145, %v5585, %v5587
        %v5593 = vsel %vm1145, %v5589, %v5591
        %5596 = vst [vmem:[#allocation3] sm:$0xff] %v5592
        %5597 = vst [vmem:[#allocation3 + $0x8] sm:$0xff] %v5593
        %v5598 = vld [vmem:[#allocation2] sm:$0xff]
        %v5599 = vld [vmem:[#allocation2 + $0x8] sm:$0xff]
        %v5600 = vld [vmem:[#allocation2 + $0x10] sm:$0xff]
        %v5601 = vld [vmem:[#allocation2 + $0x18] sm:$0xff]
        %5606 = vrot.lane.b32.xlu0 %v5598, 107
        %v5607 = vpop.permute.xlu0 %5606
        %5608 = vrot.lane.b32.xlu0 %v5599, 107
        %v5609 = vpop.permute.xlu0 %5608
        %5610 = vrot.lane.b32.xlu0 %v5600, 107
        %v5611 = vpop.permute.xlu0 %5610
        %5612 = vrot.lane.b32.xlu0 %v5601, 107
        %v5613 = vpop.permute.xlu0 %5612
        %v5614 = vsel %vm3327, %v5607, %v5609
        %v5615 = vsel %vm3327, %v5611, %v5613
        %5618 = vst [vmem:[#allocation3 + $0x10] sm:$0xff] %v5614
        %5619 = vst [vmem:[#allocation3 + $0x18] sm:$0xff] %v5615
        %v5620 = vld [vmem:[#allocation2] sm:$0xff]
        %v5621 = vld [vmem:[#allocation2 + $0x8] sm:$0xff]
        %v5622 = vld [vmem:[#allocation2 + $0x10] sm:$0xff]
        %v5623 = vld [vmem:[#allocation2 + $0x18] sm:$0xff]
        %5628 = vrot.lane.b32.xlu0 %v5620, 106
        %v5629 = vpop.permute.xlu0 %5628
        %5630 = vrot.lane.b32.xlu0 %v5621, 106
        %v5631 = vpop.permute.xlu0 %5630
        %5632 = vrot.lane.b32.xlu0 %v5622, 106
        %v5633 = vpop.permute.xlu0 %5632
        %5634 = vrot.lane.b32.xlu0 %v5623, 106
        %v5635 = vpop.permute.xlu0 %5634
        %v5636 = vsel %vm753, %v5629, %v5631
        %v5637 = vsel %vm753, %v5633, %v5635
        %5640 = vst [vmem:[#allocation3 + $0x20] sm:$0xff] %v5636
        %5641 = vst [vmem:[#allocation3 + $0x28] sm:$0xff] %v5637
        %v5642 = vld [vmem:[#allocation2] sm:$0xff]
        %v5643 = vld [vmem:[#allocation2 + $0x8] sm:$0xff]
        %v5644 = vld [vmem:[#allocation2 + $0x10] sm:$0xff]
        %v5645 = vld [vmem:[#allocation2 + $0x18] sm:$0xff]
        %5650 = vrot.lane.b32.xlu0 %v5642, 105
        %v5651 = vpop.permute.xlu0 %5650
        %5652 = vrot.lane.b32.xlu0 %v5643, 105
        %v5653 = vpop.permute.xlu0 %5652
        %5654 = vrot.lane.b32.xlu0 %v5644, 105
        %v5655 = vpop.permute.xlu0 %5654
        %5656 = vrot.lane.b32.xlu0 %v5645, 105
        %v5657 = vpop.permute.xlu0 %5656
        %v5658 = vsel %vm1539, %v5651, %v5653
        %v5659 = vsel %vm1539, %v5655, %v5657
        %5662 = vst [vmem:[#allocation3 + $0x30] sm:$0xff] %v5658
        %5663 = vst [vmem:[#allocation3 + $0x38] sm:$0xff] %v5659
        %v5664 = vld [vmem:[#allocation2] sm:$0xff]
        %v5665 = vld [vmem:[#allocation2 + $0x8] sm:$0xff]
        %v5666 = vld [vmem:[#allocation2 + $0x10] sm:$0xff]
        %v5667 = vld [vmem:[#allocation2 + $0x18] sm:$0xff]
        %5672 = vrot.lane.b32.xlu0 %v5664, 104
        %v5673 = vpop.permute.xlu0 %5672
        %5674 = vrot.lane.b32.xlu0 %v5665, 104
        %v5675 = vpop.permute.xlu0 %5674
        %5676 = vrot.lane.b32.xlu0 %v5666, 104
        %v5677 = vpop.permute.xlu0 %5676
        %5678 = vrot.lane.b32.xlu0 %v5667, 104
        %v5679 = vpop.permute.xlu0 %5678
        %v5680 = vsel %vm359, %v5673, %v5675
        %v5681 = vsel %vm359, %v5677, %v5679
        %5684 = vst [vmem:[#allocation3 + $0x40] sm:$0xff] %v5680
        %5685 = vst [vmem:[#allocation3 + $0x48] sm:$0xff] %v5681
        %v5686 = vld [vmem:[#allocation2] sm:$0xff]
        %v5687 = vld [vmem:[#allocation2 + $0x8] sm:$0xff]
        %v5688 = vld [vmem:[#allocation2 + $0x10] sm:$0xff]
        %v5689 = vld [vmem:[#allocation2 + $0x18] sm:$0xff]
        %5694 = vrot.lane.b32.xlu0 %v5686, 103
        %v5695 = vpop.permute.xlu0 %5694
        %5696 = vrot.lane.b32.xlu0 %v5687, 103
        %v5697 = vpop.permute.xlu0 %5696
        %5698 = vrot.lane.b32.xlu0 %v5688, 103
        %v5699 = vpop.permute.xlu0 %5698
        %5700 = vrot.lane.b32.xlu0 %v5689, 103
        %v5701 = vpop.permute.xlu0 %5700
        %v5702 = vsel %vm382, %v5695, %v5697
        %v5703 = vsel %vm382, %v5699, %v5701
        %5706 = vst [vmem:[#allocation3 + $0x50] sm:$0xff] %v5702
        %5707 = vst [vmem:[#allocation3 + $0x58] sm:$0xff] %v5703
        %v5708 = vld [vmem:[#allocation2] sm:$0xff]
        %v5709 = vld [vmem:[#allocation2 + $0x8] sm:$0xff]
        %v5710 = vld [vmem:[#allocation2 + $0x10] sm:$0xff]
        %v5711 = vld [vmem:[#allocation2 + $0x18] sm:$0xff]
        %5716 = vrot.lane.b32.xlu0 %v5708, 102
        %v5717 = vpop.permute.xlu0 %5716
        %5718 = vrot.lane.b32.xlu0 %v5709, 102
        %v5719 = vpop.permute.xlu0 %5718
        %5720 = vrot.lane.b32.xlu0 %v5710, 102
        %v5721 = vpop.permute.xlu0 %5720
        %5722 = vrot.lane.b32.xlu0 %v5711, 102
        %v5723 = vpop.permute.xlu0 %5722
        %v5724 = vsel %vm405, %v5717, %v5719
        %v5725 = vsel %vm405, %v5721, %v5723
        %5728 = vst [vmem:[#allocation3 + $0x60] sm:$0xff] %v5724
        %5729 = vst [vmem:[#allocation3 + $0x68] sm:$0xff] %v5725
        %v5730 = vld [vmem:[#allocation2] sm:$0xff]
        %v5731 = vld [vmem:[#allocation2 + $0x8] sm:$0xff]
        %v5732 = vld [vmem:[#allocation2 + $0x10] sm:$0xff]
        %v5733 = vld [vmem:[#allocation2 + $0x18] sm:$0xff]
        %5738 = vrot.lane.b32.xlu0 %v5730, 101
        %v5739 = vpop.permute.xlu0 %5738
        %5740 = vrot.lane.b32.xlu0 %v5731, 101
        %v5741 = vpop.permute.xlu0 %5740
        %5742 = vrot.lane.b32.xlu0 %v5732, 101
        %v5743 = vpop.permute.xlu0 %5742
        %5744 = vrot.lane.b32.xlu0 %v5733, 101
        %v5745 = vpop.permute.xlu0 %5744
        %v5746 = vsel %vm1628, %v5739, %v5741
        %v5747 = vsel %vm1628, %v5743, %v5745
        %5750 = vst [vmem:[#allocation3 + $0x70] sm:$0xff] %v5746
        %5751 = vst [vmem:[#allocation3 + $0x78] sm:$0xff] %v5747
        %v5752 = vld [vmem:[#allocation2] sm:$0xff]
        %v5753 = vld [vmem:[#allocation2 + $0x8] sm:$0xff]
        %v5754 = vld [vmem:[#allocation2 + $0x10] sm:$0xff]
        %v5755 = vld [vmem:[#allocation2 + $0x18] sm:$0xff]
        %5760 = vrot.lane.b32.xlu0 %v5752, 100
        %v5761 = vpop.permute.xlu0 %5760
        %5762 = vrot.lane.b32.xlu0 %v5753, 100
        %v5763 = vpop.permute.xlu0 %5762
        %5764 = vrot.lane.b32.xlu0 %v5754, 100
        %v5765 = vpop.permute.xlu0 %5764
        %5766 = vrot.lane.b32.xlu0 %v5755, 100
        %v5767 = vpop.permute.xlu0 %5766
        %v5768 = vsel %vm798, %v5761, %v5763
        %v5769 = vsel %vm798, %v5765, %v5767
        %5772 = vst [vmem:[#allocation3 + $0x80] sm:$0xff] %v5768
        %5773 = vst [vmem:[#allocation3 + $0x88] sm:$0xff] %v5769
        %v5774 = vld [vmem:[#allocation2] sm:$0xff]
        %v5775 = vld [vmem:[#allocation2 + $0x8] sm:$0xff]
        %v5776 = vld [vmem:[#allocation2 + $0x10] sm:$0xff]
        %v5777 = vld [vmem:[#allocation2 + $0x18] sm:$0xff]
        %5782 = vrot.lane.b32.xlu0 %v5774, 99
        %v5783 = vpop.permute.xlu0 %5782
        %5784 = vrot.lane.b32.xlu0 %v5775, 99
        %v5785 = vpop.permute.xlu0 %5784
        %5786 = vrot.lane.b32.xlu0 %v5776, 99
        %v5787 = vpop.permute.xlu0 %5786
        %5788 = vrot.lane.b32.xlu0 %v5777, 99
        %v5789 = vpop.permute.xlu0 %5788
        %v5790 = vsel %vm3504, %v5783, %v5785
        %v5791 = vsel %vm3504, %v5787, %v5789
        %5794 = vst [vmem:[#allocation3 + $0x90] sm:$0xff] %v5790
        %5795 = vst [vmem:[#allocation3 + $0x98] sm:$0xff] %v5791
        %v5796 = vld [vmem:[#allocation2] sm:$0xff]
        %v5797 = vld [vmem:[#allocation2 + $0x8] sm:$0xff]
        %v5798 = vld [vmem:[#allocation2 + $0x10] sm:$0xff]
        %v5799 = vld [vmem:[#allocation2 + $0x18] sm:$0xff]
        %5804 = vrot.lane.b32.xlu0 %v5796, 98
        %v5805 = vpop.permute.xlu0 %5804
        %5806 = vrot.lane.b32.xlu0 %v5797, 98
        %v5807 = vpop.permute.xlu0 %5806
        %5808 = vrot.lane.b32.xlu0 %v5798, 98
        %v5809 = vpop.permute.xlu0 %5808
        %5810 = vrot.lane.b32.xlu0 %v5799, 98
        %v5811 = vpop.permute.xlu0 %5810
        %v5812 = vsel %vm1190, %v5805, %v5807
        %v5813 = vsel %vm1190, %v5809, %v5811
        %5816 = vst [vmem:[#allocation3 + $0xa0] sm:$0xff] %v5812
        %5817 = vst [vmem:[#allocation3 + $0xa8] sm:$0xff] %v5813
        %v5818 = vld [vmem:[#allocation3] sm:$0xff]
        %v5819 = vld [vmem:[#allocation3 + $0x8] sm:$0xff]
        %v5820 = vld [vmem:[#allocation3 + $0x10] sm:$0xff]
        %v5821 = vld [vmem:[#allocation3 + $0x18] sm:$0xff]
        %v5822 = vld [vmem:[#allocation3 + $0x20] sm:$0xff]
        %v5823 = vld [vmem:[#allocation3 + $0x28] sm:$0xff]
        %v5824 = vld [vmem:[#allocation3 + $0x30] sm:$0xff]
        %v5825 = vld [vmem:[#allocation3 + $0x38] sm:$0xff]
        %v5826 = vld [vmem:[#allocation3 + $0x40] sm:$0xff]
        %v5827 = vld [vmem:[#allocation3 + $0x48] sm:$0xff]
        %v5828 = vld [vmem:[#allocation3 + $0x50] sm:$0xff]
        %v5829 = vld [vmem:[#allocation3 + $0x58] sm:$0xff]
        %v5830 = vld [vmem:[#allocation3 + $0x60] sm:$0xff]
        %v5831 = vld [vmem:[#allocation3 + $0x68] sm:$0xff]
        %v5832 = vld [vmem:[#allocation3 + $0x70] sm:$0xff]
        %v5833 = vld [vmem:[#allocation3 + $0x78] sm:$0xff]
        %v5834 = vld [vmem:[#allocation3 + $0x80] sm:$0xff]
        %v5835 = vld [vmem:[#allocation3 + $0x88] sm:$0xff]
        %v5836 = vld [vmem:[#allocation3 + $0x90] sm:$0xff]
        %v5837 = vld [vmem:[#allocation3 + $0x98] sm:$0xff]
        %v5838 = vld [vmem:[#allocation3 + $0xa0] sm:$0xff]
        %v5839 = vld [vmem:[#allocation3 + $0xa8] sm:$0xff]
        %5841 = vset.pattern.permute.xlu0 0
        %5842 = vperm.xlu0 %5841, %v5558
        %v5843 = vpop.permute.xlu0 %5842
        %5846 = vset.pattern.permute.xlu0 0
        %5847 = vperm.xlu0 %5846, %v5559
        %v5848 = vpop.permute.xlu0 %5847
        %5851 = vset.pattern.permute.xlu0 0
        %5852 = vperm.xlu0 %5851, %v5560
        %v5853 = vpop.permute.xlu0 %5852
        %5856 = vset.pattern.permute.xlu0 0
        %5857 = vperm.xlu0 %5856, %v5561
        %v5858 = vpop.permute.xlu0 %5857
        %v5868 = vunpack.c.l.b16 %v5549
        %v5869 = vunpack.c.h.b16 %v5549
        %v5870 = vunpack.c.l.b16 %v5550
        %v5871 = vunpack.c.l.b16 %v5551
        %v5872 = vunpack.c.h.b16 %v5551
        %v5873 = vunpack.c.l.b16 %v5552
        %v5874 = vunpack.c.l.b16 %v5553
        %v5875 = vunpack.c.h.b16 %v5553
        %v5876 = vunpack.c.l.b16 %v5554
        %v5877 = vunpack.c.l.b16 %v5555
        %v5878 = vunpack.c.h.b16 %v5555
        %v5879 = vunpack.c.l.b16 %v5556
        %v5880 = vpack.c.b16 %v5871, %v5868
        %v5881 = vpack.c.b16 %v5872, %v5869
        %v5882 = vpack.c.b16 %v5873, %v5870
        %v5883 = vpack.c.b16 %v5877, %v5874
        %v5884 = vpack.c.b16 %v5878, %v5875
        %v5885 = vpack.c.b16 %v5879, %v5876
        %v5891 = vsel %vm448, %v5882, 0
        %v5894 = vsel %vm448, %v5885, 0
        %5896 = vmatprep.subr.bf16.mxu0 0
        %5897 = vmatpush1.bf16.msra.mxu0 %v5818
        %5898 = vmatprep.subr.bf16.mxu0 0
        %5899 = vmatpush1.bf16.msra.mxu0 %v5819
        %5900 = vmatprep.subr.bf16.mxu0 0
        %5901 = vmatpush1.bf16.msra.mxu0 %v5820
        %5902 = vmatprep.subr.bf16.mxu0 0
        %5903 = vmatpush1.bf16.msra.mxu0 %v5821
        %5904 = vmatprep.subr.bf16.mxu0 0
        %5905 = vmatpush1.bf16.msra.mxu0 %v5822
        %5906 = vmatprep.subr.bf16.mxu0 0
        %5907 = vmatpush1.bf16.msra.mxu0 %v5823
        %5908 = vmatprep.subr.bf16.mxu0 0
        %5909 = vmatpush1.bf16.msra.mxu0 %v5824
        %5910 = vmatprep.subr.bf16.mxu0 0
        %5911 = vmatpush1.bf16.msra.mxu0 %v5825
        %5912 = vmatprep.subr.bf16.mxu0 0
        %5913 = vmatpush1.bf16.msra.mxu0 %v5826
        %5914 = vmatprep.subr.bf16.mxu0 0
        %5915 = vmatpush1.bf16.msra.mxu0 %v5827
        %5916 = vmatprep.subr.bf16.mxu0 0
        %5917 = vmatpush1.bf16.msra.mxu0 %v5828
        %5918 = vmatprep.subr.bf16.mxu0 0
        %5919 = vmatpush1.bf16.msra.mxu0 %v5829
        %5920 = vmatprep.subr.bf16.mxu0 0
        %5921 = vmatpush1.bf16.msra.mxu0 %v5830
        %5922 = vmatprep.subr.bf16.mxu0 0
        %5923 = vmatpush1.bf16.msra.mxu0 %v5831
        %5924 = vmatprep.subr.bf16.mxu0 0
        %5925 = vmatpush1.bf16.msra.mxu0 %v5832
        %5926 = vmatprep.subr.bf16.mxu0 0
        %5927 = vmatpush1.bf16.msra.mxu0 %v5833
        %5928 = vmatprep.mubr.bf16.mxu0 %v5881
        %5929 = vmatmul.mubr.bf16.gmra.mrb[0].mxu0 %v5880
        %v5930 = vpop.f32.mrb[0].mxu0
        %v5931 = vadd.f32 %v5843, %v5930
        %v5932 = vpop.f32.mrb[0].mxu0
        %v5933 = vpop.f32.mrb[0].mxu0
        %v5934 = vadd.f32 %v5848, %v5933
        %v5935 = vpop.f32.mrb[0].mxu0
        %5936 = vmatprep.mubr.bf16.mxu0 %v5884
        %5937 = vmatmul.mubr.bf16.gmra.mrb[0].mxu0 %v5883
        %v5938 = vpop.f32.mrb[0].mxu0
        %v5939 = vadd.f32 %v5853, %v5938
        %v5940 = vpop.f32.mrb[0].mxu0
        %v5941 = vpop.f32.mrb[0].mxu0
        %v5942 = vadd.f32 %v5858, %v5941
        %v5943 = vpop.f32.mrb[0].mxu0
        %5944 = vdwg.mxu0
        %5945 = vmatprep.subr.bf16.mxu0 0
        %5946 = vmatpush1.bf16.msra.mxu0 %v5834
        %5947 = vmatprep.subr.bf16.mxu0 0
        %5948 = vmatpush1.bf16.msra.mxu0 %v5835
        %5949 = vmatprep.subr.bf16.mxu0 0
        %5950 = vmatpush1.bf16.msra.mxu0 %v5836
        %5951 = vmatprep.subr.bf16.mxu0 0
        %5952 = vmatpush1.bf16.msra.mxu0 %v5837
        %5953 = vmatprep.subr.bf16.mxu0 0
        %5954 = vmatpush1.bf16.msra.mxu0 %v5838
        %5955 = vmatprep.subr.bf16.mxu0 0
        %5956 = vmatpush1.bf16.msra.mxu0 %v5839
        %5957 = vmatprep.subr.bf16.mxu0 0
        %5958 = vmatpush1.bf16.msra.mxu0 0
        %5959 = vmatprep.subr.bf16.mxu0 0
        %5960 = vmatpush1.bf16.msra.mxu0 0
        %5961 = vmatprep.subr.bf16.mxu0 0
        %5962 = vmatpush1.bf16.msra.mxu0 0
        %5963 = vmatprep.subr.bf16.mxu0 0
        %5964 = vmatpush1.bf16.msra.mxu0 0
        %5965 = vmatprep.subr.bf16.mxu0 0
        %5966 = vmatpush1.bf16.msra.mxu0 0
        %5967 = vmatprep.subr.bf16.mxu0 0
        %5968 = vmatpush1.bf16.msra.mxu0 0
        %5969 = vmatprep.subr.bf16.mxu0 0
        %5970 = vmatpush1.bf16.msra.mxu0 0
        %5971 = vmatprep.subr.bf16.mxu0 0
        %5972 = vmatpush1.bf16.msra.mxu0 0
        %5973 = vmatprep.subr.bf16.mxu0 0
        %5974 = vmatpush1.bf16.msra.mxu0 0
        %5975 = vmatprep.subr.bf16.mxu0 0
        %5976 = vmatpush1.bf16.msra.mxu0 0
        %5977 = vmatprep.mubr.bf16.mxu0 0
        %5978 = vmatmul.mubr.bf16.gmra.mrb[0].mxu0 %v5891
        %v5979 = vpop.f32.mrb[0].mxu0
        %v5980 = vadd.f32 %v5931, %v5979
        %v5981 = vpop.f32.mrb[0].mxu0
        %v5982 = vpop.f32.mrb[0].mxu0
        %v5983 = vadd.f32 %v5934, %v5982
        %v5984 = vpop.f32.mrb[0].mxu0
        %5985 = vmatprep.mubr.bf16.mxu0 0
        %5986 = vmatmul.mubr.bf16.gmra.mrb[0].mxu0 %v5894
        %v5987 = vpop.f32.mrb[0].mxu0
        %v5988 = vadd.f32 %v5939, %v5987
        %v5989 = vpop.f32.mrb[0].mxu0
        %v5990 = vpop.f32.mrb[0].mxu0
        %v5991 = vadd.f32 %v5942, %v5990
        %v5992 = vpop.f32.mrb[0].mxu0
        %5993 = vdwg.mxu0
        %v5994 = vadd.f32 %v5980, %v5089
        %v5995 = vadd.f32 %v5983, %v5090
        %v5996 = vadd.f32 %v5988, %v5091
        %v5997 = vadd.f32 %v5991, %v5092
        %v5998 = vadd.f32 %v3269, %v5994
        %v5999 = vadd.f32 %v3270, %v5995
        %v6000 = vadd.f32 %v3271, %v5996
        %v6001 = vadd.f32 %v3272, %v5997
        %v6002 = vmul.f32 %v5998, 0.33333334
        %v6003 = vmul.f32 %v5999, 0.33333334
        %v6004 = vmul.f32 %v6000, 0.33333334
        %v6005 = vmul.f32 %v6001, 0.33333334
        %6006 = vst [vmem:[%s296] sm:$0xff] %v6002
        %6007 = vst [vmem:[%s296 + $0x8] sm:$0xff] %v6003
        %6008 = vst [vmem:[%s296 + $0x10] sm:$0xff] %v6004
        %6009 = vst [vmem:[%s296 + $0x18] sm:$0xff] %v6005
        %s6010 = sand.u32 %s184, 1
        %s6011 = scalar_lea.sflag [#allocation6], %s6010
        %s6012 = sand.u32 %s184, 1
        %s6013 = smul.addr %s6012, 32
        %s6014 = scalar_lea.vmem [#allocation7], %s6013
        // Predicated region
        $region53: #{tpu_custom_call.1} parent=47 // pred_check
          %p6015 = pneg %p194
        $region54: #{tpu_custom_call.1} parent=47 // pred_check_branch
          %6017 = sbr.rel (%p6015) target = $region56
        $region55: #{tpu_custom_call.1} parent=47 // pred_region
          %s6019 = ssub.s32 512, 512
          %6020 = vsyncadd %s6011, %s6019
          %s6021 = smul.addr %s24, 4
          %s6022 = smul.addr %s6021, 128
          %s6023 = scalar_lea.hbm %s7, %s6022
          %s6024 = sshll.u32 %s6014, 4
          %s6025 = int_to_ptr.vmem [resolvable:$true] %s6024
          %6030 = dma.vmem_to_hbm [thread:$0]  %s6025, 512, %s6023, %s6011, 128, 128, 8
        $region56: #{tpu_custom_call.1} parent=47 // pred_fallthru
          _
      $region48: #{tpu_custom_call.1} parent=5 // pred_fallthru
        _
      %p6031 = scmp.le.s32.totalorder 2, %s19
      // Predicated region
      $region57: #{tpu_custom_call.1} parent=5 // pred_check
        %p6032 = pneg %p6031
      $region58: #{tpu_custom_call.1} parent=5 // pred_check_branch
        %6034 = sbr.rel (%p6032) target = $region60
      $region59: #{tpu_custom_call.1} parent=5 // pred_region
        %s6035 = ssub.s32 %s19, 2
        // Predicated region
        $region61: #{tpu_custom_call.1} parent=59 // pred_check
          %p6036 = pneg %p200
        $region62: #{tpu_custom_call.1} parent=59 // pred_check_branch
          %6038 = sbr.rel (%p6036) target = $region64
        $region63: #{tpu_custom_call.1} parent=59 // pred_region
          %s6039 = sand.u32 %s185, 1
          %s6040 = scalar_lea.sflag [#allocation6], %s6039
          %s6041 = sand.u32 %s185, 1
          %s6042 = smul.addr %s6041, 32
          %s6043 = scalar_lea.vmem [#allocation7], %s6042
          %6044 = dma.done %s6040, 512
        $region64: #{tpu_custom_call.1} parent=59 // pred_fallthru
          _
      $region60: #{tpu_custom_call.1} parent=5 // pred_fallthru
        _
    $region6: #{tpu_custom_call.1} parent=1 // loop_footer
      %s23 = sadd.s32 1, %s19
    $region7: #{tpu_custom_call.1} parent=1 // loop_footer_branch
      %18 = sbr.rel target = $region3
    $region8: #{tpu_custom_call.1} parent=1 // loop_exit
      _
    %6045 = vsyncpa [#allocation5], 1
    %s6046 = scalar_lea.sflag [#allocation5], 1
    %6047 = vsyncpa %s6046, 1
    %6048 = vsyncpa [#allocation6], 1
    %s6049 = scalar_lea.sflag [#allocation6], 1
    %6050 = vsyncpa %s6049, 1

</llo_original>
